<compile_context>
chip_gen: v7x
topology: tpu7x:2x2x1
jax: 0.10.0
libtpu: 0.0.40
codegen_flags: <defaults>
</compile_context>

<pallas_src>
import functools

import jax
import jax.numpy as jnp
from jax import lax
from jax.experimental import pallas as pl
from jax.experimental.pallas import tpu as pltpu

EPS = 1e-5


def _cnn_block_kernel(xg_ref, *args, rowp, Rp, Gg, A, B, Cin, Cout, nb, has_xt):
    """One grid step = `nb` zero-padded, row-flattened images.

    xg_ref  : (nb, Rp + 2*Gg, Cin)  f32   padded images + Gg guard rows top/bottom
    xt_ref  : (nb, Rp, Cout)        bf16  optional x_t injection (only if has_xt)
    mask_ref: (Rp, 1)               f32   1.0 at interior pixels, 0.0 on pad ring
    w1_ref  : (9*Cin, Cout)         bf16  dw1[k] * pw1 * bn1_scale, stacked per tap
    b1_ref  : (1, Cout)             f32   folded BN1 bias
    w2_ref  : (9*Cout, Cout)        bf16  dw2[k] * pw2 * bn2_scale
    b2_ref  : (1, Cout)             f32
    wr_ref  : (Cin, Cout)           bf16  residual 1x1 * bn_r scale
    rb_ref  : (1, Cout)             f32
    out_ref : (nb, Rp, Cout)        f32
    hbuf_ref: (Rp + 2*Gg, Cout)     f32   staging scratch for stage-1 activation
    """
    if has_xt:
        (xt_ref, mask_ref, w1_ref, b1_ref, w2_ref, b2_ref,
         wr_ref, rb_ref, out_ref, hbuf_ref) = args
    else:
        xt_ref = None
        (mask_ref, w1_ref, b1_ref, w2_ref, b2_ref,
         wr_ref, rb_ref, out_ref, hbuf_ref) = args

    f32 = jnp.float32
    bf16 = jnp.bfloat16
    Rc = B - A                                    # 16-aligned compute band length
    offs = [(di - 1) * rowp + (dj - 1) for di in range(3) for dj in range(3)]

    # ---- per-step invariants, hoisted out of the image loop -------------------
    mband = mask_ref[A - Gg:B - Gg, :]            # (Rc, 1)
    b1 = b1_ref[...]
    b2 = b2_ref[...]
    rb = rb_ref[...]
    wr = wr_ref[...]
    w1_taps = [w1_ref[k * Cin:(k + 1) * Cin, :] for k in range(9)]
    w2_taps = [w2_ref[k * Cout:(k + 1) * Cout, :] for k in range(9)]

    # hbuf rows outside the compute band (guard rows + top/bottom padding ring
    # read by the stage-2 taps) are zeroed once per step; the per-image band
    # store below never touches them.
    hbuf_ref[0:A, :] = jnp.zeros((A, Cout), f32)
    hbuf_ref[B:Rp + 2 * Gg, :] = jnp.zeros((Rp + 2 * Gg - B, Cout), f32)

    for img in range(nb):                         # static unroll over images
        # ---- stage 1: depthwise 3x3 + pointwise 1x1 + BN1, as 9 MXU matmuls --
        h = jnp.zeros((Rc, Cout), f32)
        for k, o in enumerate(offs):
            h = h + jnp.dot(xg_ref[img, A + o:A + o + Rc, :].astype(bf16),
                            w1_taps[k], preferred_element_type=f32)
        h = jnp.maximum(h + b1, 0.0)
        if has_xt:
            h = h + xt_ref[img, A - Gg:B - Gg, :].astype(f32)
        # re-zero the padding ring so stage 2 sees true zero padding
        h = h * mband
        hbuf_ref[A:B, :] = h

        # ---- stage 2: depthwise 3x3 + pointwise 1x1 + BN2, as 9 MXU matmuls --
        g = jnp.zeros((Rc, Cout), f32)
        for k, o in enumerate(offs):
            g = g + jnp.dot(hbuf_ref[A + o:A + o + Rc, :].astype(bf16),
                            w2_taps[k], preferred_element_type=f32)
        g = g + b2

        # ---- residual 1x1 conv + BN (MXU) -------------------------------------
        r = jnp.dot(xg_ref[img, A:B, :].astype(bf16), wr,
                    preferred_element_type=f32) + rb

        # ---- add + ReLU (rows outside the band are padded ring -> cropped) ----
        out_ref[img, A - Gg:B - Gg, :] = jnp.maximum(g + r, 0.0)


def _fold_bn(gamma, beta, mean, var):
    # NOTE: BatchNorm in inference mode: running stats folded to scale/bias.
    # TODO(synk): training-mode BatchNorm (batch statistics) not implemented.
    scale = gamma / jnp.sqrt(var + EPS)
    return scale.reshape(1, -1), (beta - mean * scale).reshape(1, -1)


def cnn_block_forward(x_nchw, params, x_t_nchw=None, stride=1):
    if stride != 1:
        # TODO(synk): stride > 1 (strided depthwise + strided residual 1x1 conv)
        # is not implemented; module default is stride=1.
        raise NotImplementedError("only stride=1 is implemented")

    N, Cin, H, W = x_nchw.shape
    Cout = params["pw1_t"].shape[0]
    rowp = W + 2
    Rp = (H + 2) * rowp                    # pixels per zero-padded image
    D = rowp + 1                           # max |tap row offset| in flattened space
    Gg = ((D + 15) // 16) * 16             # 16-aligned guard rows per image
    # 16-aligned compute band (in guarded coordinates): covers every interior
    # pixel, keeps all tap reads in-bounds, and keeps the bf16 x_t band slice
    # and output band store on packed-tile boundaries.
    A = max(((Gg + D) // 16) * 16, Gg)
    B = min(((Gg + Rp - D + 15) // 16) * 16, Gg + Rp)
    has_xt = x_t_nchw is not None

    # --- images per grid step: bounded by a VMEM working-set budget -----------
    per_img = ((Rp + 2 * Gg) * Cin * 4 + Rp * Cout * 4
               + (Rp * Cout * 2 if has_xt else 0))
    nb = max(1, min(N, (6 * 1024 * 1024) // max(2 * per_img, 1)))
    nb = min(nb, 8)                        # cap static unroll / traced code size
    if N >= 2:
        nb = max(1, min(nb, N // 2))       # keep >= 2 grid steps for megacore
    Np = ((N + nb - 1) // nb) * nb         # pad batch to a multiple of nb

    # --- glue: NCHW -> padded, row-flattened channels-last + guard rows -------
    x_nhwc = jnp.transpose(x_nchw, (0, 2, 3, 1)).astype(jnp.float32)
    xflat = jnp.pad(x_nhwc, ((0, 0), (1, 1), (1, 1), (0, 0))).reshape(N, Rp, Cin)
    xg = jnp.pad(xflat, ((0, Np - N), (Gg, Gg), (0, 0)))

    mask = jnp.zeros((H + 2, W + 2), jnp.float32)
    mask = mask.at[1:H + 1, 1:W + 1].set(1.0).reshape(Rp, 1)

    # --- glue: fold depthwise + pointwise + BN into per-tap MXU weights (bf16) -
    s1, b1 = _fold_bn(params["g1"], params["be1"], params["m1"], params["v1"])
    s2, b2 = _fold_bn(params["g2"], params["be2"], params["m2"], params["v2"])
    rs, rb = _fold_bn(params["gr"], params["ber"], params["mr"], params["vr"])

    dw1 = jnp.transpose(params["dw1_t"][:, 0], (1, 2, 0)).reshape(9, Cin)   # [k, c]
    dw2 = jnp.transpose(params["dw2_t"][:, 0], (1, 2, 0)).reshape(9, Cout)
    pw1 = params["pw1_t"][:, :, 0, 0].T    # (Cin, Cout)
    pw2 = params["pw2_t"][:, :, 0, 0].T    # (Cout, Cout)
    resw = params["resw_t"][:, :, 0, 0].T  # (Cin, Cout)

    w1 = ((dw1[:, :, None] * pw1[None]).reshape(9 * Cin, Cout) * s1).astype(jnp.bfloat16)
    w2 = ((dw2[:, :, None] * pw2[None]).reshape(9 * Cout, Cout) * s2).astype(jnp.bfloat16)
    wr = (resw * rs).astype(jnp.bfloat16)

    kernel = functools.partial(
        _cnn_block_kernel, rowp=rowp, Rp=Rp, Gg=Gg, A=A, B=B,
        Cin=Cin, Cout=Cout, nb=nb, has_xt=has_xt)

    def full2d(shp):
        return pl.BlockSpec(shp, lambda n: (0, 0))

    in_specs = [pl.BlockSpec((nb, Rp + 2 * Gg, Cin), lambda n: (n, 0, 0))]
    args = [xg]
    if has_xt:
        xt_nhwc = jnp.transpose(x_t_nchw, (0, 2, 3, 1))
        xt = jnp.pad(xt_nhwc, ((0, 0), (1, 1), (1, 1), (0, 0))).reshape(N, Rp, Cout)
        xt = jnp.pad(xt, ((0, Np - N), (0, 0), (0, 0))).astype(jnp.bfloat16)
        in_specs.append(pl.BlockSpec((nb, Rp, Cout), lambda n: (n, 0, 0)))
        args.append(xt)
    in_specs += [full2d((Rp, 1)),
                 full2d((9 * Cin, Cout)), full2d((1, Cout)),
                 full2d((9 * Cout, Cout)), full2d((1, Cout)),
                 full2d((Cin, Cout)), full2d((1, Cout))]
    args += [mask, w1, b1, w2, b2, wr, rb]

    out_flat = pl.pallas_call(
        kernel,
        out_shape=jax.ShapeDtypeStruct((Np, Rp, Cout), jnp.float32),
        grid=(Np // nb,),
        in_specs=in_specs,
        out_specs=pl.BlockSpec((nb, Rp, Cout), lambda n: (n, 0, 0)),
        scratch_shapes=[pltpu.VMEM((Rp + 2 * Gg, Cout), jnp.float32)],
        compiler_params=pltpu.CompilerParams(
            dimension_semantics=("parallel",),     # megacore: split batch on v7x
            vmem_limit_bytes=32 * 1024 * 1024),
    )(*args)

    out = out_flat[:N].reshape(N, H + 2, W + 2, Cout)[:, 1:H + 1, 1:W + 1, :]
    return jnp.transpose(out, (0, 3, 1, 2))  # back to NCHW


def init_params(key, in_dim, out_dim):
    ks = jax.random.split(key, 17)
    p = {
        "dw1_t": 0.3 * jax.random.normal(ks[0], (in_dim, 1, 3, 3), jnp.float32),
        "pw1_t": 0.3 * jax.random.normal(ks[1], (out_dim, in_dim, 1, 1), jnp.float32),
        "dw2_t": 0.3 * jax.random.normal(ks[2], (out_dim, 1, 3, 3), jnp.float32),
        "pw2_t": 0.3 * jax.random.normal(ks[3], (out_dim, out_dim, 1, 1), jnp.float32),
        "resw_t": 0.3 * jax.random.normal(ks[4], (out_dim, in_dim, 1, 1), jnp.float32),
    }
    for i, tag in enumerate(("1", "2", "r")):
        b = 5 + 4 * i
        p["g" + tag] = 1.0 + 0.1 * jax.random.normal(ks[b], (out_dim,), jnp.float32)
        p["be" + tag] = 0.1 * jax.random.normal(ks[b + 1], (out_dim,), jnp.float32)
        p["m" + tag] = 0.1 * jax.random.normal(ks[b + 2], (out_dim,), jnp.float32)
        p["v" + tag] = 0.5 + jax.random.uniform(ks[b + 3], (out_dim,), jnp.float32)
    return p


def reference_nchw(x, x_t, params):
    """Pure-JAX f32 reference mirroring the PyTorch forward (inference-mode BN)."""
    P = lax.Precision.HIGHEST
    dn = ("NCHW", "OIHW", "NCHW")

    def conv(a, w, padding, groups=1):
        return lax.conv_general_dilated(
            a, w, window_strides=(1, 1), padding=padding,
            dimension_numbers=dn, feature_group_count=groups, precision=P)

    def bn(a, g, b, m, v):
        s = (1, -1, 1, 1)
        return (a - m.reshape(s)) / jnp.sqrt(v.reshape(s) + EPS) * g.reshape(s) + b.reshape(s)

    Cin = x.shape[1]
    h = conv(x, params["dw1_t"], [(1, 1), (1, 1)], groups=Cin)
    h = conv(h, params["pw1_t"], [(0, 0), (0, 0)])
    h = jax.nn.relu(bn(h, params["g1"], params["be1"], params["m1"], params["v1"]))
    if x_t is not None:
        h = h + x_t
    Cout = params["pw1_t"].shape[0]
    h = conv(h, params["dw2_t"], [(1, 1), (1, 1)], groups=Cout)
    h = conv(h, params["pw2_t"], [(0, 0), (0, 0)])
    h = bn(h, params["g2"], params["be2"], params["m2"], params["v2"])
    r = conv(x, params["resw_t"], [(0, 0), (0, 0)])
    r = bn(r, params["gr"], params["ber"], params["mr"], params["vr"])
    return jax.nn.relu(h + r)


if __name__ == "__main__":
    key = jax.random.PRNGKey(0)
    kx, kxt, kp = jax.random.split(key, 3)
    N, Cin, Cout, H, W = 2, 8, 16, 16, 16

    x = jax.random.normal(kx, (N, Cin, H, W), jnp.float32)
    x_t = jax.random.normal(kxt, (N, Cout, H, W), jnp.float32)
    params = init_params(kp, Cin, Cout)

    fwd = jax.jit(cnn_block_forward)

    # path 1: x_t is None (specialized kernel without the xt input)
    out = jax.block_until_ready(fwd(x, params))
    assert out.shape == (N, Cout, H, W)
    ref = reference_nchw(x, None, params)
    err = float(jnp.max(jnp.abs(out - ref)))
    # bf16 MXU operands vs exact f32 reference -> allow a bf16-level tolerance.
    assert err < 5e-2, f"mismatch vs reference (x_t=None): {err}"

    # path 2: with x_t
    out_t = jax.block_until_ready(fwd(x, params, x_t))
    ref_t = reference_nchw(x, x_t, params)
    err_t = float(jnp.max(jnp.abs(out_t - ref_t)))
    assert err_t < 5e-2, f"mismatch vs reference (with x_t): {err_t}"

    print("KERNEL_OK")
</pallas_src>

<mosaic_0001>
module attributes {stable_mosaic.version = 11 : i64} {
  func.func @_cnn_block_kernel(%arg0: i32, %arg1: memref<1x388x8xf32, #tpu.memory_space<vmem>>, %arg2: memref<324x1xf32, #tpu.memory_space<vmem>>, %arg3: memref<72x16xbf16, #tpu.memory_space<vmem>>, %arg4: memref<1x16xf32, #tpu.memory_space<vmem>>, %arg5: memref<144x16xbf16, #tpu.memory_space<vmem>>, %arg6: memref<1x16xf32, #tpu.memory_space<vmem>>, %arg7: memref<8x16xbf16, #tpu.memory_space<vmem>>, %arg8: memref<1x16xf32, #tpu.memory_space<vmem>>, %arg9: memref<1x324x16xf32, #tpu.memory_space<vmem>>, %arg10: memref<388x16xf32, #tpu.memory_space<vmem>>) attributes {dimension_semantics = [#tpu.dimension_semantics<parallel>], iteration_bounds = array<i64: 2>, scalar_prefetch = 0 : i64, scratch_operands = 1 : i64, tpu.core_type = #tpu.core_type<tc>, window_params = [{transform_indices = @transform_0, window_bounds = array<i64: 1, 388, 8>}, {pipeline_mode = #tpu.pipeline_mode<synchronous>, transform_indices = @transform_1, window_bounds = array<i64: 324, 1>}, {pipeline_mode = #tpu.pipeline_mode<synchronous>, transform_indices = @transform_2, window_bounds = array<i64: 72, 16>}, {pipeline_mode = #tpu.pipeline_mode<synchronous>, transform_indices = @transform_3, window_bounds = array<i64: 1, 16>}, {pipeline_mode = #tpu.pipeline_mode<synchronous>, transform_indices = @transform_4, window_bounds = array<i64: 144, 16>}, {pipeline_mode = #tpu.pipeline_mode<synchronous>, transform_indices = @transform_5, window_bounds = array<i64: 1, 16>}, {pipeline_mode = #tpu.pipeline_mode<synchronous>, transform_indices = @transform_6, window_bounds = array<i64: 8, 16>}, {pipeline_mode = #tpu.pipeline_mode<synchronous>, transform_indices = @transform_7, window_bounds = array<i64: 1, 16>}, {transform_indices = @transform_8, window_bounds = array<i64: 1, 324, 16>}]} {
    %c16 = arith.constant 16 : index
    %c0 = arith.constant 0 : index
    %0 = vector.load %arg2[%c16, %c0] : memref<324x1xf32, #tpu.memory_space<vmem>>, vector<304x1xf32>
    %c0_0 = arith.constant 0 : index
    %c0_1 = arith.constant 0 : index
    %1 = vector.load %arg4[%c0_0, %c0_1] : memref<1x16xf32, #tpu.memory_space<vmem>>, vector<1x16xf32>
    %c0_2 = arith.constant 0 : index
    %c0_3 = arith.constant 0 : index
    %2 = vector.load %arg6[%c0_2, %c0_3] : memref<1x16xf32, #tpu.memory_space<vmem>>, vector<1x16xf32>
    %c0_4 = arith.constant 0 : index
    %c0_5 = arith.constant 0 : index
    %3 = vector.load %arg8[%c0_4, %c0_5] : memref<1x16xf32, #tpu.memory_space<vmem>>, vector<1x16xf32>
    %c0_6 = arith.constant 0 : index
    %c0_7 = arith.constant 0 : index
    %4 = vector.load %arg7[%c0_6, %c0_7] : memref<8x16xbf16, #tpu.memory_space<vmem>>, vector<8x16xbf16>
    %c0_8 = arith.constant 0 : index
    %c0_9 = arith.constant 0 : index
    %5 = vector.load %arg3[%c0_8, %c0_9] : memref<72x16xbf16, #tpu.memory_space<vmem>>, vector<8x16xbf16>
    %c8 = arith.constant 8 : index
    %c0_10 = arith.constant 0 : index
    %6 = vector.load %arg3[%c8, %c0_10] : memref<72x16xbf16, #tpu.memory_space<vmem>>, vector<8x16xbf16>
    %c16_11 = arith.constant 16 : index
    %c0_12 = arith.constant 0 : index
    %7 = vector.load %arg3[%c16_11, %c0_12] : memref<72x16xbf16, #tpu.memory_space<vmem>>, vector<8x16xbf16>
    %c24 = arith.constant 24 : index
    %c0_13 = arith.constant 0 : index
    %8 = vector.load %arg3[%c24, %c0_13] : memref<72x16xbf16, #tpu.memory_space<vmem>>, vector<8x16xbf16>
    %c32 = arith.constant 32 : index
    %c0_14 = arith.constant 0 : index
    %9 = vector.load %arg3[%c32, %c0_14] : memref<72x16xbf16, #tpu.memory_space<vmem>>, vector<8x16xbf16>
    %c40 = arith.constant 40 : index
    %c0_15 = arith.constant 0 : index
    %10 = vector.load %arg3[%c40, %c0_15] : memref<72x16xbf16, #tpu.memory_space<vmem>>, vector<8x16xbf16>
    %c48 = arith.constant 48 : index
    %c0_16 = arith.constant 0 : index
    %11 = vector.load %arg3[%c48, %c0_16] : memref<72x16xbf16, #tpu.memory_space<vmem>>, vector<8x16xbf16>
    %c56 = arith.constant 56 : index
    %c0_17 = arith.constant 0 : index
    %12 = vector.load %arg3[%c56, %c0_17] : memref<72x16xbf16, #tpu.memory_space<vmem>>, vector<8x16xbf16>
    %c64 = arith.constant 64 : index
    %c0_18 = arith.constant 0 : index
    %13 = vector.load %arg3[%c64, %c0_18] : memref<72x16xbf16, #tpu.memory_space<vmem>>, vector<8x16xbf16>
    %c0_19 = arith.constant 0 : index
    %c0_20 = arith.constant 0 : index
    %14 = vector.load %arg5[%c0_19, %c0_20] : memref<144x16xbf16, #tpu.memory_space<vmem>>, vector<16x16xbf16>
    %c16_21 = arith.constant 16 : index
    %c0_22 = arith.constant 0 : index
    %15 = vector.load %arg5[%c16_21, %c0_22] : memref<144x16xbf16, #tpu.memory_space<vmem>>, vector<16x16xbf16>
    %c32_23 = arith.constant 32 : index
    %c0_24 = arith.constant 0 : index
    %16 = vector.load %arg5[%c32_23, %c0_24] : memref<144x16xbf16, #tpu.memory_space<vmem>>, vector<16x16xbf16>
    %c48_25 = arith.constant 48 : index
    %c0_26 = arith.constant 0 : index
    %17 = vector.load %arg5[%c48_25, %c0_26] : memref<144x16xbf16, #tpu.memory_space<vmem>>, vector<16x16xbf16>
    %c64_27 = arith.constant 64 : index
    %c0_28 = arith.constant 0 : index
    %18 = vector.load %arg5[%c64_27, %c0_28] : memref<144x16xbf16, #tpu.memory_space<vmem>>, vector<16x16xbf16>
    %c80 = arith.constant 80 : index
    %c0_29 = arith.constant 0 : index
    %19 = vector.load %arg5[%c80, %c0_29] : memref<144x16xbf16, #tpu.memory_space<vmem>>, vector<16x16xbf16>
    %c96 = arith.constant 96 : index
    %c0_30 = arith.constant 0 : index
    %20 = vector.load %arg5[%c96, %c0_30] : memref<144x16xbf16, #tpu.memory_space<vmem>>, vector<16x16xbf16>
    %c112 = arith.constant 112 : index
    %c0_31 = arith.constant 0 : index
    %21 = vector.load %arg5[%c112, %c0_31] : memref<144x16xbf16, #tpu.memory_space<vmem>>, vector<16x16xbf16>
    %c128 = arith.constant 128 : index
    %c0_32 = arith.constant 0 : index
    %22 = vector.load %arg5[%c128, %c0_32] : memref<144x16xbf16, #tpu.memory_space<vmem>>, vector<16x16xbf16>
    %cst = arith.constant 0.000000e+00 : f32
    %23 = vector.broadcast %cst : f32 to vector<48x16xf32>
    %c0_33 = arith.constant 0 : index
    %c0_34 = arith.constant 0 : index
    %24 = vector.load %arg10[%c0_33, %c0_34] : memref<388x16xf32, #tpu.memory_space<vmem>>, vector<48x16xf32>
    tpu.vector_store %arg10[%c0_33, %c0_34], %23 {strides = array<i32>} : memref<388x16xf32, #tpu.memory_space<vmem>>, vector<48x16xf32>,
    %cst_35 = arith.constant 0.000000e+00 : f32
    %25 = vector.broadcast %cst_35 : f32 to vector<36x16xf32>
    %c352 = arith.constant 352 : index
    %c0_36 = arith.constant 0 : index
    %26 = vector.load %arg10[%c352, %c0_36] : memref<388x16xf32, #tpu.memory_space<vmem>>, vector<36x16xf32>
    tpu.vector_store %arg10[%c352, %c0_36], %25 {strides = array<i32>} : memref<388x16xf32, #tpu.memory_space<vmem>>, vector<36x16xf32>,
    %cst_37 = arith.constant 0.000000e+00 : f32
    %27 = vector.broadcast %cst_37 : f32 to vector<304x16xf32>
    %c0_38 = arith.constant 0 : index
    %c29 = arith.constant 29 : index
    %c0_39 = arith.constant 0 : index
    %28 = vector.load %arg1[%c0_38, %c29, %c0_39] : memref<1x388x8xf32, #tpu.memory_space<vmem>>, vector<1x304x8xf32>
    %29 = vector.shape_cast %28 : vector<1x304x8xf32> to vector<304x8xf32>
    %30 = arith.truncf %29 : vector<304x8xf32> to vector<304x8xbf16>
    %cst_40 = arith.constant dense<0.000000e+00> : vector<304x16xf32>
    %31 = tpu.matmul %30, %5, %cst_40 {dimension_numbers = #tpu.dot_dimension_numbers<[1], [0], [0], [1], [0, 0, 1, 1], [], []>} : vector<304x8xbf16>, vector<8x16xbf16>, vector<304x16xf32> -> vector<304x16xf32>
    %32 = arith.addf %27, %31 : vector<304x16xf32>
    %c0_41 = arith.constant 0 : index
    %c30 = arith.constant 30 : index
    %c0_42 = arith.constant 0 : index
    %33 = vector.load %arg1[%c0_41, %c30, %c0_42] : memref<1x388x8xf32, #tpu.memory_space<vmem>>, vector<1x304x8xf32>
    %34 = vector.shape_cast %33 : vector<1x304x8xf32> to vector<304x8xf32>
    %35 = arith.truncf %34 : vector<304x8xf32> to vector<304x8xbf16>
    %cst_43 = arith.constant dense<0.000000e+00> : vector<304x16xf32>
    %36 = tpu.matmul %35, %6, %cst_43 {dimension_numbers = #tpu.dot_dimension_numbers<[1], [0], [0], [1], [0, 0, 1, 1], [], []>} : vector<304x8xbf16>, vector<8x16xbf16>, vector<304x16xf32> -> vector<304x16xf32>
    %37 = arith.addf %32, %36 : vector<304x16xf32>
    %c0_44 = arith.constant 0 : index
    %c31 = arith.constant 31 : index
    %c0_45 = arith.constant 0 : index
    %38 = vector.load %arg1[%c0_44, %c31, %c0_45] : memref<1x388x8xf32, #tpu.memory_space<vmem>>, vector<1x304x8xf32>
    %39 = vector.shape_cast %38 : vector<1x304x8xf32> to vector<304x8xf32>
    %40 = arith.truncf %39 : vector<304x8xf32> to vector<304x8xbf16>
    %cst_46 = arith.constant dense<0.000000e+00> : vector<304x16xf32>
    %41 = tpu.matmul %40, %7, %cst_46 {dimension_numbers = #tpu.dot_dimension_numbers<[1], [0], [0], [1], [0, 0, 1, 1], [], []>} : vector<304x8xbf16>, vector<8x16xbf16>, vector<304x16xf32> -> vector<304x16xf32>
    %42 = arith.addf %37, %41 : vector<304x16xf32>
    %c0_47 = arith.constant 0 : index
    %c47 = arith.constant 47 : index
    %c0_48 = arith.constant 0 : index
    %43 = vector.load %arg1[%c0_47, %c47, %c0_48] : memref<1x388x8xf32, #tpu.memory_space<vmem>>, vector<1x304x8xf32>
    %44 = vector.shape_cast %43 : vector<1x304x8xf32> to vector<304x8xf32>
    %45 = arith.truncf %44 : vector<304x8xf32> to vector<304x8xbf16>
    %cst_49 = arith.constant dense<0.000000e+00> : vector<304x16xf32>
    %46 = tpu.matmul %45, %8, %cst_49 {dimension_numbers = #tpu.dot_dimension_numbers<[1], [0], [0], [1], [0, 0, 1, 1], [], []>} : vector<304x8xbf16>, vector<8x16xbf16>, vector<304x16xf32> -> vector<304x16xf32>
    %47 = arith.addf %42, %46 : vector<304x16xf32>
    %c0_50 = arith.constant 0 : index
    %c48_51 = arith.constant 48 : index
    %c0_52 = arith.constant 0 : index
    %48 = vector.load %arg1[%c0_50, %c48_51, %c0_52] : memref<1x388x8xf32, #tpu.memory_space<vmem>>, vector<1x304x8xf32>
    %49 = vector.shape_cast %48 : vector<1x304x8xf32> to vector<304x8xf32>
    %50 = arith.truncf %49 : vector<304x8xf32> to vector<304x8xbf16>
    %cst_53 = arith.constant dense<0.000000e+00> : vector<304x16xf32>
    %51 = tpu.matmul %50, %9, %cst_53 {dimension_numbers = #tpu.dot_dimension_numbers<[1], [0], [0], [1], [0, 0, 1, 1], [], []>} : vector<304x8xbf16>, vector<8x16xbf16>, vector<304x16xf32> -> vector<304x16xf32>
    %52 = arith.addf %47, %51 : vector<304x16xf32>
    %c0_54 = arith.constant 0 : index
    %c49 = arith.constant 49 : index
    %c0_55 = arith.constant 0 : index
    %53 = vector.load %arg1[%c0_54, %c49, %c0_55] : memref<1x388x8xf32, #tpu.memory_space<vmem>>, vector<1x304x8xf32>
    %54 = vector.shape_cast %53 : vector<1x304x8xf32> to vector<304x8xf32>
    %55 = arith.truncf %54 : vector<304x8xf32> to vector<304x8xbf16>
    %cst_56 = arith.constant dense<0.000000e+00> : vector<304x16xf32>
    %56 = tpu.matmul %55, %10, %cst_56 {dimension_numbers = #tpu.dot_dimension_numbers<[1], [0], [0], [1], [0, 0, 1, 1], [], []>} : vector<304x8xbf16>, vector<8x16xbf16>, vector<304x16xf32> -> vector<304x16xf32>
    %57 = arith.addf %52, %56 : vector<304x16xf32>
    %c0_57 = arith.constant 0 : index
    %c65 = arith.constant 65 : index
    %c0_58 = arith.constant 0 : index
    %58 = vector.load %arg1[%c0_57, %c65, %c0_58] : memref<1x388x8xf32, #tpu.memory_space<vmem>>, vector<1x304x8xf32>
    %59 = vector.shape_cast %58 : vector<1x304x8xf32> to vector<304x8xf32>
    %60 = arith.truncf %59 : vector<304x8xf32> to vector<304x8xbf16>
    %cst_59 = arith.constant dense<0.000000e+00> : vector<304x16xf32>
    %61 = tpu.matmul %60, %11, %cst_59 {dimension_numbers = #tpu.dot_dimension_numbers<[1], [0], [0], [1], [0, 0, 1, 1], [], []>} : vector<304x8xbf16>, vector<8x16xbf16>, vector<304x16xf32> -> vector<304x16xf32>
    %62 = arith.addf %57, %61 : vector<304x16xf32>
    %c0_60 = arith.constant 0 : index
    %c66 = arith.constant 66 : index
    %c0_61 = arith.constant 0 : index
    %63 = vector.load %arg1[%c0_60, %c66, %c0_61] : memref<1x388x8xf32, #tpu.memory_space<vmem>>, vector<1x304x8xf32>
    %64 = vector.shape_cast %63 : vector<1x304x8xf32> to vector<304x8xf32>
    %65 = arith.truncf %64 : vector<304x8xf32> to vector<304x8xbf16>
    %cst_62 = arith.constant dense<0.000000e+00> : vector<304x16xf32>
    %66 = tpu.matmul %65, %12, %cst_62 {dimension_numbers = #tpu.dot_dimension_numbers<[1], [0], [0], [1], [0, 0, 1, 1], [], []>} : vector<304x8xbf16>, vector<8x16xbf16>, vector<304x16xf32> -> vector<304x16xf32>
    %67 = arith.addf %62, %66 : vector<304x16xf32>
    %c0_63 = arith.constant 0 : index
    %c67 = arith.constant 67 : index
    %c0_64 = arith.constant 0 : index
    %68 = vector.load %arg1[%c0_63, %c67, %c0_64] : memref<1x388x8xf32, #tpu.memory_space<vmem>>, vector<1x304x8xf32>
    %69 = vector.shape_cast %68 : vector<1x304x8xf32> to vector<304x8xf32>
    %70 = arith.truncf %69 : vector<304x8xf32> to vector<304x8xbf16>
    %cst_65 = arith.constant dense<0.000000e+00> : vector<304x16xf32>
    %71 = tpu.matmul %70, %13, %cst_65 {dimension_numbers = #tpu.dot_dimension_numbers<[1], [0], [0], [1], [0, 0, 1, 1], [], []>} : vector<304x8xbf16>, vector<8x16xbf16>, vector<304x16xf32> -> vector<304x16xf32>
    %72 = arith.addf %67, %71 : vector<304x16xf32>
    %73 = vector.broadcast %1 : vector<1x16xf32> to vector<304x16xf32>
    %74 = arith.addf %72, %73 : vector<304x16xf32>
    %cst_66 = arith.constant 0.000000e+00 : f32
    %75 = vector.broadcast %cst_66 : f32 to vector<304x16xf32>
    %76 = arith.maximumf %74, %75 : vector<304x16xf32>
    %77 = vector.broadcast %0 : vector<304x1xf32> to vector<304x16xf32>
    %78 = arith.mulf %76, %77 : vector<304x16xf32>
    %c48_67 = arith.constant 48 : index
    %c0_68 = arith.constant 0 : index
    %79 = vector.load %arg10[%c48_67, %c0_68] : memref<388x16xf32, #tpu.memory_space<vmem>>, vector<304x16xf32>
    tpu.vector_store %arg10[%c48_67, %c0_68], %78 {strides = array<i32>} : memref<388x16xf32, #tpu.memory_space<vmem>>, vector<304x16xf32>,
    %cst_69 = arith.constant 0.000000e+00 : f32
    %80 = vector.broadcast %cst_69 : f32 to vector<304x16xf32>
    %c29_70 = arith.constant 29 : index
    %c0_71 = arith.constant 0 : index
    %81 = vector.load %arg10[%c29_70, %c0_71] : memref<388x16xf32, #tpu.memory_space<vmem>>, vector<304x16xf32>
    %82 = arith.truncf %81 : vector<304x16xf32> to vector<304x16xbf16>
    %cst_72 = arith.constant dense<0.000000e+00> : vector<304x16xf32>
    %83 = tpu.matmul %82, %14, %cst_72 {dimension_numbers = #tpu.dot_dimension_numbers<[1], [0], [0], [1], [0, 0, 1, 1], [], []>} : vector<304x16xbf16>, vector<16x16xbf16>, vector<304x16xf32> -> vector<304x16xf32>
    %84 = arith.addf %80, %83 : vector<304x16xf32>
    %c30_73 = arith.constant 30 : index
    %c0_74 = arith.constant 0 : index
    %85 = vector.load %arg10[%c30_73, %c0_74] : memref<388x16xf32, #tpu.memory_space<vmem>>, vector<304x16xf32>
    %86 = arith.truncf %85 : vector<304x16xf32> to vector<304x16xbf16>
    %cst_75 = arith.constant dense<0.000000e+00> : vector<304x16xf32>
    %87 = tpu.matmul %86, %15, %cst_75 {dimension_numbers = #tpu.dot_dimension_numbers<[1], [0], [0], [1], [0, 0, 1, 1], [], []>} : vector<304x16xbf16>, vector<16x16xbf16>, vector<304x16xf32> -> vector<304x16xf32>
    %88 = arith.addf %84, %87 : vector<304x16xf32>
    %c31_76 = arith.constant 31 : index
    %c0_77 = arith.constant 0 : index
    %89 = vector.load %arg10[%c31_76, %c0_77] : memref<388x16xf32, #tpu.memory_space<vmem>>, vector<304x16xf32>
    %90 = arith.truncf %89 : vector<304x16xf32> to vector<304x16xbf16>
    %cst_78 = arith.constant dense<0.000000e+00> : vector<304x16xf32>
    %91 = tpu.matmul %90, %16, %cst_78 {dimension_numbers = #tpu.dot_dimension_numbers<[1], [0], [0], [1], [0, 0, 1, 1], [], []>} : vector<304x16xbf16>, vector<16x16xbf16>, vector<304x16xf32> -> vector<304x16xf32>
    %92 = arith.addf %88, %91 : vector<304x16xf32>
    %c47_79 = arith.constant 47 : index
    %c0_80 = arith.constant 0 : index
    %93 = vector.load %arg10[%c47_79, %c0_80] : memref<388x16xf32, #tpu.memory_space<vmem>>, vector<304x16xf32>
    %94 = arith.truncf %93 : vector<304x16xf32> to vector<304x16xbf16>
    %cst_81 = arith.constant dense<0.000000e+00> : vector<304x16xf32>
    %95 = tpu.matmul %94, %17, %cst_81 {dimension_numbers = #tpu.dot_dimension_numbers<[1], [0], [0], [1], [0, 0, 1, 1], [], []>} : vector<304x16xbf16>, vector<16x16xbf16>, vector<304x16xf32> -> vector<304x16xf32>
    %96 = arith.addf %92, %95 : vector<304x16xf32>
    %c48_82 = arith.constant 48 : index
    %c0_83 = arith.constant 0 : index
    %97 = vector.load %arg10[%c48_82, %c0_83] : memref<388x16xf32, #tpu.memory_space<vmem>>, vector<304x16xf32>
    %98 = arith.truncf %97 : vector<304x16xf32> to vector<304x16xbf16>
    %cst_84 = arith.constant dense<0.000000e+00> : vector<304x16xf32>
    %99 = tpu.matmul %98, %18, %cst_84 {dimension_numbers = #tpu.dot_dimension_numbers<[1], [0], [0], [1], [0, 0, 1, 1], [], []>} : vector<304x16xbf16>, vector<16x16xbf16>, vector<304x16xf32> -> vector<304x16xf32>
    %100 = arith.addf %96, %99 : vector<304x16xf32>
    %c49_85 = arith.constant 49 : index
    %c0_86 = arith.constant 0 : index
    %101 = vector.load %arg10[%c49_85, %c0_86] : memref<388x16xf32, #tpu.memory_space<vmem>>, vector<304x16xf32>
    %102 = arith.truncf %101 : vector<304x16xf32> to vector<304x16xbf16>
    %cst_87 = arith.constant dense<0.000000e+00> : vector<304x16xf32>
    %103 = tpu.matmul %102, %19, %cst_87 {dimension_numbers = #tpu.dot_dimension_numbers<[1], [0], [0], [1], [0, 0, 1, 1], [], []>} : vector<304x16xbf16>, vector<16x16xbf16>, vector<304x16xf32> -> vector<304x16xf32>
    %104 = arith.addf %100, %103 : vector<304x16xf32>
    %c65_88 = arith.constant 65 : index
    %c0_89 = arith.constant 0 : index
    %105 = vector.load %arg10[%c65_88, %c0_89] : memref<388x16xf32, #tpu.memory_space<vmem>>, vector<304x16xf32>
    %106 = arith.truncf %105 : vector<304x16xf32> to vector<304x16xbf16>
    %cst_90 = arith.constant dense<0.000000e+00> : vector<304x16xf32>
    %107 = tpu.matmul %106, %20, %cst_90 {dimension_numbers = #tpu.dot_dimension_numbers<[1], [0], [0], [1], [0, 0, 1, 1], [], []>} : vector<304x16xbf16>, vector<16x16xbf16>, vector<304x16xf32> -> vector<304x16xf32>
    %108 = arith.addf %104, %107 : vector<304x16xf32>
    %c66_91 = arith.constant 66 : index
    %c0_92 = arith.constant 0 : index
    %109 = vector.load %arg10[%c66_91, %c0_92] : memref<388x16xf32, #tpu.memory_space<vmem>>, vector<304x16xf32>
    %110 = arith.truncf %109 : vector<304x16xf32> to vector<304x16xbf16>
    %cst_93 = arith.constant dense<0.000000e+00> : vector<304x16xf32>
    %111 = tpu.matmul %110, %21, %cst_93 {dimension_numbers = #tpu.dot_dimension_numbers<[1], [0], [0], [1], [0, 0, 1, 1], [], []>} : vector<304x16xbf16>, vector<16x16xbf16>, vector<304x16xf32> -> vector<304x16xf32>
    %112 = arith.addf %108, %111 : vector<304x16xf32>
    %c67_94 = arith.constant 67 : index
    %c0_95 = arith.constant 0 : index
    %113 = vector.load %arg10[%c67_94, %c0_95] : memref<388x16xf32, #tpu.memory_space<vmem>>, vector<304x16xf32>
    %114 = arith.truncf %113 : vector<304x16xf32> to vector<304x16xbf16>
    %cst_96 = arith.constant dense<0.000000e+00> : vector<304x16xf32>
    %115 = tpu.matmul %114, %22, %cst_96 {dimension_numbers = #tpu.dot_dimension_numbers<[1], [0], [0], [1], [0, 0, 1, 1], [], []>} : vector<304x16xbf16>, vector<16x16xbf16>, vector<304x16xf32> -> vector<304x16xf32>
    %116 = arith.addf %112, %115 : vector<304x16xf32>
    %117 = vector.broadcast %2 : vector<1x16xf32> to vector<304x16xf32>
    %118 = arith.addf %116, %117 : vector<304x16xf32>
    %c0_97 = arith.constant 0 : index
    %c48_98 = arith.constant 48 : index
    %c0_99 = arith.constant 0 : index
    %119 = vector.load %arg1[%c0_97, %c48_98, %c0_99] : memref<1x388x8xf32, #tpu.memory_space<vmem>>, vector<1x304x8xf32>
    %120 = vector.shape_cast %119 : vector<1x304x8xf32> to vector<304x8xf32>
    %121 = arith.truncf %120 : vector<304x8xf32> to vector<304x8xbf16>
    %cst_100 = arith.constant dense<0.000000e+00> : vector<304x16xf32>
    %122 = tpu.matmul %121, %4, %cst_100 {dimension_numbers = #tpu.dot_dimension_numbers<[1], [0], [0], [1], [0, 0, 1, 1], [], []>} : vector<304x8xbf16>, vector<8x16xbf16>, vector<304x16xf32> -> vector<304x16xf32>
    %123 = vector.broadcast %3 : vector<1x16xf32> to vector<304x16xf32>
    %124 = arith.addf %122, %123 : vector<304x16xf32>
    %125 = arith.addf %118, %124 : vector<304x16xf32>
    %cst_101 = arith.constant 0.000000e+00 : f32
    %126 = vector.broadcast %cst_101 : f32 to vector<304x16xf32>
    %127 = arith.maximumf %125, %126 : vector<304x16xf32>
    %c0_102 = arith.constant 0 : index
    %c16_103 = arith.constant 16 : index
    %c0_104 = arith.constant 0 : index
    %128 = vector.load %arg9[%c0_102, %c16_103, %c0_104] : memref<1x324x16xf32, #tpu.memory_space<vmem>>, vector<1x304x16xf32>
    %129 = vector.shape_cast %128 : vector<1x304x16xf32> to vector<304x16xf32>
    %130 = vector.shape_cast %127 : vector<304x16xf32> to vector<1x304x16xf32>
    tpu.vector_store %arg9[%c0_102, %c16_103, %c0_104], %130 {strides = array<i32>} : memref<1x324x16xf32, #tpu.memory_space<vmem>>, vector<1x304x16xf32>,
    return
  }
  func.func @transform_0(%arg0: i32) -> (i32, i32, i32) {
    %c0_i32 = arith.constant 0 : i32
    %c0_i32_0 = arith.constant 0 : i32
    %c0_i32_1 = arith.constant 0 : i32
    return %arg0, %c0_i32, %c0_i32_0 : i32, i32, i32
  }
  func.func @transform_1(%arg0: i32) -> (i32, i32) {
    %c0_i32 = arith.constant 0 : i32
    %c0_i32_0 = arith.constant 0 : i32
    %c0_i32_1 = arith.constant 0 : i32
    return %c0_i32, %c0_i32_0 : i32, i32
  }
  func.func @transform_2(%arg0: i32) -> (i32, i32) {
    %c0_i32 = arith.constant 0 : i32
    %c0_i32_0 = arith.constant 0 : i32
    %c0_i32_1 = arith.constant 0 : i32
    return %c0_i32, %c0_i32_0 : i32, i32
  }
  func.func @transform_3(%arg0: i32) -> (i32, i32) {
    %c0_i32 = arith.constant 0 : i32
    %c0_i32_0 = arith.constant 0 : i32
    %c0_i32_1 = arith.constant 0 : i32
    return %c0_i32, %c0_i32_0 : i32, i32
  }
  func.func @transform_4(%arg0: i32) -> (i32, i32) {
    %c0_i32 = arith.constant 0 : i32
    %c0_i32_0 = arith.constant 0 : i32
    %c0_i32_1 = arith.constant 0 : i32
    return %c0_i32, %c0_i32_0 : i32, i32
  }
  func.func @transform_5(%arg0: i32) -> (i32, i32) {
    %c0_i32 = arith.constant 0 : i32
    %c0_i32_0 = arith.constant 0 : i32
    %c0_i32_1 = arith.constant 0 : i32
    return %c0_i32, %c0_i32_0 : i32, i32
  }
  func.func @transform_6(%arg0: i32) -> (i32, i32) {
    %c0_i32 = arith.constant 0 : i32
    %c0_i32_0 = arith.constant 0 : i32
    %c0_i32_1 = arith.constant 0 : i32
    return %c0_i32, %c0_i32_0 : i32, i32
  }
  func.func @transform_7(%arg0: i32) -> (i32, i32) {
    %c0_i32 = arith.constant 0 : i32
    %c0_i32_0 = arith.constant 0 : i32
    %c0_i32_1 = arith.constant 0 : i32
    return %c0_i32, %c0_i32_0 : i32, i32
  }
  func.func @transform_8(%arg0: i32) -> (i32, i32, i32) {
    %c0_i32 = arith.constant 0 : i32
    %c0_i32_0 = arith.constant 0 : i32
    %c0_i32_1 = arith.constant 0 : i32
    return %arg0, %c0_i32, %c0_i32_0 : i32, i32, i32
  }
}

</mosaic_0001>

<llo_original>
// kernel: cnn_block_forward.1
$region0: #{cnn_block_forward.1}
  #allocation0 [shape = 'u32[]', space=smem, size = 0x4, offset = 0x4, fixed_abs, tag = 'smem constant byte address 0x4 - core index']
  #allocation1 [shape = 'u32[144,128]{1,0:T(1,128)}', space=vmem, size = 0x12000, scoped, tag = 'internal scratch']
  #allocation2 [shape = 'f32[388,16]{1,0:T(8,128)}', space=vmem, size = 0x31000, scoped, tag = 'scratch operand']
  %s0 = inlined_call_operand.vmem [shape: f32[2,388,8], index: 0, kind: input, shape index: {}]
  %s1 = inlined_call_operand.vmem [shape: f32[324,1], index: 1, kind: input, shape index: {}]
  %s2 = inlined_call_operand.vmem [shape: bf16[72,16], index: 2, kind: input, shape index: {}]
  %s3 = inlined_call_operand.vmem [shape: f32[1,16], index: 3, kind: input, shape index: {}]
  %s4 = inlined_call_operand.vmem [shape: bf16[144,16], index: 4, kind: input, shape index: {}]
  %s5 = inlined_call_operand.vmem [shape: f32[1,16], index: 5, kind: input, shape index: {}]
  %s6 = inlined_call_operand.vmem [shape: bf16[8,16], index: 6, kind: input, shape index: {}]
  %s7 = inlined_call_operand.vmem [shape: f32[1,16], index: 7, kind: input, shape index: {}]
  %s8 = inlined_call_operand.vmem [shape: f32[2,324,16], index: 8, kind: output, shape index: {}]
  %s9 = sld [smem:[#allocation0]]
  $region65: #{cnn_block_forward.1} parent=0
    _
  %s11 = ssub.s32 1, %s9
  %s12 = scalar_select 0, %s11, %s9
  loop: start=0, step=1, limit=4
  $region2: #{cnn_block_forward.1} parent=0 // loop_pre_header
    _
  $region3: #{cnn_block_forward.1} parent=0 // loop_header
    %s14 = sphi 0, %s18
    %p15 = scmp.ge.s32.totalorder %s14, 4
    %s24 = sphi 0, %s26
    %s27 = sphi 0, %s24
    %s28 = sphi 0, %s27
    %s44 = sphi 0, %s28
    %s48 = sphi 0, %s48
    %s50 = sphi 0, %s48
    %s51 = sphi 0, %s50
    %s65 = sphi 0, %s51
    %s69 = sphi 0, %s69
    %s71 = sphi 0, %s69
    %s72 = sphi 0, %s71
    %s86 = sphi 0, %s72
    %s90 = sphi 0, %s90
    %s92 = sphi 0, %s90
    %s93 = sphi 0, %s92
    %s107 = sphi 0, %s93
    %s111 = sphi 0, %s111
    %s113 = sphi 0, %s111
    %s114 = sphi 0, %s113
    %s128 = sphi 0, %s114
    %s132 = sphi 0, %s132
    %s134 = sphi 0, %s132
    %s135 = sphi 0, %s134
    %s149 = sphi 0, %s135
    %s153 = sphi 0, %s153
    %s155 = sphi 0, %s153
    %s156 = sphi 0, %s155
    %s170 = sphi 0, %s156
    %s174 = sphi 0, %s174
    %s176 = sphi 0, %s174
    %s177 = sphi 0, %s176
    %s191 = sphi 0, %s177
    %s197 = sphi 0, %s199
    %s200 = sphi 0, %s197
    %s201 = sphi 0, %s200
    %s217 = sphi 0, %s201
  $region4: #{cnn_block_forward.1} parent=0 // loop_header_branch
    %17 = sbr.rel (%p15) target = $region8
  $region5: #{cnn_block_forward.1} parent=0 // loop_body
    %s19 = ssub.s32 %s14, 1
    %s20 = ssub.s32 %s14, 2
    %s21 = sadd.s32 %s14, 1
    %s22 = ssub.s32 %s14, %s21
    %p23 = scmp.eq.s32.totalorder %s22, 0
    %s25 = sadd.s32 %s24, 1
    %s26 = scalar_select %p23, %s24, %s25
    %p29 = pneg %p23
    %p30 = scmp.eq.s32.totalorder %s14, 1
    %p31 = por %p29, %p30
    %p32 = scmp.ne.s32.totalorder %s24, %s27
    %p33 = scmp.eq.s32.totalorder %s14, 0
    %p34 = por %p32, %p33
    %p35 = scmp.ne.s32.totalorder %s24, %s27
    %p36 = scmp.eq.s32.totalorder %s19, 1
    %p37 = por %p35, %p36
    %p38 = scmp.ne.s32.totalorder %s27, %s28
    %p39 = scmp.eq.s32.totalorder %s19, 0
    %p40 = por %p38, %p39
    %p41 = scmp.ne.s32.totalorder %s27, %s28
    %p42 = scmp.eq.s32.totalorder %s20, 1
    %p43 = por %p41, %p42
    %p45 = scmp.ne.s32.totalorder %s28, %s44
    %p46 = scmp.eq.s32.totalorder %s20, 0
    %p47 = por %p45, %p46
    %s49 = sadd.s32 %s48, 1
    %p52 = scmp.eq.s32.totalorder %s14, 1
    %p53 = scmp.ne.s32.totalorder %s48, %s50
    %p54 = scmp.eq.s32.totalorder %s14, 0
    %p55 = por %p53, %p54
    %p56 = scmp.ne.s32.totalorder %s48, %s50
    %p57 = scmp.eq.s32.totalorder %s19, 1
    %p58 = por %p56, %p57
    %p59 = scmp.ne.s32.totalorder %s50, %s51
    %p60 = scmp.eq.s32.totalorder %s19, 0
    %p61 = por %p59, %p60
    %p62 = scmp.ne.s32.totalorder %s50, %s51
    %p63 = scmp.eq.s32.totalorder %s20, 1
    %p64 = por %p62, %p63
    %p66 = scmp.ne.s32.totalorder %s51, %s65
    %p67 = scmp.eq.s32.totalorder %s20, 0
    %p68 = por %p66, %p67
    %s70 = sadd.s32 %s69, 1
    %p73 = scmp.eq.s32.totalorder %s14, 1
    %p74 = scmp.ne.s32.totalorder %s69, %s71
    %p75 = scmp.eq.s32.totalorder %s14, 0
    %p76 = por %p74, %p75
    %p77 = scmp.ne.s32.totalorder %s69, %s71
    %p78 = scmp.eq.s32.totalorder %s19, 1
    %p79 = por %p77, %p78
    %p80 = scmp.ne.s32.totalorder %s71, %s72
    %p81 = scmp.eq.s32.totalorder %s19, 0
    %p82 = por %p80, %p81
    %p83 = scmp.ne.s32.totalorder %s71, %s72
    %p84 = scmp.eq.s32.totalorder %s20, 1
    %p85 = por %p83, %p84
    %p87 = scmp.ne.s32.totalorder %s72, %s86
    %p88 = scmp.eq.s32.totalorder %s20, 0
    %p89 = por %p87, %p88
    %s91 = sadd.s32 %s90, 1
    %p94 = scmp.eq.s32.totalorder %s14, 1
    %p95 = scmp.ne.s32.totalorder %s90, %s92
    %p96 = scmp.eq.s32.totalorder %s14, 0
    %p97 = por %p95, %p96
    %p98 = scmp.ne.s32.totalorder %s90, %s92
    %p99 = scmp.eq.s32.totalorder %s19, 1
    %p100 = por %p98, %p99
    %p101 = scmp.ne.s32.totalorder %s92, %s93
    %p102 = scmp.eq.s32.totalorder %s19, 0
    %p103 = por %p101, %p102
    %p104 = scmp.ne.s32.totalorder %s92, %s93
    %p105 = scmp.eq.s32.totalorder %s20, 1
    %p106 = por %p104, %p105
    %p108 = scmp.ne.s32.totalorder %s93, %s107
    %p109 = scmp.eq.s32.totalorder %s20, 0
    %p110 = por %p108, %p109
    %s112 = sadd.s32 %s111, 1
    %p115 = scmp.eq.s32.totalorder %s14, 1
    %p116 = scmp.ne.s32.totalorder %s111, %s113
    %p117 = scmp.eq.s32.totalorder %s14, 0
    %p118 = por %p116, %p117
    %p119 = scmp.ne.s32.totalorder %s111, %s113
    %p120 = scmp.eq.s32.totalorder %s19, 1
    %p121 = por %p119, %p120
    %p122 = scmp.ne.s32.totalorder %s113, %s114
    %p123 = scmp.eq.s32.totalorder %s19, 0
    %p124 = por %p122, %p123
    %p125 = scmp.ne.s32.totalorder %s113, %s114
    %p126 = scmp.eq.s32.totalorder %s20, 1
    %p127 = por %p125, %p126
    %p129 = scmp.ne.s32.totalorder %s114, %s128
    %p130 = scmp.eq.s32.totalorder %s20, 0
    %p131 = por %p129, %p130
    %s133 = sadd.s32 %s132, 1
    %p136 = scmp.eq.s32.totalorder %s14, 1
    %p137 = scmp.ne.s32.totalorder %s132, %s134
    %p138 = scmp.eq.s32.totalorder %s14, 0
    %p139 = por %p137, %p138
    %p140 = scmp.ne.s32.totalorder %s132, %s134
    %p141 = scmp.eq.s32.totalorder %s19, 1
    %p142 = por %p140, %p141
    %p143 = scmp.ne.s32.totalorder %s134, %s135
    %p144 = scmp.eq.s32.totalorder %s19, 0
    %p145 = por %p143, %p144
    %p146 = scmp.ne.s32.totalorder %s134, %s135
    %p147 = scmp.eq.s32.totalorder %s20, 1
    %p148 = por %p146, %p147
    %p150 = scmp.ne.s32.totalorder %s135, %s149
    %p151 = scmp.eq.s32.totalorder %s20, 0
    %p152 = por %p150, %p151
    %s154 = sadd.s32 %s153, 1
    %p157 = scmp.eq.s32.totalorder %s14, 1
    %p158 = scmp.ne.s32.totalorder %s153, %s155
    %p159 = scmp.eq.s32.totalorder %s14, 0
    %p160 = por %p158, %p159
    %p161 = scmp.ne.s32.totalorder %s153, %s155
    %p162 = scmp.eq.s32.totalorder %s19, 1
    %p163 = por %p161, %p162
    %p164 = scmp.ne.s32.totalorder %s155, %s156
    %p165 = scmp.eq.s32.totalorder %s19, 0
    %p166 = por %p164, %p165
    %p167 = scmp.ne.s32.totalorder %s155, %s156
    %p168 = scmp.eq.s32.totalorder %s20, 1
    %p169 = por %p167, %p168
    %p171 = scmp.ne.s32.totalorder %s156, %s170
    %p172 = scmp.eq.s32.totalorder %s20, 0
    %p173 = por %p171, %p172
    %s175 = sadd.s32 %s174, 1
    %p178 = scmp.eq.s32.totalorder %s14, 1
    %p179 = scmp.ne.s32.totalorder %s174, %s176
    %p180 = scmp.eq.s32.totalorder %s14, 0
    %p181 = por %p179, %p180
    %p182 = scmp.ne.s32.totalorder %s174, %s176
    %p183 = scmp.eq.s32.totalorder %s19, 1
    %p184 = por %p182, %p183
    %p185 = scmp.ne.s32.totalorder %s176, %s177
    %p186 = scmp.eq.s32.totalorder %s19, 0
    %p187 = por %p185, %p186
    %p188 = scmp.ne.s32.totalorder %s176, %s177
    %p189 = scmp.eq.s32.totalorder %s20, 1
    %p190 = por %p188, %p189
    %p192 = scmp.ne.s32.totalorder %s177, %s191
    %p193 = scmp.eq.s32.totalorder %s20, 0
    %p194 = por %p192, %p193
    %s195 = ssub.s32 %s14, %s21
    %p196 = scmp.eq.s32.totalorder %s195, 0
    %s198 = sadd.s32 %s197, 1
    %s199 = scalar_select %p196, %s197, %s198
    %p202 = pneg %p196
    %p203 = scmp.eq.s32.totalorder %s14, 1
    %p204 = por %p202, %p203
    %p205 = scmp.ne.s32.totalorder %s197, %s200
    %p206 = scmp.eq.s32.totalorder %s14, 0
    %p207 = por %p205, %p206
    %p208 = scmp.ne.s32.totalorder %s197, %s200
    %p209 = scmp.eq.s32.totalorder %s19, 1
    %p210 = por %p208, %p209
    %p211 = scmp.ne.s32.totalorder %s200, %s201
    %p212 = scmp.eq.s32.totalorder %s19, 0
    %p213 = por %p211, %p212
    %p214 = scmp.ne.s32.totalorder %s200, %s201
    %p215 = scmp.eq.s32.totalorder %s20, 1
    %p216 = por %p214, %p215
    %p218 = scmp.ne.s32.totalorder %s201, %s217
    %p219 = scmp.eq.s32.totalorder %s20, 0
    %p220 = por %p218, %p219
    %p221 = scmp.le.s32.totalorder 1, %s14
    %p222 = scmp.lt.s32.totalorder %s14, 3
    %p223 = pnand %p221, %p222
    %p224 = pneg %p223
    // Predicated region
    $region9: #{cnn_block_forward.1} parent=5 // pred_check
      _
    $region10: #{cnn_block_forward.1} parent=5 // pred_check_branch
      %226 = sbr.rel (%p223) target = $region12
    $region11: #{cnn_block_forward.1} parent=5 // pred_region
      %s227 = ssub.s32 %s14, 1
      // Predicated region
      $region13: #{cnn_block_forward.1} parent=11 // pred_check
        %p228 = pneg %p61
      $region14: #{cnn_block_forward.1} parent=11 // pred_check_branch
        %230 = sbr.rel (%p228) target = $region16
      $region15: #{cnn_block_forward.1} parent=11 // pred_region
        _
      $region16: #{cnn_block_forward.1} parent=11 // pred_fallthru
        _
      // Predicated region
      $region17: #{cnn_block_forward.1} parent=11 // pred_check
        %p231 = pneg %p82
      $region18: #{cnn_block_forward.1} parent=11 // pred_check_branch
        %233 = sbr.rel (%p231) target = $region20
      $region19: #{cnn_block_forward.1} parent=11 // pred_region
        _
      $region20: #{cnn_block_forward.1} parent=11 // pred_fallthru
        _
      // Predicated region
      $region21: #{cnn_block_forward.1} parent=11 // pred_check
        %p234 = pneg %p103
      $region22: #{cnn_block_forward.1} parent=11 // pred_check_branch
        %236 = sbr.rel (%p234) target = $region24
      $region23: #{cnn_block_forward.1} parent=11 // pred_region
        _
      $region24: #{cnn_block_forward.1} parent=11 // pred_fallthru
        _
      // Predicated region
      $region25: #{cnn_block_forward.1} parent=11 // pred_check
        %p237 = pneg %p124
      $region26: #{cnn_block_forward.1} parent=11 // pred_check_branch
        %239 = sbr.rel (%p237) target = $region28
      $region27: #{cnn_block_forward.1} parent=11 // pred_region
        _
      $region28: #{cnn_block_forward.1} parent=11 // pred_fallthru
        _
      // Predicated region
      $region29: #{cnn_block_forward.1} parent=11 // pred_check
        %p240 = pneg %p145
      $region30: #{cnn_block_forward.1} parent=11 // pred_check_branch
        %242 = sbr.rel (%p240) target = $region32
      $region31: #{cnn_block_forward.1} parent=11 // pred_region
        _
      $region32: #{cnn_block_forward.1} parent=11 // pred_fallthru
        _
      // Predicated region
      $region33: #{cnn_block_forward.1} parent=11 // pred_check
        %p243 = pneg %p166
      $region34: #{cnn_block_forward.1} parent=11 // pred_check_branch
        %245 = sbr.rel (%p243) target = $region36
      $region35: #{cnn_block_forward.1} parent=11 // pred_region
        _
      $region36: #{cnn_block_forward.1} parent=11 // pred_fallthru
        _
      // Predicated region
      $region37: #{cnn_block_forward.1} parent=11 // pred_check
        %p246 = pneg %p187
      $region38: #{cnn_block_forward.1} parent=11 // pred_check_branch
        %248 = sbr.rel (%p246) target = $region40
      $region39: #{cnn_block_forward.1} parent=11 // pred_region
        _
      $region40: #{cnn_block_forward.1} parent=11 // pred_fallthru
        _
    $region12: #{cnn_block_forward.1} parent=5 // pred_fallthru
      _
    %p249 = scmp.lt.s32.totalorder %s14, 2
    // Predicated region
    $region41: #{cnn_block_forward.1} parent=5 // pred_check
      %p250 = pneg %p249
    $region42: #{cnn_block_forward.1} parent=5 // pred_check_branch
      %252 = sbr.rel (%p250) target = $region44
    $region43: #{cnn_block_forward.1} parent=5 // pred_region
      // Predicated region
      $region45: #{cnn_block_forward.1} parent=43 // pred_check
        %p253 = pneg %p34
      $region46: #{cnn_block_forward.1} parent=43 // pred_check_branch
        %255 = sbr.rel (%p253) target = $region48
      $region47: #{cnn_block_forward.1} parent=43 // pred_region
        %p256 = scmp.lt.s32.totalorder %s14, 1
        %s257 = scalar_select %p256, %s14, 1
        %s258 = smul.addr %s257, 49
        %s259 = smul.addr %s258, 8
        %s260 = scalar_lea.vmem %s0, %s259
      $region48: #{cnn_block_forward.1} parent=43 // pred_fallthru
        _
    $region44: #{cnn_block_forward.1} parent=5 // pred_fallthru
      _
    %p261 = scmp.le.s32.totalorder 1, %s14
    %p262 = scmp.lt.s32.totalorder %s14, 3
    %p263 = pnand %p261, %p262
    %p264 = pneg %p263
    // Predicated region
    $region49: #{cnn_block_forward.1} parent=5 // pred_check
      _
    $region50: #{cnn_block_forward.1} parent=5 // pred_check_branch
      %266 = sbr.rel (%p263) target = $region52
    $region51: #{cnn_block_forward.1} parent=5 // pred_region
      %s267 = ssub.s32 %s14, 1
      %p268 = scmp.lt.s32.totalorder %s19, 1
      %s269 = scalar_select %p268, %s19, 1
      %s270 = smul.addr %s269, 49
      %s271 = smul.addr %s270, 8
      %s272 = scalar_lea.vmem %s0, %s271
      %p273 = pneg %p40
      %p274 = pneg %p37
      %p275 = pneg %p61
      %p276 = pneg %p58
      %p277 = pneg %p82
      %p278 = pneg %p79
      %p279 = pneg %p103
      %p280 = pneg %p100
      %p281 = pneg %p124
      %p282 = pneg %p121
      %p283 = pneg %p145
      %p284 = pneg %p142
      %p285 = pneg %p166
      %p286 = pneg %p163
      %p287 = pneg %p187
      %p288 = pneg %p184
      %p289 = pneg %p213
      %p290 = pneg %p210
      %p291 = scmp.lt.s32.totalorder %s19, 1
      %s292 = scalar_select %p291, %s19, 1
      %s293 = smul.addr %s292, 41
      %s294 = smul.addr %s293, 8
      %s295 = scalar_lea.vmem %s8, %s294
      %p296 = scmp.lt.s32.totalorder %s19, 1
      %s297 = scalar_select %p296, %s19, 1
      %s298 = smul.addr %s297, 49
      %s299 = smul.addr %s298, 8
      %s300 = scalar_lea.vmem %s0, %s299
      %p301 = scmp.lt.s32.totalorder %s19, 1
      %s302 = scalar_select %p301, %s19, 1
      %s303 = smul.addr %s302, 41
      %s304 = smul.addr %s303, 8
      %s305 = scalar_lea.vmem %s8, %s304
      %v307 = vld [vmem:[%s1 + $0x10] sm:$0xff]
      %v308 = vld [vmem:[%s1 + $0x18] sm:$0xff]
      %v309 = vld [vmem:[%s1 + $0x20] sm:$0xff]
      %v310 = vld [vmem:[%s1 + $0x28] sm:$0xff]
      %v311 = vld [vmem:[%s1 + $0x30] sm:$0xff]
      %v312 = vld [vmem:[%s1 + $0x38] sm:$0xff]
      %v313 = vld [vmem:[%s1 + $0x40] sm:$0xff]
      %v314 = vld [vmem:[%s1 + $0x48] sm:$0xff]
      %v315 = vld [vmem:[%s1 + $0x50] sm:$0xff]
      %v316 = vld [vmem:[%s1 + $0x58] sm:$0xff]
      %v317 = vld [vmem:[%s1 + $0x60] sm:$0xff]
      %v318 = vld [vmem:[%s1 + $0x68] sm:$0xff]
      %v319 = vld [vmem:[%s1 + $0x70] sm:$0xff]
      %v320 = vld [vmem:[%s1 + $0x78] sm:$0xff]
      %v321 = vld [vmem:[%s1 + $0x80] sm:$0xff]
      %v322 = vld [vmem:[%s1 + $0x88] sm:$0xff]
      %v323 = vld [vmem:[%s1 + $0x90] sm:$0xff]
      %v324 = vld [vmem:[%s1 + $0x98] sm:$0xff]
      %v325 = vld [vmem:[%s1 + $0xa0] sm:$0xff]
      %v326 = vld [vmem:[%s1 + $0xa8] sm:$0xff]
      %v327 = vld [vmem:[%s1 + $0xb0] sm:$0xff]
      %v328 = vld [vmem:[%s1 + $0xb8] sm:$0xff]
      %v329 = vld [vmem:[%s1 + $0xc0] sm:$0xff]
      %v330 = vld [vmem:[%s1 + $0xc8] sm:$0xff]
      %v331 = vld [vmem:[%s1 + $0xd0] sm:$0xff]
      %v332 = vld [vmem:[%s1 + $0xd8] sm:$0xff]
      %v333 = vld [vmem:[%s1 + $0xe0] sm:$0xff]
      %v334 = vld [vmem:[%s1 + $0xe8] sm:$0xff]
      %v335 = vld [vmem:[%s1 + $0xf0] sm:$0xff]
      %v336 = vld [vmem:[%s1 + $0xf8] sm:$0xff]
      %v337 = vld [vmem:[%s1 + $0x100] sm:$0xff]
      %v338 = vld [vmem:[%s1 + $0x108] sm:$0xff]
      %v339 = vld [vmem:[%s1 + $0x110] sm:$0xff]
      %v340 = vld [vmem:[%s1 + $0x118] sm:$0xff]
      %v341 = vld [vmem:[%s1 + $0x120] sm:$0xff]
      %v342 = vld [vmem:[%s1 + $0x128] sm:$0xff]
      %v343 = vld [vmem:[%s1 + $0x130] sm:$0xff]
      %v344 = vld [vmem:[%s1 + $0x138] sm:$0xff]
      %v345 = vld [vmem:[%s3] sm:$0x1]
      %v346 = vld [vmem:[%s5] sm:$0x1]
      %v347 = vld [vmem:[%s7] sm:$0x1]
      %v348 = vld [vmem:[%s6] sm:$0xf]
      %v349 = vld [vmem:[%s2] sm:$0xf]
      %v350 = vld [vmem:[%s2 + $0x4] sm:$0xf]
      %v351 = vld [vmem:[%s2 + $0x8] sm:$0xf]
      %v352 = vld [vmem:[%s2 + $0xc] sm:$0xf]
      %v353 = vld [vmem:[%s2 + $0x10] sm:$0xf]
      %v354 = vld [vmem:[%s2 + $0x14] sm:$0xf]
      %v355 = vld [vmem:[%s2 + $0x18] sm:$0xf]
      %v356 = vld [vmem:[%s2 + $0x1c] sm:$0xf]
      %v357 = vld [vmem:[%s2 + $0x20] sm:$0xf]
      %v358 = vld [vmem:[%s4] sm:$0xf]
      %v359 = vld [vmem:[%s4 + $0x4] sm:$0xf]
      %v360 = vld [vmem:[%s4 + $0x8] sm:$0xf]
      %v361 = vld [vmem:[%s4 + $0xc] sm:$0xf]
      %v362 = vld [vmem:[%s4 + $0x10] sm:$0xf]
      %v363 = vld [vmem:[%s4 + $0x14] sm:$0xf]
      %v364 = vld [vmem:[%s4 + $0x18] sm:$0xf]
      %v365 = vld [vmem:[%s4 + $0x1c] sm:$0xf]
      %v366 = vld [vmem:[%s4 + $0x20] sm:$0xf]
      %v367 = vld [vmem:[%s4 + $0x24] sm:$0xf]
      %v368 = vld [vmem:[%s4 + $0x28] sm:$0xf]
      %v369 = vld [vmem:[%s4 + $0x2c] sm:$0xf]
      %v370 = vld [vmem:[%s4 + $0x30] sm:$0xf]
      %v371 = vld [vmem:[%s4 + $0x34] sm:$0xf]
      %v372 = vld [vmem:[%s4 + $0x38] sm:$0xf]
      %v373 = vld [vmem:[%s4 + $0x3c] sm:$0xf]
      %v374 = vld [vmem:[%s4 + $0x40] sm:$0xf]
      %v375 = vld [vmem:[%s4 + $0x44] sm:$0xf]
      %vm376 = vcmask 130048
      %377 = vst.msk [vmem:[#allocation2] sm:$0xff] %vm376, 0.0
      %378 = vst.msk [vmem:[#allocation2 + $0x8] sm:$0xff] %vm376, 0.0
      %379 = vst.msk [vmem:[#allocation2 + $0x10] sm:$0xff] %vm376, 0.0
      %380 = vst.msk [vmem:[#allocation2 + $0x18] sm:$0xff] %vm376, 0.0
      %381 = vst.msk [vmem:[#allocation2 + $0x20] sm:$0xff] %vm376, 0.0
      %382 = vst.msk [vmem:[#allocation2 + $0x28] sm:$0xff] %vm376, 0.0
      %383 = vst.msk [vmem:[#allocation2 + $0x160] sm:$0xff] %vm376, 0.0
      %384 = vst.msk [vmem:[#allocation2 + $0x168] sm:$0xff] %vm376, 0.0
      %385 = vst.msk [vmem:[#allocation2 + $0x170] sm:$0xff] %vm376, 0.0
      %386 = vst.msk [vmem:[#allocation2 + $0x178] sm:$0xff] %vm376, 0.0
      %vm387 = vcmask 125952
      %388 = vst.msk [vmem:[#allocation2 + $0x180] sm:$0xf] %vm387, 0.0
      %v389 = vld [vmem:[%s300 + $0x1d] sm:$0xff]
      %v390 = vld [vmem:[%s300 + $0x25] sm:$0xff]
      %v391 = vld [vmem:[%s300 + $0x2d] sm:$0xff]
      %v392 = vld [vmem:[%s300 + $0x35] sm:$0xff]
      %v393 = vld [vmem:[%s300 + $0x3d] sm:$0xff]
      %v394 = vld [vmem:[%s300 + $0x45] sm:$0xff]
      %v395 = vld [vmem:[%s300 + $0x4d] sm:$0xff]
      %v396 = vld [vmem:[%s300 + $0x55] sm:$0xff]
      %v397 = vld [vmem:[%s300 + $0x5d] sm:$0xff]
      %v398 = vld [vmem:[%s300 + $0x65] sm:$0xff]
      %v399 = vld [vmem:[%s300 + $0x6d] sm:$0xff]
      %v400 = vld [vmem:[%s300 + $0x75] sm:$0xff]
      %v401 = vld [vmem:[%s300 + $0x7d] sm:$0xff]
      %v402 = vld [vmem:[%s300 + $0x85] sm:$0xff]
      %v403 = vld [vmem:[%s300 + $0x8d] sm:$0xff]
      %v404 = vld [vmem:[%s300 + $0x95] sm:$0xff]
      %v405 = vld [vmem:[%s300 + $0x9d] sm:$0xff]
      %v406 = vld [vmem:[%s300 + $0xa5] sm:$0xff]
      %v407 = vld [vmem:[%s300 + $0xad] sm:$0xff]
      %v408 = vld [vmem:[%s300 + $0xb5] sm:$0xff]
      %v409 = vld [vmem:[%s300 + $0xbd] sm:$0xff]
      %v410 = vld [vmem:[%s300 + $0xc5] sm:$0xff]
      %v411 = vld [vmem:[%s300 + $0xcd] sm:$0xff]
      %v412 = vld [vmem:[%s300 + $0xd5] sm:$0xff]
      %v413 = vld [vmem:[%s300 + $0xdd] sm:$0xff]
      %v414 = vld [vmem:[%s300 + $0xe5] sm:$0xff]
      %v415 = vld [vmem:[%s300 + $0xed] sm:$0xff]
      %v416 = vld [vmem:[%s300 + $0xf5] sm:$0xff]
      %v417 = vld [vmem:[%s300 + $0xfd] sm:$0xff]
      %v418 = vld [vmem:[%s300 + $0x105] sm:$0xff]
      %v419 = vld [vmem:[%s300 + $0x10d] sm:$0xff]
      %v420 = vld [vmem:[%s300 + $0x115] sm:$0xff]
      %v421 = vld [vmem:[%s300 + $0x11d] sm:$0xff]
      %v422 = vld [vmem:[%s300 + $0x125] sm:$0xff]
      %v423 = vld [vmem:[%s300 + $0x12d] sm:$0xff]
      %v424 = vld [vmem:[%s300 + $0x135] sm:$0xff]
      %v425 = vld [vmem:[%s300 + $0x13d] sm:$0xff]
      %v426 = vld [vmem:[%s300 + $0x145] sm:$0xff]
      %v427 = vpack.c.bf16 %v390, %v389
      %v428 = vpack.c.bf16 %v392, %v391
      %v429 = vpack.c.bf16 %v394, %v393
      %v430 = vpack.c.bf16 %v396, %v395
      %v431 = vpack.c.bf16 %v398, %v397
      %v432 = vpack.c.bf16 %v400, %v399
      %v433 = vpack.c.bf16 %v402, %v401
      %v434 = vpack.c.bf16 %v404, %v403
      %v435 = vpack.c.bf16 %v406, %v405
      %v436 = vpack.c.bf16 %v408, %v407
      %v437 = vpack.c.bf16 %v410, %v409
      %v438 = vpack.c.bf16 %v412, %v411
      %v439 = vpack.c.bf16 %v414, %v413
      %v440 = vpack.c.bf16 %v416, %v415
      %v441 = vpack.c.bf16 %v418, %v417
      %v442 = vpack.c.bf16 %v420, %v419
      %v443 = vpack.c.bf16 %v422, %v421
      %v444 = vpack.c.bf16 %v424, %v423
      %v445 = vpack.c.bf16 %v426, %v425
      %v446 = vld [vmem:[%s300 + $0x1e] sm:$0xff]
      %v447 = vld [vmem:[%s300 + $0x26] sm:$0xff]
      %v448 = vld [vmem:[%s300 + $0x2e] sm:$0xff]
      %v449 = vld [vmem:[%s300 + $0x36] sm:$0xff]
      %v450 = vld [vmem:[%s300 + $0x3e] sm:$0xff]
      %v451 = vld [vmem:[%s300 + $0x46] sm:$0xff]
      %v452 = vld [vmem:[%s300 + $0x4e] sm:$0xff]
      %v453 = vld [vmem:[%s300 + $0x56] sm:$0xff]
      %v454 = vld [vmem:[%s300 + $0x5e] sm:$0xff]
      %v455 = vld [vmem:[%s300 + $0x66] sm:$0xff]
      %v456 = vld [vmem:[%s300 + $0x6e] sm:$0xff]
      %v457 = vld [vmem:[%s300 + $0x76] sm:$0xff]
      %v458 = vld [vmem:[%s300 + $0x7e] sm:$0xff]
      %v459 = vld [vmem:[%s300 + $0x86] sm:$0xff]
      %v460 = vld [vmem:[%s300 + $0x8e] sm:$0xff]
      %v461 = vld [vmem:[%s300 + $0x96] sm:$0xff]
      %v462 = vld [vmem:[%s300 + $0x9e] sm:$0xff]
      %v463 = vld [vmem:[%s300 + $0xa6] sm:$0xff]
      %v464 = vld [vmem:[%s300 + $0xae] sm:$0xff]
      %v465 = vld [vmem:[%s300 + $0xb6] sm:$0xff]
      %v466 = vld [vmem:[%s300 + $0xbe] sm:$0xff]
      %v467 = vld [vmem:[%s300 + $0xc6] sm:$0xff]
      %v468 = vld [vmem:[%s300 + $0xce] sm:$0xff]
      %v469 = vld [vmem:[%s300 + $0xd6] sm:$0xff]
      %v470 = vld [vmem:[%s300 + $0xde] sm:$0xff]
      %v471 = vld [vmem:[%s300 + $0xe6] sm:$0xff]
      %v472 = vld [vmem:[%s300 + $0xee] sm:$0xff]
      %v473 = vld [vmem:[%s300 + $0xf6] sm:$0xff]
      %v474 = vld [vmem:[%s300 + $0xfe] sm:$0xff]
      %v475 = vld [vmem:[%s300 + $0x106] sm:$0xff]
      %v476 = vld [vmem:[%s300 + $0x10e] sm:$0xff]
      %v477 = vld [vmem:[%s300 + $0x116] sm:$0xff]
      %v478 = vld [vmem:[%s300 + $0x11e] sm:$0xff]
      %v479 = vld [vmem:[%s300 + $0x126] sm:$0xff]
      %v480 = vld [vmem:[%s300 + $0x12e] sm:$0xff]
      %v481 = vld [vmem:[%s300 + $0x136] sm:$0xff]
      %v482 = vld [vmem:[%s300 + $0x13e] sm:$0xff]
      %v483 = vld [vmem:[%s300 + $0x146] sm:$0xff]
      %v484 = vpack.c.bf16 %v447, %v446
      %v485 = vpack.c.bf16 %v449, %v448
      %v486 = vpack.c.bf16 %v451, %v450
      %v487 = vpack.c.bf16 %v453, %v452
      %v488 = vpack.c.bf16 %v455, %v454
      %v489 = vpack.c.bf16 %v457, %v456
      %v490 = vpack.c.bf16 %v459, %v458
      %v491 = vpack.c.bf16 %v461, %v460
      %v492 = vpack.c.bf16 %v463, %v462
      %v493 = vpack.c.bf16 %v465, %v464
      %v494 = vpack.c.bf16 %v467, %v466
      %v495 = vpack.c.bf16 %v469, %v468
      %v496 = vpack.c.bf16 %v471, %v470
      %v497 = vpack.c.bf16 %v473, %v472
      %v498 = vpack.c.bf16 %v475, %v474
      %v499 = vpack.c.bf16 %v477, %v476
      %v500 = vpack.c.bf16 %v479, %v478
      %v501 = vpack.c.bf16 %v481, %v480
      %v502 = vpack.c.bf16 %v483, %v482
      %vm503 = vcmask 64512
      %v505 = vsel %vm503, %v484, 0
      %v508 = vsel %vm503, %v485, 0
      %v511 = vsel %vm503, %v486, 0
      %v514 = vsel %vm503, %v487, 0
      %v517 = vsel %vm503, %v488, 0
      %v520 = vsel %vm503, %v489, 0
      %v523 = vsel %vm503, %v490, 0
      %v526 = vsel %vm503, %v491, 0
      %v529 = vsel %vm503, %v492, 0
      %v532 = vsel %vm503, %v493, 0
      %v535 = vsel %vm503, %v494, 0
      %v538 = vsel %vm503, %v495, 0
      %v541 = vsel %vm503, %v496, 0
      %v544 = vsel %vm503, %v497, 0
      %v547 = vsel %vm503, %v498, 0
      %v550 = vsel %vm503, %v499, 0
      %v553 = vsel %vm503, %v500, 0
      %v556 = vsel %vm503, %v501, 0
      %v559 = vsel %vm503, %v502, 0
      %vm561 = vcmask 1043456
      %v563 = vsel %vm561, %v350, 0
      %565 = vmatprep.subr.bf16.mxu0 0
      %566 = vmatpush1.bf16.msra.mxu0 %v563
      %567 = vmatprep.subr.bf16.mxu0 0
      %568 = vmatpush1.bf16.msra.mxu0 0
      %569 = vmatprep.subr.bf16.mxu0 0
      %570 = vmatpush1.bf16.msra.mxu0 0
      %571 = vmatprep.subr.bf16.mxu0 0
      %572 = vmatpush1.bf16.msra.mxu0 0
      %573 = vmatprep.subr.bf16.mxu0 0
      %574 = vmatpush1.bf16.msra.mxu0 0
      %575 = vmatprep.subr.bf16.mxu0 0
      %576 = vmatpush1.bf16.msra.mxu0 0
      %577 = vmatprep.subr.bf16.mxu0 0
      %578 = vmatpush1.bf16.msra.mxu0 0
      %579 = vmatprep.subr.bf16.mxu0 0
      %580 = vmatpush1.bf16.msra.mxu0 0
      %581 = vmatprep.subr.bf16.mxu0 0
      %582 = vmatpush1.bf16.msra.mxu0 0
      %583 = vmatprep.subr.bf16.mxu0 0
      %584 = vmatpush1.bf16.msra.mxu0 0
      %585 = vmatprep.subr.bf16.mxu0 0
      %586 = vmatpush1.bf16.msra.mxu0 0
      %587 = vmatprep.subr.bf16.mxu0 0
      %588 = vmatpush1.bf16.msra.mxu0 0
      %589 = vmatprep.subr.bf16.mxu0 0
      %590 = vmatpush1.bf16.msra.mxu0 0
      %591 = vmatprep.subr.bf16.mxu0 0
      %592 = vmatpush1.bf16.msra.mxu0 0
      %593 = vmatprep.subr.bf16.mxu0 0
      %594 = vmatpush1.bf16.msra.mxu0 0
      %595 = vmatprep.subr.bf16.mxu0 0
      %596 = vmatpush1.bf16.msra.mxu0 0
      %597 = vmatprep.mubr.bf16.mxu0 0
      %598 = vmatmul.mubr.bf16.gmra.mrb[0].mxu0 %v505
      %v599 = vpop.f32.mrb[0].mxu0
      %v600 = vadd.f32 0.0, %v599
      %v601 = vpop.f32.mrb[0].mxu0
      %v602 = vpop.f32.mrb[0].mxu0
      %v603 = vadd.f32 0.0, %v602
      %v604 = vpop.f32.mrb[0].mxu0
      %605 = vmatprep.mubr.bf16.mxu0 0
      %606 = vmatmul.mubr.bf16.gmra.mrb[0].mxu0 %v508
      %v607 = vpop.f32.mrb[0].mxu0
      %v608 = vadd.f32 0.0, %v607
      %v609 = vpop.f32.mrb[0].mxu0
      %v610 = vpop.f32.mrb[0].mxu0
      %v611 = vadd.f32 0.0, %v610
      %v612 = vpop.f32.mrb[0].mxu0
      %613 = vmatprep.mubr.bf16.mxu0 0
      %614 = vmatmul.mubr.bf16.gmra.mrb[0].mxu0 %v511
      %v615 = vpop.f32.mrb[0].mxu0
      %v616 = vadd.f32 0.0, %v615
      %v617 = vpop.f32.mrb[0].mxu0
      %v618 = vpop.f32.mrb[0].mxu0
      %v619 = vadd.f32 0.0, %v618
      %v620 = vpop.f32.mrb[0].mxu0
      %621 = vmatprep.mubr.bf16.mxu0 0
      %622 = vmatmul.mubr.bf16.gmra.mrb[0].mxu0 %v514
      %v623 = vpop.f32.mrb[0].mxu0
      %v624 = vadd.f32 0.0, %v623
      %v625 = vpop.f32.mrb[0].mxu0
      %v626 = vpop.f32.mrb[0].mxu0
      %v627 = vadd.f32 0.0, %v626
      %v628 = vpop.f32.mrb[0].mxu0
      %629 = vmatprep.mubr.bf16.mxu0 0
      %630 = vmatmul.mubr.bf16.gmra.mrb[0].mxu0 %v517
      %v631 = vpop.f32.mrb[0].mxu0
      %v632 = vadd.f32 0.0, %v631
      %v633 = vpop.f32.mrb[0].mxu0
      %v634 = vpop.f32.mrb[0].mxu0
      %v635 = vadd.f32 0.0, %v634
      %v636 = vpop.f32.mrb[0].mxu0
      %637 = vmatprep.mubr.bf16.mxu0 0
      %638 = vmatmul.mubr.bf16.gmra.mrb[0].mxu0 %v520
      %v639 = vpop.f32.mrb[0].mxu0
      %v640 = vadd.f32 0.0, %v639
      %v641 = vpop.f32.mrb[0].mxu0
      %v642 = vpop.f32.mrb[0].mxu0
      %v643 = vadd.f32 0.0, %v642
      %v644 = vpop.f32.mrb[0].mxu0
      %645 = vmatprep.mubr.bf16.mxu0 0
      %646 = vmatmul.mubr.bf16.gmra.mrb[0].mxu0 %v523
      %v647 = vpop.f32.mrb[0].mxu0
      %v648 = vadd.f32 0.0, %v647
      %v649 = vpop.f32.mrb[0].mxu0
      %v650 = vpop.f32.mrb[0].mxu0
      %v651 = vadd.f32 0.0, %v650
      %v652 = vpop.f32.mrb[0].mxu0
      %653 = vmatprep.mubr.bf16.mxu0 0
      %654 = vmatmul.mubr.bf16.gmra.mrb[0].mxu0 %v526
      %v655 = vpop.f32.mrb[0].mxu0
      %v656 = vadd.f32 0.0, %v655
      %v657 = vpop.f32.mrb[0].mxu0
      %v658 = vpop.f32.mrb[0].mxu0
      %v659 = vadd.f32 0.0, %v658
      %v660 = vpop.f32.mrb[0].mxu0
      %661 = vmatprep.mubr.bf16.mxu0 0
      %662 = vmatmul.mubr.bf16.gmra.mrb[0].mxu0 %v529
      %v663 = vpop.f32.mrb[0].mxu0
      %v664 = vadd.f32 0.0, %v663
      %v665 = vpop.f32.mrb[0].mxu0
      %v666 = vpop.f32.mrb[0].mxu0
      %v667 = vadd.f32 0.0, %v666
      %v668 = vpop.f32.mrb[0].mxu0
      %669 = vmatprep.mubr.bf16.mxu0 0
      %670 = vmatmul.mubr.bf16.gmra.mrb[0].mxu0 %v532
      %v671 = vpop.f32.mrb[0].mxu0
      %v672 = vadd.f32 0.0, %v671
      %v673 = vpop.f32.mrb[0].mxu0
      %v674 = vpop.f32.mrb[0].mxu0
      %v675 = vadd.f32 0.0, %v674
      %v676 = vpop.f32.mrb[0].mxu0
      %677 = vmatprep.mubr.bf16.mxu0 0
      %678 = vmatmul.mubr.bf16.gmra.mrb[0].mxu0 %v535
      %v679 = vpop.f32.mrb[0].mxu0
      %v680 = vadd.f32 0.0, %v679
      %v681 = vpop.f32.mrb[0].mxu0
      %v682 = vpop.f32.mrb[0].mxu0
      %v683 = vadd.f32 0.0, %v682
      %v684 = vpop.f32.mrb[0].mxu0
      %685 = vmatprep.mubr.bf16.mxu0 0
      %686 = vmatmul.mubr.bf16.gmra.mrb[0].mxu0 %v538
      %v687 = vpop.f32.mrb[0].mxu0
      %v688 = vadd.f32 0.0, %v687
      %v689 = vpop.f32.mrb[0].mxu0
      %v690 = vpop.f32.mrb[0].mxu0
      %v691 = vadd.f32 0.0, %v690
      %v692 = vpop.f32.mrb[0].mxu0
      %693 = vmatprep.mubr.bf16.mxu0 0
      %694 = vmatmul.mubr.bf16.gmra.mrb[0].mxu0 %v541
      %v695 = vpop.f32.mrb[0].mxu0
      %v696 = vadd.f32 0.0, %v695
      %v697 = vpop.f32.mrb[0].mxu0
      %v698 = vpop.f32.mrb[0].mxu0
      %v699 = vadd.f32 0.0, %v698
      %v700 = vpop.f32.mrb[0].mxu0
      %701 = vmatprep.mubr.bf16.mxu0 0
      %702 = vmatmul.mubr.bf16.gmra.mrb[0].mxu0 %v544
      %v703 = vpop.f32.mrb[0].mxu0
      %v704 = vadd.f32 0.0, %v703
      %v705 = vpop.f32.mrb[0].mxu0
      %v706 = vpop.f32.mrb[0].mxu0
      %v707 = vadd.f32 0.0, %v706
      %v708 = vpop.f32.mrb[0].mxu0
      %709 = vmatprep.mubr.bf16.mxu0 0
      %710 = vmatmul.mubr.bf16.gmra.mrb[0].mxu0 %v547
      %v711 = vpop.f32.mrb[0].mxu0
      %v712 = vadd.f32 0.0, %v711
      %v713 = vpop.f32.mrb[0].mxu0
      %v714 = vpop.f32.mrb[0].mxu0
      %v715 = vadd.f32 0.0, %v714
      %v716 = vpop.f32.mrb[0].mxu0
      %717 = vmatprep.mubr.bf16.mxu0 0
      %718 = vmatmul.mubr.bf16.gmra.mrb[0].mxu0 %v550
      %v719 = vpop.f32.mrb[0].mxu0
      %v720 = vadd.f32 0.0, %v719
      %v721 = vpop.f32.mrb[0].mxu0
      %v722 = vpop.f32.mrb[0].mxu0
      %v723 = vadd.f32 0.0, %v722
      %v724 = vpop.f32.mrb[0].mxu0
      %725 = vmatprep.mubr.bf16.mxu0 0
      %726 = vmatmul.mubr.bf16.gmra.mrb[0].mxu0 %v553
      %v727 = vpop.f32.mrb[0].mxu0
      %v728 = vadd.f32 0.0, %v727
      %v729 = vpop.f32.mrb[0].mxu0
      %v730 = vpop.f32.mrb[0].mxu0
      %v731 = vadd.f32 0.0, %v730
      %v732 = vpop.f32.mrb[0].mxu0
      %733 = vmatprep.mubr.bf16.mxu0 0
      %734 = vmatmul.mubr.bf16.gmra.mrb[0].mxu0 %v556
      %v735 = vpop.f32.mrb[0].mxu0
      %v736 = vadd.f32 0.0, %v735
      %v737 = vpop.f32.mrb[0].mxu0
      %v738 = vpop.f32.mrb[0].mxu0
      %v739 = vadd.f32 0.0, %v738
      %v740 = vpop.f32.mrb[0].mxu0
      %741 = vmatprep.mubr.bf16.mxu0 0
      %742 = vmatmul.mubr.bf16.gmra.mrb[0].mxu0 %v559
      %v743 = vpop.f32.mrb[0].mxu0
      %v744 = vadd.f32 0.0, %v743
      %v745 = vpop.f32.mrb[0].mxu0
      %v746 = vpop.f32.mrb[0].mxu0
      %v747 = vadd.f32 0.0, %v746
      %v748 = vpop.f32.mrb[0].mxu0
      %749 = vdwg.mxu0
      %v751 = vsel %vm503, %v427, 0
      %v754 = vsel %vm503, %v428, 0
      %v757 = vsel %vm503, %v429, 0
      %v760 = vsel %vm503, %v430, 0
      %v763 = vsel %vm503, %v431, 0
      %v766 = vsel %vm503, %v432, 0
      %v769 = vsel %vm503, %v433, 0
      %v772 = vsel %vm503, %v434, 0
      %v775 = vsel %vm503, %v435, 0
      %v778 = vsel %vm503, %v436, 0
      %v781 = vsel %vm503, %v437, 0
      %v784 = vsel %vm503, %v438, 0
      %v787 = vsel %vm503, %v439, 0
      %v790 = vsel %vm503, %v440, 0
      %v793 = vsel %vm503, %v441, 0
      %v796 = vsel %vm503, %v442, 0
      %v799 = vsel %vm503, %v443, 0
      %v802 = vsel %vm503, %v444, 0
      %v805 = vsel %vm503, %v445, 0
      %v808 = vsel %vm561, %v349, 0
      %810 = vmatprep.subr.bf16.mxu0 0
      %811 = vmatpush1.bf16.msra.mxu0 %v808
      %812 = vmatprep.subr.bf16.mxu0 0
      %813 = vmatpush1.bf16.msra.mxu0 0
      %814 = vmatprep.subr.bf16.mxu0 0
      %815 = vmatpush1.bf16.msra.mxu0 0
      %816 = vmatprep.subr.bf16.mxu0 0
      %817 = vmatpush1.bf16.msra.mxu0 0
      %818 = vmatprep.subr.bf16.mxu0 0
      %819 = vmatpush1.bf16.msra.mxu0 0
      %820 = vmatprep.subr.bf16.mxu0 0
      %821 = vmatpush1.bf16.msra.mxu0 0
      %822 = vmatprep.subr.bf16.mxu0 0
      %823 = vmatpush1.bf16.msra.mxu0 0
      %824 = vmatprep.subr.bf16.mxu0 0
      %825 = vmatpush1.bf16.msra.mxu0 0
      %826 = vmatprep.subr.bf16.mxu0 0
      %827 = vmatpush1.bf16.msra.mxu0 0
      %828 = vmatprep.subr.bf16.mxu0 0
      %829 = vmatpush1.bf16.msra.mxu0 0
      %830 = vmatprep.subr.bf16.mxu0 0
      %831 = vmatpush1.bf16.msra.mxu0 0
      %832 = vmatprep.subr.bf16.mxu0 0
      %833 = vmatpush1.bf16.msra.mxu0 0
      %834 = vmatprep.subr.bf16.mxu0 0
      %835 = vmatpush1.bf16.msra.mxu0 0
      %836 = vmatprep.subr.bf16.mxu0 0
      %837 = vmatpush1.bf16.msra.mxu0 0
      %838 = vmatprep.subr.bf16.mxu0 0
      %839 = vmatpush1.bf16.msra.mxu0 0
      %840 = vmatprep.subr.bf16.mxu0 0
      %841 = vmatpush1.bf16.msra.mxu0 0
      %842 = vmatprep.mubr.bf16.mxu0 0
      %843 = vmatmul.mubr.bf16.gmra.mrb[0].mxu0 %v751
      %v844 = vpop.f32.mrb[0].mxu0
      %v845 = vadd.f32 %v600, %v844
      %v846 = vpop.f32.mrb[0].mxu0
      %v847 = vpop.f32.mrb[0].mxu0
      %v848 = vadd.f32 %v603, %v847
      %v849 = vpop.f32.mrb[0].mxu0
      %850 = vmatprep.mubr.bf16.mxu0 0
      %851 = vmatmul.mubr.bf16.gmra.mrb[0].mxu0 %v754
      %v852 = vpop.f32.mrb[0].mxu0
      %v853 = vadd.f32 %v608, %v852
      %v854 = vpop.f32.mrb[0].mxu0
      %v855 = vpop.f32.mrb[0].mxu0
      %v856 = vadd.f32 %v611, %v855
      %v857 = vpop.f32.mrb[0].mxu0
      %858 = vmatprep.mubr.bf16.mxu0 0
      %859 = vmatmul.mubr.bf16.gmra.mrb[0].mxu0 %v757
      %v860 = vpop.f32.mrb[0].mxu0
      %v861 = vadd.f32 %v616, %v860
      %v862 = vpop.f32.mrb[0].mxu0
      %v863 = vpop.f32.mrb[0].mxu0
      %v864 = vadd.f32 %v619, %v863
      %v865 = vpop.f32.mrb[0].mxu0
      %866 = vmatprep.mubr.bf16.mxu0 0
      %867 = vmatmul.mubr.bf16.gmra.mrb[0].mxu0 %v760
      %v868 = vpop.f32.mrb[0].mxu0
      %v869 = vadd.f32 %v624, %v868
      %v870 = vpop.f32.mrb[0].mxu0
      %v871 = vpop.f32.mrb[0].mxu0
      %v872 = vadd.f32 %v627, %v871
      %v873 = vpop.f32.mrb[0].mxu0
      %874 = vmatprep.mubr.bf16.mxu0 0
      %875 = vmatmul.mubr.bf16.gmra.mrb[0].mxu0 %v763
      %v876 = vpop.f32.mrb[0].mxu0
      %v877 = vadd.f32 %v632, %v876
      %v878 = vpop.f32.mrb[0].mxu0
      %v879 = vpop.f32.mrb[0].mxu0
      %v880 = vadd.f32 %v635, %v879
      %v881 = vpop.f32.mrb[0].mxu0
      %882 = vmatprep.mubr.bf16.mxu0 0
      %883 = vmatmul.mubr.bf16.gmra.mrb[0].mxu0 %v766
      %v884 = vpop.f32.mrb[0].mxu0
      %v885 = vadd.f32 %v640, %v884
      %v886 = vpop.f32.mrb[0].mxu0
      %v887 = vpop.f32.mrb[0].mxu0
      %v888 = vadd.f32 %v643, %v887
      %v889 = vpop.f32.mrb[0].mxu0
      %890 = vmatprep.mubr.bf16.mxu0 0
      %891 = vmatmul.mubr.bf16.gmra.mrb[0].mxu0 %v769
      %v892 = vpop.f32.mrb[0].mxu0
      %v893 = vadd.f32 %v648, %v892
      %v894 = vpop.f32.mrb[0].mxu0
      %v895 = vpop.f32.mrb[0].mxu0
      %v896 = vadd.f32 %v651, %v895
      %v897 = vpop.f32.mrb[0].mxu0
      %898 = vmatprep.mubr.bf16.mxu0 0
      %899 = vmatmul.mubr.bf16.gmra.mrb[0].mxu0 %v772
      %v900 = vpop.f32.mrb[0].mxu0
      %v901 = vadd.f32 %v656, %v900
      %v902 = vpop.f32.mrb[0].mxu0
      %v903 = vpop.f32.mrb[0].mxu0
      %v904 = vadd.f32 %v659, %v903
      %v905 = vpop.f32.mrb[0].mxu0
      %906 = vmatprep.mubr.bf16.mxu0 0
      %907 = vmatmul.mubr.bf16.gmra.mrb[0].mxu0 %v775
      %v908 = vpop.f32.mrb[0].mxu0
      %v909 = vadd.f32 %v664, %v908
      %v910 = vpop.f32.mrb[0].mxu0
      %v911 = vpop.f32.mrb[0].mxu0
      %v912 = vadd.f32 %v667, %v911
      %v913 = vpop.f32.mrb[0].mxu0
      %914 = vmatprep.mubr.bf16.mxu0 0
      %915 = vmatmul.mubr.bf16.gmra.mrb[0].mxu0 %v778
      %v916 = vpop.f32.mrb[0].mxu0
      %v917 = vadd.f32 %v672, %v916
      %v918 = vpop.f32.mrb[0].mxu0
      %v919 = vpop.f32.mrb[0].mxu0
      %v920 = vadd.f32 %v675, %v919
      %v921 = vpop.f32.mrb[0].mxu0
      %922 = vmatprep.mubr.bf16.mxu0 0
      %923 = vmatmul.mubr.bf16.gmra.mrb[0].mxu0 %v781
      %v924 = vpop.f32.mrb[0].mxu0
      %v925 = vadd.f32 %v680, %v924
      %v926 = vpop.f32.mrb[0].mxu0
      %v927 = vpop.f32.mrb[0].mxu0
      %v928 = vadd.f32 %v683, %v927
      %v929 = vpop.f32.mrb[0].mxu0
      %930 = vmatprep.mubr.bf16.mxu0 0
      %931 = vmatmul.mubr.bf16.gmra.mrb[0].mxu0 %v784
      %v932 = vpop.f32.mrb[0].mxu0
      %v933 = vadd.f32 %v688, %v932
      %v934 = vpop.f32.mrb[0].mxu0
      %v935 = vpop.f32.mrb[0].mxu0
      %v936 = vadd.f32 %v691, %v935
      %v937 = vpop.f32.mrb[0].mxu0
      %938 = vmatprep.mubr.bf16.mxu0 0
      %939 = vmatmul.mubr.bf16.gmra.mrb[0].mxu0 %v787
      %v940 = vpop.f32.mrb[0].mxu0
      %v941 = vadd.f32 %v696, %v940
      %v942 = vpop.f32.mrb[0].mxu0
      %v943 = vpop.f32.mrb[0].mxu0
      %v944 = vadd.f32 %v699, %v943
      %v945 = vpop.f32.mrb[0].mxu0
      %946 = vmatprep.mubr.bf16.mxu0 0
      %947 = vmatmul.mubr.bf16.gmra.mrb[0].mxu0 %v790
      %v948 = vpop.f32.mrb[0].mxu0
      %v949 = vadd.f32 %v704, %v948
      %v950 = vpop.f32.mrb[0].mxu0
      %v951 = vpop.f32.mrb[0].mxu0
      %v952 = vadd.f32 %v707, %v951
      %v953 = vpop.f32.mrb[0].mxu0
      %954 = vmatprep.mubr.bf16.mxu0 0
      %955 = vmatmul.mubr.bf16.gmra.mrb[0].mxu0 %v793
      %v956 = vpop.f32.mrb[0].mxu0
      %v957 = vadd.f32 %v712, %v956
      %v958 = vpop.f32.mrb[0].mxu0
      %v959 = vpop.f32.mrb[0].mxu0
      %v960 = vadd.f32 %v715, %v959
      %v961 = vpop.f32.mrb[0].mxu0
      %962 = vmatprep.mubr.bf16.mxu0 0
      %963 = vmatmul.mubr.bf16.gmra.mrb[0].mxu0 %v796
      %v964 = vpop.f32.mrb[0].mxu0
      %v965 = vadd.f32 %v720, %v964
      %v966 = vpop.f32.mrb[0].mxu0
      %v967 = vpop.f32.mrb[0].mxu0
      %v968 = vadd.f32 %v723, %v967
      %v969 = vpop.f32.mrb[0].mxu0
      %970 = vmatprep.mubr.bf16.mxu0 0
      %971 = vmatmul.mubr.bf16.gmra.mrb[0].mxu0 %v799
      %v972 = vpop.f32.mrb[0].mxu0
      %v973 = vadd.f32 %v728, %v972
      %v974 = vpop.f32.mrb[0].mxu0
      %v975 = vpop.f32.mrb[0].mxu0
      %v976 = vadd.f32 %v731, %v975
      %v977 = vpop.f32.mrb[0].mxu0
      %978 = vmatprep.mubr.bf16.mxu0 0
      %979 = vmatmul.mubr.bf16.gmra.mrb[0].mxu0 %v802
      %v980 = vpop.f32.mrb[0].mxu0
      %v981 = vadd.f32 %v736, %v980
      %v982 = vpop.f32.mrb[0].mxu0
      %v983 = vpop.f32.mrb[0].mxu0
      %v984 = vadd.f32 %v739, %v983
      %v985 = vpop.f32.mrb[0].mxu0
      %986 = vmatprep.mubr.bf16.mxu0 0
      %987 = vmatmul.mubr.bf16.gmra.mrb[0].mxu0 %v805
      %v988 = vpop.f32.mrb[0].mxu0
      %v989 = vadd.f32 %v744, %v988
      %v990 = vpop.f32.mrb[0].mxu0
      %v991 = vpop.f32.mrb[0].mxu0
      %v992 = vadd.f32 %v747, %v991
      %v993 = vpop.f32.mrb[0].mxu0
      %994 = vdwg.mxu0
      %v995 = vld [vmem:[%s300 + $0x1f] sm:$0xff]
      %v996 = vld [vmem:[%s300 + $0x27] sm:$0xff]
      %v997 = vld [vmem:[%s300 + $0x2f] sm:$0xff]
      %v998 = vld [vmem:[%s300 + $0x37] sm:$0xff]
      %v999 = vld [vmem:[%s300 + $0x3f] sm:$0xff]
      %v1000 = vld [vmem:[%s300 + $0x47] sm:$0xff]
      %v1001 = vld [vmem:[%s300 + $0x4f] sm:$0xff]
      %v1002 = vld [vmem:[%s300 + $0x57] sm:$0xff]
      %v1003 = vld [vmem:[%s300 + $0x5f] sm:$0xff]
      %v1004 = vld [vmem:[%s300 + $0x67] sm:$0xff]
      %v1005 = vld [vmem:[%s300 + $0x6f] sm:$0xff]
      %v1006 = vld [vmem:[%s300 + $0x77] sm:$0xff]
      %v1007 = vld [vmem:[%s300 + $0x7f] sm:$0xff]
      %v1008 = vld [vmem:[%s300 + $0x87] sm:$0xff]
      %v1009 = vld [vmem:[%s300 + $0x8f] sm:$0xff]
      %v1010 = vld [vmem:[%s300 + $0x97] sm:$0xff]
      %v1011 = vld [vmem:[%s300 + $0x9f] sm:$0xff]
      %v1012 = vld [vmem:[%s300 + $0xa7] sm:$0xff]
      %v1013 = vld [vmem:[%s300 + $0xaf] sm:$0xff]
      %v1014 = vld [vmem:[%s300 + $0xb7] sm:$0xff]
      %v1015 = vld [vmem:[%s300 + $0xbf] sm:$0xff]
      %v1016 = vld [vmem:[%s300 + $0xc7] sm:$0xff]
      %v1017 = vld [vmem:[%s300 + $0xcf] sm:$0xff]
      %v1018 = vld [vmem:[%s300 + $0xd7] sm:$0xff]
      %v1019 = vld [vmem:[%s300 + $0xdf] sm:$0xff]
      %v1020 = vld [vmem:[%s300 + $0xe7] sm:$0xff]
      %v1021 = vld [vmem:[%s300 + $0xef] sm:$0xff]
      %v1022 = vld [vmem:[%s300 + $0xf7] sm:$0xff]
      %v1023 = vld [vmem:[%s300 + $0xff] sm:$0xff]
      %v1024 = vld [vmem:[%s300 + $0x107] sm:$0xff]
      %v1025 = vld [vmem:[%s300 + $0x10f] sm:$0xff]
      %v1026 = vld [vmem:[%s300 + $0x117] sm:$0xff]
      %v1027 = vld [vmem:[%s300 + $0x11f] sm:$0xff]
      %v1028 = vld [vmem:[%s300 + $0x127] sm:$0xff]
      %v1029 = vld [vmem:[%s300 + $0x12f] sm:$0xff]
      %v1030 = vld [vmem:[%s300 + $0x137] sm:$0xff]
      %v1031 = vld [vmem:[%s300 + $0x13f] sm:$0xff]
      %v1032 = vld [vmem:[%s300 + $0x147] sm:$0xff]
      %v1033 = vpack.c.bf16 %v996, %v995
      %v1034 = vpack.c.bf16 %v998, %v997
      %v1035 = vpack.c.bf16 %v1000, %v999
      %v1036 = vpack.c.bf16 %v1002, %v1001
      %v1037 = vpack.c.bf16 %v1004, %v1003
      %v1038 = vpack.c.bf16 %v1006, %v1005
      %v1039 = vpack.c.bf16 %v1008, %v1007
      %v1040 = vpack.c.bf16 %v1010, %v1009
      %v1041 = vpack.c.bf16 %v1012, %v1011
      %v1042 = vpack.c.bf16 %v1014, %v1013
      %v1043 = vpack.c.bf16 %v1016, %v1015
      %v1044 = vpack.c.bf16 %v1018, %v1017
      %v1045 = vpack.c.bf16 %v1020, %v1019
      %v1046 = vpack.c.bf16 %v1022, %v1021
      %v1047 = vpack.c.bf16 %v1024, %v1023
      %v1048 = vpack.c.bf16 %v1026, %v1025
      %v1049 = vpack.c.bf16 %v1028, %v1027
      %v1050 = vpack.c.bf16 %v1030, %v1029
      %v1051 = vpack.c.bf16 %v1032, %v1031
      %v1053 = vsel %vm503, %v1033, 0
      %v1056 = vsel %vm503, %v1034, 0
      %v1059 = vsel %vm503, %v1035, 0
      %v1062 = vsel %vm503, %v1036, 0
      %v1065 = vsel %vm503, %v1037, 0
      %v1068 = vsel %vm503, %v1038, 0
      %v1071 = vsel %vm503, %v1039, 0
      %v1074 = vsel %vm503, %v1040, 0
      %v1077 = vsel %vm503, %v1041, 0
      %v1080 = vsel %vm503, %v1042, 0
      %v1083 = vsel %vm503, %v1043, 0
      %v1086 = vsel %vm503, %v1044, 0
      %v1089 = vsel %vm503, %v1045, 0
      %v1092 = vsel %vm503, %v1046, 0
      %v1095 = vsel %vm503, %v1047, 0
      %v1098 = vsel %vm503, %v1048, 0
      %v1101 = vsel %vm503, %v1049, 0
      %v1104 = vsel %vm503, %v1050, 0
      %v1107 = vsel %vm503, %v1051, 0
      %v1110 = vsel %vm561, %v351, 0
      %1112 = vmatprep.subr.bf16.mxu0 0
      %1113 = vmatpush1.bf16.msra.mxu0 %v1110
      %1114 = vmatprep.subr.bf16.mxu0 0
      %1115 = vmatpush1.bf16.msra.mxu0 0
      %1116 = vmatprep.subr.bf16.mxu0 0
      %1117 = vmatpush1.bf16.msra.mxu0 0
      %1118 = vmatprep.subr.bf16.mxu0 0
      %1119 = vmatpush1.bf16.msra.mxu0 0
      %1120 = vmatprep.subr.bf16.mxu0 0
      %1121 = vmatpush1.bf16.msra.mxu0 0
      %1122 = vmatprep.subr.bf16.mxu0 0
      %1123 = vmatpush1.bf16.msra.mxu0 0
      %1124 = vmatprep.subr.bf16.mxu0 0
      %1125 = vmatpush1.bf16.msra.mxu0 0
      %1126 = vmatprep.subr.bf16.mxu0 0
      %1127 = vmatpush1.bf16.msra.mxu0 0
      %1128 = vmatprep.subr.bf16.mxu0 0
      %1129 = vmatpush1.bf16.msra.mxu0 0
      %1130 = vmatprep.subr.bf16.mxu0 0
      %1131 = vmatpush1.bf16.msra.mxu0 0
      %1132 = vmatprep.subr.bf16.mxu0 0
      %1133 = vmatpush1.bf16.msra.mxu0 0
      %1134 = vmatprep.subr.bf16.mxu0 0
      %1135 = vmatpush1.bf16.msra.mxu0 0
      %1136 = vmatprep.subr.bf16.mxu0 0
      %1137 = vmatpush1.bf16.msra.mxu0 0
      %1138 = vmatprep.subr.bf16.mxu0 0
      %1139 = vmatpush1.bf16.msra.mxu0 0
      %1140 = vmatprep.subr.bf16.mxu0 0
      %1141 = vmatpush1.bf16.msra.mxu0 0
      %1142 = vmatprep.subr.bf16.mxu0 0
      %1143 = vmatpush1.bf16.msra.mxu0 0
      %1144 = vmatprep.mubr.bf16.mxu0 0
      %1145 = vmatmul.mubr.bf16.gmra.mrb[0].mxu0 %v1053
      %v1146 = vpop.f32.mrb[0].mxu0
      %v1147 = vadd.f32 0.0, %v1146
      %v1148 = vpop.f32.mrb[0].mxu0
      %v1149 = vpop.f32.mrb[0].mxu0
      %v1150 = vadd.f32 0.0, %v1149
      %v1151 = vpop.f32.mrb[0].mxu0
      %1152 = vmatprep.mubr.bf16.mxu0 0
      %1153 = vmatmul.mubr.bf16.gmra.mrb[0].mxu0 %v1056
      %v1154 = vpop.f32.mrb[0].mxu0
      %v1155 = vadd.f32 0.0, %v1154
      %v1156 = vpop.f32.mrb[0].mxu0
      %v1157 = vpop.f32.mrb[0].mxu0
      %v1158 = vadd.f32 0.0, %v1157
      %v1159 = vpop.f32.mrb[0].mxu0
      %1160 = vmatprep.mubr.bf16.mxu0 0
      %1161 = vmatmul.mubr.bf16.gmra.mrb[0].mxu0 %v1059
      %v1162 = vpop.f32.mrb[0].mxu0
      %v1163 = vadd.f32 0.0, %v1162
      %v1164 = vpop.f32.mrb[0].mxu0
      %v1165 = vpop.f32.mrb[0].mxu0
      %v1166 = vadd.f32 0.0, %v1165
      %v1167 = vpop.f32.mrb[0].mxu0
      %1168 = vmatprep.mubr.bf16.mxu0 0
      %1169 = vmatmul.mubr.bf16.gmra.mrb[0].mxu0 %v1062
      %v1170 = vpop.f32.mrb[0].mxu0
      %v1171 = vadd.f32 0.0, %v1170
      %v1172 = vpop.f32.mrb[0].mxu0
      %v1173 = vpop.f32.mrb[0].mxu0
      %v1174 = vadd.f32 0.0, %v1173
      %v1175 = vpop.f32.mrb[0].mxu0
      %1176 = vmatprep.mubr.bf16.mxu0 0
      %1177 = vmatmul.mubr.bf16.gmra.mrb[0].mxu0 %v1065
      %v1178 = vpop.f32.mrb[0].mxu0
      %v1179 = vadd.f32 0.0, %v1178
      %v1180 = vpop.f32.mrb[0].mxu0
      %v1181 = vpop.f32.mrb[0].mxu0
      %v1182 = vadd.f32 0.0, %v1181
      %v1183 = vpop.f32.mrb[0].mxu0
      %1184 = vmatprep.mubr.bf16.mxu0 0
      %1185 = vmatmul.mubr.bf16.gmra.mrb[0].mxu0 %v1068
      %v1186 = vpop.f32.mrb[0].mxu0
      %v1187 = vadd.f32 0.0, %v1186
      %v1188 = vpop.f32.mrb[0].mxu0
      %v1189 = vpop.f32.mrb[0].mxu0
      %v1190 = vadd.f32 0.0, %v1189
      %v1191 = vpop.f32.mrb[0].mxu0
      %1192 = vmatprep.mubr.bf16.mxu0 0
      %1193 = vmatmul.mubr.bf16.gmra.mrb[0].mxu0 %v1071
      %v1194 = vpop.f32.mrb[0].mxu0
      %v1195 = vadd.f32 0.0, %v1194
      %v1196 = vpop.f32.mrb[0].mxu0
      %v1197 = vpop.f32.mrb[0].mxu0
      %v1198 = vadd.f32 0.0, %v1197
      %v1199 = vpop.f32.mrb[0].mxu0
      %1200 = vmatprep.mubr.bf16.mxu0 0
      %1201 = vmatmul.mubr.bf16.gmra.mrb[0].mxu0 %v1074
      %v1202 = vpop.f32.mrb[0].mxu0
      %v1203 = vadd.f32 0.0, %v1202
      %v1204 = vpop.f32.mrb[0].mxu0
      %v1205 = vpop.f32.mrb[0].mxu0
      %v1206 = vadd.f32 0.0, %v1205
      %v1207 = vpop.f32.mrb[0].mxu0
      %1208 = vmatprep.mubr.bf16.mxu0 0
      %1209 = vmatmul.mubr.bf16.gmra.mrb[0].mxu0 %v1077
      %v1210 = vpop.f32.mrb[0].mxu0
      %v1211 = vadd.f32 0.0, %v1210
      %v1212 = vpop.f32.mrb[0].mxu0
      %v1213 = vpop.f32.mrb[0].mxu0
      %v1214 = vadd.f32 0.0, %v1213
      %v1215 = vpop.f32.mrb[0].mxu0
      %1216 = vmatprep.mubr.bf16.mxu0 0
      %1217 = vmatmul.mubr.bf16.gmra.mrb[0].mxu0 %v1080
      %v1218 = vpop.f32.mrb[0].mxu0
      %v1219 = vadd.f32 0.0, %v1218
      %v1220 = vpop.f32.mrb[0].mxu0
      %v1221 = vpop.f32.mrb[0].mxu0
      %v1222 = vadd.f32 0.0, %v1221
      %v1223 = vpop.f32.mrb[0].mxu0
      %1224 = vmatprep.mubr.bf16.mxu0 0
      %1225 = vmatmul.mubr.bf16.gmra.mrb[0].mxu0 %v1083
      %v1226 = vpop.f32.mrb[0].mxu0
      %v1227 = vadd.f32 0.0, %v1226
      %v1228 = vpop.f32.mrb[0].mxu0
      %v1229 = vpop.f32.mrb[0].mxu0
      %v1230 = vadd.f32 0.0, %v1229
      %v1231 = vpop.f32.mrb[0].mxu0
      %1232 = vmatprep.mubr.bf16.mxu0 0
      %1233 = vmatmul.mubr.bf16.gmra.mrb[0].mxu0 %v1086
      %v1234 = vpop.f32.mrb[0].mxu0
      %v1235 = vadd.f32 0.0, %v1234
      %v1236 = vpop.f32.mrb[0].mxu0
      %v1237 = vpop.f32.mrb[0].mxu0
      %v1238 = vadd.f32 0.0, %v1237
      %v1239 = vpop.f32.mrb[0].mxu0
      %1240 = vmatprep.mubr.bf16.mxu0 0
      %1241 = vmatmul.mubr.bf16.gmra.mrb[0].mxu0 %v1089
      %v1242 = vpop.f32.mrb[0].mxu0
      %v1243 = vadd.f32 0.0, %v1242
      %v1244 = vpop.f32.mrb[0].mxu0
      %v1245 = vpop.f32.mrb[0].mxu0
      %v1246 = vadd.f32 0.0, %v1245
      %v1247 = vpop.f32.mrb[0].mxu0
      %1248 = vmatprep.mubr.bf16.mxu0 0
      %1249 = vmatmul.mubr.bf16.gmra.mrb[0].mxu0 %v1092
      %v1250 = vpop.f32.mrb[0].mxu0
      %v1251 = vadd.f32 0.0, %v1250
      %v1252 = vpop.f32.mrb[0].mxu0
      %v1253 = vpop.f32.mrb[0].mxu0
      %v1254 = vadd.f32 0.0, %v1253
      %v1255 = vpop.f32.mrb[0].mxu0
      %1256 = vmatprep.mubr.bf16.mxu0 0
      %1257 = vmatmul.mubr.bf16.gmra.mrb[0].mxu0 %v1095
      %v1258 = vpop.f32.mrb[0].mxu0
      %v1259 = vadd.f32 0.0, %v1258
      %v1260 = vpop.f32.mrb[0].mxu0
      %v1261 = vpop.f32.mrb[0].mxu0
      %v1262 = vadd.f32 0.0, %v1261
      %v1263 = vpop.f32.mrb[0].mxu0
      %1264 = vmatprep.mubr.bf16.mxu0 0
      %1265 = vmatmul.mubr.bf16.gmra.mrb[0].mxu0 %v1098
      %v1266 = vpop.f32.mrb[0].mxu0
      %v1267 = vadd.f32 0.0, %v1266
      %v1268 = vpop.f32.mrb[0].mxu0
      %v1269 = vpop.f32.mrb[0].mxu0
      %v1270 = vadd.f32 0.0, %v1269
      %v1271 = vpop.f32.mrb[0].mxu0
      %1272 = vmatprep.mubr.bf16.mxu0 0
      %1273 = vmatmul.mubr.bf16.gmra.mrb[0].mxu0 %v1101
      %v1274 = vpop.f32.mrb[0].mxu0
      %v1275 = vadd.f32 0.0, %v1274
      %v1276 = vpop.f32.mrb[0].mxu0
      %v1277 = vpop.f32.mrb[0].mxu0
      %v1278 = vadd.f32 0.0, %v1277
      %v1279 = vpop.f32.mrb[0].mxu0
      %1280 = vmatprep.mubr.bf16.mxu0 0
      %1281 = vmatmul.mubr.bf16.gmra.mrb[0].mxu0 %v1104
      %v1282 = vpop.f32.mrb[0].mxu0
      %v1283 = vadd.f32 0.0, %v1282
      %v1284 = vpop.f32.mrb[0].mxu0
      %v1285 = vpop.f32.mrb[0].mxu0
      %v1286 = vadd.f32 0.0, %v1285
      %v1287 = vpop.f32.mrb[0].mxu0
      %1288 = vmatprep.mubr.bf16.mxu0 0
      %1289 = vmatmul.mubr.bf16.gmra.mrb[0].mxu0 %v1107
      %v1290 = vpop.f32.mrb[0].mxu0
      %v1291 = vadd.f32 0.0, %v1290
      %v1292 = vpop.f32.mrb[0].mxu0
      %v1293 = vpop.f32.mrb[0].mxu0
      %v1294 = vadd.f32 0.0, %v1293
      %v1295 = vpop.f32.mrb[0].mxu0
      %1296 = vdwg.mxu0
      %v1297 = vadd.f32 %v845, %v1147
      %v1298 = vadd.f32 %v848, %v1150
      %v1299 = vadd.f32 %v853, %v1155
      %v1300 = vadd.f32 %v856, %v1158
      %v1301 = vadd.f32 %v861, %v1163
      %v1302 = vadd.f32 %v864, %v1166
      %v1303 = vadd.f32 %v869, %v1171
      %v1304 = vadd.f32 %v872, %v1174
      %v1305 = vadd.f32 %v877, %v1179
      %v1306 = vadd.f32 %v880, %v1182
      %v1307 = vadd.f32 %v885, %v1187
      %v1308 = vadd.f32 %v888, %v1190
      %v1309 = vadd.f32 %v893, %v1195
      %v1310 = vadd.f32 %v896, %v1198
      %v1311 = vadd.f32 %v901, %v1203
      %v1312 = vadd.f32 %v904, %v1206
      %v1313 = vadd.f32 %v909, %v1211
      %v1314 = vadd.f32 %v912, %v1214
      %v1315 = vadd.f32 %v917, %v1219
      %v1316 = vadd.f32 %v920, %v1222
      %v1317 = vadd.f32 %v925, %v1227
      %v1318 = vadd.f32 %v928, %v1230
      %v1319 = vadd.f32 %v933, %v1235
      %v1320 = vadd.f32 %v936, %v1238
      %v1321 = vadd.f32 %v941, %v1243
      %v1322 = vadd.f32 %v944, %v1246
      %v1323 = vadd.f32 %v949, %v1251
      %v1324 = vadd.f32 %v952, %v1254
      %v1325 = vadd.f32 %v957, %v1259
      %v1326 = vadd.f32 %v960, %v1262
      %v1327 = vadd.f32 %v965, %v1267
      %v1328 = vadd.f32 %v968, %v1270
      %v1329 = vadd.f32 %v973, %v1275
      %v1330 = vadd.f32 %v976, %v1278
      %v1331 = vadd.f32 %v981, %v1283
      %v1332 = vadd.f32 %v984, %v1286
      %v1333 = vadd.f32 %v989, %v1291
      %v1334 = vadd.f32 %v992, %v1294
      %v1335 = vld [vmem:[%s300 + $0x2f] sm:$0xff]
      %v1336 = vld [vmem:[%s300 + $0x37] sm:$0xff]
      %v1337 = vld [vmem:[%s300 + $0x3f] sm:$0xff]
      %v1338 = vld [vmem:[%s300 + $0x47] sm:$0xff]
      %v1339 = vld [vmem:[%s300 + $0x4f] sm:$0xff]
      %v1340 = vld [vmem:[%s300 + $0x57] sm:$0xff]
      %v1341 = vld [vmem:[%s300 + $0x5f] sm:$0xff]
      %v1342 = vld [vmem:[%s300 + $0x67] sm:$0xff]
      %v1343 = vld [vmem:[%s300 + $0x6f] sm:$0xff]
      %v1344 = vld [vmem:[%s300 + $0x77] sm:$0xff]
      %v1345 = vld [vmem:[%s300 + $0x7f] sm:$0xff]
      %v1346 = vld [vmem:[%s300 + $0x87] sm:$0xff]
      %v1347 = vld [vmem:[%s300 + $0x8f] sm:$0xff]
      %v1348 = vld [vmem:[%s300 + $0x97] sm:$0xff]
      %v1349 = vld [vmem:[%s300 + $0x9f] sm:$0xff]
      %v1350 = vld [vmem:[%s300 + $0xa7] sm:$0xff]
      %v1351 = vld [vmem:[%s300 + $0xaf] sm:$0xff]
      %v1352 = vld [vmem:[%s300 + $0xb7] sm:$0xff]
      %v1353 = vld [vmem:[%s300 + $0xbf] sm:$0xff]
      %v1354 = vld [vmem:[%s300 + $0xc7] sm:$0xff]
      %v1355 = vld [vmem:[%s300 + $0xcf] sm:$0xff]
      %v1356 = vld [vmem:[%s300 + $0xd7] sm:$0xff]
      %v1357 = vld [vmem:[%s300 + $0xdf] sm:$0xff]
      %v1358 = vld [vmem:[%s300 + $0xe7] sm:$0xff]
      %v1359 = vld [vmem:[%s300 + $0xef] sm:$0xff]
      %v1360 = vld [vmem:[%s300 + $0xf7] sm:$0xff]
      %v1361 = vld [vmem:[%s300 + $0xff] sm:$0xff]
      %v1362 = vld [vmem:[%s300 + $0x107] sm:$0xff]
      %v1363 = vld [vmem:[%s300 + $0x10f] sm:$0xff]
      %v1364 = vld [vmem:[%s300 + $0x117] sm:$0xff]
      %v1365 = vld [vmem:[%s300 + $0x11f] sm:$0xff]
      %v1366 = vld [vmem:[%s300 + $0x127] sm:$0xff]
      %v1367 = vld [vmem:[%s300 + $0x12f] sm:$0xff]
      %v1368 = vld [vmem:[%s300 + $0x137] sm:$0xff]
      %v1369 = vld [vmem:[%s300 + $0x13f] sm:$0xff]
      %v1370 = vld [vmem:[%s300 + $0x147] sm:$0xff]
      %v1371 = vld [vmem:[%s300 + $0x14f] sm:$0xff]
      %v1372 = vld [vmem:[%s300 + $0x157] sm:$0xff]
      %v1373 = vpack.c.bf16 %v1336, %v1335
      %v1374 = vpack.c.bf16 %v1338, %v1337
      %v1375 = vpack.c.bf16 %v1340, %v1339
      %v1376 = vpack.c.bf16 %v1342, %v1341
      %v1377 = vpack.c.bf16 %v1344, %v1343
      %v1378 = vpack.c.bf16 %v1346, %v1345
      %v1379 = vpack.c.bf16 %v1348, %v1347
      %v1380 = vpack.c.bf16 %v1350, %v1349
      %v1381 = vpack.c.bf16 %v1352, %v1351
      %v1382 = vpack.c.bf16 %v1354, %v1353
      %v1383 = vpack.c.bf16 %v1356, %v1355
      %v1384 = vpack.c.bf16 %v1358, %v1357
      %v1385 = vpack.c.bf16 %v1360, %v1359
      %v1386 = vpack.c.bf16 %v1362, %v1361
      %v1387 = vpack.c.bf16 %v1364, %v1363
      %v1388 = vpack.c.bf16 %v1366, %v1365
      %v1389 = vpack.c.bf16 %v1368, %v1367
      %v1390 = vpack.c.bf16 %v1370, %v1369
      %v1391 = vpack.c.bf16 %v1372, %v1371
      %v1393 = vsel %vm503, %v1373, 0
      %v1396 = vsel %vm503, %v1374, 0
      %v1399 = vsel %vm503, %v1375, 0
      %v1402 = vsel %vm503, %v1376, 0
      %v1405 = vsel %vm503, %v1377, 0
      %v1408 = vsel %vm503, %v1378, 0
      %v1411 = vsel %vm503, %v1379, 0
      %v1414 = vsel %vm503, %v1380, 0
      %v1417 = vsel %vm503, %v1381, 0
      %v1420 = vsel %vm503, %v1382, 0
      %v1423 = vsel %vm503, %v1383, 0
      %v1426 = vsel %vm503, %v1384, 0
      %v1429 = vsel %vm503, %v1385, 0
      %v1432 = vsel %vm503, %v1386, 0
      %v1435 = vsel %vm503, %v1387, 0
      %v1438 = vsel %vm503, %v1388, 0
      %v1441 = vsel %vm503, %v1389, 0
      %v1444 = vsel %vm503, %v1390, 0
      %v1447 = vsel %vm503, %v1391, 0
      %v1450 = vsel %vm561, %v352, 0
      %1452 = vmatprep.subr.bf16.mxu0 0
      %1453 = vmatpush1.bf16.msra.mxu0 %v1450
      %1454 = vmatprep.subr.bf16.mxu0 0
      %1455 = vmatpush1.bf16.msra.mxu0 0
      %1456 = vmatprep.subr.bf16.mxu0 0
      %1457 = vmatpush1.bf16.msra.mxu0 0
      %1458 = vmatprep.subr.bf16.mxu0 0
      %1459 = vmatpush1.bf16.msra.mxu0 0
      %1460 = vmatprep.subr.bf16.mxu0 0
      %1461 = vmatpush1.bf16.msra.mxu0 0
      %1462 = vmatprep.subr.bf16.mxu0 0
      %1463 = vmatpush1.bf16.msra.mxu0 0
      %1464 = vmatprep.subr.bf16.mxu0 0
      %1465 = vmatpush1.bf16.msra.mxu0 0
      %1466 = vmatprep.subr.bf16.mxu0 0
      %1467 = vmatpush1.bf16.msra.mxu0 0
      %1468 = vmatprep.subr.bf16.mxu0 0
      %1469 = vmatpush1.bf16.msra.mxu0 0
      %1470 = vmatprep.subr.bf16.mxu0 0
      %1471 = vmatpush1.bf16.msra.mxu0 0
      %1472 = vmatprep.subr.bf16.mxu0 0
      %1473 = vmatpush1.bf16.msra.mxu0 0
      %1474 = vmatprep.subr.bf16.mxu0 0
      %1475 = vmatpush1.bf16.msra.mxu0 0
      %1476 = vmatprep.subr.bf16.mxu0 0
      %1477 = vmatpush1.bf16.msra.mxu0 0
      %1478 = vmatprep.subr.bf16.mxu0 0
      %1479 = vmatpush1.bf16.msra.mxu0 0
      %1480 = vmatprep.subr.bf16.mxu0 0
      %1481 = vmatpush1.bf16.msra.mxu0 0
      %1482 = vmatprep.subr.bf16.mxu0 0
      %1483 = vmatpush1.bf16.msra.mxu0 0
      %1484 = vmatprep.mubr.bf16.mxu0 0
      %1485 = vmatmul.mubr.bf16.gmra.mrb[0].mxu0 %v1393
      %v1486 = vpop.f32.mrb[0].mxu0
      %v1487 = vadd.f32 0.0, %v1486
      %v1488 = vpop.f32.mrb[0].mxu0
      %v1489 = vpop.f32.mrb[0].mxu0
      %v1490 = vadd.f32 0.0, %v1489
      %v1491 = vpop.f32.mrb[0].mxu0
      %1492 = vmatprep.mubr.bf16.mxu0 0
      %1493 = vmatmul.mubr.bf16.gmra.mrb[0].mxu0 %v1396
      %v1494 = vpop.f32.mrb[0].mxu0
      %v1495 = vadd.f32 0.0, %v1494
      %v1496 = vpop.f32.mrb[0].mxu0
      %v1497 = vpop.f32.mrb[0].mxu0
      %v1498 = vadd.f32 0.0, %v1497
      %v1499 = vpop.f32.mrb[0].mxu0
      %1500 = vmatprep.mubr.bf16.mxu0 0
      %1501 = vmatmul.mubr.bf16.gmra.mrb[0].mxu0 %v1399
      %v1502 = vpop.f32.mrb[0].mxu0
      %v1503 = vadd.f32 0.0, %v1502
      %v1504 = vpop.f32.mrb[0].mxu0
      %v1505 = vpop.f32.mrb[0].mxu0
      %v1506 = vadd.f32 0.0, %v1505
      %v1507 = vpop.f32.mrb[0].mxu0
      %1508 = vmatprep.mubr.bf16.mxu0 0
      %1509 = vmatmul.mubr.bf16.gmra.mrb[0].mxu0 %v1402
      %v1510 = vpop.f32.mrb[0].mxu0
      %v1511 = vadd.f32 0.0, %v1510
      %v1512 = vpop.f32.mrb[0].mxu0
      %v1513 = vpop.f32.mrb[0].mxu0
      %v1514 = vadd.f32 0.0, %v1513
      %v1515 = vpop.f32.mrb[0].mxu0
      %1516 = vmatprep.mubr.bf16.mxu0 0
      %1517 = vmatmul.mubr.bf16.gmra.mrb[0].mxu0 %v1405
      %v1518 = vpop.f32.mrb[0].mxu0
      %v1519 = vadd.f32 0.0, %v1518
      %v1520 = vpop.f32.mrb[0].mxu0
      %v1521 = vpop.f32.mrb[0].mxu0
      %v1522 = vadd.f32 0.0, %v1521
      %v1523 = vpop.f32.mrb[0].mxu0
      %1524 = vmatprep.mubr.bf16.mxu0 0
      %1525 = vmatmul.mubr.bf16.gmra.mrb[0].mxu0 %v1408
      %v1526 = vpop.f32.mrb[0].mxu0
      %v1527 = vadd.f32 0.0, %v1526
      %v1528 = vpop.f32.mrb[0].mxu0
      %v1529 = vpop.f32.mrb[0].mxu0
      %v1530 = vadd.f32 0.0, %v1529
      %v1531 = vpop.f32.mrb[0].mxu0
      %1532 = vmatprep.mubr.bf16.mxu0 0
      %1533 = vmatmul.mubr.bf16.gmra.mrb[0].mxu0 %v1411
      %v1534 = vpop.f32.mrb[0].mxu0
      %v1535 = vadd.f32 0.0, %v1534
      %v1536 = vpop.f32.mrb[0].mxu0
      %v1537 = vpop.f32.mrb[0].mxu0
      %v1538 = vadd.f32 0.0, %v1537
      %v1539 = vpop.f32.mrb[0].mxu0
      %1540 = vmatprep.mubr.bf16.mxu0 0
      %1541 = vmatmul.mubr.bf16.gmra.mrb[0].mxu0 %v1414
      %v1542 = vpop.f32.mrb[0].mxu0
      %v1543 = vadd.f32 0.0, %v1542
      %v1544 = vpop.f32.mrb[0].mxu0
      %v1545 = vpop.f32.mrb[0].mxu0
      %v1546 = vadd.f32 0.0, %v1545
      %v1547 = vpop.f32.mrb[0].mxu0
      %1548 = vmatprep.mubr.bf16.mxu0 0
      %1549 = vmatmul.mubr.bf16.gmra.mrb[0].mxu0 %v1417
      %v1550 = vpop.f32.mrb[0].mxu0
      %v1551 = vadd.f32 0.0, %v1550
      %v1552 = vpop.f32.mrb[0].mxu0
      %v1553 = vpop.f32.mrb[0].mxu0
      %v1554 = vadd.f32 0.0, %v1553
      %v1555 = vpop.f32.mrb[0].mxu0
      %1556 = vmatprep.mubr.bf16.mxu0 0
      %1557 = vmatmul.mubr.bf16.gmra.mrb[0].mxu0 %v1420
      %v1558 = vpop.f32.mrb[0].mxu0
      %v1559 = vadd.f32 0.0, %v1558
      %v1560 = vpop.f32.mrb[0].mxu0
      %v1561 = vpop.f32.mrb[0].mxu0
      %v1562 = vadd.f32 0.0, %v1561
      %v1563 = vpop.f32.mrb[0].mxu0
      %1564 = vmatprep.mubr.bf16.mxu0 0
      %1565 = vmatmul.mubr.bf16.gmra.mrb[0].mxu0 %v1423
      %v1566 = vpop.f32.mrb[0].mxu0
      %v1567 = vadd.f32 0.0, %v1566
      %v1568 = vpop.f32.mrb[0].mxu0
      %v1569 = vpop.f32.mrb[0].mxu0
      %v1570 = vadd.f32 0.0, %v1569
      %v1571 = vpop.f32.mrb[0].mxu0
      %1572 = vmatprep.mubr.bf16.mxu0 0
      %1573 = vmatmul.mubr.bf16.gmra.mrb[0].mxu0 %v1426
      %v1574 = vpop.f32.mrb[0].mxu0
      %v1575 = vadd.f32 0.0, %v1574
      %v1576 = vpop.f32.mrb[0].mxu0
      %v1577 = vpop.f32.mrb[0].mxu0
      %v1578 = vadd.f32 0.0, %v1577
      %v1579 = vpop.f32.mrb[0].mxu0
      %1580 = vmatprep.mubr.bf16.mxu0 0
      %1581 = vmatmul.mubr.bf16.gmra.mrb[0].mxu0 %v1429
      %v1582 = vpop.f32.mrb[0].mxu0
      %v1583 = vadd.f32 0.0, %v1582
      %v1584 = vpop.f32.mrb[0].mxu0
      %v1585 = vpop.f32.mrb[0].mxu0
      %v1586 = vadd.f32 0.0, %v1585
      %v1587 = vpop.f32.mrb[0].mxu0
      %1588 = vmatprep.mubr.bf16.mxu0 0
      %1589 = vmatmul.mubr.bf16.gmra.mrb[0].mxu0 %v1432
      %v1590 = vpop.f32.mrb[0].mxu0
      %v1591 = vadd.f32 0.0, %v1590
      %v1592 = vpop.f32.mrb[0].mxu0
      %v1593 = vpop.f32.mrb[0].mxu0
      %v1594 = vadd.f32 0.0, %v1593
      %v1595 = vpop.f32.mrb[0].mxu0
      %1596 = vmatprep.mubr.bf16.mxu0 0
      %1597 = vmatmul.mubr.bf16.gmra.mrb[0].mxu0 %v1435
      %v1598 = vpop.f32.mrb[0].mxu0
      %v1599 = vadd.f32 0.0, %v1598
      %v1600 = vpop.f32.mrb[0].mxu0
      %v1601 = vpop.f32.mrb[0].mxu0
      %v1602 = vadd.f32 0.0, %v1601
      %v1603 = vpop.f32.mrb[0].mxu0
      %1604 = vmatprep.mubr.bf16.mxu0 0
      %1605 = vmatmul.mubr.bf16.gmra.mrb[0].mxu0 %v1438
      %v1606 = vpop.f32.mrb[0].mxu0
      %v1607 = vadd.f32 0.0, %v1606
      %v1608 = vpop.f32.mrb[0].mxu0
      %v1609 = vpop.f32.mrb[0].mxu0
      %v1610 = vadd.f32 0.0, %v1609
      %v1611 = vpop.f32.mrb[0].mxu0
      %1612 = vmatprep.mubr.bf16.mxu0 0
      %1613 = vmatmul.mubr.bf16.gmra.mrb[0].mxu0 %v1441
      %v1614 = vpop.f32.mrb[0].mxu0
      %v1615 = vadd.f32 0.0, %v1614
      %v1616 = vpop.f32.mrb[0].mxu0
      %v1617 = vpop.f32.mrb[0].mxu0
      %v1618 = vadd.f32 0.0, %v1617
      %v1619 = vpop.f32.mrb[0].mxu0
      %1620 = vmatprep.mubr.bf16.mxu0 0
      %1621 = vmatmul.mubr.bf16.gmra.mrb[0].mxu0 %v1444
      %v1622 = vpop.f32.mrb[0].mxu0
      %v1623 = vadd.f32 0.0, %v1622
      %v1624 = vpop.f32.mrb[0].mxu0
      %v1625 = vpop.f32.mrb[0].mxu0
      %v1626 = vadd.f32 0.0, %v1625
      %v1627 = vpop.f32.mrb[0].mxu0
      %1628 = vmatprep.mubr.bf16.mxu0 0
      %1629 = vmatmul.mubr.bf16.gmra.mrb[0].mxu0 %v1447
      %v1630 = vpop.f32.mrb[0].mxu0
      %v1631 = vadd.f32 0.0, %v1630
      %v1632 = vpop.f32.mrb[0].mxu0
      %v1633 = vpop.f32.mrb[0].mxu0
      %v1634 = vadd.f32 0.0, %v1633
      %v1635 = vpop.f32.mrb[0].mxu0
      %1636 = vdwg.mxu0
      %v1637 = vadd.f32 %v1297, %v1487
      %v1638 = vadd.f32 %v1298, %v1490
      %v1639 = vadd.f32 %v1299, %v1495
      %v1640 = vadd.f32 %v1300, %v1498
      %v1641 = vadd.f32 %v1301, %v1503
      %v1642 = vadd.f32 %v1302, %v1506
      %v1643 = vadd.f32 %v1303, %v1511
      %v1644 = vadd.f32 %v1304, %v1514
      %v1645 = vadd.f32 %v1305, %v1519
      %v1646 = vadd.f32 %v1306, %v1522
      %v1647 = vadd.f32 %v1307, %v1527
      %v1648 = vadd.f32 %v1308, %v1530
      %v1649 = vadd.f32 %v1309, %v1535
      %v1650 = vadd.f32 %v1310, %v1538
      %v1651 = vadd.f32 %v1311, %v1543
      %v1652 = vadd.f32 %v1312, %v1546
      %v1653 = vadd.f32 %v1313, %v1551
      %v1654 = vadd.f32 %v1314, %v1554
      %v1655 = vadd.f32 %v1315, %v1559
      %v1656 = vadd.f32 %v1316, %v1562
      %v1657 = vadd.f32 %v1317, %v1567
      %v1658 = vadd.f32 %v1318, %v1570
      %v1659 = vadd.f32 %v1319, %v1575
      %v1660 = vadd.f32 %v1320, %v1578
      %v1661 = vadd.f32 %v1321, %v1583
      %v1662 = vadd.f32 %v1322, %v1586
      %v1663 = vadd.f32 %v1323, %v1591
      %v1664 = vadd.f32 %v1324, %v1594
      %v1665 = vadd.f32 %v1325, %v1599
      %v1666 = vadd.f32 %v1326, %v1602
      %v1667 = vadd.f32 %v1327, %v1607
      %v1668 = vadd.f32 %v1328, %v1610
      %v1669 = vadd.f32 %v1329, %v1615
      %v1670 = vadd.f32 %v1330, %v1618
      %v1671 = vadd.f32 %v1331, %v1623
      %v1672 = vadd.f32 %v1332, %v1626
      %v1673 = vadd.f32 %v1333, %v1631
      %v1674 = vadd.f32 %v1334, %v1634
      %v1675 = vld [vmem:[%s300 + $0x30] sm:$0xff]
      %v1676 = vld [vmem:[%s300 + $0x38] sm:$0xff]
      %v1677 = vld [vmem:[%s300 + $0x40] sm:$0xff]
      %v1678 = vld [vmem:[%s300 + $0x48] sm:$0xff]
      %v1679 = vld [vmem:[%s300 + $0x50] sm:$0xff]
      %v1680 = vld [vmem:[%s300 + $0x58] sm:$0xff]
      %v1681 = vld [vmem:[%s300 + $0x60] sm:$0xff]
      %v1682 = vld [vmem:[%s300 + $0x68] sm:$0xff]
      %v1683 = vld [vmem:[%s300 + $0x70] sm:$0xff]
      %v1684 = vld [vmem:[%s300 + $0x78] sm:$0xff]
      %v1685 = vld [vmem:[%s300 + $0x80] sm:$0xff]
      %v1686 = vld [vmem:[%s300 + $0x88] sm:$0xff]
      %v1687 = vld [vmem:[%s300 + $0x90] sm:$0xff]
      %v1688 = vld [vmem:[%s300 + $0x98] sm:$0xff]
      %v1689 = vld [vmem:[%s300 + $0xa0] sm:$0xff]
      %v1690 = vld [vmem:[%s300 + $0xa8] sm:$0xff]
      %v1691 = vld [vmem:[%s300 + $0xb0] sm:$0xff]
      %v1692 = vld [vmem:[%s300 + $0xb8] sm:$0xff]
      %v1693 = vld [vmem:[%s300 + $0xc0] sm:$0xff]
      %v1694 = vld [vmem:[%s300 + $0xc8] sm:$0xff]
      %v1695 = vld [vmem:[%s300 + $0xd0] sm:$0xff]
      %v1696 = vld [vmem:[%s300 + $0xd8] sm:$0xff]
      %v1697 = vld [vmem:[%s300 + $0xe0] sm:$0xff]
      %v1698 = vld [vmem:[%s300 + $0xe8] sm:$0xff]
      %v1699 = vld [vmem:[%s300 + $0xf0] sm:$0xff]
      %v1700 = vld [vmem:[%s300 + $0xf8] sm:$0xff]
      %v1701 = vld [vmem:[%s300 + $0x100] sm:$0xff]
      %v1702 = vld [vmem:[%s300 + $0x108] sm:$0xff]
      %v1703 = vld [vmem:[%s300 + $0x110] sm:$0xff]
      %v1704 = vld [vmem:[%s300 + $0x118] sm:$0xff]
      %v1705 = vld [vmem:[%s300 + $0x120] sm:$0xff]
      %v1706 = vld [vmem:[%s300 + $0x128] sm:$0xff]
      %v1707 = vld [vmem:[%s300 + $0x130] sm:$0xff]
      %v1708 = vld [vmem:[%s300 + $0x138] sm:$0xff]
      %v1709 = vld [vmem:[%s300 + $0x140] sm:$0xff]
      %v1710 = vld [vmem:[%s300 + $0x148] sm:$0xff]
      %v1711 = vld [vmem:[%s300 + $0x150] sm:$0xff]
      %v1712 = vld [vmem:[%s300 + $0x158] sm:$0xff]
      %v1713 = vpack.c.bf16 %v1676, %v1675
      %v1714 = vpack.c.bf16 %v1678, %v1677
      %v1715 = vpack.c.bf16 %v1680, %v1679
      %v1716 = vpack.c.bf16 %v1682, %v1681
      %v1717 = vpack.c.bf16 %v1684, %v1683
      %v1718 = vpack.c.bf16 %v1686, %v1685
      %v1719 = vpack.c.bf16 %v1688, %v1687
      %v1720 = vpack.c.bf16 %v1690, %v1689
      %v1721 = vpack.c.bf16 %v1692, %v1691
      %v1722 = vpack.c.bf16 %v1694, %v1693
      %v1723 = vpack.c.bf16 %v1696, %v1695
      %v1724 = vpack.c.bf16 %v1698, %v1697
      %v1725 = vpack.c.bf16 %v1700, %v1699
      %v1726 = vpack.c.bf16 %v1702, %v1701
      %v1727 = vpack.c.bf16 %v1704, %v1703
      %v1728 = vpack.c.bf16 %v1706, %v1705
      %v1729 = vpack.c.bf16 %v1708, %v1707
      %v1730 = vpack.c.bf16 %v1710, %v1709
      %v1731 = vpack.c.bf16 %v1712, %v1711
      %v1733 = vsel %vm503, %v1713, 0
      %v1736 = vsel %vm503, %v1714, 0
      %v1739 = vsel %vm503, %v1715, 0
      %v1742 = vsel %vm503, %v1716, 0
      %v1745 = vsel %vm503, %v1717, 0
      %v1748 = vsel %vm503, %v1718, 0
      %v1751 = vsel %vm503, %v1719, 0
      %v1754 = vsel %vm503, %v1720, 0
      %v1757 = vsel %vm503, %v1721, 0
      %v1760 = vsel %vm503, %v1722, 0
      %v1763 = vsel %vm503, %v1723, 0
      %v1766 = vsel %vm503, %v1724, 0
      %v1769 = vsel %vm503, %v1725, 0
      %v1772 = vsel %vm503, %v1726, 0
      %v1775 = vsel %vm503, %v1727, 0
      %v1778 = vsel %vm503, %v1728, 0
      %v1781 = vsel %vm503, %v1729, 0
      %v1784 = vsel %vm503, %v1730, 0
      %v1787 = vsel %vm503, %v1731, 0
      %v1790 = vsel %vm561, %v353, 0
      %1792 = vmatprep.subr.bf16.mxu0 0
      %1793 = vmatpush1.bf16.msra.mxu0 %v1790
      %1794 = vmatprep.subr.bf16.mxu0 0
      %1795 = vmatpush1.bf16.msra.mxu0 0
      %1796 = vmatprep.subr.bf16.mxu0 0
      %1797 = vmatpush1.bf16.msra.mxu0 0
      %1798 = vmatprep.subr.bf16.mxu0 0
      %1799 = vmatpush1.bf16.msra.mxu0 0
      %1800 = vmatprep.subr.bf16.mxu0 0
      %1801 = vmatpush1.bf16.msra.mxu0 0
      %1802 = vmatprep.subr.bf16.mxu0 0
      %1803 = vmatpush1.bf16.msra.mxu0 0
      %1804 = vmatprep.subr.bf16.mxu0 0
      %1805 = vmatpush1.bf16.msra.mxu0 0
      %1806 = vmatprep.subr.bf16.mxu0 0
      %1807 = vmatpush1.bf16.msra.mxu0 0
      %1808 = vmatprep.subr.bf16.mxu0 0
      %1809 = vmatpush1.bf16.msra.mxu0 0
      %1810 = vmatprep.subr.bf16.mxu0 0
      %1811 = vmatpush1.bf16.msra.mxu0 0
      %1812 = vmatprep.subr.bf16.mxu0 0
      %1813 = vmatpush1.bf16.msra.mxu0 0
      %1814 = vmatprep.subr.bf16.mxu0 0
      %1815 = vmatpush1.bf16.msra.mxu0 0
      %1816 = vmatprep.subr.bf16.mxu0 0
      %1817 = vmatpush1.bf16.msra.mxu0 0
      %1818 = vmatprep.subr.bf16.mxu0 0
      %1819 = vmatpush1.bf16.msra.mxu0 0
      %1820 = vmatprep.subr.bf16.mxu0 0
      %1821 = vmatpush1.bf16.msra.mxu0 0
      %1822 = vmatprep.subr.bf16.mxu0 0
      %1823 = vmatpush1.bf16.msra.mxu0 0
      %1824 = vmatprep.mubr.bf16.mxu0 0
      %1825 = vmatmul.mubr.bf16.gmra.mrb[0].mxu0 %v1733
      %v1826 = vpop.f32.mrb[0].mxu0
      %v1827 = vadd.f32 0.0, %v1826
      %v1828 = vpop.f32.mrb[0].mxu0
      %v1829 = vpop.f32.mrb[0].mxu0
      %v1830 = vadd.f32 0.0, %v1829
      %v1831 = vpop.f32.mrb[0].mxu0
      %1832 = vmatprep.mubr.bf16.mxu0 0
      %1833 = vmatmul.mubr.bf16.gmra.mrb[0].mxu0 %v1736
      %v1834 = vpop.f32.mrb[0].mxu0
      %v1835 = vadd.f32 0.0, %v1834
      %v1836 = vpop.f32.mrb[0].mxu0
      %v1837 = vpop.f32.mrb[0].mxu0
      %v1838 = vadd.f32 0.0, %v1837
      %v1839 = vpop.f32.mrb[0].mxu0
      %1840 = vmatprep.mubr.bf16.mxu0 0
      %1841 = vmatmul.mubr.bf16.gmra.mrb[0].mxu0 %v1739
      %v1842 = vpop.f32.mrb[0].mxu0
      %v1843 = vadd.f32 0.0, %v1842
      %v1844 = vpop.f32.mrb[0].mxu0
      %v1845 = vpop.f32.mrb[0].mxu0
      %v1846 = vadd.f32 0.0, %v1845
      %v1847 = vpop.f32.mrb[0].mxu0
      %1848 = vmatprep.mubr.bf16.mxu0 0
      %1849 = vmatmul.mubr.bf16.gmra.mrb[0].mxu0 %v1742
      %v1850 = vpop.f32.mrb[0].mxu0
      %v1851 = vadd.f32 0.0, %v1850
      %v1852 = vpop.f32.mrb[0].mxu0
      %v1853 = vpop.f32.mrb[0].mxu0
      %v1854 = vadd.f32 0.0, %v1853
      %v1855 = vpop.f32.mrb[0].mxu0
      %1856 = vmatprep.mubr.bf16.mxu0 0
      %1857 = vmatmul.mubr.bf16.gmra.mrb[0].mxu0 %v1745
      %v1858 = vpop.f32.mrb[0].mxu0
      %v1859 = vadd.f32 0.0, %v1858
      %v1860 = vpop.f32.mrb[0].mxu0
      %v1861 = vpop.f32.mrb[0].mxu0
      %v1862 = vadd.f32 0.0, %v1861
      %v1863 = vpop.f32.mrb[0].mxu0
      %1864 = vmatprep.mubr.bf16.mxu0 0
      %1865 = vmatmul.mubr.bf16.gmra.mrb[0].mxu0 %v1748
      %v1866 = vpop.f32.mrb[0].mxu0
      %v1867 = vadd.f32 0.0, %v1866
      %v1868 = vpop.f32.mrb[0].mxu0
      %v1869 = vpop.f32.mrb[0].mxu0
      %v1870 = vadd.f32 0.0, %v1869
      %v1871 = vpop.f32.mrb[0].mxu0
      %1872 = vmatprep.mubr.bf16.mxu0 0
      %1873 = vmatmul.mubr.bf16.gmra.mrb[0].mxu0 %v1751
      %v1874 = vpop.f32.mrb[0].mxu0
      %v1875 = vadd.f32 0.0, %v1874
      %v1876 = vpop.f32.mrb[0].mxu0
      %v1877 = vpop.f32.mrb[0].mxu0
      %v1878 = vadd.f32 0.0, %v1877
      %v1879 = vpop.f32.mrb[0].mxu0
      %1880 = vmatprep.mubr.bf16.mxu0 0
      %1881 = vmatmul.mubr.bf16.gmra.mrb[0].mxu0 %v1754
      %v1882 = vpop.f32.mrb[0].mxu0
      %v1883 = vadd.f32 0.0, %v1882
      %v1884 = vpop.f32.mrb[0].mxu0
      %v1885 = vpop.f32.mrb[0].mxu0
      %v1886 = vadd.f32 0.0, %v1885
      %v1887 = vpop.f32.mrb[0].mxu0
      %1888 = vmatprep.mubr.bf16.mxu0 0
      %1889 = vmatmul.mubr.bf16.gmra.mrb[0].mxu0 %v1757
      %v1890 = vpop.f32.mrb[0].mxu0
      %v1891 = vadd.f32 0.0, %v1890
      %v1892 = vpop.f32.mrb[0].mxu0
      %v1893 = vpop.f32.mrb[0].mxu0
      %v1894 = vadd.f32 0.0, %v1893
      %v1895 = vpop.f32.mrb[0].mxu0
      %1896 = vmatprep.mubr.bf16.mxu0 0
      %1897 = vmatmul.mubr.bf16.gmra.mrb[0].mxu0 %v1760
      %v1898 = vpop.f32.mrb[0].mxu0
      %v1899 = vadd.f32 0.0, %v1898
      %v1900 = vpop.f32.mrb[0].mxu0
      %v1901 = vpop.f32.mrb[0].mxu0
      %v1902 = vadd.f32 0.0, %v1901
      %v1903 = vpop.f32.mrb[0].mxu0
      %1904 = vmatprep.mubr.bf16.mxu0 0
      %1905 = vmatmul.mubr.bf16.gmra.mrb[0].mxu0 %v1763
      %v1906 = vpop.f32.mrb[0].mxu0
      %v1907 = vadd.f32 0.0, %v1906
      %v1908 = vpop.f32.mrb[0].mxu0
      %v1909 = vpop.f32.mrb[0].mxu0
      %v1910 = vadd.f32 0.0, %v1909
      %v1911 = vpop.f32.mrb[0].mxu0
      %1912 = vmatprep.mubr.bf16.mxu0 0
      %1913 = vmatmul.mubr.bf16.gmra.mrb[0].mxu0 %v1766
      %v1914 = vpop.f32.mrb[0].mxu0
      %v1915 = vadd.f32 0.0, %v1914
      %v1916 = vpop.f32.mrb[0].mxu0
      %v1917 = vpop.f32.mrb[0].mxu0
      %v1918 = vadd.f32 0.0, %v1917
      %v1919 = vpop.f32.mrb[0].mxu0
      %1920 = vmatprep.mubr.bf16.mxu0 0
      %1921 = vmatmul.mubr.bf16.gmra.mrb[0].mxu0 %v1769
      %v1922 = vpop.f32.mrb[0].mxu0
      %v1923 = vadd.f32 0.0, %v1922
      %v1924 = vpop.f32.mrb[0].mxu0
      %v1925 = vpop.f32.mrb[0].mxu0
      %v1926 = vadd.f32 0.0, %v1925
      %v1927 = vpop.f32.mrb[0].mxu0
      %1928 = vmatprep.mubr.bf16.mxu0 0
      %1929 = vmatmul.mubr.bf16.gmra.mrb[0].mxu0 %v1772
      %v1930 = vpop.f32.mrb[0].mxu0
      %v1931 = vadd.f32 0.0, %v1930
      %v1932 = vpop.f32.mrb[0].mxu0
      %v1933 = vpop.f32.mrb[0].mxu0
      %v1934 = vadd.f32 0.0, %v1933
      %v1935 = vpop.f32.mrb[0].mxu0
      %1936 = vmatprep.mubr.bf16.mxu0 0
      %1937 = vmatmul.mubr.bf16.gmra.mrb[0].mxu0 %v1775
      %v1938 = vpop.f32.mrb[0].mxu0
      %v1939 = vadd.f32 0.0, %v1938
      %v1940 = vpop.f32.mrb[0].mxu0
      %v1941 = vpop.f32.mrb[0].mxu0
      %v1942 = vadd.f32 0.0, %v1941
      %v1943 = vpop.f32.mrb[0].mxu0
      %1944 = vmatprep.mubr.bf16.mxu0 0
      %1945 = vmatmul.mubr.bf16.gmra.mrb[0].mxu0 %v1778
      %v1946 = vpop.f32.mrb[0].mxu0
      %v1947 = vadd.f32 0.0, %v1946
      %v1948 = vpop.f32.mrb[0].mxu0
      %v1949 = vpop.f32.mrb[0].mxu0
      %v1950 = vadd.f32 0.0, %v1949
      %v1951 = vpop.f32.mrb[0].mxu0
      %1952 = vmatprep.mubr.bf16.mxu0 0
      %1953 = vmatmul.mubr.bf16.gmra.mrb[0].mxu0 %v1781
      %v1954 = vpop.f32.mrb[0].mxu0
      %v1955 = vadd.f32 0.0, %v1954
      %v1956 = vpop.f32.mrb[0].mxu0
      %v1957 = vpop.f32.mrb[0].mxu0
      %v1958 = vadd.f32 0.0, %v1957
      %v1959 = vpop.f32.mrb[0].mxu0
      %1960 = vmatprep.mubr.bf16.mxu0 0
      %1961 = vmatmul.mubr.bf16.gmra.mrb[0].mxu0 %v1784
      %v1962 = vpop.f32.mrb[0].mxu0
      %v1963 = vadd.f32 0.0, %v1962
      %v1964 = vpop.f32.mrb[0].mxu0
      %v1965 = vpop.f32.mrb[0].mxu0
      %v1966 = vadd.f32 0.0, %v1965
      %v1967 = vpop.f32.mrb[0].mxu0
      %1968 = vmatprep.mubr.bf16.mxu0 0
      %1969 = vmatmul.mubr.bf16.gmra.mrb[0].mxu0 %v1787
      %v1970 = vpop.f32.mrb[0].mxu0
      %v1971 = vadd.f32 0.0, %v1970
      %v1972 = vpop.f32.mrb[0].mxu0
      %v1973 = vpop.f32.mrb[0].mxu0
      %v1974 = vadd.f32 0.0, %v1973
      %v1975 = vpop.f32.mrb[0].mxu0
      %1976 = vdwg.mxu0
      %v1977 = vadd.f32 %v1637, %v1827
      %v1978 = vadd.f32 %v1638, %v1830
      %v1979 = vadd.f32 %v1639, %v1835
      %v1980 = vadd.f32 %v1640, %v1838
      %v1981 = vadd.f32 %v1641, %v1843
      %v1982 = vadd.f32 %v1642, %v1846
      %v1983 = vadd.f32 %v1643, %v1851
      %v1984 = vadd.f32 %v1644, %v1854
      %v1985 = vadd.f32 %v1645, %v1859
      %v1986 = vadd.f32 %v1646, %v1862
      %v1987 = vadd.f32 %v1647, %v1867
      %v1988 = vadd.f32 %v1648, %v1870
      %v1989 = vadd.f32 %v1649, %v1875
      %v1990 = vadd.f32 %v1650, %v1878
      %v1991 = vadd.f32 %v1651, %v1883
      %v1992 = vadd.f32 %v1652, %v1886
      %v1993 = vadd.f32 %v1653, %v1891
      %v1994 = vadd.f32 %v1654, %v1894
      %v1995 = vadd.f32 %v1655, %v1899
      %v1996 = vadd.f32 %v1656, %v1902
      %v1997 = vadd.f32 %v1657, %v1907
      %v1998 = vadd.f32 %v1658, %v1910
      %v1999 = vadd.f32 %v1659, %v1915
      %v2000 = vadd.f32 %v1660, %v1918
      %v2001 = vadd.f32 %v1661, %v1923
      %v2002 = vadd.f32 %v1662, %v1926
      %v2003 = vadd.f32 %v1663, %v1931
      %v2004 = vadd.f32 %v1664, %v1934
      %v2005 = vadd.f32 %v1665, %v1939
      %v2006 = vadd.f32 %v1666, %v1942
      %v2007 = vadd.f32 %v1667, %v1947
      %v2008 = vadd.f32 %v1668, %v1950
      %v2009 = vadd.f32 %v1669, %v1955
      %v2010 = vadd.f32 %v1670, %v1958
      %v2011 = vadd.f32 %v1671, %v1963
      %v2012 = vadd.f32 %v1672, %v1966
      %v2013 = vadd.f32 %v1673, %v1971
      %v2014 = vadd.f32 %v1674, %v1974
      %v2015 = vld [vmem:[%s300 + $0x31] sm:$0xff]
      %v2016 = vld [vmem:[%s300 + $0x39] sm:$0xff]
      %v2017 = vld [vmem:[%s300 + $0x41] sm:$0xff]
      %v2018 = vld [vmem:[%s300 + $0x49] sm:$0xff]
      %v2019 = vld [vmem:[%s300 + $0x51] sm:$0xff]
      %v2020 = vld [vmem:[%s300 + $0x59] sm:$0xff]
      %v2021 = vld [vmem:[%s300 + $0x61] sm:$0xff]
      %v2022 = vld [vmem:[%s300 + $0x69] sm:$0xff]
      %v2023 = vld [vmem:[%s300 + $0x71] sm:$0xff]
      %v2024 = vld [vmem:[%s300 + $0x79] sm:$0xff]
      %v2025 = vld [vmem:[%s300 + $0x81] sm:$0xff]
      %v2026 = vld [vmem:[%s300 + $0x89] sm:$0xff]
      %v2027 = vld [vmem:[%s300 + $0x91] sm:$0xff]
      %v2028 = vld [vmem:[%s300 + $0x99] sm:$0xff]
      %v2029 = vld [vmem:[%s300 + $0xa1] sm:$0xff]
      %v2030 = vld [vmem:[%s300 + $0xa9] sm:$0xff]
      %v2031 = vld [vmem:[%s300 + $0xb1] sm:$0xff]
      %v2032 = vld [vmem:[%s300 + $0xb9] sm:$0xff]
      %v2033 = vld [vmem:[%s300 + $0xc1] sm:$0xff]
      %v2034 = vld [vmem:[%s300 + $0xc9] sm:$0xff]
      %v2035 = vld [vmem:[%s300 + $0xd1] sm:$0xff]
      %v2036 = vld [vmem:[%s300 + $0xd9] sm:$0xff]
      %v2037 = vld [vmem:[%s300 + $0xe1] sm:$0xff]
      %v2038 = vld [vmem:[%s300 + $0xe9] sm:$0xff]
      %v2039 = vld [vmem:[%s300 + $0xf1] sm:$0xff]
      %v2040 = vld [vmem:[%s300 + $0xf9] sm:$0xff]
      %v2041 = vld [vmem:[%s300 + $0x101] sm:$0xff]
      %v2042 = vld [vmem:[%s300 + $0x109] sm:$0xff]
      %v2043 = vld [vmem:[%s300 + $0x111] sm:$0xff]
      %v2044 = vld [vmem:[%s300 + $0x119] sm:$0xff]
      %v2045 = vld [vmem:[%s300 + $0x121] sm:$0xff]
      %v2046 = vld [vmem:[%s300 + $0x129] sm:$0xff]
      %v2047 = vld [vmem:[%s300 + $0x131] sm:$0xff]
      %v2048 = vld [vmem:[%s300 + $0x139] sm:$0xff]
      %v2049 = vld [vmem:[%s300 + $0x141] sm:$0xff]
      %v2050 = vld [vmem:[%s300 + $0x149] sm:$0xff]
      %v2051 = vld [vmem:[%s300 + $0x151] sm:$0xff]
      %v2052 = vld [vmem:[%s300 + $0x159] sm:$0xff]
      %v2053 = vpack.c.bf16 %v2016, %v2015
      %v2054 = vpack.c.bf16 %v2018, %v2017
      %v2055 = vpack.c.bf16 %v2020, %v2019
      %v2056 = vpack.c.bf16 %v2022, %v2021
      %v2057 = vpack.c.bf16 %v2024, %v2023
      %v2058 = vpack.c.bf16 %v2026, %v2025
      %v2059 = vpack.c.bf16 %v2028, %v2027
      %v2060 = vpack.c.bf16 %v2030, %v2029
      %v2061 = vpack.c.bf16 %v2032, %v2031
      %v2062 = vpack.c.bf16 %v2034, %v2033
      %v2063 = vpack.c.bf16 %v2036, %v2035
      %v2064 = vpack.c.bf16 %v2038, %v2037
      %v2065 = vpack.c.bf16 %v2040, %v2039
      %v2066 = vpack.c.bf16 %v2042, %v2041
      %v2067 = vpack.c.bf16 %v2044, %v2043
      %v2068 = vpack.c.bf16 %v2046, %v2045
      %v2069 = vpack.c.bf16 %v2048, %v2047
      %v2070 = vpack.c.bf16 %v2050, %v2049
      %v2071 = vpack.c.bf16 %v2052, %v2051
      %v2073 = vsel %vm503, %v2053, 0
      %v2076 = vsel %vm503, %v2054, 0
      %v2079 = vsel %vm503, %v2055, 0
      %v2082 = vsel %vm503, %v2056, 0
      %v2085 = vsel %vm503, %v2057, 0
      %v2088 = vsel %vm503, %v2058, 0
      %v2091 = vsel %vm503, %v2059, 0
      %v2094 = vsel %vm503, %v2060, 0
      %v2097 = vsel %vm503, %v2061, 0
      %v2100 = vsel %vm503, %v2062, 0
      %v2103 = vsel %vm503, %v2063, 0
      %v2106 = vsel %vm503, %v2064, 0
      %v2109 = vsel %vm503, %v2065, 0
      %v2112 = vsel %vm503, %v2066, 0
      %v2115 = vsel %vm503, %v2067, 0
      %v2118 = vsel %vm503, %v2068, 0
      %v2121 = vsel %vm503, %v2069, 0
      %v2124 = vsel %vm503, %v2070, 0
      %v2127 = vsel %vm503, %v2071, 0
      %v2130 = vsel %vm561, %v354, 0
      %2132 = vmatprep.subr.bf16.mxu0 0
      %2133 = vmatpush1.bf16.msra.mxu0 %v2130
      %2134 = vmatprep.subr.bf16.mxu0 0
      %2135 = vmatpush1.bf16.msra.mxu0 0
      %2136 = vmatprep.subr.bf16.mxu0 0
      %2137 = vmatpush1.bf16.msra.mxu0 0
      %2138 = vmatprep.subr.bf16.mxu0 0
      %2139 = vmatpush1.bf16.msra.mxu0 0
      %2140 = vmatprep.subr.bf16.mxu0 0
      %2141 = vmatpush1.bf16.msra.mxu0 0
      %2142 = vmatprep.subr.bf16.mxu0 0
      %2143 = vmatpush1.bf16.msra.mxu0 0
      %2144 = vmatprep.subr.bf16.mxu0 0
      %2145 = vmatpush1.bf16.msra.mxu0 0
      %2146 = vmatprep.subr.bf16.mxu0 0
      %2147 = vmatpush1.bf16.msra.mxu0 0
      %2148 = vmatprep.subr.bf16.mxu0 0
      %2149 = vmatpush1.bf16.msra.mxu0 0
      %2150 = vmatprep.subr.bf16.mxu0 0
      %2151 = vmatpush1.bf16.msra.mxu0 0
      %2152 = vmatprep.subr.bf16.mxu0 0
      %2153 = vmatpush1.bf16.msra.mxu0 0
      %2154 = vmatprep.subr.bf16.mxu0 0
      %2155 = vmatpush1.bf16.msra.mxu0 0
      %2156 = vmatprep.subr.bf16.mxu0 0
      %2157 = vmatpush1.bf16.msra.mxu0 0
      %2158 = vmatprep.subr.bf16.mxu0 0
      %2159 = vmatpush1.bf16.msra.mxu0 0
      %2160 = vmatprep.subr.bf16.mxu0 0
      %2161 = vmatpush1.bf16.msra.mxu0 0
      %2162 = vmatprep.subr.bf16.mxu0 0
      %2163 = vmatpush1.bf16.msra.mxu0 0
      %2164 = vmatprep.mubr.bf16.mxu0 0
      %2165 = vmatmul.mubr.bf16.gmra.mrb[0].mxu0 %v2073
      %v2166 = vpop.f32.mrb[0].mxu0
      %v2167 = vadd.f32 0.0, %v2166
      %v2168 = vpop.f32.mrb[0].mxu0
      %v2169 = vpop.f32.mrb[0].mxu0
      %v2170 = vadd.f32 0.0, %v2169
      %v2171 = vpop.f32.mrb[0].mxu0
      %2172 = vmatprep.mubr.bf16.mxu0 0
      %2173 = vmatmul.mubr.bf16.gmra.mrb[0].mxu0 %v2076
      %v2174 = vpop.f32.mrb[0].mxu0
      %v2175 = vadd.f32 0.0, %v2174
      %v2176 = vpop.f32.mrb[0].mxu0
      %v2177 = vpop.f32.mrb[0].mxu0
      %v2178 = vadd.f32 0.0, %v2177
      %v2179 = vpop.f32.mrb[0].mxu0
      %2180 = vmatprep.mubr.bf16.mxu0 0
      %2181 = vmatmul.mubr.bf16.gmra.mrb[0].mxu0 %v2079
      %v2182 = vpop.f32.mrb[0].mxu0
      %v2183 = vadd.f32 0.0, %v2182
      %v2184 = vpop.f32.mrb[0].mxu0
      %v2185 = vpop.f32.mrb[0].mxu0
      %v2186 = vadd.f32 0.0, %v2185
      %v2187 = vpop.f32.mrb[0].mxu0
      %2188 = vmatprep.mubr.bf16.mxu0 0
      %2189 = vmatmul.mubr.bf16.gmra.mrb[0].mxu0 %v2082
      %v2190 = vpop.f32.mrb[0].mxu0
      %v2191 = vadd.f32 0.0, %v2190
      %v2192 = vpop.f32.mrb[0].mxu0
      %v2193 = vpop.f32.mrb[0].mxu0
      %v2194 = vadd.f32 0.0, %v2193
      %v2195 = vpop.f32.mrb[0].mxu0
      %2196 = vmatprep.mubr.bf16.mxu0 0
      %2197 = vmatmul.mubr.bf16.gmra.mrb[0].mxu0 %v2085
      %v2198 = vpop.f32.mrb[0].mxu0
      %v2199 = vadd.f32 0.0, %v2198
      %v2200 = vpop.f32.mrb[0].mxu0
      %v2201 = vpop.f32.mrb[0].mxu0
      %v2202 = vadd.f32 0.0, %v2201
      %v2203 = vpop.f32.mrb[0].mxu0
      %2204 = vmatprep.mubr.bf16.mxu0 0
      %2205 = vmatmul.mubr.bf16.gmra.mrb[0].mxu0 %v2088
      %v2206 = vpop.f32.mrb[0].mxu0
      %v2207 = vadd.f32 0.0, %v2206
      %v2208 = vpop.f32.mrb[0].mxu0
      %v2209 = vpop.f32.mrb[0].mxu0
      %v2210 = vadd.f32 0.0, %v2209
      %v2211 = vpop.f32.mrb[0].mxu0
      %2212 = vmatprep.mubr.bf16.mxu0 0
      %2213 = vmatmul.mubr.bf16.gmra.mrb[0].mxu0 %v2091
      %v2214 = vpop.f32.mrb[0].mxu0
      %v2215 = vadd.f32 0.0, %v2214
      %v2216 = vpop.f32.mrb[0].mxu0
      %v2217 = vpop.f32.mrb[0].mxu0
      %v2218 = vadd.f32 0.0, %v2217
      %v2219 = vpop.f32.mrb[0].mxu0
      %2220 = vmatprep.mubr.bf16.mxu0 0
      %2221 = vmatmul.mubr.bf16.gmra.mrb[0].mxu0 %v2094
      %v2222 = vpop.f32.mrb[0].mxu0
      %v2223 = vadd.f32 0.0, %v2222
      %v2224 = vpop.f32.mrb[0].mxu0
      %v2225 = vpop.f32.mrb[0].mxu0
      %v2226 = vadd.f32 0.0, %v2225
      %v2227 = vpop.f32.mrb[0].mxu0
      %2228 = vmatprep.mubr.bf16.mxu0 0
      %2229 = vmatmul.mubr.bf16.gmra.mrb[0].mxu0 %v2097
      %v2230 = vpop.f32.mrb[0].mxu0
      %v2231 = vadd.f32 0.0, %v2230
      %v2232 = vpop.f32.mrb[0].mxu0
      %v2233 = vpop.f32.mrb[0].mxu0
      %v2234 = vadd.f32 0.0, %v2233
      %v2235 = vpop.f32.mrb[0].mxu0
      %2236 = vmatprep.mubr.bf16.mxu0 0
      %2237 = vmatmul.mubr.bf16.gmra.mrb[0].mxu0 %v2100
      %v2238 = vpop.f32.mrb[0].mxu0
      %v2239 = vadd.f32 0.0, %v2238
      %v2240 = vpop.f32.mrb[0].mxu0
      %v2241 = vpop.f32.mrb[0].mxu0
      %v2242 = vadd.f32 0.0, %v2241
      %v2243 = vpop.f32.mrb[0].mxu0
      %2244 = vmatprep.mubr.bf16.mxu0 0
      %2245 = vmatmul.mubr.bf16.gmra.mrb[0].mxu0 %v2103
      %v2246 = vpop.f32.mrb[0].mxu0
      %v2247 = vadd.f32 0.0, %v2246
      %v2248 = vpop.f32.mrb[0].mxu0
      %v2249 = vpop.f32.mrb[0].mxu0
      %v2250 = vadd.f32 0.0, %v2249
      %v2251 = vpop.f32.mrb[0].mxu0
      %2252 = vmatprep.mubr.bf16.mxu0 0
      %2253 = vmatmul.mubr.bf16.gmra.mrb[0].mxu0 %v2106
      %v2254 = vpop.f32.mrb[0].mxu0
      %v2255 = vadd.f32 0.0, %v2254
      %v2256 = vpop.f32.mrb[0].mxu0
      %v2257 = vpop.f32.mrb[0].mxu0
      %v2258 = vadd.f32 0.0, %v2257
      %v2259 = vpop.f32.mrb[0].mxu0
      %2260 = vmatprep.mubr.bf16.mxu0 0
      %2261 = vmatmul.mubr.bf16.gmra.mrb[0].mxu0 %v2109
      %v2262 = vpop.f32.mrb[0].mxu0
      %v2263 = vadd.f32 0.0, %v2262
      %v2264 = vpop.f32.mrb[0].mxu0
      %v2265 = vpop.f32.mrb[0].mxu0
      %v2266 = vadd.f32 0.0, %v2265
      %v2267 = vpop.f32.mrb[0].mxu0
      %2268 = vmatprep.mubr.bf16.mxu0 0
      %2269 = vmatmul.mubr.bf16.gmra.mrb[0].mxu0 %v2112
      %v2270 = vpop.f32.mrb[0].mxu0
      %v2271 = vadd.f32 0.0, %v2270
      %v2272 = vpop.f32.mrb[0].mxu0
      %v2273 = vpop.f32.mrb[0].mxu0
      %v2274 = vadd.f32 0.0, %v2273
      %v2275 = vpop.f32.mrb[0].mxu0
      %2276 = vmatprep.mubr.bf16.mxu0 0
      %2277 = vmatmul.mubr.bf16.gmra.mrb[0].mxu0 %v2115
      %v2278 = vpop.f32.mrb[0].mxu0
      %v2279 = vadd.f32 0.0, %v2278
      %v2280 = vpop.f32.mrb[0].mxu0
      %v2281 = vpop.f32.mrb[0].mxu0
      %v2282 = vadd.f32 0.0, %v2281
      %v2283 = vpop.f32.mrb[0].mxu0
      %2284 = vmatprep.mubr.bf16.mxu0 0
      %2285 = vmatmul.mubr.bf16.gmra.mrb[0].mxu0 %v2118
      %v2286 = vpop.f32.mrb[0].mxu0
      %v2287 = vadd.f32 0.0, %v2286
      %v2288 = vpop.f32.mrb[0].mxu0
      %v2289 = vpop.f32.mrb[0].mxu0
      %v2290 = vadd.f32 0.0, %v2289
      %v2291 = vpop.f32.mrb[0].mxu0
      %2292 = vmatprep.mubr.bf16.mxu0 0
      %2293 = vmatmul.mubr.bf16.gmra.mrb[0].mxu0 %v2121
      %v2294 = vpop.f32.mrb[0].mxu0
      %v2295 = vadd.f32 0.0, %v2294
      %v2296 = vpop.f32.mrb[0].mxu0
      %v2297 = vpop.f32.mrb[0].mxu0
      %v2298 = vadd.f32 0.0, %v2297
      %v2299 = vpop.f32.mrb[0].mxu0
      %2300 = vmatprep.mubr.bf16.mxu0 0
      %2301 = vmatmul.mubr.bf16.gmra.mrb[0].mxu0 %v2124
      %v2302 = vpop.f32.mrb[0].mxu0
      %v2303 = vadd.f32 0.0, %v2302
      %v2304 = vpop.f32.mrb[0].mxu0
      %v2305 = vpop.f32.mrb[0].mxu0
      %v2306 = vadd.f32 0.0, %v2305
      %v2307 = vpop.f32.mrb[0].mxu0
      %2308 = vmatprep.mubr.bf16.mxu0 0
      %2309 = vmatmul.mubr.bf16.gmra.mrb[0].mxu0 %v2127
      %v2310 = vpop.f32.mrb[0].mxu0
      %v2311 = vadd.f32 0.0, %v2310
      %v2312 = vpop.f32.mrb[0].mxu0
      %v2313 = vpop.f32.mrb[0].mxu0
      %v2314 = vadd.f32 0.0, %v2313
      %v2315 = vpop.f32.mrb[0].mxu0
      %2316 = vdwg.mxu0
      %v2317 = vadd.f32 %v1977, %v2167
      %v2318 = vadd.f32 %v1978, %v2170
      %v2319 = vadd.f32 %v1979, %v2175
      %v2320 = vadd.f32 %v1980, %v2178
      %v2321 = vadd.f32 %v1981, %v2183
      %v2322 = vadd.f32 %v1982, %v2186
      %v2323 = vadd.f32 %v1983, %v2191
      %v2324 = vadd.f32 %v1984, %v2194
      %v2325 = vadd.f32 %v1985, %v2199
      %v2326 = vadd.f32 %v1986, %v2202
      %v2327 = vadd.f32 %v1987, %v2207
      %v2328 = vadd.f32 %v1988, %v2210
      %v2329 = vadd.f32 %v1989, %v2215
      %v2330 = vadd.f32 %v1990, %v2218
      %v2331 = vadd.f32 %v1991, %v2223
      %v2332 = vadd.f32 %v1992, %v2226
      %v2333 = vadd.f32 %v1993, %v2231
      %v2334 = vadd.f32 %v1994, %v2234
      %v2335 = vadd.f32 %v1995, %v2239
      %v2336 = vadd.f32 %v1996, %v2242
      %v2337 = vadd.f32 %v1997, %v2247
      %v2338 = vadd.f32 %v1998, %v2250
      %v2339 = vadd.f32 %v1999, %v2255
      %v2340 = vadd.f32 %v2000, %v2258
      %v2341 = vadd.f32 %v2001, %v2263
      %v2342 = vadd.f32 %v2002, %v2266
      %v2343 = vadd.f32 %v2003, %v2271
      %v2344 = vadd.f32 %v2004, %v2274
      %v2345 = vadd.f32 %v2005, %v2279
      %v2346 = vadd.f32 %v2006, %v2282
      %v2347 = vadd.f32 %v2007, %v2287
      %v2348 = vadd.f32 %v2008, %v2290
      %v2349 = vadd.f32 %v2009, %v2295
      %v2350 = vadd.f32 %v2010, %v2298
      %v2351 = vadd.f32 %v2011, %v2303
      %v2352 = vadd.f32 %v2012, %v2306
      %v2353 = vadd.f32 %v2013, %v2311
      %v2354 = vadd.f32 %v2014, %v2314
      %v2355 = vld [vmem:[%s300 + $0x41] sm:$0xff]
      %v2356 = vld [vmem:[%s300 + $0x49] sm:$0xff]
      %v2357 = vld [vmem:[%s300 + $0x51] sm:$0xff]
      %v2358 = vld [vmem:[%s300 + $0x59] sm:$0xff]
      %v2359 = vld [vmem:[%s300 + $0x61] sm:$0xff]
      %v2360 = vld [vmem:[%s300 + $0x69] sm:$0xff]
      %v2361 = vld [vmem:[%s300 + $0x71] sm:$0xff]
      %v2362 = vld [vmem:[%s300 + $0x79] sm:$0xff]
      %v2363 = vld [vmem:[%s300 + $0x81] sm:$0xff]
      %v2364 = vld [vmem:[%s300 + $0x89] sm:$0xff]
      %v2365 = vld [vmem:[%s300 + $0x91] sm:$0xff]
      %v2366 = vld [vmem:[%s300 + $0x99] sm:$0xff]
      %v2367 = vld [vmem:[%s300 + $0xa1] sm:$0xff]
      %v2368 = vld [vmem:[%s300 + $0xa9] sm:$0xff]
      %v2369 = vld [vmem:[%s300 + $0xb1] sm:$0xff]
      %v2370 = vld [vmem:[%s300 + $0xb9] sm:$0xff]
      %v2371 = vld [vmem:[%s300 + $0xc1] sm:$0xff]
      %v2372 = vld [vmem:[%s300 + $0xc9] sm:$0xff]
      %v2373 = vld [vmem:[%s300 + $0xd1] sm:$0xff]
      %v2374 = vld [vmem:[%s300 + $0xd9] sm:$0xff]
      %v2375 = vld [vmem:[%s300 + $0xe1] sm:$0xff]
      %v2376 = vld [vmem:[%s300 + $0xe9] sm:$0xff]
      %v2377 = vld [vmem:[%s300 + $0xf1] sm:$0xff]
      %v2378 = vld [vmem:[%s300 + $0xf9] sm:$0xff]
      %v2379 = vld [vmem:[%s300 + $0x101] sm:$0xff]
      %v2380 = vld [vmem:[%s300 + $0x109] sm:$0xff]
      %v2381 = vld [vmem:[%s300 + $0x111] sm:$0xff]
      %v2382 = vld [vmem:[%s300 + $0x119] sm:$0xff]
      %v2383 = vld [vmem:[%s300 + $0x121] sm:$0xff]
      %v2384 = vld [vmem:[%s300 + $0x129] sm:$0xff]
      %v2385 = vld [vmem:[%s300 + $0x131] sm:$0xff]
      %v2386 = vld [vmem:[%s300 + $0x139] sm:$0xff]
      %v2387 = vld [vmem:[%s300 + $0x141] sm:$0xff]
      %v2388 = vld [vmem:[%s300 + $0x149] sm:$0xff]
      %v2389 = vld [vmem:[%s300 + $0x151] sm:$0xff]
      %v2390 = vld [vmem:[%s300 + $0x159] sm:$0xff]
      %v2391 = vld [vmem:[%s300 + $0x161] sm:$0xff]
      %v2392 = vld [vmem:[%s300 + $0x169] sm:$0xff]
      %v2393 = vpack.c.bf16 %v2356, %v2355
      %v2394 = vpack.c.bf16 %v2358, %v2357
      %v2395 = vpack.c.bf16 %v2360, %v2359
      %v2396 = vpack.c.bf16 %v2362, %v2361
      %v2397 = vpack.c.bf16 %v2364, %v2363
      %v2398 = vpack.c.bf16 %v2366, %v2365
      %v2399 = vpack.c.bf16 %v2368, %v2367
      %v2400 = vpack.c.bf16 %v2370, %v2369
      %v2401 = vpack.c.bf16 %v2372, %v2371
      %v2402 = vpack.c.bf16 %v2374, %v2373
      %v2403 = vpack.c.bf16 %v2376, %v2375
      %v2404 = vpack.c.bf16 %v2378, %v2377
      %v2405 = vpack.c.bf16 %v2380, %v2379
      %v2406 = vpack.c.bf16 %v2382, %v2381
      %v2407 = vpack.c.bf16 %v2384, %v2383
      %v2408 = vpack.c.bf16 %v2386, %v2385
      %v2409 = vpack.c.bf16 %v2388, %v2387
      %v2410 = vpack.c.bf16 %v2390, %v2389
      %v2411 = vpack.c.bf16 %v2392, %v2391
      %v2413 = vsel %vm503, %v2393, 0
      %v2416 = vsel %vm503, %v2394, 0
      %v2419 = vsel %vm503, %v2395, 0
      %v2422 = vsel %vm503, %v2396, 0
      %v2425 = vsel %vm503, %v2397, 0
      %v2428 = vsel %vm503, %v2398, 0
      %v2431 = vsel %vm503, %v2399, 0
      %v2434 = vsel %vm503, %v2400, 0
      %v2437 = vsel %vm503, %v2401, 0
      %v2440 = vsel %vm503, %v2402, 0
      %v2443 = vsel %vm503, %v2403, 0
      %v2446 = vsel %vm503, %v2404, 0
      %v2449 = vsel %vm503, %v2405, 0
      %v2452 = vsel %vm503, %v2406, 0
      %v2455 = vsel %vm503, %v2407, 0
      %v2458 = vsel %vm503, %v2408, 0
      %v2461 = vsel %vm503, %v2409, 0
      %v2464 = vsel %vm503, %v2410, 0
      %v2467 = vsel %vm503, %v2411, 0
      %v2470 = vsel %vm561, %v355, 0
      %2472 = vmatprep.subr.bf16.mxu0 0
      %2473 = vmatpush1.bf16.msra.mxu0 %v2470
      %2474 = vmatprep.subr.bf16.mxu0 0
      %2475 = vmatpush1.bf16.msra.mxu0 0
      %2476 = vmatprep.subr.bf16.mxu0 0
      %2477 = vmatpush1.bf16.msra.mxu0 0
      %2478 = vmatprep.subr.bf16.mxu0 0
      %2479 = vmatpush1.bf16.msra.mxu0 0
      %2480 = vmatprep.subr.bf16.mxu0 0
      %2481 = vmatpush1.bf16.msra.mxu0 0
      %2482 = vmatprep.subr.bf16.mxu0 0
      %2483 = vmatpush1.bf16.msra.mxu0 0
      %2484 = vmatprep.subr.bf16.mxu0 0
      %2485 = vmatpush1.bf16.msra.mxu0 0
      %2486 = vmatprep.subr.bf16.mxu0 0
      %2487 = vmatpush1.bf16.msra.mxu0 0
      %2488 = vmatprep.subr.bf16.mxu0 0
      %2489 = vmatpush1.bf16.msra.mxu0 0
      %2490 = vmatprep.subr.bf16.mxu0 0
      %2491 = vmatpush1.bf16.msra.mxu0 0
      %2492 = vmatprep.subr.bf16.mxu0 0
      %2493 = vmatpush1.bf16.msra.mxu0 0
      %2494 = vmatprep.subr.bf16.mxu0 0
      %2495 = vmatpush1.bf16.msra.mxu0 0
      %2496 = vmatprep.subr.bf16.mxu0 0
      %2497 = vmatpush1.bf16.msra.mxu0 0
      %2498 = vmatprep.subr.bf16.mxu0 0
      %2499 = vmatpush1.bf16.msra.mxu0 0
      %2500 = vmatprep.subr.bf16.mxu0 0
      %2501 = vmatpush1.bf16.msra.mxu0 0
      %2502 = vmatprep.subr.bf16.mxu0 0
      %2503 = vmatpush1.bf16.msra.mxu0 0
      %2504 = vmatprep.mubr.bf16.mxu0 0
      %2505 = vmatmul.mubr.bf16.gmra.mrb[0].mxu0 %v2413
      %v2506 = vpop.f32.mrb[0].mxu0
      %v2507 = vadd.f32 0.0, %v2506
      %v2508 = vpop.f32.mrb[0].mxu0
      %v2509 = vpop.f32.mrb[0].mxu0
      %v2510 = vadd.f32 0.0, %v2509
      %v2511 = vpop.f32.mrb[0].mxu0
      %2512 = vmatprep.mubr.bf16.mxu0 0
      %2513 = vmatmul.mubr.bf16.gmra.mrb[0].mxu0 %v2416
      %v2514 = vpop.f32.mrb[0].mxu0
      %v2515 = vadd.f32 0.0, %v2514
      %v2516 = vpop.f32.mrb[0].mxu0
      %v2517 = vpop.f32.mrb[0].mxu0
      %v2518 = vadd.f32 0.0, %v2517
      %v2519 = vpop.f32.mrb[0].mxu0
      %2520 = vmatprep.mubr.bf16.mxu0 0
      %2521 = vmatmul.mubr.bf16.gmra.mrb[0].mxu0 %v2419
      %v2522 = vpop.f32.mrb[0].mxu0
      %v2523 = vadd.f32 0.0, %v2522
      %v2524 = vpop.f32.mrb[0].mxu0
      %v2525 = vpop.f32.mrb[0].mxu0
      %v2526 = vadd.f32 0.0, %v2525
      %v2527 = vpop.f32.mrb[0].mxu0
      %2528 = vmatprep.mubr.bf16.mxu0 0
      %2529 = vmatmul.mubr.bf16.gmra.mrb[0].mxu0 %v2422
      %v2530 = vpop.f32.mrb[0].mxu0
      %v2531 = vadd.f32 0.0, %v2530
      %v2532 = vpop.f32.mrb[0].mxu0
      %v2533 = vpop.f32.mrb[0].mxu0
      %v2534 = vadd.f32 0.0, %v2533
      %v2535 = vpop.f32.mrb[0].mxu0
      %2536 = vmatprep.mubr.bf16.mxu0 0
      %2537 = vmatmul.mubr.bf16.gmra.mrb[0].mxu0 %v2425
      %v2538 = vpop.f32.mrb[0].mxu0
      %v2539 = vadd.f32 0.0, %v2538
      %v2540 = vpop.f32.mrb[0].mxu0
      %v2541 = vpop.f32.mrb[0].mxu0
      %v2542 = vadd.f32 0.0, %v2541
      %v2543 = vpop.f32.mrb[0].mxu0
      %2544 = vmatprep.mubr.bf16.mxu0 0
      %2545 = vmatmul.mubr.bf16.gmra.mrb[0].mxu0 %v2428
      %v2546 = vpop.f32.mrb[0].mxu0
      %v2547 = vadd.f32 0.0, %v2546
      %v2548 = vpop.f32.mrb[0].mxu0
      %v2549 = vpop.f32.mrb[0].mxu0
      %v2550 = vadd.f32 0.0, %v2549
      %v2551 = vpop.f32.mrb[0].mxu0
      %2552 = vmatprep.mubr.bf16.mxu0 0
      %2553 = vmatmul.mubr.bf16.gmra.mrb[0].mxu0 %v2431
      %v2554 = vpop.f32.mrb[0].mxu0
      %v2555 = vadd.f32 0.0, %v2554
      %v2556 = vpop.f32.mrb[0].mxu0
      %v2557 = vpop.f32.mrb[0].mxu0
      %v2558 = vadd.f32 0.0, %v2557
      %v2559 = vpop.f32.mrb[0].mxu0
      %2560 = vmatprep.mubr.bf16.mxu0 0
      %2561 = vmatmul.mubr.bf16.gmra.mrb[0].mxu0 %v2434
      %v2562 = vpop.f32.mrb[0].mxu0
      %v2563 = vadd.f32 0.0, %v2562
      %v2564 = vpop.f32.mrb[0].mxu0
      %v2565 = vpop.f32.mrb[0].mxu0
      %v2566 = vadd.f32 0.0, %v2565
      %v2567 = vpop.f32.mrb[0].mxu0
      %2568 = vmatprep.mubr.bf16.mxu0 0
      %2569 = vmatmul.mubr.bf16.gmra.mrb[0].mxu0 %v2437
      %v2570 = vpop.f32.mrb[0].mxu0
      %v2571 = vadd.f32 0.0, %v2570
      %v2572 = vpop.f32.mrb[0].mxu0
      %v2573 = vpop.f32.mrb[0].mxu0
      %v2574 = vadd.f32 0.0, %v2573
      %v2575 = vpop.f32.mrb[0].mxu0
      %2576 = vmatprep.mubr.bf16.mxu0 0
      %2577 = vmatmul.mubr.bf16.gmra.mrb[0].mxu0 %v2440
      %v2578 = vpop.f32.mrb[0].mxu0
      %v2579 = vadd.f32 0.0, %v2578
      %v2580 = vpop.f32.mrb[0].mxu0
      %v2581 = vpop.f32.mrb[0].mxu0
      %v2582 = vadd.f32 0.0, %v2581
      %v2583 = vpop.f32.mrb[0].mxu0
      %2584 = vmatprep.mubr.bf16.mxu0 0
      %2585 = vmatmul.mubr.bf16.gmra.mrb[0].mxu0 %v2443
      %v2586 = vpop.f32.mrb[0].mxu0
      %v2587 = vadd.f32 0.0, %v2586
      %v2588 = vpop.f32.mrb[0].mxu0
      %v2589 = vpop.f32.mrb[0].mxu0
      %v2590 = vadd.f32 0.0, %v2589
      %v2591 = vpop.f32.mrb[0].mxu0
      %2592 = vmatprep.mubr.bf16.mxu0 0
      %2593 = vmatmul.mubr.bf16.gmra.mrb[0].mxu0 %v2446
      %v2594 = vpop.f32.mrb[0].mxu0
      %v2595 = vadd.f32 0.0, %v2594
      %v2596 = vpop.f32.mrb[0].mxu0
      %v2597 = vpop.f32.mrb[0].mxu0
      %v2598 = vadd.f32 0.0, %v2597
      %v2599 = vpop.f32.mrb[0].mxu0
      %2600 = vmatprep.mubr.bf16.mxu0 0
      %2601 = vmatmul.mubr.bf16.gmra.mrb[0].mxu0 %v2449
      %v2602 = vpop.f32.mrb[0].mxu0
      %v2603 = vadd.f32 0.0, %v2602
      %v2604 = vpop.f32.mrb[0].mxu0
      %v2605 = vpop.f32.mrb[0].mxu0
      %v2606 = vadd.f32 0.0, %v2605
      %v2607 = vpop.f32.mrb[0].mxu0
      %2608 = vmatprep.mubr.bf16.mxu0 0
      %2609 = vmatmul.mubr.bf16.gmra.mrb[0].mxu0 %v2452
      %v2610 = vpop.f32.mrb[0].mxu0
      %v2611 = vadd.f32 0.0, %v2610
      %v2612 = vpop.f32.mrb[0].mxu0
      %v2613 = vpop.f32.mrb[0].mxu0
      %v2614 = vadd.f32 0.0, %v2613
      %v2615 = vpop.f32.mrb[0].mxu0
      %2616 = vmatprep.mubr.bf16.mxu0 0
      %2617 = vmatmul.mubr.bf16.gmra.mrb[0].mxu0 %v2455
      %v2618 = vpop.f32.mrb[0].mxu0
      %v2619 = vadd.f32 0.0, %v2618
      %v2620 = vpop.f32.mrb[0].mxu0
      %v2621 = vpop.f32.mrb[0].mxu0
      %v2622 = vadd.f32 0.0, %v2621
      %v2623 = vpop.f32.mrb[0].mxu0
      %2624 = vmatprep.mubr.bf16.mxu0 0
      %2625 = vmatmul.mubr.bf16.gmra.mrb[0].mxu0 %v2458
      %v2626 = vpop.f32.mrb[0].mxu0
      %v2627 = vadd.f32 0.0, %v2626
      %v2628 = vpop.f32.mrb[0].mxu0
      %v2629 = vpop.f32.mrb[0].mxu0
      %v2630 = vadd.f32 0.0, %v2629
      %v2631 = vpop.f32.mrb[0].mxu0
      %2632 = vmatprep.mubr.bf16.mxu0 0
      %2633 = vmatmul.mubr.bf16.gmra.mrb[0].mxu0 %v2461
      %v2634 = vpop.f32.mrb[0].mxu0
      %v2635 = vadd.f32 0.0, %v2634
      %v2636 = vpop.f32.mrb[0].mxu0
      %v2637 = vpop.f32.mrb[0].mxu0
      %v2638 = vadd.f32 0.0, %v2637
      %v2639 = vpop.f32.mrb[0].mxu0
      %2640 = vmatprep.mubr.bf16.mxu0 0
      %2641 = vmatmul.mubr.bf16.gmra.mrb[0].mxu0 %v2464
      %v2642 = vpop.f32.mrb[0].mxu0
      %v2643 = vadd.f32 0.0, %v2642
      %v2644 = vpop.f32.mrb[0].mxu0
      %v2645 = vpop.f32.mrb[0].mxu0
      %v2646 = vadd.f32 0.0, %v2645
      %v2647 = vpop.f32.mrb[0].mxu0
      %2648 = vmatprep.mubr.bf16.mxu0 0
      %2649 = vmatmul.mubr.bf16.gmra.mrb[0].mxu0 %v2467
      %v2650 = vpop.f32.mrb[0].mxu0
      %v2651 = vadd.f32 0.0, %v2650
      %v2652 = vpop.f32.mrb[0].mxu0
      %v2653 = vpop.f32.mrb[0].mxu0
      %v2654 = vadd.f32 0.0, %v2653
      %v2655 = vpop.f32.mrb[0].mxu0
      %2656 = vdwg.mxu0
      %v2657 = vadd.f32 %v2317, %v2507
      %v2658 = vadd.f32 %v2318, %v2510
      %v2659 = vadd.f32 %v2319, %v2515
      %v2660 = vadd.f32 %v2320, %v2518
      %v2661 = vadd.f32 %v2321, %v2523
      %v2662 = vadd.f32 %v2322, %v2526
      %v2663 = vadd.f32 %v2323, %v2531
      %v2664 = vadd.f32 %v2324, %v2534
      %v2665 = vadd.f32 %v2325, %v2539
      %v2666 = vadd.f32 %v2326, %v2542
      %v2667 = vadd.f32 %v2327, %v2547
      %v2668 = vadd.f32 %v2328, %v2550
      %v2669 = vadd.f32 %v2329, %v2555
      %v2670 = vadd.f32 %v2330, %v2558
      %v2671 = vadd.f32 %v2331, %v2563
      %v2672 = vadd.f32 %v2332, %v2566
      %v2673 = vadd.f32 %v2333, %v2571
      %v2674 = vadd.f32 %v2334, %v2574
      %v2675 = vadd.f32 %v2335, %v2579
      %v2676 = vadd.f32 %v2336, %v2582
      %v2677 = vadd.f32 %v2337, %v2587
      %v2678 = vadd.f32 %v2338, %v2590
      %v2679 = vadd.f32 %v2339, %v2595
      %v2680 = vadd.f32 %v2340, %v2598
      %v2681 = vadd.f32 %v2341, %v2603
      %v2682 = vadd.f32 %v2342, %v2606
      %v2683 = vadd.f32 %v2343, %v2611
      %v2684 = vadd.f32 %v2344, %v2614
      %v2685 = vadd.f32 %v2345, %v2619
      %v2686 = vadd.f32 %v2346, %v2622
      %v2687 = vadd.f32 %v2347, %v2627
      %v2688 = vadd.f32 %v2348, %v2630
      %v2689 = vadd.f32 %v2349, %v2635
      %v2690 = vadd.f32 %v2350, %v2638
      %v2691 = vadd.f32 %v2351, %v2643
      %v2692 = vadd.f32 %v2352, %v2646
      %v2693 = vadd.f32 %v2353, %v2651
      %v2694 = vadd.f32 %v2354, %v2654
      %v2695 = vld [vmem:[%s300 + $0x42] sm:$0xff]
      %v2696 = vld [vmem:[%s300 + $0x4a] sm:$0xff]
      %v2697 = vld [vmem:[%s300 + $0x52] sm:$0xff]
      %v2698 = vld [vmem:[%s300 + $0x5a] sm:$0xff]
      %v2699 = vld [vmem:[%s300 + $0x62] sm:$0xff]
      %v2700 = vld [vmem:[%s300 + $0x6a] sm:$0xff]
      %v2701 = vld [vmem:[%s300 + $0x72] sm:$0xff]
      %v2702 = vld [vmem:[%s300 + $0x7a] sm:$0xff]
      %v2703 = vld [vmem:[%s300 + $0x82] sm:$0xff]
      %v2704 = vld [vmem:[%s300 + $0x8a] sm:$0xff]
      %v2705 = vld [vmem:[%s300 + $0x92] sm:$0xff]
      %v2706 = vld [vmem:[%s300 + $0x9a] sm:$0xff]
      %v2707 = vld [vmem:[%s300 + $0xa2] sm:$0xff]
      %v2708 = vld [vmem:[%s300 + $0xaa] sm:$0xff]
      %v2709 = vld [vmem:[%s300 + $0xb2] sm:$0xff]
      %v2710 = vld [vmem:[%s300 + $0xba] sm:$0xff]
      %v2711 = vld [vmem:[%s300 + $0xc2] sm:$0xff]
      %v2712 = vld [vmem:[%s300 + $0xca] sm:$0xff]
      %v2713 = vld [vmem:[%s300 + $0xd2] sm:$0xff]
      %v2714 = vld [vmem:[%s300 + $0xda] sm:$0xff]
      %v2715 = vld [vmem:[%s300 + $0xe2] sm:$0xff]
      %v2716 = vld [vmem:[%s300 + $0xea] sm:$0xff]
      %v2717 = vld [vmem:[%s300 + $0xf2] sm:$0xff]
      %v2718 = vld [vmem:[%s300 + $0xfa] sm:$0xff]
      %v2719 = vld [vmem:[%s300 + $0x102] sm:$0xff]
      %v2720 = vld [vmem:[%s300 + $0x10a] sm:$0xff]
      %v2721 = vld [vmem:[%s300 + $0x112] sm:$0xff]
      %v2722 = vld [vmem:[%s300 + $0x11a] sm:$0xff]
      %v2723 = vld [vmem:[%s300 + $0x122] sm:$0xff]
      %v2724 = vld [vmem:[%s300 + $0x12a] sm:$0xff]
      %v2725 = vld [vmem:[%s300 + $0x132] sm:$0xff]
      %v2726 = vld [vmem:[%s300 + $0x13a] sm:$0xff]
      %v2727 = vld [vmem:[%s300 + $0x142] sm:$0xff]
      %v2728 = vld [vmem:[%s300 + $0x14a] sm:$0xff]
      %v2729 = vld [vmem:[%s300 + $0x152] sm:$0xff]
      %v2730 = vld [vmem:[%s300 + $0x15a] sm:$0xff]
      %v2731 = vld [vmem:[%s300 + $0x162] sm:$0xff]
      %v2732 = vld [vmem:[%s300 + $0x16a] sm:$0xff]
      %v2733 = vpack.c.bf16 %v2696, %v2695
      %v2734 = vpack.c.bf16 %v2698, %v2697
      %v2735 = vpack.c.bf16 %v2700, %v2699
      %v2736 = vpack.c.bf16 %v2702, %v2701
      %v2737 = vpack.c.bf16 %v2704, %v2703
      %v2738 = vpack.c.bf16 %v2706, %v2705
      %v2739 = vpack.c.bf16 %v2708, %v2707
      %v2740 = vpack.c.bf16 %v2710, %v2709
      %v2741 = vpack.c.bf16 %v2712, %v2711
      %v2742 = vpack.c.bf16 %v2714, %v2713
      %v2743 = vpack.c.bf16 %v2716, %v2715
      %v2744 = vpack.c.bf16 %v2718, %v2717
      %v2745 = vpack.c.bf16 %v2720, %v2719
      %v2746 = vpack.c.bf16 %v2722, %v2721
      %v2747 = vpack.c.bf16 %v2724, %v2723
      %v2748 = vpack.c.bf16 %v2726, %v2725
      %v2749 = vpack.c.bf16 %v2728, %v2727
      %v2750 = vpack.c.bf16 %v2730, %v2729
      %v2751 = vpack.c.bf16 %v2732, %v2731
      %v2753 = vsel %vm503, %v2733, 0
      %v2756 = vsel %vm503, %v2734, 0
      %v2759 = vsel %vm503, %v2735, 0
      %v2762 = vsel %vm503, %v2736, 0
      %v2765 = vsel %vm503, %v2737, 0
      %v2768 = vsel %vm503, %v2738, 0
      %v2771 = vsel %vm503, %v2739, 0
      %v2774 = vsel %vm503, %v2740, 0
      %v2777 = vsel %vm503, %v2741, 0
      %v2780 = vsel %vm503, %v2742, 0
      %v2783 = vsel %vm503, %v2743, 0
      %v2786 = vsel %vm503, %v2744, 0
      %v2789 = vsel %vm503, %v2745, 0
      %v2792 = vsel %vm503, %v2746, 0
      %v2795 = vsel %vm503, %v2747, 0
      %v2798 = vsel %vm503, %v2748, 0
      %v2801 = vsel %vm503, %v2749, 0
      %v2804 = vsel %vm503, %v2750, 0
      %v2807 = vsel %vm503, %v2751, 0
      %v2810 = vsel %vm561, %v356, 0
      %2812 = vmatprep.subr.bf16.mxu0 0
      %2813 = vmatpush1.bf16.msra.mxu0 %v2810
      %2814 = vmatprep.subr.bf16.mxu0 0
      %2815 = vmatpush1.bf16.msra.mxu0 0
      %2816 = vmatprep.subr.bf16.mxu0 0
      %2817 = vmatpush1.bf16.msra.mxu0 0
      %2818 = vmatprep.subr.bf16.mxu0 0
      %2819 = vmatpush1.bf16.msra.mxu0 0
      %2820 = vmatprep.subr.bf16.mxu0 0
      %2821 = vmatpush1.bf16.msra.mxu0 0
      %2822 = vmatprep.subr.bf16.mxu0 0
      %2823 = vmatpush1.bf16.msra.mxu0 0
      %2824 = vmatprep.subr.bf16.mxu0 0
      %2825 = vmatpush1.bf16.msra.mxu0 0
      %2826 = vmatprep.subr.bf16.mxu0 0
      %2827 = vmatpush1.bf16.msra.mxu0 0
      %2828 = vmatprep.subr.bf16.mxu0 0
      %2829 = vmatpush1.bf16.msra.mxu0 0
      %2830 = vmatprep.subr.bf16.mxu0 0
      %2831 = vmatpush1.bf16.msra.mxu0 0
      %2832 = vmatprep.subr.bf16.mxu0 0
      %2833 = vmatpush1.bf16.msra.mxu0 0
      %2834 = vmatprep.subr.bf16.mxu0 0
      %2835 = vmatpush1.bf16.msra.mxu0 0
      %2836 = vmatprep.subr.bf16.mxu0 0
      %2837 = vmatpush1.bf16.msra.mxu0 0
      %2838 = vmatprep.subr.bf16.mxu0 0
      %2839 = vmatpush1.bf16.msra.mxu0 0
      %2840 = vmatprep.subr.bf16.mxu0 0
      %2841 = vmatpush1.bf16.msra.mxu0 0
      %2842 = vmatprep.subr.bf16.mxu0 0
      %2843 = vmatpush1.bf16.msra.mxu0 0
      %2844 = vmatprep.mubr.bf16.mxu0 0
      %2845 = vmatmul.mubr.bf16.gmra.mrb[0].mxu0 %v2753
      %v2846 = vpop.f32.mrb[0].mxu0
      %v2847 = vadd.f32 0.0, %v2846
      %v2848 = vpop.f32.mrb[0].mxu0
      %v2849 = vpop.f32.mrb[0].mxu0
      %v2850 = vadd.f32 0.0, %v2849
      %v2851 = vpop.f32.mrb[0].mxu0
      %2852 = vmatprep.mubr.bf16.mxu0 0
      %2853 = vmatmul.mubr.bf16.gmra.mrb[0].mxu0 %v2756
      %v2854 = vpop.f32.mrb[0].mxu0
      %v2855 = vadd.f32 0.0, %v2854
      %v2856 = vpop.f32.mrb[0].mxu0
      %v2857 = vpop.f32.mrb[0].mxu0
      %v2858 = vadd.f32 0.0, %v2857
      %v2859 = vpop.f32.mrb[0].mxu0
      %2860 = vmatprep.mubr.bf16.mxu0 0
      %2861 = vmatmul.mubr.bf16.gmra.mrb[0].mxu0 %v2759
      %v2862 = vpop.f32.mrb[0].mxu0
      %v2863 = vadd.f32 0.0, %v2862
      %v2864 = vpop.f32.mrb[0].mxu0
      %v2865 = vpop.f32.mrb[0].mxu0
      %v2866 = vadd.f32 0.0, %v2865
      %v2867 = vpop.f32.mrb[0].mxu0
      %2868 = vmatprep.mubr.bf16.mxu0 0
      %2869 = vmatmul.mubr.bf16.gmra.mrb[0].mxu0 %v2762
      %v2870 = vpop.f32.mrb[0].mxu0
      %v2871 = vadd.f32 0.0, %v2870
      %v2872 = vpop.f32.mrb[0].mxu0
      %v2873 = vpop.f32.mrb[0].mxu0
      %v2874 = vadd.f32 0.0, %v2873
      %v2875 = vpop.f32.mrb[0].mxu0
      %2876 = vmatprep.mubr.bf16.mxu0 0
      %2877 = vmatmul.mubr.bf16.gmra.mrb[0].mxu0 %v2765
      %v2878 = vpop.f32.mrb[0].mxu0
      %v2879 = vadd.f32 0.0, %v2878
      %v2880 = vpop.f32.mrb[0].mxu0
      %v2881 = vpop.f32.mrb[0].mxu0
      %v2882 = vadd.f32 0.0, %v2881
      %v2883 = vpop.f32.mrb[0].mxu0
      %2884 = vmatprep.mubr.bf16.mxu0 0
      %2885 = vmatmul.mubr.bf16.gmra.mrb[0].mxu0 %v2768
      %v2886 = vpop.f32.mrb[0].mxu0
      %v2887 = vadd.f32 0.0, %v2886
      %v2888 = vpop.f32.mrb[0].mxu0
      %v2889 = vpop.f32.mrb[0].mxu0
      %v2890 = vadd.f32 0.0, %v2889
      %v2891 = vpop.f32.mrb[0].mxu0
      %2892 = vmatprep.mubr.bf16.mxu0 0
      %2893 = vmatmul.mubr.bf16.gmra.mrb[0].mxu0 %v2771
      %v2894 = vpop.f32.mrb[0].mxu0
      %v2895 = vadd.f32 0.0, %v2894
      %v2896 = vpop.f32.mrb[0].mxu0
      %v2897 = vpop.f32.mrb[0].mxu0
      %v2898 = vadd.f32 0.0, %v2897
      %v2899 = vpop.f32.mrb[0].mxu0
      %2900 = vmatprep.mubr.bf16.mxu0 0
      %2901 = vmatmul.mubr.bf16.gmra.mrb[0].mxu0 %v2774
      %v2902 = vpop.f32.mrb[0].mxu0
      %v2903 = vadd.f32 0.0, %v2902
      %v2904 = vpop.f32.mrb[0].mxu0
      %v2905 = vpop.f32.mrb[0].mxu0
      %v2906 = vadd.f32 0.0, %v2905
      %v2907 = vpop.f32.mrb[0].mxu0
      %2908 = vmatprep.mubr.bf16.mxu0 0
      %2909 = vmatmul.mubr.bf16.gmra.mrb[0].mxu0 %v2777
      %v2910 = vpop.f32.mrb[0].mxu0
      %v2911 = vadd.f32 0.0, %v2910
      %v2912 = vpop.f32.mrb[0].mxu0
      %v2913 = vpop.f32.mrb[0].mxu0
      %v2914 = vadd.f32 0.0, %v2913
      %v2915 = vpop.f32.mrb[0].mxu0
      %2916 = vmatprep.mubr.bf16.mxu0 0
      %2917 = vmatmul.mubr.bf16.gmra.mrb[0].mxu0 %v2780
      %v2918 = vpop.f32.mrb[0].mxu0
      %v2919 = vadd.f32 0.0, %v2918
      %v2920 = vpop.f32.mrb[0].mxu0
      %v2921 = vpop.f32.mrb[0].mxu0
      %v2922 = vadd.f32 0.0, %v2921
      %v2923 = vpop.f32.mrb[0].mxu0
      %2924 = vmatprep.mubr.bf16.mxu0 0
      %2925 = vmatmul.mubr.bf16.gmra.mrb[0].mxu0 %v2783
      %v2926 = vpop.f32.mrb[0].mxu0
      %v2927 = vadd.f32 0.0, %v2926
      %v2928 = vpop.f32.mrb[0].mxu0
      %v2929 = vpop.f32.mrb[0].mxu0
      %v2930 = vadd.f32 0.0, %v2929
      %v2931 = vpop.f32.mrb[0].mxu0
      %2932 = vmatprep.mubr.bf16.mxu0 0
      %2933 = vmatmul.mubr.bf16.gmra.mrb[0].mxu0 %v2786
      %v2934 = vpop.f32.mrb[0].mxu0
      %v2935 = vadd.f32 0.0, %v2934
      %v2936 = vpop.f32.mrb[0].mxu0
      %v2937 = vpop.f32.mrb[0].mxu0
      %v2938 = vadd.f32 0.0, %v2937
      %v2939 = vpop.f32.mrb[0].mxu0
      %2940 = vmatprep.mubr.bf16.mxu0 0
      %2941 = vmatmul.mubr.bf16.gmra.mrb[0].mxu0 %v2789
      %v2942 = vpop.f32.mrb[0].mxu0
      %v2943 = vadd.f32 0.0, %v2942
      %v2944 = vpop.f32.mrb[0].mxu0
      %v2945 = vpop.f32.mrb[0].mxu0
      %v2946 = vadd.f32 0.0, %v2945
      %v2947 = vpop.f32.mrb[0].mxu0
      %2948 = vmatprep.mubr.bf16.mxu0 0
      %2949 = vmatmul.mubr.bf16.gmra.mrb[0].mxu0 %v2792
      %v2950 = vpop.f32.mrb[0].mxu0
      %v2951 = vadd.f32 0.0, %v2950
      %v2952 = vpop.f32.mrb[0].mxu0
      %v2953 = vpop.f32.mrb[0].mxu0
      %v2954 = vadd.f32 0.0, %v2953
      %v2955 = vpop.f32.mrb[0].mxu0
      %2956 = vmatprep.mubr.bf16.mxu0 0
      %2957 = vmatmul.mubr.bf16.gmra.mrb[0].mxu0 %v2795
      %v2958 = vpop.f32.mrb[0].mxu0
      %v2959 = vadd.f32 0.0, %v2958
      %v2960 = vpop.f32.mrb[0].mxu0
      %v2961 = vpop.f32.mrb[0].mxu0
      %v2962 = vadd.f32 0.0, %v2961
      %v2963 = vpop.f32.mrb[0].mxu0
      %2964 = vmatprep.mubr.bf16.mxu0 0
      %2965 = vmatmul.mubr.bf16.gmra.mrb[0].mxu0 %v2798
      %v2966 = vpop.f32.mrb[0].mxu0
      %v2967 = vadd.f32 0.0, %v2966
      %v2968 = vpop.f32.mrb[0].mxu0
      %v2969 = vpop.f32.mrb[0].mxu0
      %v2970 = vadd.f32 0.0, %v2969
      %v2971 = vpop.f32.mrb[0].mxu0
      %2972 = vmatprep.mubr.bf16.mxu0 0
      %2973 = vmatmul.mubr.bf16.gmra.mrb[0].mxu0 %v2801
      %v2974 = vpop.f32.mrb[0].mxu0
      %v2975 = vadd.f32 0.0, %v2974
      %v2976 = vpop.f32.mrb[0].mxu0
      %v2977 = vpop.f32.mrb[0].mxu0
      %v2978 = vadd.f32 0.0, %v2977
      %v2979 = vpop.f32.mrb[0].mxu0
      %2980 = vmatprep.mubr.bf16.mxu0 0
      %2981 = vmatmul.mubr.bf16.gmra.mrb[0].mxu0 %v2804
      %v2982 = vpop.f32.mrb[0].mxu0
      %v2983 = vadd.f32 0.0, %v2982
      %v2984 = vpop.f32.mrb[0].mxu0
      %v2985 = vpop.f32.mrb[0].mxu0
      %v2986 = vadd.f32 0.0, %v2985
      %v2987 = vpop.f32.mrb[0].mxu0
      %2988 = vmatprep.mubr.bf16.mxu0 0
      %2989 = vmatmul.mubr.bf16.gmra.mrb[0].mxu0 %v2807
      %v2990 = vpop.f32.mrb[0].mxu0
      %v2991 = vadd.f32 0.0, %v2990
      %v2992 = vpop.f32.mrb[0].mxu0
      %v2993 = vpop.f32.mrb[0].mxu0
      %v2994 = vadd.f32 0.0, %v2993
      %v2995 = vpop.f32.mrb[0].mxu0
      %2996 = vdwg.mxu0
      %v2997 = vadd.f32 %v2657, %v2847
      %v2998 = vadd.f32 %v2658, %v2850
      %v2999 = vadd.f32 %v2659, %v2855
      %v3000 = vadd.f32 %v2660, %v2858
      %v3001 = vadd.f32 %v2661, %v2863
      %v3002 = vadd.f32 %v2662, %v2866
      %v3003 = vadd.f32 %v2663, %v2871
      %v3004 = vadd.f32 %v2664, %v2874
      %v3005 = vadd.f32 %v2665, %v2879
      %v3006 = vadd.f32 %v2666, %v2882
      %v3007 = vadd.f32 %v2667, %v2887
      %v3008 = vadd.f32 %v2668, %v2890
      %v3009 = vadd.f32 %v2669, %v2895
      %v3010 = vadd.f32 %v2670, %v2898
      %v3011 = vadd.f32 %v2671, %v2903
      %v3012 = vadd.f32 %v2672, %v2906
      %v3013 = vadd.f32 %v2673, %v2911
      %v3014 = vadd.f32 %v2674, %v2914
      %v3015 = vadd.f32 %v2675, %v2919
      %v3016 = vadd.f32 %v2676, %v2922
      %v3017 = vadd.f32 %v2677, %v2927
      %v3018 = vadd.f32 %v2678, %v2930
      %v3019 = vadd.f32 %v2679, %v2935
      %v3020 = vadd.f32 %v2680, %v2938
      %v3021 = vadd.f32 %v2681, %v2943
      %v3022 = vadd.f32 %v2682, %v2946
      %v3023 = vadd.f32 %v2683, %v2951
      %v3024 = vadd.f32 %v2684, %v2954
      %v3025 = vadd.f32 %v2685, %v2959
      %v3026 = vadd.f32 %v2686, %v2962
      %v3027 = vadd.f32 %v2687, %v2967
      %v3028 = vadd.f32 %v2688, %v2970
      %v3029 = vadd.f32 %v2689, %v2975
      %v3030 = vadd.f32 %v2690, %v2978
      %v3031 = vadd.f32 %v2691, %v2983
      %v3032 = vadd.f32 %v2692, %v2986
      %v3033 = vadd.f32 %v2693, %v2991
      %v3034 = vadd.f32 %v2694, %v2994
      %v3035 = vld [vmem:[%s300 + $0x43] sm:$0xff]
      %v3036 = vld [vmem:[%s300 + $0x4b] sm:$0xff]
      %v3037 = vld [vmem:[%s300 + $0x53] sm:$0xff]
      %v3038 = vld [vmem:[%s300 + $0x5b] sm:$0xff]
      %v3039 = vld [vmem:[%s300 + $0x63] sm:$0xff]
      %v3040 = vld [vmem:[%s300 + $0x6b] sm:$0xff]
      %v3041 = vld [vmem:[%s300 + $0x73] sm:$0xff]
      %v3042 = vld [vmem:[%s300 + $0x7b] sm:$0xff]
      %v3043 = vld [vmem:[%s300 + $0x83] sm:$0xff]
      %v3044 = vld [vmem:[%s300 + $0x8b] sm:$0xff]
      %v3045 = vld [vmem:[%s300 + $0x93] sm:$0xff]
      %v3046 = vld [vmem:[%s300 + $0x9b] sm:$0xff]
      %v3047 = vld [vmem:[%s300 + $0xa3] sm:$0xff]
      %v3048 = vld [vmem:[%s300 + $0xab] sm:$0xff]
      %v3049 = vld [vmem:[%s300 + $0xb3] sm:$0xff]
      %v3050 = vld [vmem:[%s300 + $0xbb] sm:$0xff]
      %v3051 = vld [vmem:[%s300 + $0xc3] sm:$0xff]
      %v3052 = vld [vmem:[%s300 + $0xcb] sm:$0xff]
      %v3053 = vld [vmem:[%s300 + $0xd3] sm:$0xff]
      %v3054 = vld [vmem:[%s300 + $0xdb] sm:$0xff]
      %v3055 = vld [vmem:[%s300 + $0xe3] sm:$0xff]
      %v3056 = vld [vmem:[%s300 + $0xeb] sm:$0xff]
      %v3057 = vld [vmem:[%s300 + $0xf3] sm:$0xff]
      %v3058 = vld [vmem:[%s300 + $0xfb] sm:$0xff]
      %v3059 = vld [vmem:[%s300 + $0x103] sm:$0xff]
      %v3060 = vld [vmem:[%s300 + $0x10b] sm:$0xff]
      %v3061 = vld [vmem:[%s300 + $0x113] sm:$0xff]
      %v3062 = vld [vmem:[%s300 + $0x11b] sm:$0xff]
      %v3063 = vld [vmem:[%s300 + $0x123] sm:$0xff]
      %v3064 = vld [vmem:[%s300 + $0x12b] sm:$0xff]
      %v3065 = vld [vmem:[%s300 + $0x133] sm:$0xff]
      %v3066 = vld [vmem:[%s300 + $0x13b] sm:$0xff]
      %v3067 = vld [vmem:[%s300 + $0x143] sm:$0xff]
      %v3068 = vld [vmem:[%s300 + $0x14b] sm:$0xff]
      %v3069 = vld [vmem:[%s300 + $0x153] sm:$0xff]
      %v3070 = vld [vmem:[%s300 + $0x15b] sm:$0xff]
      %v3071 = vld [vmem:[%s300 + $0x163] sm:$0xff]
      %v3072 = vld [vmem:[%s300 + $0x16b] sm:$0xff]
      %v3073 = vpack.c.bf16 %v3036, %v3035
      %v3074 = vpack.c.bf16 %v3038, %v3037
      %v3075 = vpack.c.bf16 %v3040, %v3039
      %v3076 = vpack.c.bf16 %v3042, %v3041
      %v3077 = vpack.c.bf16 %v3044, %v3043
      %v3078 = vpack.c.bf16 %v3046, %v3045
      %v3079 = vpack.c.bf16 %v3048, %v3047
      %v3080 = vpack.c.bf16 %v3050, %v3049
      %v3081 = vpack.c.bf16 %v3052, %v3051
      %v3082 = vpack.c.bf16 %v3054, %v3053
      %v3083 = vpack.c.bf16 %v3056, %v3055
      %v3084 = vpack.c.bf16 %v3058, %v3057
      %v3085 = vpack.c.bf16 %v3060, %v3059
      %v3086 = vpack.c.bf16 %v3062, %v3061
      %v3087 = vpack.c.bf16 %v3064, %v3063
      %v3088 = vpack.c.bf16 %v3066, %v3065
      %v3089 = vpack.c.bf16 %v3068, %v3067
      %v3090 = vpack.c.bf16 %v3070, %v3069
      %v3091 = vpack.c.bf16 %v3072, %v3071
      %v3093 = vsel %vm503, %v3073, 0
      %v3096 = vsel %vm503, %v3074, 0
      %v3099 = vsel %vm503, %v3075, 0
      %v3102 = vsel %vm503, %v3076, 0
      %v3105 = vsel %vm503, %v3077, 0
      %v3108 = vsel %vm503, %v3078, 0
      %v3111 = vsel %vm503, %v3079, 0
      %v3114 = vsel %vm503, %v3080, 0
      %v3117 = vsel %vm503, %v3081, 0
      %v3120 = vsel %vm503, %v3082, 0
      %v3123 = vsel %vm503, %v3083, 0
      %v3126 = vsel %vm503, %v3084, 0
      %v3129 = vsel %vm503, %v3085, 0
      %v3132 = vsel %vm503, %v3086, 0
      %v3135 = vsel %vm503, %v3087, 0
      %v3138 = vsel %vm503, %v3088, 0
      %v3141 = vsel %vm503, %v3089, 0
      %v3144 = vsel %vm503, %v3090, 0
      %v3147 = vsel %vm503, %v3091, 0
      %v3150 = vsel %vm561, %v357, 0
      %3152 = vmatprep.subr.bf16.mxu0 0
      %3153 = vmatpush1.bf16.msra.mxu0 %v3150
      %3154 = vmatprep.subr.bf16.mxu0 0
      %3155 = vmatpush1.bf16.msra.mxu0 0
      %3156 = vmatprep.subr.bf16.mxu0 0
      %3157 = vmatpush1.bf16.msra.mxu0 0
      %3158 = vmatprep.subr.bf16.mxu0 0
      %3159 = vmatpush1.bf16.msra.mxu0 0
      %3160 = vmatprep.subr.bf16.mxu0 0
      %3161 = vmatpush1.bf16.msra.mxu0 0
      %3162 = vmatprep.subr.bf16.mxu0 0
      %3163 = vmatpush1.bf16.msra.mxu0 0
      %3164 = vmatprep.subr.bf16.mxu0 0
      %3165 = vmatpush1.bf16.msra.mxu0 0
      %3166 = vmatprep.subr.bf16.mxu0 0
      %3167 = vmatpush1.bf16.msra.mxu0 0
      %3168 = vmatprep.subr.bf16.mxu0 0
      %3169 = vmatpush1.bf16.msra.mxu0 0
      %3170 = vmatprep.subr.bf16.mxu0 0
      %3171 = vmatpush1.bf16.msra.mxu0 0
      %3172 = vmatprep.subr.bf16.mxu0 0
      %3173 = vmatpush1.bf16.msra.mxu0 0
      %3174 = vmatprep.subr.bf16.mxu0 0
      %3175 = vmatpush1.bf16.msra.mxu0 0
      %3176 = vmatprep.subr.bf16.mxu0 0
      %3177 = vmatpush1.bf16.msra.mxu0 0
      %3178 = vmatprep.subr.bf16.mxu0 0
      %3179 = vmatpush1.bf16.msra.mxu0 0
      %3180 = vmatprep.subr.bf16.mxu0 0
      %3181 = vmatpush1.bf16.msra.mxu0 0
      %3182 = vmatprep.subr.bf16.mxu0 0
      %3183 = vmatpush1.bf16.msra.mxu0 0
      %3184 = vmatprep.mubr.bf16.mxu0 0
      %3185 = vmatmul.mubr.bf16.gmra.mrb[0].mxu0 %v3093
      %v3186 = vpop.f32.mrb[0].mxu0
      %v3187 = vadd.f32 0.0, %v3186
      %v3188 = vpop.f32.mrb[0].mxu0
      %v3189 = vpop.f32.mrb[0].mxu0
      %v3190 = vadd.f32 0.0, %v3189
      %v3191 = vpop.f32.mrb[0].mxu0
      %3192 = vmatprep.mubr.bf16.mxu0 0
      %3193 = vmatmul.mubr.bf16.gmra.mrb[0].mxu0 %v3096
      %v3194 = vpop.f32.mrb[0].mxu0
      %v3195 = vadd.f32 0.0, %v3194
      %v3196 = vpop.f32.mrb[0].mxu0
      %v3197 = vpop.f32.mrb[0].mxu0
      %v3198 = vadd.f32 0.0, %v3197
      %v3199 = vpop.f32.mrb[0].mxu0
      %3200 = vmatprep.mubr.bf16.mxu0 0
      %3201 = vmatmul.mubr.bf16.gmra.mrb[0].mxu0 %v3099
      %v3202 = vpop.f32.mrb[0].mxu0
      %v3203 = vadd.f32 0.0, %v3202
      %v3204 = vpop.f32.mrb[0].mxu0
      %v3205 = vpop.f32.mrb[0].mxu0
      %v3206 = vadd.f32 0.0, %v3205
      %v3207 = vpop.f32.mrb[0].mxu0
      %3208 = vmatprep.mubr.bf16.mxu0 0
      %3209 = vmatmul.mubr.bf16.gmra.mrb[0].mxu0 %v3102
      %v3210 = vpop.f32.mrb[0].mxu0
      %v3211 = vadd.f32 0.0, %v3210
      %v3212 = vpop.f32.mrb[0].mxu0
      %v3213 = vpop.f32.mrb[0].mxu0
      %v3214 = vadd.f32 0.0, %v3213
      %v3215 = vpop.f32.mrb[0].mxu0
      %3216 = vmatprep.mubr.bf16.mxu0 0
      %3217 = vmatmul.mubr.bf16.gmra.mrb[0].mxu0 %v3105
      %v3218 = vpop.f32.mrb[0].mxu0
      %v3219 = vadd.f32 0.0, %v3218
      %v3220 = vpop.f32.mrb[0].mxu0
      %v3221 = vpop.f32.mrb[0].mxu0
      %v3222 = vadd.f32 0.0, %v3221
      %v3223 = vpop.f32.mrb[0].mxu0
      %3224 = vmatprep.mubr.bf16.mxu0 0
      %3225 = vmatmul.mubr.bf16.gmra.mrb[0].mxu0 %v3108
      %v3226 = vpop.f32.mrb[0].mxu0
      %v3227 = vadd.f32 0.0, %v3226
      %v3228 = vpop.f32.mrb[0].mxu0
      %v3229 = vpop.f32.mrb[0].mxu0
      %v3230 = vadd.f32 0.0, %v3229
      %v3231 = vpop.f32.mrb[0].mxu0
      %3232 = vmatprep.mubr.bf16.mxu0 0
      %3233 = vmatmul.mubr.bf16.gmra.mrb[0].mxu0 %v3111
      %v3234 = vpop.f32.mrb[0].mxu0
      %v3235 = vadd.f32 0.0, %v3234
      %v3236 = vpop.f32.mrb[0].mxu0
      %v3237 = vpop.f32.mrb[0].mxu0
      %v3238 = vadd.f32 0.0, %v3237
      %v3239 = vpop.f32.mrb[0].mxu0
      %3240 = vmatprep.mubr.bf16.mxu0 0
      %3241 = vmatmul.mubr.bf16.gmra.mrb[0].mxu0 %v3114
      %v3242 = vpop.f32.mrb[0].mxu0
      %v3243 = vadd.f32 0.0, %v3242
      %v3244 = vpop.f32.mrb[0].mxu0
      %v3245 = vpop.f32.mrb[0].mxu0
      %v3246 = vadd.f32 0.0, %v3245
      %v3247 = vpop.f32.mrb[0].mxu0
      %3248 = vmatprep.mubr.bf16.mxu0 0
      %3249 = vmatmul.mubr.bf16.gmra.mrb[0].mxu0 %v3117
      %v3250 = vpop.f32.mrb[0].mxu0
      %v3251 = vadd.f32 0.0, %v3250
      %v3252 = vpop.f32.mrb[0].mxu0
      %v3253 = vpop.f32.mrb[0].mxu0
      %v3254 = vadd.f32 0.0, %v3253
      %v3255 = vpop.f32.mrb[0].mxu0
      %3256 = vmatprep.mubr.bf16.mxu0 0
      %3257 = vmatmul.mubr.bf16.gmra.mrb[0].mxu0 %v3120
      %v3258 = vpop.f32.mrb[0].mxu0
      %v3259 = vadd.f32 0.0, %v3258
      %v3260 = vpop.f32.mrb[0].mxu0
      %v3261 = vpop.f32.mrb[0].mxu0
      %v3262 = vadd.f32 0.0, %v3261
      %v3263 = vpop.f32.mrb[0].mxu0
      %3264 = vmatprep.mubr.bf16.mxu0 0
      %3265 = vmatmul.mubr.bf16.gmra.mrb[0].mxu0 %v3123
      %v3266 = vpop.f32.mrb[0].mxu0
      %v3267 = vadd.f32 0.0, %v3266
      %v3268 = vpop.f32.mrb[0].mxu0
      %v3269 = vpop.f32.mrb[0].mxu0
      %v3270 = vadd.f32 0.0, %v3269
      %v3271 = vpop.f32.mrb[0].mxu0
      %3272 = vmatprep.mubr.bf16.mxu0 0
      %3273 = vmatmul.mubr.bf16.gmra.mrb[0].mxu0 %v3126
      %v3274 = vpop.f32.mrb[0].mxu0
      %v3275 = vadd.f32 0.0, %v3274
      %v3276 = vpop.f32.mrb[0].mxu0
      %v3277 = vpop.f32.mrb[0].mxu0
      %v3278 = vadd.f32 0.0, %v3277
      %v3279 = vpop.f32.mrb[0].mxu0
      %3280 = vmatprep.mubr.bf16.mxu0 0
      %3281 = vmatmul.mubr.bf16.gmra.mrb[0].mxu0 %v3129
      %v3282 = vpop.f32.mrb[0].mxu0
      %v3283 = vadd.f32 0.0, %v3282
      %v3284 = vpop.f32.mrb[0].mxu0
      %v3285 = vpop.f32.mrb[0].mxu0
      %v3286 = vadd.f32 0.0, %v3285
      %v3287 = vpop.f32.mrb[0].mxu0
      %3288 = vmatprep.mubr.bf16.mxu0 0
      %3289 = vmatmul.mubr.bf16.gmra.mrb[0].mxu0 %v3132
      %v3290 = vpop.f32.mrb[0].mxu0
      %v3291 = vadd.f32 0.0, %v3290
      %v3292 = vpop.f32.mrb[0].mxu0
      %v3293 = vpop.f32.mrb[0].mxu0
      %v3294 = vadd.f32 0.0, %v3293
      %v3295 = vpop.f32.mrb[0].mxu0
      %3296 = vmatprep.mubr.bf16.mxu0 0
      %3297 = vmatmul.mubr.bf16.gmra.mrb[0].mxu0 %v3135
      %v3298 = vpop.f32.mrb[0].mxu0
      %v3299 = vadd.f32 0.0, %v3298
      %v3300 = vpop.f32.mrb[0].mxu0
      %v3301 = vpop.f32.mrb[0].mxu0
      %v3302 = vadd.f32 0.0, %v3301
      %v3303 = vpop.f32.mrb[0].mxu0
      %3304 = vmatprep.mubr.bf16.mxu0 0
      %3305 = vmatmul.mubr.bf16.gmra.mrb[0].mxu0 %v3138
      %v3306 = vpop.f32.mrb[0].mxu0
      %v3307 = vadd.f32 0.0, %v3306
      %v3308 = vpop.f32.mrb[0].mxu0
      %v3309 = vpop.f32.mrb[0].mxu0
      %v3310 = vadd.f32 0.0, %v3309
      %v3311 = vpop.f32.mrb[0].mxu0
      %3312 = vmatprep.mubr.bf16.mxu0 0
      %3313 = vmatmul.mubr.bf16.gmra.mrb[0].mxu0 %v3141
      %v3314 = vpop.f32.mrb[0].mxu0
      %v3315 = vadd.f32 0.0, %v3314
      %v3316 = vpop.f32.mrb[0].mxu0
      %v3317 = vpop.f32.mrb[0].mxu0
      %v3318 = vadd.f32 0.0, %v3317
      %v3319 = vpop.f32.mrb[0].mxu0
      %3320 = vmatprep.mubr.bf16.mxu0 0
      %3321 = vmatmul.mubr.bf16.gmra.mrb[0].mxu0 %v3144
      %v3322 = vpop.f32.mrb[0].mxu0
      %v3323 = vadd.f32 0.0, %v3322
      %v3324 = vpop.f32.mrb[0].mxu0
      %v3325 = vpop.f32.mrb[0].mxu0
      %v3326 = vadd.f32 0.0, %v3325
      %v3327 = vpop.f32.mrb[0].mxu0
      %3328 = vmatprep.mubr.bf16.mxu0 0
      %3329 = vmatmul.mubr.bf16.gmra.mrb[0].mxu0 %v3147
      %v3330 = vpop.f32.mrb[0].mxu0
      %v3331 = vadd.f32 0.0, %v3330
      %v3332 = vpop.f32.mrb[0].mxu0
      %v3333 = vpop.f32.mrb[0].mxu0
      %v3334 = vadd.f32 0.0, %v3333
      %v3335 = vpop.f32.mrb[0].mxu0
      %3336 = vdwg.mxu0
      %v3337 = vadd.f32 %v2997, %v3187
      %v3338 = vadd.f32 %v2998, %v3190
      %v3339 = vadd.f32 %v2999, %v3195
      %v3340 = vadd.f32 %v3000, %v3198
      %v3341 = vadd.f32 %v3001, %v3203
      %v3342 = vadd.f32 %v3002, %v3206
      %v3343 = vadd.f32 %v3003, %v3211
      %v3344 = vadd.f32 %v3004, %v3214
      %v3345 = vadd.f32 %v3005, %v3219
      %v3346 = vadd.f32 %v3006, %v3222
      %v3347 = vadd.f32 %v3007, %v3227
      %v3348 = vadd.f32 %v3008, %v3230
      %v3349 = vadd.f32 %v3009, %v3235
      %v3350 = vadd.f32 %v3010, %v3238
      %v3351 = vadd.f32 %v3011, %v3243
      %v3352 = vadd.f32 %v3012, %v3246
      %v3353 = vadd.f32 %v3013, %v3251
      %v3354 = vadd.f32 %v3014, %v3254
      %v3355 = vadd.f32 %v3015, %v3259
      %v3356 = vadd.f32 %v3016, %v3262
      %v3357 = vadd.f32 %v3017, %v3267
      %v3358 = vadd.f32 %v3018, %v3270
      %v3359 = vadd.f32 %v3019, %v3275
      %v3360 = vadd.f32 %v3020, %v3278
      %v3361 = vadd.f32 %v3021, %v3283
      %v3362 = vadd.f32 %v3022, %v3286
      %v3363 = vadd.f32 %v3023, %v3291
      %v3364 = vadd.f32 %v3024, %v3294
      %v3365 = vadd.f32 %v3025, %v3299
      %v3366 = vadd.f32 %v3026, %v3302
      %v3367 = vadd.f32 %v3027, %v3307
      %v3368 = vadd.f32 %v3028, %v3310
      %v3369 = vadd.f32 %v3029, %v3315
      %v3370 = vadd.f32 %v3030, %v3318
      %v3371 = vadd.f32 %v3031, %v3323
      %v3372 = vadd.f32 %v3032, %v3326
      %v3373 = vadd.f32 %v3033, %v3331
      %v3374 = vadd.f32 %v3034, %v3334
      %v3376 = vlaneseq
      %v3377 = vshrl.u32 %v3376, 7
      %v3378 = vsub.s32 0, %v3377
      %v3379 = vrot.slane %v345, %v3378
      %v3381 = vadd.f32 %v3337, %v3379
      %v3382 = vadd.f32 %v3338, %v3379
      %v3383 = vadd.f32 %v3339, %v3379
      %v3384 = vadd.f32 %v3340, %v3379
      %v3385 = vadd.f32 %v3341, %v3379
      %v3386 = vadd.f32 %v3342, %v3379
      %v3387 = vadd.f32 %v3343, %v3379
      %v3388 = vadd.f32 %v3344, %v3379
      %v3389 = vadd.f32 %v3345, %v3379
      %v3390 = vadd.f32 %v3346, %v3379
      %v3391 = vadd.f32 %v3347, %v3379
      %v3392 = vadd.f32 %v3348, %v3379
      %v3393 = vadd.f32 %v3349, %v3379
      %v3394 = vadd.f32 %v3350, %v3379
      %v3395 = vadd.f32 %v3351, %v3379
      %v3396 = vadd.f32 %v3352, %v3379
      %v3397 = vadd.f32 %v3353, %v3379
      %v3398 = vadd.f32 %v3354, %v3379
      %v3399 = vadd.f32 %v3355, %v3379
      %v3400 = vadd.f32 %v3356, %v3379
      %v3401 = vadd.f32 %v3357, %v3379
      %v3402 = vadd.f32 %v3358, %v3379
      %v3403 = vadd.f32 %v3359, %v3379
      %v3404 = vadd.f32 %v3360, %v3379
      %v3405 = vadd.f32 %v3361, %v3379
      %v3406 = vadd.f32 %v3362, %v3379
      %v3407 = vadd.f32 %v3363, %v3379
      %v3408 = vadd.f32 %v3364, %v3379
      %v3409 = vadd.f32 %v3365, %v3379
      %v3410 = vadd.f32 %v3366, %v3379
      %v3411 = vadd.f32 %v3367, %v3379
      %v3412 = vadd.f32 %v3368, %v3379
      %v3413 = vadd.f32 %v3369, %v3379
      %v3414 = vadd.f32 %v3370, %v3379
      %v3415 = vadd.f32 %v3371, %v3379
      %v3416 = vadd.f32 %v3372, %v3379
      %v3417 = vadd.f32 %v3373, %v3379
      %v3418 = vadd.f32 %v3374, %v3379
      %v3419 = vmax.f32 %v3381, 0.0
      %v3420 = vmax.f32 %v3382, 0.0
      %v3421 = vmax.f32 %v3383, 0.0
      %v3422 = vmax.f32 %v3384, 0.0
      %v3423 = vmax.f32 %v3385, 0.0
      %v3424 = vmax.f32 %v3386, 0.0
      %v3425 = vmax.f32 %v3387, 0.0
      %v3426 = vmax.f32 %v3388, 0.0
      %v3427 = vmax.f32 %v3389, 0.0
      %v3428 = vmax.f32 %v3390, 0.0
      %v3429 = vmax.f32 %v3391, 0.0
      %v3430 = vmax.f32 %v3392, 0.0
      %v3431 = vmax.f32 %v3393, 0.0
      %v3432 = vmax.f32 %v3394, 0.0
      %v3433 = vmax.f32 %v3395, 0.0
      %v3434 = vmax.f32 %v3396, 0.0
      %v3435 = vmax.f32 %v3397, 0.0
      %v3436 = vmax.f32 %v3398, 0.0
      %v3437 = vmax.f32 %v3399, 0.0
      %v3438 = vmax.f32 %v3400, 0.0
      %v3439 = vmax.f32 %v3401, 0.0
      %v3440 = vmax.f32 %v3402, 0.0
      %v3441 = vmax.f32 %v3403, 0.0
      %v3442 = vmax.f32 %v3404, 0.0
      %v3443 = vmax.f32 %v3405, 0.0
      %v3444 = vmax.f32 %v3406, 0.0
      %v3445 = vmax.f32 %v3407, 0.0
      %v3446 = vmax.f32 %v3408, 0.0
      %v3447 = vmax.f32 %v3409, 0.0
      %v3448 = vmax.f32 %v3410, 0.0
      %v3449 = vmax.f32 %v3411, 0.0
      %v3450 = vmax.f32 %v3412, 0.0
      %v3451 = vmax.f32 %v3413, 0.0
      %v3452 = vmax.f32 %v3414, 0.0
      %v3453 = vmax.f32 %v3415, 0.0
      %v3454 = vmax.f32 %v3416, 0.0
      %v3455 = vmax.f32 %v3417, 0.0
      %v3456 = vmax.f32 %v3418, 0.0
      %3458 = vset.pattern.permute.xlu0 0
      %3459 = vperm.xlu0 %3458, %v307
      %v3460 = vpop.permute.xlu0 %3459
      %3463 = vset.pattern.permute.xlu0 0
      %3464 = vperm.xlu0 %3463, %v308
      %v3465 = vpop.permute.xlu0 %3464
      %3468 = vset.pattern.permute.xlu0 0
      %3469 = vperm.xlu0 %3468, %v309
      %v3470 = vpop.permute.xlu0 %3469
      %3473 = vset.pattern.permute.xlu0 0
      %3474 = vperm.xlu0 %3473, %v310
      %v3475 = vpop.permute.xlu0 %3474
      %3478 = vset.pattern.permute.xlu0 0
      %3479 = vperm.xlu0 %3478, %v311
      %v3480 = vpop.permute.xlu0 %3479
      %3483 = vset.pattern.permute.xlu0 0
      %3484 = vperm.xlu0 %3483, %v312
      %v3485 = vpop.permute.xlu0 %3484
      %3488 = vset.pattern.permute.xlu0 0
      %3489 = vperm.xlu0 %3488, %v313
      %v3490 = vpop.permute.xlu0 %3489
      %3493 = vset.pattern.permute.xlu0 0
      %3494 = vperm.xlu0 %3493, %v314
      %v3495 = vpop.permute.xlu0 %3494
      %3498 = vset.pattern.permute.xlu0 0
      %3499 = vperm.xlu0 %3498, %v315
      %v3500 = vpop.permute.xlu0 %3499
      %3503 = vset.pattern.permute.xlu0 0
      %3504 = vperm.xlu0 %3503, %v316
      %v3505 = vpop.permute.xlu0 %3504
      %3508 = vset.pattern.permute.xlu0 0
      %3509 = vperm.xlu0 %3508, %v317
      %v3510 = vpop.permute.xlu0 %3509
      %3513 = vset.pattern.permute.xlu0 0
      %3514 = vperm.xlu0 %3513, %v318
      %v3515 = vpop.permute.xlu0 %3514
      %3518 = vset.pattern.permute.xlu0 0
      %3519 = vperm.xlu0 %3518, %v319
      %v3520 = vpop.permute.xlu0 %3519
      %3523 = vset.pattern.permute.xlu0 0
      %3524 = vperm.xlu0 %3523, %v320
      %v3525 = vpop.permute.xlu0 %3524
      %3528 = vset.pattern.permute.xlu0 0
      %3529 = vperm.xlu0 %3528, %v321
      %v3530 = vpop.permute.xlu0 %3529
      %3533 = vset.pattern.permute.xlu0 0
      %3534 = vperm.xlu0 %3533, %v322
      %v3535 = vpop.permute.xlu0 %3534
      %3538 = vset.pattern.permute.xlu0 0
      %3539 = vperm.xlu0 %3538, %v323
      %v3540 = vpop.permute.xlu0 %3539
      %3543 = vset.pattern.permute.xlu0 0
      %3544 = vperm.xlu0 %3543, %v324
      %v3545 = vpop.permute.xlu0 %3544
      %3548 = vset.pattern.permute.xlu0 0
      %3549 = vperm.xlu0 %3548, %v325
      %v3550 = vpop.permute.xlu0 %3549
      %3553 = vset.pattern.permute.xlu0 0
      %3554 = vperm.xlu0 %3553, %v326
      %v3555 = vpop.permute.xlu0 %3554
      %3558 = vset.pattern.permute.xlu0 0
      %3559 = vperm.xlu0 %3558, %v327
      %v3560 = vpop.permute.xlu0 %3559
      %3563 = vset.pattern.permute.xlu0 0
      %3564 = vperm.xlu0 %3563, %v328
      %v3565 = vpop.permute.xlu0 %3564
      %3568 = vset.pattern.permute.xlu0 0
      %3569 = vperm.xlu0 %3568, %v329
      %v3570 = vpop.permute.xlu0 %3569
      %3573 = vset.pattern.permute.xlu0 0
      %3574 = vperm.xlu0 %3573, %v330
      %v3575 = vpop.permute.xlu0 %3574
      %3578 = vset.pattern.permute.xlu0 0
      %3579 = vperm.xlu0 %3578, %v331
      %v3580 = vpop.permute.xlu0 %3579
      %3583 = vset.pattern.permute.xlu0 0
      %3584 = vperm.xlu0 %3583, %v332
      %v3585 = vpop.permute.xlu0 %3584
      %3588 = vset.pattern.permute.xlu0 0
      %3589 = vperm.xlu0 %3588, %v333
      %v3590 = vpop.permute.xlu0 %3589
      %3593 = vset.pattern.permute.xlu0 0
      %3594 = vperm.xlu0 %3593, %v334
      %v3595 = vpop.permute.xlu0 %3594
      %3598 = vset.pattern.permute.xlu0 0
      %3599 = vperm.xlu0 %3598, %v335
      %v3600 = vpop.permute.xlu0 %3599
      %3603 = vset.pattern.permute.xlu0 0
      %3604 = vperm.xlu0 %3603, %v336
      %v3605 = vpop.permute.xlu0 %3604
      %3608 = vset.pattern.permute.xlu0 0
      %3609 = vperm.xlu0 %3608, %v337
      %v3610 = vpop.permute.xlu0 %3609
      %3613 = vset.pattern.permute.xlu0 0
      %3614 = vperm.xlu0 %3613, %v338
      %v3615 = vpop.permute.xlu0 %3614
      %3618 = vset.pattern.permute.xlu0 0
      %3619 = vperm.xlu0 %3618, %v339
      %v3620 = vpop.permute.xlu0 %3619
      %3623 = vset.pattern.permute.xlu0 0
      %3624 = vperm.xlu0 %3623, %v340
      %v3625 = vpop.permute.xlu0 %3624
      %3628 = vset.pattern.permute.xlu0 0
      %3629 = vperm.xlu0 %3628, %v341
      %v3630 = vpop.permute.xlu0 %3629
      %3633 = vset.pattern.permute.xlu0 0
      %3634 = vperm.xlu0 %3633, %v342
      %v3635 = vpop.permute.xlu0 %3634
      %3638 = vset.pattern.permute.xlu0 0
      %3639 = vperm.xlu0 %3638, %v343
      %v3640 = vpop.permute.xlu0 %3639
      %3643 = vset.pattern.permute.xlu0 0
      %3644 = vperm.xlu0 %3643, %v344
      %v3645 = vpop.permute.xlu0 %3644
      %v3647 = vmul.f32 %v3419, %v3460
      %v3648 = vmul.f32 %v3420, %v3465
      %v3649 = vmul.f32 %v3421, %v3470
      %v3650 = vmul.f32 %v3422, %v3475
      %v3651 = vmul.f32 %v3423, %v3480
      %v3652 = vmul.f32 %v3424, %v3485
      %v3653 = vmul.f32 %v3425, %v3490
      %v3654 = vmul.f32 %v3426, %v3495
      %v3655 = vmul.f32 %v3427, %v3500
      %v3656 = vmul.f32 %v3428, %v3505
      %v3657 = vmul.f32 %v3429, %v3510
      %v3658 = vmul.f32 %v3430, %v3515
      %v3659 = vmul.f32 %v3431, %v3520
      %v3660 = vmul.f32 %v3432, %v3525
      %v3661 = vmul.f32 %v3433, %v3530
      %v3662 = vmul.f32 %v3434, %v3535
      %v3663 = vmul.f32 %v3435, %v3540
      %v3664 = vmul.f32 %v3436, %v3545
      %v3665 = vmul.f32 %v3437, %v3550
      %v3666 = vmul.f32 %v3438, %v3555
      %v3667 = vmul.f32 %v3439, %v3560
      %v3668 = vmul.f32 %v3440, %v3565
      %v3669 = vmul.f32 %v3441, %v3570
      %v3670 = vmul.f32 %v3442, %v3575
      %v3671 = vmul.f32 %v3443, %v3580
      %v3672 = vmul.f32 %v3444, %v3585
      %v3673 = vmul.f32 %v3445, %v3590
      %v3674 = vmul.f32 %v3446, %v3595
      %v3675 = vmul.f32 %v3447, %v3600
      %v3676 = vmul.f32 %v3448, %v3605
      %v3677 = vmul.f32 %v3449, %v3610
      %v3678 = vmul.f32 %v3450, %v3615
      %v3679 = vmul.f32 %v3451, %v3620
      %v3680 = vmul.f32 %v3452, %v3625
      %v3681 = vmul.f32 %v3453, %v3630
      %v3682 = vmul.f32 %v3454, %v3635
      %v3683 = vmul.f32 %v3455, %v3640
      %v3684 = vmul.f32 %v3456, %v3645
      %3685 = vst.msk [vmem:[#allocation2 + $0x30] sm:$0xff] %vm376, %v3647
      %3686 = vst.msk [vmem:[#allocation2 + $0x38] sm:$0xff] %vm376, %v3648
      %3687 = vst.msk [vmem:[#allocation2 + $0x40] sm:$0xff] %vm376, %v3649
      %3688 = vst.msk [vmem:[#allocation2 + $0x48] sm:$0xff] %vm376, %v3650
      %3689 = vst.msk [vmem:[#allocation2 + $0x50] sm:$0xff] %vm376, %v3651
      %3690 = vst.msk [vmem:[#allocation2 + $0x58] sm:$0xff] %vm376, %v3652
      %3691 = vst.msk [vmem:[#allocation2 + $0x60] sm:$0xff] %vm376, %v3653
      %3692 = vst.msk [vmem:[#allocation2 + $0x68] sm:$0xff] %vm376, %v3654
      %3693 = vst.msk [vmem:[#allocation2 + $0x70] sm:$0xff] %vm376, %v3655
      %3694 = vst.msk [vmem:[#allocation2 + $0x78] sm:$0xff] %vm376, %v3656
      %3695 = vst.msk [vmem:[#allocation2 + $0x80] sm:$0xff] %vm376, %v3657
      %3696 = vst.msk [vmem:[#allocation2 + $0x88] sm:$0xff] %vm376, %v3658
      %3697 = vst.msk [vmem:[#allocation2 + $0x90] sm:$0xff] %vm376, %v3659
      %3698 = vst.msk [vmem:[#allocation2 + $0x98] sm:$0xff] %vm376, %v3660
      %3699 = vst.msk [vmem:[#allocation2 + $0xa0] sm:$0xff] %vm376, %v3661
      %3700 = vst.msk [vmem:[#allocation2 + $0xa8] sm:$0xff] %vm376, %v3662
      %3701 = vst.msk [vmem:[#allocation2 + $0xb0] sm:$0xff] %vm376, %v3663
      %3702 = vst.msk [vmem:[#allocation2 + $0xb8] sm:$0xff] %vm376, %v3664
      %3703 = vst.msk [vmem:[#allocation2 + $0xc0] sm:$0xff] %vm376, %v3665
      %3704 = vst.msk [vmem:[#allocation2 + $0xc8] sm:$0xff] %vm376, %v3666
      %3705 = vst.msk [vmem:[#allocation2 + $0xd0] sm:$0xff] %vm376, %v3667
      %3706 = vst.msk [vmem:[#allocation2 + $0xd8] sm:$0xff] %vm376, %v3668
      %3707 = vst.msk [vmem:[#allocation2 + $0xe0] sm:$0xff] %vm376, %v3669
      %3708 = vst.msk [vmem:[#allocation2 + $0xe8] sm:$0xff] %vm376, %v3670
      %3709 = vst.msk [vmem:[#allocation2 + $0xf0] sm:$0xff] %vm376, %v3671
      %3710 = vst.msk [vmem:[#allocation2 + $0xf8] sm:$0xff] %vm376, %v3672
      %3711 = vst.msk [vmem:[#allocation2 + $0x100] sm:$0xff] %vm376, %v3673
      %3712 = vst.msk [vmem:[#allocation2 + $0x108] sm:$0xff] %vm376, %v3674
      %3713 = vst.msk [vmem:[#allocation2 + $0x110] sm:$0xff] %vm376, %v3675
      %3714 = vst.msk [vmem:[#allocation2 + $0x118] sm:$0xff] %vm376, %v3676
      %3715 = vst.msk [vmem:[#allocation2 + $0x120] sm:$0xff] %vm376, %v3677
      %3716 = vst.msk [vmem:[#allocation2 + $0x128] sm:$0xff] %vm376, %v3678
      %3717 = vst.msk [vmem:[#allocation2 + $0x130] sm:$0xff] %vm376, %v3679
      %3718 = vst.msk [vmem:[#allocation2 + $0x138] sm:$0xff] %vm376, %v3680
      %3719 = vst.msk [vmem:[#allocation2 + $0x140] sm:$0xff] %vm376, %v3681
      %3720 = vst.msk [vmem:[#allocation2 + $0x148] sm:$0xff] %vm376, %v3682
      %3721 = vst.msk [vmem:[#allocation2 + $0x150] sm:$0xff] %vm376, %v3683
      %3722 = vst.msk [vmem:[#allocation2 + $0x158] sm:$0xff] %vm376, %v3684
      %v3723 = vld [vmem:[#allocation2 + $0x1d] sm:$0xff]
      %v3724 = vld [vmem:[#allocation2 + $0x25] sm:$0xff]
      %v3725 = vld [vmem:[#allocation2 + $0x2d] sm:$0xff]
      %v3726 = vld [vmem:[#allocation2 + $0x35] sm:$0xff]
      %v3727 = vld [vmem:[#allocation2 + $0x3d] sm:$0xff]
      %v3728 = vld [vmem:[#allocation2 + $0x45] sm:$0xff]
      %v3729 = vld [vmem:[#allocation2 + $0x4d] sm:$0xff]
      %v3730 = vld [vmem:[#allocation2 + $0x55] sm:$0xff]
      %v3731 = vld [vmem:[#allocation2 + $0x5d] sm:$0xff]
      %v3732 = vld [vmem:[#allocation2 + $0x65] sm:$0xff]
      %v3733 = vld [vmem:[#allocation2 + $0x6d] sm:$0xff]
      %v3734 = vld [vmem:[#allocation2 + $0x75] sm:$0xff]
      %v3735 = vld [vmem:[#allocation2 + $0x7d] sm:$0xff]
      %v3736 = vld [vmem:[#allocation2 + $0x85] sm:$0xff]
      %v3737 = vld [vmem:[#allocation2 + $0x8d] sm:$0xff]
      %v3738 = vld [vmem:[#allocation2 + $0x95] sm:$0xff]
      %v3739 = vld [vmem:[#allocation2 + $0x9d] sm:$0xff]
      %v3740 = vld [vmem:[#allocation2 + $0xa5] sm:$0xff]
      %v3741 = vld [vmem:[#allocation2 + $0xad] sm:$0xff]
      %v3742 = vld [vmem:[#allocation2 + $0xb5] sm:$0xff]
      %v3743 = vld [vmem:[#allocation2 + $0xbd] sm:$0xff]
      %v3744 = vld [vmem:[#allocation2 + $0xc5] sm:$0xff]
      %v3745 = vld [vmem:[#allocation2 + $0xcd] sm:$0xff]
      %v3746 = vld [vmem:[#allocation2 + $0xd5] sm:$0xff]
      %v3747 = vld [vmem:[#allocation2 + $0xdd] sm:$0xff]
      %v3748 = vld [vmem:[#allocation2 + $0xe5] sm:$0xff]
      %v3749 = vld [vmem:[#allocation2 + $0xed] sm:$0xff]
      %v3750 = vld [vmem:[#allocation2 + $0xf5] sm:$0xff]
      %v3751 = vld [vmem:[#allocation2 + $0xfd] sm:$0xff]
      %v3752 = vld [vmem:[#allocation2 + $0x105] sm:$0xff]
      %v3753 = vld [vmem:[#allocation2 + $0x10d] sm:$0xff]
      %v3754 = vld [vmem:[#allocation2 + $0x115] sm:$0xff]
      %v3755 = vld [vmem:[#allocation2 + $0x11d] sm:$0xff]
      %v3756 = vld [vmem:[#allocation2 + $0x125] sm:$0xff]
      %v3757 = vld [vmem:[#allocation2 + $0x12d] sm:$0xff]
      %v3758 = vld [vmem:[#allocation2 + $0x135] sm:$0xff]
      %v3759 = vld [vmem:[#allocation2 + $0x13d] sm:$0xff]
      %v3760 = vld [vmem:[#allocation2 + $0x145] sm:$0xff]
      %v3761 = vpack.c.bf16 %v3724, %v3723
      %v3762 = vpack.c.bf16 %v3726, %v3725
      %v3763 = vpack.c.bf16 %v3728, %v3727
      %v3764 = vpack.c.bf16 %v3730, %v3729
      %v3765 = vpack.c.bf16 %v3732, %v3731
      %v3766 = vpack.c.bf16 %v3734, %v3733
      %v3767 = vpack.c.bf16 %v3736, %v3735
      %v3768 = vpack.c.bf16 %v3738, %v3737
      %v3769 = vpack.c.bf16 %v3740, %v3739
      %v3770 = vpack.c.bf16 %v3742, %v3741
      %v3771 = vpack.c.bf16 %v3744, %v3743
      %v3772 = vpack.c.bf16 %v3746, %v3745
      %v3773 = vpack.c.bf16 %v3748, %v3747
      %v3774 = vpack.c.bf16 %v3750, %v3749
      %v3775 = vpack.c.bf16 %v3752, %v3751
      %v3776 = vpack.c.bf16 %v3754, %v3753
      %v3777 = vpack.c.bf16 %v3756, %v3755
      %v3778 = vpack.c.bf16 %v3758, %v3757
      %v3779 = vpack.c.bf16 %v3760, %v3759
      %v3780 = vld [vmem:[#allocation2 + $0x1e] sm:$0xff]
      %v3781 = vld [vmem:[#allocation2 + $0x26] sm:$0xff]
      %v3782 = vld [vmem:[#allocation2 + $0x2e] sm:$0xff]
      %v3783 = vld [vmem:[#allocation2 + $0x36] sm:$0xff]
      %v3784 = vld [vmem:[#allocation2 + $0x3e] sm:$0xff]
      %v3785 = vld [vmem:[#allocation2 + $0x46] sm:$0xff]
      %v3786 = vld [vmem:[#allocation2 + $0x4e] sm:$0xff]
      %v3787 = vld [vmem:[#allocation2 + $0x56] sm:$0xff]
      %v3788 = vld [vmem:[#allocation2 + $0x5e] sm:$0xff]
      %v3789 = vld [vmem:[#allocation2 + $0x66] sm:$0xff]
      %v3790 = vld [vmem:[#allocation2 + $0x6e] sm:$0xff]
      %v3791 = vld [vmem:[#allocation2 + $0x76] sm:$0xff]
      %v3792 = vld [vmem:[#allocation2 + $0x7e] sm:$0xff]
      %v3793 = vld [vmem:[#allocation2 + $0x86] sm:$0xff]
      %v3794 = vld [vmem:[#allocation2 + $0x8e] sm:$0xff]
      %v3795 = vld [vmem:[#allocation2 + $0x96] sm:$0xff]
      %v3796 = vld [vmem:[#allocation2 + $0x9e] sm:$0xff]
      %v3797 = vld [vmem:[#allocation2 + $0xa6] sm:$0xff]
      %v3798 = vld [vmem:[#allocation2 + $0xae] sm:$0xff]
      %v3799 = vld [vmem:[#allocation2 + $0xb6] sm:$0xff]
      %v3800 = vld [vmem:[#allocation2 + $0xbe] sm:$0xff]
      %v3801 = vld [vmem:[#allocation2 + $0xc6] sm:$0xff]
      %v3802 = vld [vmem:[#allocation2 + $0xce] sm:$0xff]
      %v3803 = vld [vmem:[#allocation2 + $0xd6] sm:$0xff]
      %v3804 = vld [vmem:[#allocation2 + $0xde] sm:$0xff]
      %v3805 = vld [vmem:[#allocation2 + $0xe6] sm:$0xff]
      %v3806 = vld [vmem:[#allocation2 + $0xee] sm:$0xff]
      %v3807 = vld [vmem:[#allocation2 + $0xf6] sm:$0xff]
      %v3808 = vld [vmem:[#allocation2 + $0xfe] sm:$0xff]
      %v3809 = vld [vmem:[#allocation2 + $0x106] sm:$0xff]
      %v3810 = vld [vmem:[#allocation2 + $0x10e] sm:$0xff]
      %v3811 = vld [vmem:[#allocation2 + $0x116] sm:$0xff]
      %v3812 = vld [vmem:[#allocation2 + $0x11e] sm:$0xff]
      %v3813 = vld [vmem:[#allocation2 + $0x126] sm:$0xff]
      %v3814 = vld [vmem:[#allocation2 + $0x12e] sm:$0xff]
      %v3815 = vld [vmem:[#allocation2 + $0x136] sm:$0xff]
      %v3816 = vld [vmem:[#allocation2 + $0x13e] sm:$0xff]
      %v3817 = vld [vmem:[#allocation2 + $0x146] sm:$0xff]
      %v3818 = vpack.c.bf16 %v3781, %v3780
      %v3819 = vpack.c.bf16 %v3783, %v3782
      %v3820 = vpack.c.bf16 %v3785, %v3784
      %v3821 = vpack.c.bf16 %v3787, %v3786
      %v3822 = vpack.c.bf16 %v3789, %v3788
      %v3823 = vpack.c.bf16 %v3791, %v3790
      %v3824 = vpack.c.bf16 %v3793, %v3792
      %v3825 = vpack.c.bf16 %v3795, %v3794
      %v3826 = vpack.c.bf16 %v3797, %v3796
      %v3827 = vpack.c.bf16 %v3799, %v3798
      %v3828 = vpack.c.bf16 %v3801, %v3800
      %v3829 = vpack.c.bf16 %v3803, %v3802
      %v3830 = vpack.c.bf16 %v3805, %v3804
      %v3831 = vpack.c.bf16 %v3807, %v3806
      %v3832 = vpack.c.bf16 %v3809, %v3808
      %v3833 = vpack.c.bf16 %v3811, %v3810
      %v3834 = vpack.c.bf16 %v3813, %v3812
      %v3835 = vpack.c.bf16 %v3815, %v3814
      %v3836 = vpack.c.bf16 %v3817, %v3816
      %v3839 = vunpack.c.l.b16 %v360
      %v3840 = vunpack.c.l.b16 %v361
      %v3841 = vpack.c.b16 %v3840, %v3839
      %v3844 = vsel %vm376, %v3818, 0
      %v3847 = vsel %vm376, %v3819, 0
      %v3850 = vsel %vm376, %v3820, 0
      %v3853 = vsel %vm376, %v3821, 0
      %v3856 = vsel %vm376, %v3822, 0
      %v3859 = vsel %vm376, %v3823, 0
      %v3862 = vsel %vm376, %v3824, 0
      %v3865 = vsel %vm376, %v3825, 0
      %v3868 = vsel %vm376, %v3826, 0
      %v3871 = vsel %vm376, %v3827, 0
      %v3874 = vsel %vm376, %v3828, 0
      %v3877 = vsel %vm376, %v3829, 0
      %v3880 = vsel %vm376, %v3830, 0
      %v3883 = vsel %vm376, %v3831, 0
      %v3886 = vsel %vm376, %v3832, 0
      %v3889 = vsel %vm376, %v3833, 0
      %v3892 = vsel %vm376, %v3834, 0
      %v3895 = vsel %vm376, %v3835, 0
      %v3898 = vsel %vm376, %v3836, 0
      %3900 = vmatprep.subr.bf16.mxu0 0
      %3901 = vmatpush1.bf16.msra.mxu0 %v3841
      %3902 = vmatprep.subr.bf16.mxu0 0
      %3903 = vmatpush1.bf16.msra.mxu0 0
      %3904 = vmatprep.subr.bf16.mxu0 0
      %3905 = vmatpush1.bf16.msra.mxu0 0
      %3906 = vmatprep.subr.bf16.mxu0 0
      %3907 = vmatpush1.bf16.msra.mxu0 0
      %3908 = vmatprep.subr.bf16.mxu0 0
      %3909 = vmatpush1.bf16.msra.mxu0 0
      %3910 = vmatprep.subr.bf16.mxu0 0
      %3911 = vmatpush1.bf16.msra.mxu0 0
      %3912 = vmatprep.subr.bf16.mxu0 0
      %3913 = vmatpush1.bf16.msra.mxu0 0
      %3914 = vmatprep.subr.bf16.mxu0 0
      %3915 = vmatpush1.bf16.msra.mxu0 0
      %3916 = vmatprep.subr.bf16.mxu0 0
      %3917 = vmatpush1.bf16.msra.mxu0 0
      %3918 = vmatprep.subr.bf16.mxu0 0
      %3919 = vmatpush1.bf16.msra.mxu0 0
      %3920 = vmatprep.subr.bf16.mxu0 0
      %3921 = vmatpush1.bf16.msra.mxu0 0
      %3922 = vmatprep.subr.bf16.mxu0 0
      %3923 = vmatpush1.bf16.msra.mxu0 0
      %3924 = vmatprep.subr.bf16.mxu0 0
      %3925 = vmatpush1.bf16.msra.mxu0 0
      %3926 = vmatprep.subr.bf16.mxu0 0
      %3927 = vmatpush1.bf16.msra.mxu0 0
      %3928 = vmatprep.subr.bf16.mxu0 0
      %3929 = vmatpush1.bf16.msra.mxu0 0
      %3930 = vmatprep.subr.bf16.mxu0 0
      %3931 = vmatpush1.bf16.msra.mxu0 0
      %3932 = vmatprep.mubr.bf16.mxu0 0
      %3933 = vmatmul.mubr.bf16.gmra.mrb[0].mxu0 %v3844
      %v3934 = vpop.f32.mrb[0].mxu0
      %v3935 = vadd.f32 0.0, %v3934
      %v3936 = vpop.f32.mrb[0].mxu0
      %v3937 = vpop.f32.mrb[0].mxu0
      %v3938 = vadd.f32 0.0, %v3937
      %v3939 = vpop.f32.mrb[0].mxu0
      %3940 = vmatprep.mubr.bf16.mxu0 0
      %3941 = vmatmul.mubr.bf16.gmra.mrb[0].mxu0 %v3847
      %v3942 = vpop.f32.mrb[0].mxu0
      %v3943 = vadd.f32 0.0, %v3942
      %v3944 = vpop.f32.mrb[0].mxu0
      %v3945 = vpop.f32.mrb[0].mxu0
      %v3946 = vadd.f32 0.0, %v3945
      %v3947 = vpop.f32.mrb[0].mxu0
      %3948 = vmatprep.mubr.bf16.mxu0 0
      %3949 = vmatmul.mubr.bf16.gmra.mrb[0].mxu0 %v3850
      %v3950 = vpop.f32.mrb[0].mxu0
      %v3951 = vadd.f32 0.0, %v3950
      %v3952 = vpop.f32.mrb[0].mxu0
      %v3953 = vpop.f32.mrb[0].mxu0
      %v3954 = vadd.f32 0.0, %v3953
      %v3955 = vpop.f32.mrb[0].mxu0
      %3956 = vmatprep.mubr.bf16.mxu0 0
      %3957 = vmatmul.mubr.bf16.gmra.mrb[0].mxu0 %v3853
      %v3958 = vpop.f32.mrb[0].mxu0
      %v3959 = vadd.f32 0.0, %v3958
      %v3960 = vpop.f32.mrb[0].mxu0
      %v3961 = vpop.f32.mrb[0].mxu0
      %v3962 = vadd.f32 0.0, %v3961
      %v3963 = vpop.f32.mrb[0].mxu0
      %3964 = vmatprep.mubr.bf16.mxu0 0
      %3965 = vmatmul.mubr.bf16.gmra.mrb[0].mxu0 %v3856
      %v3966 = vpop.f32.mrb[0].mxu0
      %v3967 = vadd.f32 0.0, %v3966
      %v3968 = vpop.f32.mrb[0].mxu0
      %v3969 = vpop.f32.mrb[0].mxu0
      %v3970 = vadd.f32 0.0, %v3969
      %v3971 = vpop.f32.mrb[0].mxu0
      %3972 = vmatprep.mubr.bf16.mxu0 0
      %3973 = vmatmul.mubr.bf16.gmra.mrb[0].mxu0 %v3859
      %v3974 = vpop.f32.mrb[0].mxu0
      %v3975 = vadd.f32 0.0, %v3974
      %v3976 = vpop.f32.mrb[0].mxu0
      %v3977 = vpop.f32.mrb[0].mxu0
      %v3978 = vadd.f32 0.0, %v3977
      %v3979 = vpop.f32.mrb[0].mxu0
      %3980 = vmatprep.mubr.bf16.mxu0 0
      %3981 = vmatmul.mubr.bf16.gmra.mrb[0].mxu0 %v3862
      %v3982 = vpop.f32.mrb[0].mxu0
      %v3983 = vadd.f32 0.0, %v3982
      %v3984 = vpop.f32.mrb[0].mxu0
      %v3985 = vpop.f32.mrb[0].mxu0
      %v3986 = vadd.f32 0.0, %v3985
      %v3987 = vpop.f32.mrb[0].mxu0
      %3988 = vmatprep.mubr.bf16.mxu0 0
      %3989 = vmatmul.mubr.bf16.gmra.mrb[0].mxu0 %v3865
      %v3990 = vpop.f32.mrb[0].mxu0
      %v3991 = vadd.f32 0.0, %v3990
      %v3992 = vpop.f32.mrb[0].mxu0
      %v3993 = vpop.f32.mrb[0].mxu0
      %v3994 = vadd.f32 0.0, %v3993
      %v3995 = vpop.f32.mrb[0].mxu0
      %3996 = vmatprep.mubr.bf16.mxu0 0
      %3997 = vmatmul.mubr.bf16.gmra.mrb[0].mxu0 %v3868
      %v3998 = vpop.f32.mrb[0].mxu0
      %v3999 = vadd.f32 0.0, %v3998
      %v4000 = vpop.f32.mrb[0].mxu0
      %v4001 = vpop.f32.mrb[0].mxu0
      %v4002 = vadd.f32 0.0, %v4001
      %v4003 = vpop.f32.mrb[0].mxu0
      %4004 = vmatprep.mubr.bf16.mxu0 0
      %4005 = vmatmul.mubr.bf16.gmra.mrb[0].mxu0 %v3871
      %v4006 = vpop.f32.mrb[0].mxu0
      %v4007 = vadd.f32 0.0, %v4006
      %v4008 = vpop.f32.mrb[0].mxu0
      %v4009 = vpop.f32.mrb[0].mxu0
      %v4010 = vadd.f32 0.0, %v4009
      %v4011 = vpop.f32.mrb[0].mxu0
      %4012 = vmatprep.mubr.bf16.mxu0 0
      %4013 = vmatmul.mubr.bf16.gmra.mrb[0].mxu0 %v3874
      %v4014 = vpop.f32.mrb[0].mxu0
      %v4015 = vadd.f32 0.0, %v4014
      %v4016 = vpop.f32.mrb[0].mxu0
      %v4017 = vpop.f32.mrb[0].mxu0
      %v4018 = vadd.f32 0.0, %v4017
      %v4019 = vpop.f32.mrb[0].mxu0
      %4020 = vmatprep.mubr.bf16.mxu0 0
      %4021 = vmatmul.mubr.bf16.gmra.mrb[0].mxu0 %v3877
      %v4022 = vpop.f32.mrb[0].mxu0
      %v4023 = vadd.f32 0.0, %v4022
      %v4024 = vpop.f32.mrb[0].mxu0
      %v4025 = vpop.f32.mrb[0].mxu0
      %v4026 = vadd.f32 0.0, %v4025
      %v4027 = vpop.f32.mrb[0].mxu0
      %4028 = vmatprep.mubr.bf16.mxu0 0
      %4029 = vmatmul.mubr.bf16.gmra.mrb[0].mxu0 %v3880
      %v4030 = vpop.f32.mrb[0].mxu0
      %v4031 = vadd.f32 0.0, %v4030
      %v4032 = vpop.f32.mrb[0].mxu0
      %v4033 = vpop.f32.mrb[0].mxu0
      %v4034 = vadd.f32 0.0, %v4033
      %v4035 = vpop.f32.mrb[0].mxu0
      %4036 = vmatprep.mubr.bf16.mxu0 0
      %4037 = vmatmul.mubr.bf16.gmra.mrb[0].mxu0 %v3883
      %v4038 = vpop.f32.mrb[0].mxu0
      %v4039 = vadd.f32 0.0, %v4038
      %v4040 = vpop.f32.mrb[0].mxu0
      %v4041 = vpop.f32.mrb[0].mxu0
      %v4042 = vadd.f32 0.0, %v4041
      %v4043 = vpop.f32.mrb[0].mxu0
      %4044 = vmatprep.mubr.bf16.mxu0 0
      %4045 = vmatmul.mubr.bf16.gmra.mrb[0].mxu0 %v3886
      %v4046 = vpop.f32.mrb[0].mxu0
      %v4047 = vadd.f32 0.0, %v4046
      %v4048 = vpop.f32.mrb[0].mxu0
      %v4049 = vpop.f32.mrb[0].mxu0
      %v4050 = vadd.f32 0.0, %v4049
      %v4051 = vpop.f32.mrb[0].mxu0
      %4052 = vmatprep.mubr.bf16.mxu0 0
      %4053 = vmatmul.mubr.bf16.gmra.mrb[0].mxu0 %v3889
      %v4054 = vpop.f32.mrb[0].mxu0
      %v4055 = vadd.f32 0.0, %v4054
      %v4056 = vpop.f32.mrb[0].mxu0
      %v4057 = vpop.f32.mrb[0].mxu0
      %v4058 = vadd.f32 0.0, %v4057
      %v4059 = vpop.f32.mrb[0].mxu0
      %4060 = vmatprep.mubr.bf16.mxu0 0
      %4061 = vmatmul.mubr.bf16.gmra.mrb[0].mxu0 %v3892
      %v4062 = vpop.f32.mrb[0].mxu0
      %v4063 = vadd.f32 0.0, %v4062
      %v4064 = vpop.f32.mrb[0].mxu0
      %v4065 = vpop.f32.mrb[0].mxu0
      %v4066 = vadd.f32 0.0, %v4065
      %v4067 = vpop.f32.mrb[0].mxu0
      %4068 = vmatprep.mubr.bf16.mxu0 0
      %4069 = vmatmul.mubr.bf16.gmra.mrb[0].mxu0 %v3895
      %v4070 = vpop.f32.mrb[0].mxu0
      %v4071 = vadd.f32 0.0, %v4070
      %v4072 = vpop.f32.mrb[0].mxu0
      %v4073 = vpop.f32.mrb[0].mxu0
      %v4074 = vadd.f32 0.0, %v4073
      %v4075 = vpop.f32.mrb[0].mxu0
      %4076 = vmatprep.mubr.bf16.mxu0 0
      %4077 = vmatmul.mubr.bf16.gmra.mrb[0].mxu0 %v3898
      %v4078 = vpop.f32.mrb[0].mxu0
      %v4079 = vadd.f32 0.0, %v4078
      %v4080 = vpop.f32.mrb[0].mxu0
      %v4081 = vpop.f32.mrb[0].mxu0
      %v4082 = vadd.f32 0.0, %v4081
      %v4083 = vpop.f32.mrb[0].mxu0
      %4084 = vdwg.mxu0
      %v4087 = vunpack.c.l.b16 %v358
      %v4088 = vunpack.c.l.b16 %v359
      %v4089 = vpack.c.b16 %v4088, %v4087
      %v4092 = vsel %vm376, %v3761, 0
      %v4095 = vsel %vm376, %v3762, 0
      %v4098 = vsel %vm376, %v3763, 0
      %v4101 = vsel %vm376, %v3764, 0
      %v4104 = vsel %vm376, %v3765, 0
      %v4107 = vsel %vm376, %v3766, 0
      %v4110 = vsel %vm376, %v3767, 0
      %v4113 = vsel %vm376, %v3768, 0
      %v4116 = vsel %vm376, %v3769, 0
      %v4119 = vsel %vm376, %v3770, 0
      %v4122 = vsel %vm376, %v3771, 0
      %v4125 = vsel %vm376, %v3772, 0
      %v4128 = vsel %vm376, %v3773, 0
      %v4131 = vsel %vm376, %v3774, 0
      %v4134 = vsel %vm376, %v3775, 0
      %v4137 = vsel %vm376, %v3776, 0
      %v4140 = vsel %vm376, %v3777, 0
      %v4143 = vsel %vm376, %v3778, 0
      %v4146 = vsel %vm376, %v3779, 0
      %4148 = vmatprep.subr.bf16.mxu0 0
      %4149 = vmatpush1.bf16.msra.mxu0 %v4089
      %4150 = vmatprep.subr.bf16.mxu0 0
      %4151 = vmatpush1.bf16.msra.mxu0 0
      %4152 = vmatprep.subr.bf16.mxu0 0
      %4153 = vmatpush1.bf16.msra.mxu0 0
      %4154 = vmatprep.subr.bf16.mxu0 0
      %4155 = vmatpush1.bf16.msra.mxu0 0
      %4156 = vmatprep.subr.bf16.mxu0 0
      %4157 = vmatpush1.bf16.msra.mxu0 0
      %4158 = vmatprep.subr.bf16.mxu0 0
      %4159 = vmatpush1.bf16.msra.mxu0 0
      %4160 = vmatprep.subr.bf16.mxu0 0
      %4161 = vmatpush1.bf16.msra.mxu0 0
      %4162 = vmatprep.subr.bf16.mxu0 0
      %4163 = vmatpush1.bf16.msra.mxu0 0
      %4164 = vmatprep.subr.bf16.mxu0 0
      %4165 = vmatpush1.bf16.msra.mxu0 0
      %4166 = vmatprep.subr.bf16.mxu0 0
      %4167 = vmatpush1.bf16.msra.mxu0 0
      %4168 = vmatprep.subr.bf16.mxu0 0
      %4169 = vmatpush1.bf16.msra.mxu0 0
      %4170 = vmatprep.subr.bf16.mxu0 0
      %4171 = vmatpush1.bf16.msra.mxu0 0
      %4172 = vmatprep.subr.bf16.mxu0 0
      %4173 = vmatpush1.bf16.msra.mxu0 0
      %4174 = vmatprep.subr.bf16.mxu0 0
      %4175 = vmatpush1.bf16.msra.mxu0 0
      %4176 = vmatprep.subr.bf16.mxu0 0
      %4177 = vmatpush1.bf16.msra.mxu0 0
      %4178 = vmatprep.subr.bf16.mxu0 0
      %4179 = vmatpush1.bf16.msra.mxu0 0
      %4180 = vmatprep.mubr.bf16.mxu0 0
      %4181 = vmatmul.mubr.bf16.gmra.mrb[0].mxu0 %v4092
      %v4182 = vpop.f32.mrb[0].mxu0
      %v4183 = vadd.f32 %v3935, %v4182
      %v4184 = vpop.f32.mrb[0].mxu0
      %v4185 = vpop.f32.mrb[0].mxu0
      %v4186 = vadd.f32 %v3938, %v4185
      %v4187 = vpop.f32.mrb[0].mxu0
      %4188 = vmatprep.mubr.bf16.mxu0 0
      %4189 = vmatmul.mubr.bf16.gmra.mrb[0].mxu0 %v4095
      %v4190 = vpop.f32.mrb[0].mxu0
      %v4191 = vadd.f32 %v3943, %v4190
      %v4192 = vpop.f32.mrb[0].mxu0
      %v4193 = vpop.f32.mrb[0].mxu0
      %v4194 = vadd.f32 %v3946, %v4193
      %v4195 = vpop.f32.mrb[0].mxu0
      %4196 = vmatprep.mubr.bf16.mxu0 0
      %4197 = vmatmul.mubr.bf16.gmra.mrb[0].mxu0 %v4098
      %v4198 = vpop.f32.mrb[0].mxu0
      %v4199 = vadd.f32 %v3951, %v4198
      %v4200 = vpop.f32.mrb[0].mxu0
      %v4201 = vpop.f32.mrb[0].mxu0
      %v4202 = vadd.f32 %v3954, %v4201
      %v4203 = vpop.f32.mrb[0].mxu0
      %4204 = vmatprep.mubr.bf16.mxu0 0
      %4205 = vmatmul.mubr.bf16.gmra.mrb[0].mxu0 %v4101
      %v4206 = vpop.f32.mrb[0].mxu0
      %v4207 = vadd.f32 %v3959, %v4206
      %v4208 = vpop.f32.mrb[0].mxu0
      %v4209 = vpop.f32.mrb[0].mxu0
      %v4210 = vadd.f32 %v3962, %v4209
      %v4211 = vpop.f32.mrb[0].mxu0
      %4212 = vmatprep.mubr.bf16.mxu0 0
      %4213 = vmatmul.mubr.bf16.gmra.mrb[0].mxu0 %v4104
      %v4214 = vpop.f32.mrb[0].mxu0
      %v4215 = vadd.f32 %v3967, %v4214
      %v4216 = vpop.f32.mrb[0].mxu0
      %v4217 = vpop.f32.mrb[0].mxu0
      %v4218 = vadd.f32 %v3970, %v4217
      %v4219 = vpop.f32.mrb[0].mxu0
      %4220 = vmatprep.mubr.bf16.mxu0 0
      %4221 = vmatmul.mubr.bf16.gmra.mrb[0].mxu0 %v4107
      %v4222 = vpop.f32.mrb[0].mxu0
      %v4223 = vadd.f32 %v3975, %v4222
      %v4224 = vpop.f32.mrb[0].mxu0
      %v4225 = vpop.f32.mrb[0].mxu0
      %v4226 = vadd.f32 %v3978, %v4225
      %v4227 = vpop.f32.mrb[0].mxu0
      %4228 = vmatprep.mubr.bf16.mxu0 0
      %4229 = vmatmul.mubr.bf16.gmra.mrb[0].mxu0 %v4110
      %v4230 = vpop.f32.mrb[0].mxu0
      %v4231 = vadd.f32 %v3983, %v4230
      %v4232 = vpop.f32.mrb[0].mxu0
      %v4233 = vpop.f32.mrb[0].mxu0
      %v4234 = vadd.f32 %v3986, %v4233
      %v4235 = vpop.f32.mrb[0].mxu0
      %4236 = vmatprep.mubr.bf16.mxu0 0
      %4237 = vmatmul.mubr.bf16.gmra.mrb[0].mxu0 %v4113
      %v4238 = vpop.f32.mrb[0].mxu0
      %v4239 = vadd.f32 %v3991, %v4238
      %v4240 = vpop.f32.mrb[0].mxu0
      %v4241 = vpop.f32.mrb[0].mxu0
      %v4242 = vadd.f32 %v3994, %v4241
      %v4243 = vpop.f32.mrb[0].mxu0
      %4244 = vmatprep.mubr.bf16.mxu0 0
      %4245 = vmatmul.mubr.bf16.gmra.mrb[0].mxu0 %v4116
      %v4246 = vpop.f32.mrb[0].mxu0
      %v4247 = vadd.f32 %v3999, %v4246
      %v4248 = vpop.f32.mrb[0].mxu0
      %v4249 = vpop.f32.mrb[0].mxu0
      %v4250 = vadd.f32 %v4002, %v4249
      %v4251 = vpop.f32.mrb[0].mxu0
      %4252 = vmatprep.mubr.bf16.mxu0 0
      %4253 = vmatmul.mubr.bf16.gmra.mrb[0].mxu0 %v4119
      %v4254 = vpop.f32.mrb[0].mxu0
      %v4255 = vadd.f32 %v4007, %v4254
      %v4256 = vpop.f32.mrb[0].mxu0
      %v4257 = vpop.f32.mrb[0].mxu0
      %v4258 = vadd.f32 %v4010, %v4257
      %v4259 = vpop.f32.mrb[0].mxu0
      %4260 = vmatprep.mubr.bf16.mxu0 0
      %4261 = vmatmul.mubr.bf16.gmra.mrb[0].mxu0 %v4122
      %v4262 = vpop.f32.mrb[0].mxu0
      %v4263 = vadd.f32 %v4015, %v4262
      %v4264 = vpop.f32.mrb[0].mxu0
      %v4265 = vpop.f32.mrb[0].mxu0
      %v4266 = vadd.f32 %v4018, %v4265
      %v4267 = vpop.f32.mrb[0].mxu0
      %4268 = vmatprep.mubr.bf16.mxu0 0
      %4269 = vmatmul.mubr.bf16.gmra.mrb[0].mxu0 %v4125
      %v4270 = vpop.f32.mrb[0].mxu0
      %v4271 = vadd.f32 %v4023, %v4270
      %v4272 = vpop.f32.mrb[0].mxu0
      %v4273 = vpop.f32.mrb[0].mxu0
      %v4274 = vadd.f32 %v4026, %v4273
      %v4275 = vpop.f32.mrb[0].mxu0
      %4276 = vmatprep.mubr.bf16.mxu0 0
      %4277 = vmatmul.mubr.bf16.gmra.mrb[0].mxu0 %v4128
      %v4278 = vpop.f32.mrb[0].mxu0
      %v4279 = vadd.f32 %v4031, %v4278
      %v4280 = vpop.f32.mrb[0].mxu0
      %v4281 = vpop.f32.mrb[0].mxu0
      %v4282 = vadd.f32 %v4034, %v4281
      %v4283 = vpop.f32.mrb[0].mxu0
      %4284 = vmatprep.mubr.bf16.mxu0 0
      %4285 = vmatmul.mubr.bf16.gmra.mrb[0].mxu0 %v4131
      %v4286 = vpop.f32.mrb[0].mxu0
      %v4287 = vadd.f32 %v4039, %v4286
      %v4288 = vpop.f32.mrb[0].mxu0
      %v4289 = vpop.f32.mrb[0].mxu0
      %v4290 = vadd.f32 %v4042, %v4289
      %v4291 = vpop.f32.mrb[0].mxu0
      %4292 = vmatprep.mubr.bf16.mxu0 0
      %4293 = vmatmul.mubr.bf16.gmra.mrb[0].mxu0 %v4134
      %v4294 = vpop.f32.mrb[0].mxu0
      %v4295 = vadd.f32 %v4047, %v4294
      %v4296 = vpop.f32.mrb[0].mxu0
      %v4297 = vpop.f32.mrb[0].mxu0
      %v4298 = vadd.f32 %v4050, %v4297
      %v4299 = vpop.f32.mrb[0].mxu0
      %4300 = vmatprep.mubr.bf16.mxu0 0
      %4301 = vmatmul.mubr.bf16.gmra.mrb[0].mxu0 %v4137
      %v4302 = vpop.f32.mrb[0].mxu0
      %v4303 = vadd.f32 %v4055, %v4302
      %v4304 = vpop.f32.mrb[0].mxu0
      %v4305 = vpop.f32.mrb[0].mxu0
      %v4306 = vadd.f32 %v4058, %v4305
      %v4307 = vpop.f32.mrb[0].mxu0
      %4308 = vmatprep.mubr.bf16.mxu0 0
      %4309 = vmatmul.mubr.bf16.gmra.mrb[0].mxu0 %v4140
      %v4310 = vpop.f32.mrb[0].mxu0
      %v4311 = vadd.f32 %v4063, %v4310
      %v4312 = vpop.f32.mrb[0].mxu0
      %v4313 = vpop.f32.mrb[0].mxu0
      %v4314 = vadd.f32 %v4066, %v4313
      %v4315 = vpop.f32.mrb[0].mxu0
      %4316 = vmatprep.mubr.bf16.mxu0 0
      %4317 = vmatmul.mubr.bf16.gmra.mrb[0].mxu0 %v4143
      %v4318 = vpop.f32.mrb[0].mxu0
      %v4319 = vadd.f32 %v4071, %v4318
      %v4320 = vpop.f32.mrb[0].mxu0
      %v4321 = vpop.f32.mrb[0].mxu0
      %v4322 = vadd.f32 %v4074, %v4321
      %v4323 = vpop.f32.mrb[0].mxu0
      %4324 = vmatprep.mubr.bf16.mxu0 0
      %4325 = vmatmul.mubr.bf16.gmra.mrb[0].mxu0 %v4146
      %v4326 = vpop.f32.mrb[0].mxu0
      %v4327 = vadd.f32 %v4079, %v4326
      %v4328 = vpop.f32.mrb[0].mxu0
      %v4329 = vpop.f32.mrb[0].mxu0
      %v4330 = vadd.f32 %v4082, %v4329
      %v4331 = vpop.f32.mrb[0].mxu0
      %4332 = vdwg.mxu0
      %v4333 = vld [vmem:[#allocation2 + $0x1f] sm:$0xff]
      %v4334 = vld [vmem:[#allocation2 + $0x27] sm:$0xff]
      %v4335 = vld [vmem:[#allocation2 + $0x2f] sm:$0xff]
      %v4336 = vld [vmem:[#allocation2 + $0x37] sm:$0xff]
      %v4337 = vld [vmem:[#allocation2 + $0x3f] sm:$0xff]
      %v4338 = vld [vmem:[#allocation2 + $0x47] sm:$0xff]
      %v4339 = vld [vmem:[#allocation2 + $0x4f] sm:$0xff]
      %v4340 = vld [vmem:[#allocation2 + $0x57] sm:$0xff]
      %v4341 = vld [vmem:[#allocation2 + $0x5f] sm:$0xff]
      %v4342 = vld [vmem:[#allocation2 + $0x67] sm:$0xff]
      %v4343 = vld [vmem:[#allocation2 + $0x6f] sm:$0xff]
      %v4344 = vld [vmem:[#allocation2 + $0x77] sm:$0xff]
      %v4345 = vld [vmem:[#allocation2 + $0x7f] sm:$0xff]
      %v4346 = vld [vmem:[#allocation2 + $0x87] sm:$0xff]
      %v4347 = vld [vmem:[#allocation2 + $0x8f] sm:$0xff]
      %v4348 = vld [vmem:[#allocation2 + $0x97] sm:$0xff]
      %v4349 = vld [vmem:[#allocation2 + $0x9f] sm:$0xff]
      %v4350 = vld [vmem:[#allocation2 + $0xa7] sm:$0xff]
      %v4351 = vld [vmem:[#allocation2 + $0xaf] sm:$0xff]
      %v4352 = vld [vmem:[#allocation2 + $0xb7] sm:$0xff]
      %v4353 = vld [vmem:[#allocation2 + $0xbf] sm:$0xff]
      %v4354 = vld [vmem:[#allocation2 + $0xc7] sm:$0xff]
      %v4355 = vld [vmem:[#allocation2 + $0xcf] sm:$0xff]
      %v4356 = vld [vmem:[#allocation2 + $0xd7] sm:$0xff]
      %v4357 = vld [vmem:[#allocation2 + $0xdf] sm:$0xff]
      %v4358 = vld [vmem:[#allocation2 + $0xe7] sm:$0xff]
      %v4359 = vld [vmem:[#allocation2 + $0xef] sm:$0xff]
      %v4360 = vld [vmem:[#allocation2 + $0xf7] sm:$0xff]
      %v4361 = vld [vmem:[#allocation2 + $0xff] sm:$0xff]
      %v4362 = vld [vmem:[#allocation2 + $0x107] sm:$0xff]
      %v4363 = vld [vmem:[#allocation2 + $0x10f] sm:$0xff]
      %v4364 = vld [vmem:[#allocation2 + $0x117] sm:$0xff]
      %v4365 = vld [vmem:[#allocation2 + $0x11f] sm:$0xff]
      %v4366 = vld [vmem:[#allocation2 + $0x127] sm:$0xff]
      %v4367 = vld [vmem:[#allocation2 + $0x12f] sm:$0xff]
      %v4368 = vld [vmem:[#allocation2 + $0x137] sm:$0xff]
      %v4369 = vld [vmem:[#allocation2 + $0x13f] sm:$0xff]
      %v4370 = vld [vmem:[#allocation2 + $0x147] sm:$0xff]
      %v4371 = vpack.c.bf16 %v4334, %v4333
      %v4372 = vpack.c.bf16 %v4336, %v4335
      %v4373 = vpack.c.bf16 %v4338, %v4337
      %v4374 = vpack.c.bf16 %v4340, %v4339
      %v4375 = vpack.c.bf16 %v4342, %v4341
      %v4376 = vpack.c.bf16 %v4344, %v4343
      %v4377 = vpack.c.bf16 %v4346, %v4345
      %v4378 = vpack.c.bf16 %v4348, %v4347
      %v4379 = vpack.c.bf16 %v4350, %v4349
      %v4380 = vpack.c.bf16 %v4352, %v4351
      %v4381 = vpack.c.bf16 %v4354, %v4353
      %v4382 = vpack.c.bf16 %v4356, %v4355
      %v4383 = vpack.c.bf16 %v4358, %v4357
      %v4384 = vpack.c.bf16 %v4360, %v4359
      %v4385 = vpack.c.bf16 %v4362, %v4361
      %v4386 = vpack.c.bf16 %v4364, %v4363
      %v4387 = vpack.c.bf16 %v4366, %v4365
      %v4388 = vpack.c.bf16 %v4368, %v4367
      %v4389 = vpack.c.bf16 %v4370, %v4369
      %v4392 = vunpack.c.l.b16 %v362
      %v4393 = vunpack.c.l.b16 %v363
      %v4394 = vpack.c.b16 %v4393, %v4392
      %v4397 = vsel %vm376, %v4371, 0
      %v4400 = vsel %vm376, %v4372, 0
      %v4403 = vsel %vm376, %v4373, 0
      %v4406 = vsel %vm376, %v4374, 0
      %v4409 = vsel %vm376, %v4375, 0
      %v4412 = vsel %vm376, %v4376, 0
      %v4415 = vsel %vm376, %v4377, 0
      %v4418 = vsel %vm376, %v4378, 0
      %v4421 = vsel %vm376, %v4379, 0
      %v4424 = vsel %vm376, %v4380, 0
      %v4427 = vsel %vm376, %v4381, 0
      %v4430 = vsel %vm376, %v4382, 0
      %v4433 = vsel %vm376, %v4383, 0
      %v4436 = vsel %vm376, %v4384, 0
      %v4439 = vsel %vm376, %v4385, 0
      %v4442 = vsel %vm376, %v4386, 0
      %v4445 = vsel %vm376, %v4387, 0
      %v4448 = vsel %vm376, %v4388, 0
      %v4451 = vsel %vm376, %v4389, 0
      %4453 = vmatprep.subr.bf16.mxu0 0
      %4454 = vmatpush1.bf16.msra.mxu0 %v4394
      %4455 = vmatprep.subr.bf16.mxu0 0
      %4456 = vmatpush1.bf16.msra.mxu0 0
      %4457 = vmatprep.subr.bf16.mxu0 0
      %4458 = vmatpush1.bf16.msra.mxu0 0
      %4459 = vmatprep.subr.bf16.mxu0 0
      %4460 = vmatpush1.bf16.msra.mxu0 0
      %4461 = vmatprep.subr.bf16.mxu0 0
      %4462 = vmatpush1.bf16.msra.mxu0 0
      %4463 = vmatprep.subr.bf16.mxu0 0
      %4464 = vmatpush1.bf16.msra.mxu0 0
      %4465 = vmatprep.subr.bf16.mxu0 0
      %4466 = vmatpush1.bf16.msra.mxu0 0
      %4467 = vmatprep.subr.bf16.mxu0 0
      %4468 = vmatpush1.bf16.msra.mxu0 0
      %4469 = vmatprep.subr.bf16.mxu0 0
      %4470 = vmatpush1.bf16.msra.mxu0 0
      %4471 = vmatprep.subr.bf16.mxu0 0
      %4472 = vmatpush1.bf16.msra.mxu0 0
      %4473 = vmatprep.subr.bf16.mxu0 0
      %4474 = vmatpush1.bf16.msra.mxu0 0
      %4475 = vmatprep.subr.bf16.mxu0 0
      %4476 = vmatpush1.bf16.msra.mxu0 0
      %4477 = vmatprep.subr.bf16.mxu0 0
      %4478 = vmatpush1.bf16.msra.mxu0 0
      %4479 = vmatprep.subr.bf16.mxu0 0
      %4480 = vmatpush1.bf16.msra.mxu0 0
      %4481 = vmatprep.subr.bf16.mxu0 0
      %4482 = vmatpush1.bf16.msra.mxu0 0
      %4483 = vmatprep.subr.bf16.mxu0 0
      %4484 = vmatpush1.bf16.msra.mxu0 0
      %4485 = vmatprep.mubr.bf16.mxu0 0
      %4486 = vmatmul.mubr.bf16.gmra.mrb[0].mxu0 %v4397
      %v4487 = vpop.f32.mrb[0].mxu0
      %v4488 = vadd.f32 0.0, %v4487
      %v4489 = vpop.f32.mrb[0].mxu0
      %v4490 = vpop.f32.mrb[0].mxu0
      %v4491 = vadd.f32 0.0, %v4490
      %v4492 = vpop.f32.mrb[0].mxu0
      %4493 = vmatprep.mubr.bf16.mxu0 0
      %4494 = vmatmul.mubr.bf16.gmra.mrb[0].mxu0 %v4400
      %v4495 = vpop.f32.mrb[0].mxu0
      %v4496 = vadd.f32 0.0, %v4495
      %v4497 = vpop.f32.mrb[0].mxu0
      %v4498 = vpop.f32.mrb[0].mxu0
      %v4499 = vadd.f32 0.0, %v4498
      %v4500 = vpop.f32.mrb[0].mxu0
      %4501 = vmatprep.mubr.bf16.mxu0 0
      %4502 = vmatmul.mubr.bf16.gmra.mrb[0].mxu0 %v4403
      %v4503 = vpop.f32.mrb[0].mxu0
      %v4504 = vadd.f32 0.0, %v4503
      %v4505 = vpop.f32.mrb[0].mxu0
      %v4506 = vpop.f32.mrb[0].mxu0
      %v4507 = vadd.f32 0.0, %v4506
      %v4508 = vpop.f32.mrb[0].mxu0
      %4509 = vmatprep.mubr.bf16.mxu0 0
      %4510 = vmatmul.mubr.bf16.gmra.mrb[0].mxu0 %v4406
      %v4511 = vpop.f32.mrb[0].mxu0
      %v4512 = vadd.f32 0.0, %v4511
      %v4513 = vpop.f32.mrb[0].mxu0
      %v4514 = vpop.f32.mrb[0].mxu0
      %v4515 = vadd.f32 0.0, %v4514
      %v4516 = vpop.f32.mrb[0].mxu0
      %4517 = vmatprep.mubr.bf16.mxu0 0
      %4518 = vmatmul.mubr.bf16.gmra.mrb[0].mxu0 %v4409
      %v4519 = vpop.f32.mrb[0].mxu0
      %v4520 = vadd.f32 0.0, %v4519
      %v4521 = vpop.f32.mrb[0].mxu0
      %v4522 = vpop.f32.mrb[0].mxu0
      %v4523 = vadd.f32 0.0, %v4522
      %v4524 = vpop.f32.mrb[0].mxu0
      %4525 = vmatprep.mubr.bf16.mxu0 0
      %4526 = vmatmul.mubr.bf16.gmra.mrb[0].mxu0 %v4412
      %v4527 = vpop.f32.mrb[0].mxu0
      %v4528 = vadd.f32 0.0, %v4527
      %v4529 = vpop.f32.mrb[0].mxu0
      %v4530 = vpop.f32.mrb[0].mxu0
      %v4531 = vadd.f32 0.0, %v4530
      %v4532 = vpop.f32.mrb[0].mxu0
      %4533 = vmatprep.mubr.bf16.mxu0 0
      %4534 = vmatmul.mubr.bf16.gmra.mrb[0].mxu0 %v4415
      %v4535 = vpop.f32.mrb[0].mxu0
      %v4536 = vadd.f32 0.0, %v4535
      %v4537 = vpop.f32.mrb[0].mxu0
      %v4538 = vpop.f32.mrb[0].mxu0
      %v4539 = vadd.f32 0.0, %v4538
      %v4540 = vpop.f32.mrb[0].mxu0
      %4541 = vmatprep.mubr.bf16.mxu0 0
      %4542 = vmatmul.mubr.bf16.gmra.mrb[0].mxu0 %v4418
      %v4543 = vpop.f32.mrb[0].mxu0
      %v4544 = vadd.f32 0.0, %v4543
      %v4545 = vpop.f32.mrb[0].mxu0
      %v4546 = vpop.f32.mrb[0].mxu0
      %v4547 = vadd.f32 0.0, %v4546
      %v4548 = vpop.f32.mrb[0].mxu0
      %4549 = vmatprep.mubr.bf16.mxu0 0
      %4550 = vmatmul.mubr.bf16.gmra.mrb[0].mxu0 %v4421
      %v4551 = vpop.f32.mrb[0].mxu0
      %v4552 = vadd.f32 0.0, %v4551
      %v4553 = vpop.f32.mrb[0].mxu0
      %v4554 = vpop.f32.mrb[0].mxu0
      %v4555 = vadd.f32 0.0, %v4554
      %v4556 = vpop.f32.mrb[0].mxu0
      %4557 = vmatprep.mubr.bf16.mxu0 0
      %4558 = vmatmul.mubr.bf16.gmra.mrb[0].mxu0 %v4424
      %v4559 = vpop.f32.mrb[0].mxu0
      %v4560 = vadd.f32 0.0, %v4559
      %v4561 = vpop.f32.mrb[0].mxu0
      %v4562 = vpop.f32.mrb[0].mxu0
      %v4563 = vadd.f32 0.0, %v4562
      %v4564 = vpop.f32.mrb[0].mxu0
      %4565 = vmatprep.mubr.bf16.mxu0 0
      %4566 = vmatmul.mubr.bf16.gmra.mrb[0].mxu0 %v4427
      %v4567 = vpop.f32.mrb[0].mxu0
      %v4568 = vadd.f32 0.0, %v4567
      %v4569 = vpop.f32.mrb[0].mxu0
      %v4570 = vpop.f32.mrb[0].mxu0
      %v4571 = vadd.f32 0.0, %v4570
      %v4572 = vpop.f32.mrb[0].mxu0
      %4573 = vmatprep.mubr.bf16.mxu0 0
      %4574 = vmatmul.mubr.bf16.gmra.mrb[0].mxu0 %v4430
      %v4575 = vpop.f32.mrb[0].mxu0
      %v4576 = vadd.f32 0.0, %v4575
      %v4577 = vpop.f32.mrb[0].mxu0
      %v4578 = vpop.f32.mrb[0].mxu0
      %v4579 = vadd.f32 0.0, %v4578
      %v4580 = vpop.f32.mrb[0].mxu0
      %4581 = vmatprep.mubr.bf16.mxu0 0
      %4582 = vmatmul.mubr.bf16.gmra.mrb[0].mxu0 %v4433
      %v4583 = vpop.f32.mrb[0].mxu0
      %v4584 = vadd.f32 0.0, %v4583
      %v4585 = vpop.f32.mrb[0].mxu0
      %v4586 = vpop.f32.mrb[0].mxu0
      %v4587 = vadd.f32 0.0, %v4586
      %v4588 = vpop.f32.mrb[0].mxu0
      %4589 = vmatprep.mubr.bf16.mxu0 0
      %4590 = vmatmul.mubr.bf16.gmra.mrb[0].mxu0 %v4436
      %v4591 = vpop.f32.mrb[0].mxu0
      %v4592 = vadd.f32 0.0, %v4591
      %v4593 = vpop.f32.mrb[0].mxu0
      %v4594 = vpop.f32.mrb[0].mxu0
      %v4595 = vadd.f32 0.0, %v4594
      %v4596 = vpop.f32.mrb[0].mxu0
      %4597 = vmatprep.mubr.bf16.mxu0 0
      %4598 = vmatmul.mubr.bf16.gmra.mrb[0].mxu0 %v4439
      %v4599 = vpop.f32.mrb[0].mxu0
      %v4600 = vadd.f32 0.0, %v4599
      %v4601 = vpop.f32.mrb[0].mxu0
      %v4602 = vpop.f32.mrb[0].mxu0
      %v4603 = vadd.f32 0.0, %v4602
      %v4604 = vpop.f32.mrb[0].mxu0
      %4605 = vmatprep.mubr.bf16.mxu0 0
      %4606 = vmatmul.mubr.bf16.gmra.mrb[0].mxu0 %v4442
      %v4607 = vpop.f32.mrb[0].mxu0
      %v4608 = vadd.f32 0.0, %v4607
      %v4609 = vpop.f32.mrb[0].mxu0
      %v4610 = vpop.f32.mrb[0].mxu0
      %v4611 = vadd.f32 0.0, %v4610
      %v4612 = vpop.f32.mrb[0].mxu0
      %4613 = vmatprep.mubr.bf16.mxu0 0
      %4614 = vmatmul.mubr.bf16.gmra.mrb[0].mxu0 %v4445
      %v4615 = vpop.f32.mrb[0].mxu0
      %v4616 = vadd.f32 0.0, %v4615
      %v4617 = vpop.f32.mrb[0].mxu0
      %v4618 = vpop.f32.mrb[0].mxu0
      %v4619 = vadd.f32 0.0, %v4618
      %v4620 = vpop.f32.mrb[0].mxu0
      %4621 = vmatprep.mubr.bf16.mxu0 0
      %4622 = vmatmul.mubr.bf16.gmra.mrb[0].mxu0 %v4448
      %v4623 = vpop.f32.mrb[0].mxu0
      %v4624 = vadd.f32 0.0, %v4623
      %v4625 = vpop.f32.mrb[0].mxu0
      %v4626 = vpop.f32.mrb[0].mxu0
      %v4627 = vadd.f32 0.0, %v4626
      %v4628 = vpop.f32.mrb[0].mxu0
      %4629 = vmatprep.mubr.bf16.mxu0 0
      %4630 = vmatmul.mubr.bf16.gmra.mrb[0].mxu0 %v4451
      %v4631 = vpop.f32.mrb[0].mxu0
      %v4632 = vadd.f32 0.0, %v4631
      %v4633 = vpop.f32.mrb[0].mxu0
      %v4634 = vpop.f32.mrb[0].mxu0
      %v4635 = vadd.f32 0.0, %v4634
      %v4636 = vpop.f32.mrb[0].mxu0
      %4637 = vdwg.mxu0
      %v4638 = vadd.f32 %v4183, %v4488
      %v4639 = vadd.f32 %v4186, %v4491
      %v4640 = vadd.f32 %v4191, %v4496
      %v4641 = vadd.f32 %v4194, %v4499
      %v4642 = vadd.f32 %v4199, %v4504
      %v4643 = vadd.f32 %v4202, %v4507
      %v4644 = vadd.f32 %v4207, %v4512
      %v4645 = vadd.f32 %v4210, %v4515
      %v4646 = vadd.f32 %v4215, %v4520
      %v4647 = vadd.f32 %v4218, %v4523
      %v4648 = vadd.f32 %v4223, %v4528
      %v4649 = vadd.f32 %v4226, %v4531
      %v4650 = vadd.f32 %v4231, %v4536
      %v4651 = vadd.f32 %v4234, %v4539
      %v4652 = vadd.f32 %v4239, %v4544
      %v4653 = vadd.f32 %v4242, %v4547
      %v4654 = vadd.f32 %v4247, %v4552
      %v4655 = vadd.f32 %v4250, %v4555
      %v4656 = vadd.f32 %v4255, %v4560
      %v4657 = vadd.f32 %v4258, %v4563
      %v4658 = vadd.f32 %v4263, %v4568
      %v4659 = vadd.f32 %v4266, %v4571
      %v4660 = vadd.f32 %v4271, %v4576
      %v4661 = vadd.f32 %v4274, %v4579
      %v4662 = vadd.f32 %v4279, %v4584
      %v4663 = vadd.f32 %v4282, %v4587
      %v4664 = vadd.f32 %v4287, %v4592
      %v4665 = vadd.f32 %v4290, %v4595
      %v4666 = vadd.f32 %v4295, %v4600
      %v4667 = vadd.f32 %v4298, %v4603
      %v4668 = vadd.f32 %v4303, %v4608
      %v4669 = vadd.f32 %v4306, %v4611
      %v4670 = vadd.f32 %v4311, %v4616
      %v4671 = vadd.f32 %v4314, %v4619
      %v4672 = vadd.f32 %v4319, %v4624
      %v4673 = vadd.f32 %v4322, %v4627
      %v4674 = vadd.f32 %v4327, %v4632
      %v4675 = vadd.f32 %v4330, %v4635
      %v4676 = vld [vmem:[#allocation2 + $0x2f] sm:$0xff]
      %v4677 = vld [vmem:[#allocation2 + $0x37] sm:$0xff]
      %v4678 = vld [vmem:[#allocation2 + $0x3f] sm:$0xff]
      %v4679 = vld [vmem:[#allocation2 + $0x47] sm:$0xff]
      %v4680 = vld [vmem:[#allocation2 + $0x4f] sm:$0xff]
      %v4681 = vld [vmem:[#allocation2 + $0x57] sm:$0xff]
      %v4682 = vld [vmem:[#allocation2 + $0x5f] sm:$0xff]
      %v4683 = vld [vmem:[#allocation2 + $0x67] sm:$0xff]
      %v4684 = vld [vmem:[#allocation2 + $0x6f] sm:$0xff]
      %v4685 = vld [vmem:[#allocation2 + $0x77] sm:$0xff]
      %v4686 = vld [vmem:[#allocation2 + $0x7f] sm:$0xff]
      %v4687 = vld [vmem:[#allocation2 + $0x87] sm:$0xff]
      %v4688 = vld [vmem:[#allocation2 + $0x8f] sm:$0xff]
      %v4689 = vld [vmem:[#allocation2 + $0x97] sm:$0xff]
      %v4690 = vld [vmem:[#allocation2 + $0x9f] sm:$0xff]
      %v4691 = vld [vmem:[#allocation2 + $0xa7] sm:$0xff]
      %v4692 = vld [vmem:[#allocation2 + $0xaf] sm:$0xff]
      %v4693 = vld [vmem:[#allocation2 + $0xb7] sm:$0xff]
      %v4694 = vld [vmem:[#allocation2 + $0xbf] sm:$0xff]
      %v4695 = vld [vmem:[#allocation2 + $0xc7] sm:$0xff]
      %v4696 = vld [vmem:[#allocation2 + $0xcf] sm:$0xff]
      %v4697 = vld [vmem:[#allocation2 + $0xd7] sm:$0xff]
      %v4698 = vld [vmem:[#allocation2 + $0xdf] sm:$0xff]
      %v4699 = vld [vmem:[#allocation2 + $0xe7] sm:$0xff]
      %v4700 = vld [vmem:[#allocation2 + $0xef] sm:$0xff]
      %v4701 = vld [vmem:[#allocation2 + $0xf7] sm:$0xff]
      %v4702 = vld [vmem:[#allocation2 + $0xff] sm:$0xff]
      %v4703 = vld [vmem:[#allocation2 + $0x107] sm:$0xff]
      %v4704 = vld [vmem:[#allocation2 + $0x10f] sm:$0xff]
      %v4705 = vld [vmem:[#allocation2 + $0x117] sm:$0xff]
      %v4706 = vld [vmem:[#allocation2 + $0x11f] sm:$0xff]
      %v4707 = vld [vmem:[#allocation2 + $0x127] sm:$0xff]
      %v4708 = vld [vmem:[#allocation2 + $0x12f] sm:$0xff]
      %v4709 = vld [vmem:[#allocation2 + $0x137] sm:$0xff]
      %v4710 = vld [vmem:[#allocation2 + $0x13f] sm:$0xff]
      %v4711 = vld [vmem:[#allocation2 + $0x147] sm:$0xff]
      %v4712 = vld [vmem:[#allocation2 + $0x14f] sm:$0xff]
      %v4713 = vld [vmem:[#allocation2 + $0x157] sm:$0xff]
      %v4714 = vpack.c.bf16 %v4677, %v4676
      %v4715 = vpack.c.bf16 %v4679, %v4678
      %v4716 = vpack.c.bf16 %v4681, %v4680
      %v4717 = vpack.c.bf16 %v4683, %v4682
      %v4718 = vpack.c.bf16 %v4685, %v4684
      %v4719 = vpack.c.bf16 %v4687, %v4686
      %v4720 = vpack.c.bf16 %v4689, %v4688
      %v4721 = vpack.c.bf16 %v4691, %v4690
      %v4722 = vpack.c.bf16 %v4693, %v4692
      %v4723 = vpack.c.bf16 %v4695, %v4694
      %v4724 = vpack.c.bf16 %v4697, %v4696
      %v4725 = vpack.c.bf16 %v4699, %v4698
      %v4726 = vpack.c.bf16 %v4701, %v4700
      %v4727 = vpack.c.bf16 %v4703, %v4702
      %v4728 = vpack.c.bf16 %v4705, %v4704
      %v4729 = vpack.c.bf16 %v4707, %v4706
      %v4730 = vpack.c.bf16 %v4709, %v4708
      %v4731 = vpack.c.bf16 %v4711, %v4710
      %v4732 = vpack.c.bf16 %v4713, %v4712
      %v4735 = vunpack.c.l.b16 %v364
      %v4736 = vunpack.c.l.b16 %v365
      %v4737 = vpack.c.b16 %v4736, %v4735
      %v4740 = vsel %vm376, %v4714, 0
      %v4743 = vsel %vm376, %v4715, 0
      %v4746 = vsel %vm376, %v4716, 0
      %v4749 = vsel %vm376, %v4717, 0
      %v4752 = vsel %vm376, %v4718, 0
      %v4755 = vsel %vm376, %v4719, 0
      %v4758 = vsel %vm376, %v4720, 0
      %v4761 = vsel %vm376, %v4721, 0
      %v4764 = vsel %vm376, %v4722, 0
      %v4767 = vsel %vm376, %v4723, 0
      %v4770 = vsel %vm376, %v4724, 0
      %v4773 = vsel %vm376, %v4725, 0
      %v4776 = vsel %vm376, %v4726, 0
      %v4779 = vsel %vm376, %v4727, 0
      %v4782 = vsel %vm376, %v4728, 0
      %v4785 = vsel %vm376, %v4729, 0
      %v4788 = vsel %vm376, %v4730, 0
      %v4791 = vsel %vm376, %v4731, 0
      %v4794 = vsel %vm376, %v4732, 0
      %4796 = vmatprep.subr.bf16.mxu0 0
      %4797 = vmatpush1.bf16.msra.mxu0 %v4737
      %4798 = vmatprep.subr.bf16.mxu0 0
      %4799 = vmatpush1.bf16.msra.mxu0 0
      %4800 = vmatprep.subr.bf16.mxu0 0
      %4801 = vmatpush1.bf16.msra.mxu0 0
      %4802 = vmatprep.subr.bf16.mxu0 0
      %4803 = vmatpush1.bf16.msra.mxu0 0
      %4804 = vmatprep.subr.bf16.mxu0 0
      %4805 = vmatpush1.bf16.msra.mxu0 0
      %4806 = vmatprep.subr.bf16.mxu0 0
      %4807 = vmatpush1.bf16.msra.mxu0 0
      %4808 = vmatprep.subr.bf16.mxu0 0
      %4809 = vmatpush1.bf16.msra.mxu0 0
      %4810 = vmatprep.subr.bf16.mxu0 0
      %4811 = vmatpush1.bf16.msra.mxu0 0
      %4812 = vmatprep.subr.bf16.mxu0 0
      %4813 = vmatpush1.bf16.msra.mxu0 0
      %4814 = vmatprep.subr.bf16.mxu0 0
      %4815 = vmatpush1.bf16.msra.mxu0 0
      %4816 = vmatprep.subr.bf16.mxu0 0
      %4817 = vmatpush1.bf16.msra.mxu0 0
      %4818 = vmatprep.subr.bf16.mxu0 0
      %4819 = vmatpush1.bf16.msra.mxu0 0
      %4820 = vmatprep.subr.bf16.mxu0 0
      %4821 = vmatpush1.bf16.msra.mxu0 0
      %4822 = vmatprep.subr.bf16.mxu0 0
      %4823 = vmatpush1.bf16.msra.mxu0 0
      %4824 = vmatprep.subr.bf16.mxu0 0
      %4825 = vmatpush1.bf16.msra.mxu0 0
      %4826 = vmatprep.subr.bf16.mxu0 0
      %4827 = vmatpush1.bf16.msra.mxu0 0
      %4828 = vmatprep.mubr.bf16.mxu0 0
      %4829 = vmatmul.mubr.bf16.gmra.mrb[0].mxu0 %v4740
      %v4830 = vpop.f32.mrb[0].mxu0
      %v4831 = vadd.f32 0.0, %v4830
      %v4832 = vpop.f32.mrb[0].mxu0
      %v4833 = vpop.f32.mrb[0].mxu0
      %v4834 = vadd.f32 0.0, %v4833
      %v4835 = vpop.f32.mrb[0].mxu0
      %4836 = vmatprep.mubr.bf16.mxu0 0
      %4837 = vmatmul.mubr.bf16.gmra.mrb[0].mxu0 %v4743
      %v4838 = vpop.f32.mrb[0].mxu0
      %v4839 = vadd.f32 0.0, %v4838
      %v4840 = vpop.f32.mrb[0].mxu0
      %v4841 = vpop.f32.mrb[0].mxu0
      %v4842 = vadd.f32 0.0, %v4841
      %v4843 = vpop.f32.mrb[0].mxu0
      %4844 = vmatprep.mubr.bf16.mxu0 0
      %4845 = vmatmul.mubr.bf16.gmra.mrb[0].mxu0 %v4746
      %v4846 = vpop.f32.mrb[0].mxu0
      %v4847 = vadd.f32 0.0, %v4846
      %v4848 = vpop.f32.mrb[0].mxu0
      %v4849 = vpop.f32.mrb[0].mxu0
      %v4850 = vadd.f32 0.0, %v4849
      %v4851 = vpop.f32.mrb[0].mxu0
      %4852 = vmatprep.mubr.bf16.mxu0 0
      %4853 = vmatmul.mubr.bf16.gmra.mrb[0].mxu0 %v4749
      %v4854 = vpop.f32.mrb[0].mxu0
      %v4855 = vadd.f32 0.0, %v4854
      %v4856 = vpop.f32.mrb[0].mxu0
      %v4857 = vpop.f32.mrb[0].mxu0
      %v4858 = vadd.f32 0.0, %v4857
      %v4859 = vpop.f32.mrb[0].mxu0
      %4860 = vmatprep.mubr.bf16.mxu0 0
      %4861 = vmatmul.mubr.bf16.gmra.mrb[0].mxu0 %v4752
      %v4862 = vpop.f32.mrb[0].mxu0
      %v4863 = vadd.f32 0.0, %v4862
      %v4864 = vpop.f32.mrb[0].mxu0
      %v4865 = vpop.f32.mrb[0].mxu0
      %v4866 = vadd.f32 0.0, %v4865
      %v4867 = vpop.f32.mrb[0].mxu0
      %4868 = vmatprep.mubr.bf16.mxu0 0
      %4869 = vmatmul.mubr.bf16.gmra.mrb[0].mxu0 %v4755
      %v4870 = vpop.f32.mrb[0].mxu0
      %v4871 = vadd.f32 0.0, %v4870
      %v4872 = vpop.f32.mrb[0].mxu0
      %v4873 = vpop.f32.mrb[0].mxu0
      %v4874 = vadd.f32 0.0, %v4873
      %v4875 = vpop.f32.mrb[0].mxu0
      %4876 = vmatprep.mubr.bf16.mxu0 0
      %4877 = vmatmul.mubr.bf16.gmra.mrb[0].mxu0 %v4758
      %v4878 = vpop.f32.mrb[0].mxu0
      %v4879 = vadd.f32 0.0, %v4878
      %v4880 = vpop.f32.mrb[0].mxu0
      %v4881 = vpop.f32.mrb[0].mxu0
      %v4882 = vadd.f32 0.0, %v4881
      %v4883 = vpop.f32.mrb[0].mxu0
      %4884 = vmatprep.mubr.bf16.mxu0 0
      %4885 = vmatmul.mubr.bf16.gmra.mrb[0].mxu0 %v4761
      %v4886 = vpop.f32.mrb[0].mxu0
      %v4887 = vadd.f32 0.0, %v4886
      %v4888 = vpop.f32.mrb[0].mxu0
      %v4889 = vpop.f32.mrb[0].mxu0
      %v4890 = vadd.f32 0.0, %v4889
      %v4891 = vpop.f32.mrb[0].mxu0
      %4892 = vmatprep.mubr.bf16.mxu0 0
      %4893 = vmatmul.mubr.bf16.gmra.mrb[0].mxu0 %v4764
      %v4894 = vpop.f32.mrb[0].mxu0
      %v4895 = vadd.f32 0.0, %v4894
      %v4896 = vpop.f32.mrb[0].mxu0
      %v4897 = vpop.f32.mrb[0].mxu0
      %v4898 = vadd.f32 0.0, %v4897
      %v4899 = vpop.f32.mrb[0].mxu0
      %4900 = vmatprep.mubr.bf16.mxu0 0
      %4901 = vmatmul.mubr.bf16.gmra.mrb[0].mxu0 %v4767
      %v4902 = vpop.f32.mrb[0].mxu0
      %v4903 = vadd.f32 0.0, %v4902
      %v4904 = vpop.f32.mrb[0].mxu0
      %v4905 = vpop.f32.mrb[0].mxu0
      %v4906 = vadd.f32 0.0, %v4905
      %v4907 = vpop.f32.mrb[0].mxu0
      %4908 = vmatprep.mubr.bf16.mxu0 0
      %4909 = vmatmul.mubr.bf16.gmra.mrb[0].mxu0 %v4770
      %v4910 = vpop.f32.mrb[0].mxu0
      %v4911 = vadd.f32 0.0, %v4910
      %v4912 = vpop.f32.mrb[0].mxu0
      %v4913 = vpop.f32.mrb[0].mxu0
      %v4914 = vadd.f32 0.0, %v4913
      %v4915 = vpop.f32.mrb[0].mxu0
      %4916 = vmatprep.mubr.bf16.mxu0 0
      %4917 = vmatmul.mubr.bf16.gmra.mrb[0].mxu0 %v4773
      %v4918 = vpop.f32.mrb[0].mxu0
      %v4919 = vadd.f32 0.0, %v4918
      %v4920 = vpop.f32.mrb[0].mxu0
      %v4921 = vpop.f32.mrb[0].mxu0
      %v4922 = vadd.f32 0.0, %v4921
      %v4923 = vpop.f32.mrb[0].mxu0
      %4924 = vmatprep.mubr.bf16.mxu0 0
      %4925 = vmatmul.mubr.bf16.gmra.mrb[0].mxu0 %v4776
      %v4926 = vpop.f32.mrb[0].mxu0
      %v4927 = vadd.f32 0.0, %v4926
      %v4928 = vpop.f32.mrb[0].mxu0
      %v4929 = vpop.f32.mrb[0].mxu0
      %v4930 = vadd.f32 0.0, %v4929
      %v4931 = vpop.f32.mrb[0].mxu0
      %4932 = vmatprep.mubr.bf16.mxu0 0
      %4933 = vmatmul.mubr.bf16.gmra.mrb[0].mxu0 %v4779
      %v4934 = vpop.f32.mrb[0].mxu0
      %v4935 = vadd.f32 0.0, %v4934
      %v4936 = vpop.f32.mrb[0].mxu0
      %v4937 = vpop.f32.mrb[0].mxu0
      %v4938 = vadd.f32 0.0, %v4937
      %v4939 = vpop.f32.mrb[0].mxu0
      %4940 = vmatprep.mubr.bf16.mxu0 0
      %4941 = vmatmul.mubr.bf16.gmra.mrb[0].mxu0 %v4782
      %v4942 = vpop.f32.mrb[0].mxu0
      %v4943 = vadd.f32 0.0, %v4942
      %v4944 = vpop.f32.mrb[0].mxu0
      %v4945 = vpop.f32.mrb[0].mxu0
      %v4946 = vadd.f32 0.0, %v4945
      %v4947 = vpop.f32.mrb[0].mxu0
      %4948 = vmatprep.mubr.bf16.mxu0 0
      %4949 = vmatmul.mubr.bf16.gmra.mrb[0].mxu0 %v4785
      %v4950 = vpop.f32.mrb[0].mxu0
      %v4951 = vadd.f32 0.0, %v4950
      %v4952 = vpop.f32.mrb[0].mxu0
      %v4953 = vpop.f32.mrb[0].mxu0
      %v4954 = vadd.f32 0.0, %v4953
      %v4955 = vpop.f32.mrb[0].mxu0
      %4956 = vmatprep.mubr.bf16.mxu0 0
      %4957 = vmatmul.mubr.bf16.gmra.mrb[0].mxu0 %v4788
      %v4958 = vpop.f32.mrb[0].mxu0
      %v4959 = vadd.f32 0.0, %v4958
      %v4960 = vpop.f32.mrb[0].mxu0
      %v4961 = vpop.f32.mrb[0].mxu0
      %v4962 = vadd.f32 0.0, %v4961
      %v4963 = vpop.f32.mrb[0].mxu0
      %4964 = vmatprep.mubr.bf16.mxu0 0
      %4965 = vmatmul.mubr.bf16.gmra.mrb[0].mxu0 %v4791
      %v4966 = vpop.f32.mrb[0].mxu0
      %v4967 = vadd.f32 0.0, %v4966
      %v4968 = vpop.f32.mrb[0].mxu0
      %v4969 = vpop.f32.mrb[0].mxu0
      %v4970 = vadd.f32 0.0, %v4969
      %v4971 = vpop.f32.mrb[0].mxu0
      %4972 = vmatprep.mubr.bf16.mxu0 0
      %4973 = vmatmul.mubr.bf16.gmra.mrb[0].mxu0 %v4794
      %v4974 = vpop.f32.mrb[0].mxu0
      %v4975 = vadd.f32 0.0, %v4974
      %v4976 = vpop.f32.mrb[0].mxu0
      %v4977 = vpop.f32.mrb[0].mxu0
      %v4978 = vadd.f32 0.0, %v4977
      %v4979 = vpop.f32.mrb[0].mxu0
      %4980 = vdwg.mxu0
      %v4981 = vadd.f32 %v4638, %v4831
      %v4982 = vadd.f32 %v4639, %v4834
      %v4983 = vadd.f32 %v4640, %v4839
      %v4984 = vadd.f32 %v4641, %v4842
      %v4985 = vadd.f32 %v4642, %v4847
      %v4986 = vadd.f32 %v4643, %v4850
      %v4987 = vadd.f32 %v4644, %v4855
      %v4988 = vadd.f32 %v4645, %v4858
      %v4989 = vadd.f32 %v4646, %v4863
      %v4990 = vadd.f32 %v4647, %v4866
      %v4991 = vadd.f32 %v4648, %v4871
      %v4992 = vadd.f32 %v4649, %v4874
      %v4993 = vadd.f32 %v4650, %v4879
      %v4994 = vadd.f32 %v4651, %v4882
      %v4995 = vadd.f32 %v4652, %v4887
      %v4996 = vadd.f32 %v4653, %v4890
      %v4997 = vadd.f32 %v4654, %v4895
      %v4998 = vadd.f32 %v4655, %v4898
      %v4999 = vadd.f32 %v4656, %v4903
      %v5000 = vadd.f32 %v4657, %v4906
      %v5001 = vadd.f32 %v4658, %v4911
      %v5002 = vadd.f32 %v4659, %v4914
      %v5003 = vadd.f32 %v4660, %v4919
      %v5004 = vadd.f32 %v4661, %v4922
      %v5005 = vadd.f32 %v4662, %v4927
      %v5006 = vadd.f32 %v4663, %v4930
      %v5007 = vadd.f32 %v4664, %v4935
      %v5008 = vadd.f32 %v4665, %v4938
      %v5009 = vadd.f32 %v4666, %v4943
      %v5010 = vadd.f32 %v4667, %v4946
      %v5011 = vadd.f32 %v4668, %v4951
      %v5012 = vadd.f32 %v4669, %v4954
      %v5013 = vadd.f32 %v4670, %v4959
      %v5014 = vadd.f32 %v4671, %v4962
      %v5015 = vadd.f32 %v4672, %v4967
      %v5016 = vadd.f32 %v4673, %v4970
      %v5017 = vadd.f32 %v4674, %v4975
      %v5018 = vadd.f32 %v4675, %v4978
      %v5019 = vld [vmem:[#allocation2 + $0x30] sm:$0xff]
      %v5020 = vld [vmem:[#allocation2 + $0x38] sm:$0xff]
      %v5021 = vld [vmem:[#allocation2 + $0x40] sm:$0xff]
      %v5022 = vld [vmem:[#allocation2 + $0x48] sm:$0xff]
      %v5023 = vld [vmem:[#allocation2 + $0x50] sm:$0xff]
      %v5024 = vld [vmem:[#allocation2 + $0x58] sm:$0xff]
      %v5025 = vld [vmem:[#allocation2 + $0x60] sm:$0xff]
      %v5026 = vld [vmem:[#allocation2 + $0x68] sm:$0xff]
      %v5027 = vld [vmem:[#allocation2 + $0x70] sm:$0xff]
      %v5028 = vld [vmem:[#allocation2 + $0x78] sm:$0xff]
      %v5029 = vld [vmem:[#allocation2 + $0x80] sm:$0xff]
      %v5030 = vld [vmem:[#allocation2 + $0x88] sm:$0xff]
      %v5031 = vld [vmem:[#allocation2 + $0x90] sm:$0xff]
      %v5032 = vld [vmem:[#allocation2 + $0x98] sm:$0xff]
      %v5033 = vld [vmem:[#allocation2 + $0xa0] sm:$0xff]
      %v5034 = vld [vmem:[#allocation2 + $0xa8] sm:$0xff]
      %v5035 = vld [vmem:[#allocation2 + $0xb0] sm:$0xff]
      %v5036 = vld [vmem:[#allocation2 + $0xb8] sm:$0xff]
      %v5037 = vld [vmem:[#allocation2 + $0xc0] sm:$0xff]
      %v5038 = vld [vmem:[#allocation2 + $0xc8] sm:$0xff]
      %v5039 = vld [vmem:[#allocation2 + $0xd0] sm:$0xff]
      %v5040 = vld [vmem:[#allocation2 + $0xd8] sm:$0xff]
      %v5041 = vld [vmem:[#allocation2 + $0xe0] sm:$0xff]
      %v5042 = vld [vmem:[#allocation2 + $0xe8] sm:$0xff]
      %v5043 = vld [vmem:[#allocation2 + $0xf0] sm:$0xff]
      %v5044 = vld [vmem:[#allocation2 + $0xf8] sm:$0xff]
      %v5045 = vld [vmem:[#allocation2 + $0x100] sm:$0xff]
      %v5046 = vld [vmem:[#allocation2 + $0x108] sm:$0xff]
      %v5047 = vld [vmem:[#allocation2 + $0x110] sm:$0xff]
      %v5048 = vld [vmem:[#allocation2 + $0x118] sm:$0xff]
      %v5049 = vld [vmem:[#allocation2 + $0x120] sm:$0xff]
      %v5050 = vld [vmem:[#allocation2 + $0x128] sm:$0xff]
      %v5051 = vld [vmem:[#allocation2 + $0x130] sm:$0xff]
      %v5052 = vld [vmem:[#allocation2 + $0x138] sm:$0xff]
      %v5053 = vld [vmem:[#allocation2 + $0x140] sm:$0xff]
      %v5054 = vld [vmem:[#allocation2 + $0x148] sm:$0xff]
      %v5055 = vld [vmem:[#allocation2 + $0x150] sm:$0xff]
      %v5056 = vld [vmem:[#allocation2 + $0x158] sm:$0xff]
      %v5057 = vpack.c.bf16 %v5020, %v5019
      %v5058 = vpack.c.bf16 %v5022, %v5021
      %v5059 = vpack.c.bf16 %v5024, %v5023
      %v5060 = vpack.c.bf16 %v5026, %v5025
      %v5061 = vpack.c.bf16 %v5028, %v5027
      %v5062 = vpack.c.bf16 %v5030, %v5029
      %v5063 = vpack.c.bf16 %v5032, %v5031
      %v5064 = vpack.c.bf16 %v5034, %v5033
      %v5065 = vpack.c.bf16 %v5036, %v5035
      %v5066 = vpack.c.bf16 %v5038, %v5037
      %v5067 = vpack.c.bf16 %v5040, %v5039
      %v5068 = vpack.c.bf16 %v5042, %v5041
      %v5069 = vpack.c.bf16 %v5044, %v5043
      %v5070 = vpack.c.bf16 %v5046, %v5045
      %v5071 = vpack.c.bf16 %v5048, %v5047
      %v5072 = vpack.c.bf16 %v5050, %v5049
      %v5073 = vpack.c.bf16 %v5052, %v5051
      %v5074 = vpack.c.bf16 %v5054, %v5053
      %v5075 = vpack.c.bf16 %v5056, %v5055
      %v5078 = vunpack.c.l.b16 %v366
      %v5079 = vunpack.c.l.b16 %v367
      %v5080 = vpack.c.b16 %v5079, %v5078
      %v5083 = vsel %vm376, %v5057, 0
      %v5086 = vsel %vm376, %v5058, 0
      %v5089 = vsel %vm376, %v5059, 0
      %v5092 = vsel %vm376, %v5060, 0
      %v5095 = vsel %vm376, %v5061, 0
      %v5098 = vsel %vm376, %v5062, 0
      %v5101 = vsel %vm376, %v5063, 0
      %v5104 = vsel %vm376, %v5064, 0
      %v5107 = vsel %vm376, %v5065, 0
      %v5110 = vsel %vm376, %v5066, 0
      %v5113 = vsel %vm376, %v5067, 0
      %v5116 = vsel %vm376, %v5068, 0
      %v5119 = vsel %vm376, %v5069, 0
      %v5122 = vsel %vm376, %v5070, 0
      %v5125 = vsel %vm376, %v5071, 0
      %v5128 = vsel %vm376, %v5072, 0
      %v5131 = vsel %vm376, %v5073, 0
      %v5134 = vsel %vm376, %v5074, 0
      %v5137 = vsel %vm376, %v5075, 0
      %5139 = vmatprep.subr.bf16.mxu0 0
      %5140 = vmatpush1.bf16.msra.mxu0 %v5080
      %5141 = vmatprep.subr.bf16.mxu0 0
      %5142 = vmatpush1.bf16.msra.mxu0 0
      %5143 = vmatprep.subr.bf16.mxu0 0
      %5144 = vmatpush1.bf16.msra.mxu0 0
      %5145 = vmatprep.subr.bf16.mxu0 0
      %5146 = vmatpush1.bf16.msra.mxu0 0
      %5147 = vmatprep.subr.bf16.mxu0 0
      %5148 = vmatpush1.bf16.msra.mxu0 0
      %5149 = vmatprep.subr.bf16.mxu0 0
      %5150 = vmatpush1.bf16.msra.mxu0 0
      %5151 = vmatprep.subr.bf16.mxu0 0
      %5152 = vmatpush1.bf16.msra.mxu0 0
      %5153 = vmatprep.subr.bf16.mxu0 0
      %5154 = vmatpush1.bf16.msra.mxu0 0
      %5155 = vmatprep.subr.bf16.mxu0 0
      %5156 = vmatpush1.bf16.msra.mxu0 0
      %5157 = vmatprep.subr.bf16.mxu0 0
      %5158 = vmatpush1.bf16.msra.mxu0 0
      %5159 = vmatprep.subr.bf16.mxu0 0
      %5160 = vmatpush1.bf16.msra.mxu0 0
      %5161 = vmatprep.subr.bf16.mxu0 0
      %5162 = vmatpush1.bf16.msra.mxu0 0
      %5163 = vmatprep.subr.bf16.mxu0 0
      %5164 = vmatpush1.bf16.msra.mxu0 0
      %5165 = vmatprep.subr.bf16.mxu0 0
      %5166 = vmatpush1.bf16.msra.mxu0 0
      %5167 = vmatprep.subr.bf16.mxu0 0
      %5168 = vmatpush1.bf16.msra.mxu0 0
      %5169 = vmatprep.subr.bf16.mxu0 0
      %5170 = vmatpush1.bf16.msra.mxu0 0
      %5171 = vmatprep.mubr.bf16.mxu0 0
      %5172 = vmatmul.mubr.bf16.gmra.mrb[0].mxu0 %v5083
      %v5173 = vpop.f32.mrb[0].mxu0
      %v5174 = vadd.f32 0.0, %v5173
      %v5175 = vpop.f32.mrb[0].mxu0
      %v5176 = vpop.f32.mrb[0].mxu0
      %v5177 = vadd.f32 0.0, %v5176
      %v5178 = vpop.f32.mrb[0].mxu0
      %5179 = vmatprep.mubr.bf16.mxu0 0
      %5180 = vmatmul.mubr.bf16.gmra.mrb[0].mxu0 %v5086
      %v5181 = vpop.f32.mrb[0].mxu0
      %v5182 = vadd.f32 0.0, %v5181
      %v5183 = vpop.f32.mrb[0].mxu0
      %v5184 = vpop.f32.mrb[0].mxu0
      %v5185 = vadd.f32 0.0, %v5184
      %v5186 = vpop.f32.mrb[0].mxu0
      %5187 = vmatprep.mubr.bf16.mxu0 0
      %5188 = vmatmul.mubr.bf16.gmra.mrb[0].mxu0 %v5089
      %v5189 = vpop.f32.mrb[0].mxu0
      %v5190 = vadd.f32 0.0, %v5189
      %v5191 = vpop.f32.mrb[0].mxu0
      %v5192 = vpop.f32.mrb[0].mxu0
      %v5193 = vadd.f32 0.0, %v5192
      %v5194 = vpop.f32.mrb[0].mxu0
      %5195 = vmatprep.mubr.bf16.mxu0 0
      %5196 = vmatmul.mubr.bf16.gmra.mrb[0].mxu0 %v5092
      %v5197 = vpop.f32.mrb[0].mxu0
      %v5198 = vadd.f32 0.0, %v5197
      %v5199 = vpop.f32.mrb[0].mxu0
      %v5200 = vpop.f32.mrb[0].mxu0
      %v5201 = vadd.f32 0.0, %v5200
      %v5202 = vpop.f32.mrb[0].mxu0
      %5203 = vmatprep.mubr.bf16.mxu0 0
      %5204 = vmatmul.mubr.bf16.gmra.mrb[0].mxu0 %v5095
      %v5205 = vpop.f32.mrb[0].mxu0
      %v5206 = vadd.f32 0.0, %v5205
      %v5207 = vpop.f32.mrb[0].mxu0
      %v5208 = vpop.f32.mrb[0].mxu0
      %v5209 = vadd.f32 0.0, %v5208
      %v5210 = vpop.f32.mrb[0].mxu0
      %5211 = vmatprep.mubr.bf16.mxu0 0
      %5212 = vmatmul.mubr.bf16.gmra.mrb[0].mxu0 %v5098
      %v5213 = vpop.f32.mrb[0].mxu0
      %v5214 = vadd.f32 0.0, %v5213
      %v5215 = vpop.f32.mrb[0].mxu0
      %v5216 = vpop.f32.mrb[0].mxu0
      %v5217 = vadd.f32 0.0, %v5216
      %v5218 = vpop.f32.mrb[0].mxu0
      %5219 = vmatprep.mubr.bf16.mxu0 0
      %5220 = vmatmul.mubr.bf16.gmra.mrb[0].mxu0 %v5101
      %v5221 = vpop.f32.mrb[0].mxu0
      %v5222 = vadd.f32 0.0, %v5221
      %v5223 = vpop.f32.mrb[0].mxu0
      %v5224 = vpop.f32.mrb[0].mxu0
      %v5225 = vadd.f32 0.0, %v5224
      %v5226 = vpop.f32.mrb[0].mxu0
      %5227 = vmatprep.mubr.bf16.mxu0 0
      %5228 = vmatmul.mubr.bf16.gmra.mrb[0].mxu0 %v5104
      %v5229 = vpop.f32.mrb[0].mxu0
      %v5230 = vadd.f32 0.0, %v5229
      %v5231 = vpop.f32.mrb[0].mxu0
      %v5232 = vpop.f32.mrb[0].mxu0
      %v5233 = vadd.f32 0.0, %v5232
      %v5234 = vpop.f32.mrb[0].mxu0
      %5235 = vmatprep.mubr.bf16.mxu0 0
      %5236 = vmatmul.mubr.bf16.gmra.mrb[0].mxu0 %v5107
      %v5237 = vpop.f32.mrb[0].mxu0
      %v5238 = vadd.f32 0.0, %v5237
      %v5239 = vpop.f32.mrb[0].mxu0
      %v5240 = vpop.f32.mrb[0].mxu0
      %v5241 = vadd.f32 0.0, %v5240
      %v5242 = vpop.f32.mrb[0].mxu0
      %5243 = vmatprep.mubr.bf16.mxu0 0
      %5244 = vmatmul.mubr.bf16.gmra.mrb[0].mxu0 %v5110
      %v5245 = vpop.f32.mrb[0].mxu0
      %v5246 = vadd.f32 0.0, %v5245
      %v5247 = vpop.f32.mrb[0].mxu0
      %v5248 = vpop.f32.mrb[0].mxu0
      %v5249 = vadd.f32 0.0, %v5248
      %v5250 = vpop.f32.mrb[0].mxu0
      %5251 = vmatprep.mubr.bf16.mxu0 0
      %5252 = vmatmul.mubr.bf16.gmra.mrb[0].mxu0 %v5113
      %v5253 = vpop.f32.mrb[0].mxu0
      %v5254 = vadd.f32 0.0, %v5253
      %v5255 = vpop.f32.mrb[0].mxu0
      %v5256 = vpop.f32.mrb[0].mxu0
      %v5257 = vadd.f32 0.0, %v5256
      %v5258 = vpop.f32.mrb[0].mxu0
      %5259 = vmatprep.mubr.bf16.mxu0 0
      %5260 = vmatmul.mubr.bf16.gmra.mrb[0].mxu0 %v5116
      %v5261 = vpop.f32.mrb[0].mxu0
      %v5262 = vadd.f32 0.0, %v5261
      %v5263 = vpop.f32.mrb[0].mxu0
      %v5264 = vpop.f32.mrb[0].mxu0
      %v5265 = vadd.f32 0.0, %v5264
      %v5266 = vpop.f32.mrb[0].mxu0
      %5267 = vmatprep.mubr.bf16.mxu0 0
      %5268 = vmatmul.mubr.bf16.gmra.mrb[0].mxu0 %v5119
      %v5269 = vpop.f32.mrb[0].mxu0
      %v5270 = vadd.f32 0.0, %v5269
      %v5271 = vpop.f32.mrb[0].mxu0
      %v5272 = vpop.f32.mrb[0].mxu0
      %v5273 = vadd.f32 0.0, %v5272
      %v5274 = vpop.f32.mrb[0].mxu0
      %5275 = vmatprep.mubr.bf16.mxu0 0
      %5276 = vmatmul.mubr.bf16.gmra.mrb[0].mxu0 %v5122
      %v5277 = vpop.f32.mrb[0].mxu0
      %v5278 = vadd.f32 0.0, %v5277
      %v5279 = vpop.f32.mrb[0].mxu0
      %v5280 = vpop.f32.mrb[0].mxu0
      %v5281 = vadd.f32 0.0, %v5280
      %v5282 = vpop.f32.mrb[0].mxu0
      %5283 = vmatprep.mubr.bf16.mxu0 0
      %5284 = vmatmul.mubr.bf16.gmra.mrb[0].mxu0 %v5125
      %v5285 = vpop.f32.mrb[0].mxu0
      %v5286 = vadd.f32 0.0, %v5285
      %v5287 = vpop.f32.mrb[0].mxu0
      %v5288 = vpop.f32.mrb[0].mxu0
      %v5289 = vadd.f32 0.0, %v5288
      %v5290 = vpop.f32.mrb[0].mxu0
      %5291 = vmatprep.mubr.bf16.mxu0 0
      %5292 = vmatmul.mubr.bf16.gmra.mrb[0].mxu0 %v5128
      %v5293 = vpop.f32.mrb[0].mxu0
      %v5294 = vadd.f32 0.0, %v5293
      %v5295 = vpop.f32.mrb[0].mxu0
      %v5296 = vpop.f32.mrb[0].mxu0
      %v5297 = vadd.f32 0.0, %v5296
      %v5298 = vpop.f32.mrb[0].mxu0
      %5299 = vmatprep.mubr.bf16.mxu0 0
      %5300 = vmatmul.mubr.bf16.gmra.mrb[0].mxu0 %v5131
      %v5301 = vpop.f32.mrb[0].mxu0
      %v5302 = vadd.f32 0.0, %v5301
      %v5303 = vpop.f32.mrb[0].mxu0
      %v5304 = vpop.f32.mrb[0].mxu0
      %v5305 = vadd.f32 0.0, %v5304
      %v5306 = vpop.f32.mrb[0].mxu0
      %5307 = vmatprep.mubr.bf16.mxu0 0
      %5308 = vmatmul.mubr.bf16.gmra.mrb[0].mxu0 %v5134
      %v5309 = vpop.f32.mrb[0].mxu0
      %v5310 = vadd.f32 0.0, %v5309
      %v5311 = vpop.f32.mrb[0].mxu0
      %v5312 = vpop.f32.mrb[0].mxu0
      %v5313 = vadd.f32 0.0, %v5312
      %v5314 = vpop.f32.mrb[0].mxu0
      %5315 = vmatprep.mubr.bf16.mxu0 0
      %5316 = vmatmul.mubr.bf16.gmra.mrb[0].mxu0 %v5137
      %v5317 = vpop.f32.mrb[0].mxu0
      %v5318 = vadd.f32 0.0, %v5317
      %v5319 = vpop.f32.mrb[0].mxu0
      %v5320 = vpop.f32.mrb[0].mxu0
      %v5321 = vadd.f32 0.0, %v5320
      %v5322 = vpop.f32.mrb[0].mxu0
      %5323 = vdwg.mxu0
      %v5324 = vadd.f32 %v4981, %v5174
      %v5325 = vadd.f32 %v4982, %v5177
      %v5326 = vadd.f32 %v4983, %v5182
      %v5327 = vadd.f32 %v4984, %v5185
      %v5328 = vadd.f32 %v4985, %v5190
      %v5329 = vadd.f32 %v4986, %v5193
      %v5330 = vadd.f32 %v4987, %v5198
      %v5331 = vadd.f32 %v4988, %v5201
      %v5332 = vadd.f32 %v4989, %v5206
      %v5333 = vadd.f32 %v4990, %v5209
      %v5334 = vadd.f32 %v4991, %v5214
      %v5335 = vadd.f32 %v4992, %v5217
      %v5336 = vadd.f32 %v4993, %v5222
      %v5337 = vadd.f32 %v4994, %v5225
      %v5338 = vadd.f32 %v4995, %v5230
      %v5339 = vadd.f32 %v4996, %v5233
      %v5340 = vadd.f32 %v4997, %v5238
      %v5341 = vadd.f32 %v4998, %v5241
      %v5342 = vadd.f32 %v4999, %v5246
      %v5343 = vadd.f32 %v5000, %v5249
      %v5344 = vadd.f32 %v5001, %v5254
      %v5345 = vadd.f32 %v5002, %v5257
      %v5346 = vadd.f32 %v5003, %v5262
      %v5347 = vadd.f32 %v5004, %v5265
      %v5348 = vadd.f32 %v5005, %v5270
      %v5349 = vadd.f32 %v5006, %v5273
      %v5350 = vadd.f32 %v5007, %v5278
      %v5351 = vadd.f32 %v5008, %v5281
      %v5352 = vadd.f32 %v5009, %v5286
      %v5353 = vadd.f32 %v5010, %v5289
      %v5354 = vadd.f32 %v5011, %v5294
      %v5355 = vadd.f32 %v5012, %v5297
      %v5356 = vadd.f32 %v5013, %v5302
      %v5357 = vadd.f32 %v5014, %v5305
      %v5358 = vadd.f32 %v5015, %v5310
      %v5359 = vadd.f32 %v5016, %v5313
      %v5360 = vadd.f32 %v5017, %v5318
      %v5361 = vadd.f32 %v5018, %v5321
      %v5362 = vld [vmem:[#allocation2 + $0x31] sm:$0xff]
      %v5363 = vld [vmem:[#allocation2 + $0x39] sm:$0xff]
      %v5364 = vld [vmem:[#allocation2 + $0x41] sm:$0xff]
      %v5365 = vld [vmem:[#allocation2 + $0x49] sm:$0xff]
      %v5366 = vld [vmem:[#allocation2 + $0x51] sm:$0xff]
      %v5367 = vld [vmem:[#allocation2 + $0x59] sm:$0xff]
      %v5368 = vld [vmem:[#allocation2 + $0x61] sm:$0xff]
      %v5369 = vld [vmem:[#allocation2 + $0x69] sm:$0xff]
      %v5370 = vld [vmem:[#allocation2 + $0x71] sm:$0xff]
      %v5371 = vld [vmem:[#allocation2 + $0x79] sm:$0xff]
      %v5372 = vld [vmem:[#allocation2 + $0x81] sm:$0xff]
      %v5373 = vld [vmem:[#allocation2 + $0x89] sm:$0xff]
      %v5374 = vld [vmem:[#allocation2 + $0x91] sm:$0xff]
      %v5375 = vld [vmem:[#allocation2 + $0x99] sm:$0xff]
      %v5376 = vld [vmem:[#allocation2 + $0xa1] sm:$0xff]
      %v5377 = vld [vmem:[#allocation2 + $0xa9] sm:$0xff]
      %v5378 = vld [vmem:[#allocation2 + $0xb1] sm:$0xff]
      %v5379 = vld [vmem:[#allocation2 + $0xb9] sm:$0xff]
      %v5380 = vld [vmem:[#allocation2 + $0xc1] sm:$0xff]
      %v5381 = vld [vmem:[#allocation2 + $0xc9] sm:$0xff]
      %v5382 = vld [vmem:[#allocation2 + $0xd1] sm:$0xff]
      %v5383 = vld [vmem:[#allocation2 + $0xd9] sm:$0xff]
      %v5384 = vld [vmem:[#allocation2 + $0xe1] sm:$0xff]
      %v5385 = vld [vmem:[#allocation2 + $0xe9] sm:$0xff]
      %v5386 = vld [vmem:[#allocation2 + $0xf1] sm:$0xff]
      %v5387 = vld [vmem:[#allocation2 + $0xf9] sm:$0xff]
      %v5388 = vld [vmem:[#allocation2 + $0x101] sm:$0xff]
      %v5389 = vld [vmem:[#allocation2 + $0x109] sm:$0xff]
      %v5390 = vld [vmem:[#allocation2 + $0x111] sm:$0xff]
      %v5391 = vld [vmem:[#allocation2 + $0x119] sm:$0xff]
      %v5392 = vld [vmem:[#allocation2 + $0x121] sm:$0xff]
      %v5393 = vld [vmem:[#allocation2 + $0x129] sm:$0xff]
      %v5394 = vld [vmem:[#allocation2 + $0x131] sm:$0xff]
      %v5395 = vld [vmem:[#allocation2 + $0x139] sm:$0xff]
      %v5396 = vld [vmem:[#allocation2 + $0x141] sm:$0xff]
      %v5397 = vld [vmem:[#allocation2 + $0x149] sm:$0xff]
      %v5398 = vld [vmem:[#allocation2 + $0x151] sm:$0xff]
      %v5399 = vld [vmem:[#allocation2 + $0x159] sm:$0xff]
      %v5400 = vpack.c.bf16 %v5363, %v5362
      %v5401 = vpack.c.bf16 %v5365, %v5364
      %v5402 = vpack.c.bf16 %v5367, %v5366
      %v5403 = vpack.c.bf16 %v5369, %v5368
      %v5404 = vpack.c.bf16 %v5371, %v5370
      %v5405 = vpack.c.bf16 %v5373, %v5372
      %v5406 = vpack.c.bf16 %v5375, %v5374
      %v5407 = vpack.c.bf16 %v5377, %v5376
      %v5408 = vpack.c.bf16 %v5379, %v5378
      %v5409 = vpack.c.bf16 %v5381, %v5380
      %v5410 = vpack.c.bf16 %v5383, %v5382
      %v5411 = vpack.c.bf16 %v5385, %v5384
      %v5412 = vpack.c.bf16 %v5387, %v5386
      %v5413 = vpack.c.bf16 %v5389, %v5388
      %v5414 = vpack.c.bf16 %v5391, %v5390
      %v5415 = vpack.c.bf16 %v5393, %v5392
      %v5416 = vpack.c.bf16 %v5395, %v5394
      %v5417 = vpack.c.bf16 %v5397, %v5396
      %v5418 = vpack.c.bf16 %v5399, %v5398
      %v5421 = vunpack.c.l.b16 %v368
      %v5422 = vunpack.c.l.b16 %v369
      %v5423 = vpack.c.b16 %v5422, %v5421
      %v5426 = vsel %vm376, %v5400, 0
      %v5429 = vsel %vm376, %v5401, 0
      %v5432 = vsel %vm376, %v5402, 0
      %v5435 = vsel %vm376, %v5403, 0
      %v5438 = vsel %vm376, %v5404, 0
      %v5441 = vsel %vm376, %v5405, 0
      %v5444 = vsel %vm376, %v5406, 0
      %v5447 = vsel %vm376, %v5407, 0
      %v5450 = vsel %vm376, %v5408, 0
      %v5453 = vsel %vm376, %v5409, 0
      %v5456 = vsel %vm376, %v5410, 0
      %v5459 = vsel %vm376, %v5411, 0
      %v5462 = vsel %vm376, %v5412, 0
      %v5465 = vsel %vm376, %v5413, 0
      %v5468 = vsel %vm376, %v5414, 0
      %v5471 = vsel %vm376, %v5415, 0
      %v5474 = vsel %vm376, %v5416, 0
      %v5477 = vsel %vm376, %v5417, 0
      %v5480 = vsel %vm376, %v5418, 0
      %5482 = vmatprep.subr.bf16.mxu0 0
      %5483 = vmatpush1.bf16.msra.mxu0 %v5423
      %5484 = vmatprep.subr.bf16.mxu0 0
      %5485 = vmatpush1.bf16.msra.mxu0 0
      %5486 = vmatprep.subr.bf16.mxu0 0
      %5487 = vmatpush1.bf16.msra.mxu0 0
      %5488 = vmatprep.subr.bf16.mxu0 0
      %5489 = vmatpush1.bf16.msra.mxu0 0
      %5490 = vmatprep.subr.bf16.mxu0 0
      %5491 = vmatpush1.bf16.msra.mxu0 0
      %5492 = vmatprep.subr.bf16.mxu0 0
      %5493 = vmatpush1.bf16.msra.mxu0 0
      %5494 = vmatprep.subr.bf16.mxu0 0
      %5495 = vmatpush1.bf16.msra.mxu0 0
      %5496 = vmatprep.subr.bf16.mxu0 0
      %5497 = vmatpush1.bf16.msra.mxu0 0
      %5498 = vmatprep.subr.bf16.mxu0 0
      %5499 = vmatpush1.bf16.msra.mxu0 0
      %5500 = vmatprep.subr.bf16.mxu0 0
      %5501 = vmatpush1.bf16.msra.mxu0 0
      %5502 = vmatprep.subr.bf16.mxu0 0
      %5503 = vmatpush1.bf16.msra.mxu0 0
      %5504 = vmatprep.subr.bf16.mxu0 0
      %5505 = vmatpush1.bf16.msra.mxu0 0
      %5506 = vmatprep.subr.bf16.mxu0 0
      %5507 = vmatpush1.bf16.msra.mxu0 0
      %5508 = vmatprep.subr.bf16.mxu0 0
      %5509 = vmatpush1.bf16.msra.mxu0 0
      %5510 = vmatprep.subr.bf16.mxu0 0
      %5511 = vmatpush1.bf16.msra.mxu0 0
      %5512 = vmatprep.subr.bf16.mxu0 0
      %5513 = vmatpush1.bf16.msra.mxu0 0
      %5514 = vmatprep.mubr.bf16.mxu0 0
      %5515 = vmatmul.mubr.bf16.gmra.mrb[0].mxu0 %v5426
      %v5516 = vpop.f32.mrb[0].mxu0
      %v5517 = vadd.f32 0.0, %v5516
      %v5518 = vpop.f32.mrb[0].mxu0
      %v5519 = vpop.f32.mrb[0].mxu0
      %v5520 = vadd.f32 0.0, %v5519
      %v5521 = vpop.f32.mrb[0].mxu0
      %5522 = vmatprep.mubr.bf16.mxu0 0
      %5523 = vmatmul.mubr.bf16.gmra.mrb[0].mxu0 %v5429
      %v5524 = vpop.f32.mrb[0].mxu0
      %v5525 = vadd.f32 0.0, %v5524
      %v5526 = vpop.f32.mrb[0].mxu0
      %v5527 = vpop.f32.mrb[0].mxu0
      %v5528 = vadd.f32 0.0, %v5527
      %v5529 = vpop.f32.mrb[0].mxu0
      %5530 = vmatprep.mubr.bf16.mxu0 0
      %5531 = vmatmul.mubr.bf16.gmra.mrb[0].mxu0 %v5432
      %v5532 = vpop.f32.mrb[0].mxu0
      %v5533 = vadd.f32 0.0, %v5532
      %v5534 = vpop.f32.mrb[0].mxu0
      %v5535 = vpop.f32.mrb[0].mxu0
      %v5536 = vadd.f32 0.0, %v5535
      %v5537 = vpop.f32.mrb[0].mxu0
      %5538 = vmatprep.mubr.bf16.mxu0 0
      %5539 = vmatmul.mubr.bf16.gmra.mrb[0].mxu0 %v5435
      %v5540 = vpop.f32.mrb[0].mxu0
      %v5541 = vadd.f32 0.0, %v5540
      %v5542 = vpop.f32.mrb[0].mxu0
      %v5543 = vpop.f32.mrb[0].mxu0
      %v5544 = vadd.f32 0.0, %v5543
      %v5545 = vpop.f32.mrb[0].mxu0
      %5546 = vmatprep.mubr.bf16.mxu0 0
      %5547 = vmatmul.mubr.bf16.gmra.mrb[0].mxu0 %v5438
      %v5548 = vpop.f32.mrb[0].mxu0
      %v5549 = vadd.f32 0.0, %v5548
      %v5550 = vpop.f32.mrb[0].mxu0
      %v5551 = vpop.f32.mrb[0].mxu0
      %v5552 = vadd.f32 0.0, %v5551
      %v5553 = vpop.f32.mrb[0].mxu0
      %5554 = vmatprep.mubr.bf16.mxu0 0
      %5555 = vmatmul.mubr.bf16.gmra.mrb[0].mxu0 %v5441
      %v5556 = vpop.f32.mrb[0].mxu0
      %v5557 = vadd.f32 0.0, %v5556
      %v5558 = vpop.f32.mrb[0].mxu0
      %v5559 = vpop.f32.mrb[0].mxu0
      %v5560 = vadd.f32 0.0, %v5559
      %v5561 = vpop.f32.mrb[0].mxu0
      %5562 = vmatprep.mubr.bf16.mxu0 0
      %5563 = vmatmul.mubr.bf16.gmra.mrb[0].mxu0 %v5444
      %v5564 = vpop.f32.mrb[0].mxu0
      %v5565 = vadd.f32 0.0, %v5564
      %v5566 = vpop.f32.mrb[0].mxu0
      %v5567 = vpop.f32.mrb[0].mxu0
      %v5568 = vadd.f32 0.0, %v5567
      %v5569 = vpop.f32.mrb[0].mxu0
      %5570 = vmatprep.mubr.bf16.mxu0 0
      %5571 = vmatmul.mubr.bf16.gmra.mrb[0].mxu0 %v5447
      %v5572 = vpop.f32.mrb[0].mxu0
      %v5573 = vadd.f32 0.0, %v5572
      %v5574 = vpop.f32.mrb[0].mxu0
      %v5575 = vpop.f32.mrb[0].mxu0
      %v5576 = vadd.f32 0.0, %v5575
      %v5577 = vpop.f32.mrb[0].mxu0
      %5578 = vmatprep.mubr.bf16.mxu0 0
      %5579 = vmatmul.mubr.bf16.gmra.mrb[0].mxu0 %v5450
      %v5580 = vpop.f32.mrb[0].mxu0
      %v5581 = vadd.f32 0.0, %v5580
      %v5582 = vpop.f32.mrb[0].mxu0
      %v5583 = vpop.f32.mrb[0].mxu0
      %v5584 = vadd.f32 0.0, %v5583
      %v5585 = vpop.f32.mrb[0].mxu0
      %5586 = vmatprep.mubr.bf16.mxu0 0
      %5587 = vmatmul.mubr.bf16.gmra.mrb[0].mxu0 %v5453
      %v5588 = vpop.f32.mrb[0].mxu0
      %v5589 = vadd.f32 0.0, %v5588
      %v5590 = vpop.f32.mrb[0].mxu0
      %v5591 = vpop.f32.mrb[0].mxu0
      %v5592 = vadd.f32 0.0, %v5591
      %v5593 = vpop.f32.mrb[0].mxu0
      %5594 = vmatprep.mubr.bf16.mxu0 0
      %5595 = vmatmul.mubr.bf16.gmra.mrb[0].mxu0 %v5456
      %v5596 = vpop.f32.mrb[0].mxu0
      %v5597 = vadd.f32 0.0, %v5596
      %v5598 = vpop.f32.mrb[0].mxu0
      %v5599 = vpop.f32.mrb[0].mxu0
      %v5600 = vadd.f32 0.0, %v5599
      %v5601 = vpop.f32.mrb[0].mxu0
      %5602 = vmatprep.mubr.bf16.mxu0 0
      %5603 = vmatmul.mubr.bf16.gmra.mrb[0].mxu0 %v5459
      %v5604 = vpop.f32.mrb[0].mxu0
      %v5605 = vadd.f32 0.0, %v5604
      %v5606 = vpop.f32.mrb[0].mxu0
      %v5607 = vpop.f32.mrb[0].mxu0
      %v5608 = vadd.f32 0.0, %v5607
      %v5609 = vpop.f32.mrb[0].mxu0
      %5610 = vmatprep.mubr.bf16.mxu0 0
      %5611 = vmatmul.mubr.bf16.gmra.mrb[0].mxu0 %v5462
      %v5612 = vpop.f32.mrb[0].mxu0
      %v5613 = vadd.f32 0.0, %v5612
      %v5614 = vpop.f32.mrb[0].mxu0
      %v5615 = vpop.f32.mrb[0].mxu0
      %v5616 = vadd.f32 0.0, %v5615
      %v5617 = vpop.f32.mrb[0].mxu0
      %5618 = vmatprep.mubr.bf16.mxu0 0
      %5619 = vmatmul.mubr.bf16.gmra.mrb[0].mxu0 %v5465
      %v5620 = vpop.f32.mrb[0].mxu0
      %v5621 = vadd.f32 0.0, %v5620
      %v5622 = vpop.f32.mrb[0].mxu0
      %v5623 = vpop.f32.mrb[0].mxu0
      %v5624 = vadd.f32 0.0, %v5623
      %v5625 = vpop.f32.mrb[0].mxu0
      %5626 = vmatprep.mubr.bf16.mxu0 0
      %5627 = vmatmul.mubr.bf16.gmra.mrb[0].mxu0 %v5468
      %v5628 = vpop.f32.mrb[0].mxu0
      %v5629 = vadd.f32 0.0, %v5628
      %v5630 = vpop.f32.mrb[0].mxu0
      %v5631 = vpop.f32.mrb[0].mxu0
      %v5632 = vadd.f32 0.0, %v5631
      %v5633 = vpop.f32.mrb[0].mxu0
      %5634 = vmatprep.mubr.bf16.mxu0 0
      %5635 = vmatmul.mubr.bf16.gmra.mrb[0].mxu0 %v5471
      %v5636 = vpop.f32.mrb[0].mxu0
      %v5637 = vadd.f32 0.0, %v5636
      %v5638 = vpop.f32.mrb[0].mxu0
      %v5639 = vpop.f32.mrb[0].mxu0
      %v5640 = vadd.f32 0.0, %v5639
      %v5641 = vpop.f32.mrb[0].mxu0
      %5642 = vmatprep.mubr.bf16.mxu0 0
      %5643 = vmatmul.mubr.bf16.gmra.mrb[0].mxu0 %v5474
      %v5644 = vpop.f32.mrb[0].mxu0
      %v5645 = vadd.f32 0.0, %v5644
      %v5646 = vpop.f32.mrb[0].mxu0
      %v5647 = vpop.f32.mrb[0].mxu0
      %v5648 = vadd.f32 0.0, %v5647
      %v5649 = vpop.f32.mrb[0].mxu0
      %5650 = vmatprep.mubr.bf16.mxu0 0
      %5651 = vmatmul.mubr.bf16.gmra.mrb[0].mxu0 %v5477
      %v5652 = vpop.f32.mrb[0].mxu0
      %v5653 = vadd.f32 0.0, %v5652
      %v5654 = vpop.f32.mrb[0].mxu0
      %v5655 = vpop.f32.mrb[0].mxu0
      %v5656 = vadd.f32 0.0, %v5655
      %v5657 = vpop.f32.mrb[0].mxu0
      %5658 = vmatprep.mubr.bf16.mxu0 0
      %5659 = vmatmul.mubr.bf16.gmra.mrb[0].mxu0 %v5480
      %v5660 = vpop.f32.mrb[0].mxu0
      %v5661 = vadd.f32 0.0, %v5660
      %v5662 = vpop.f32.mrb[0].mxu0
      %v5663 = vpop.f32.mrb[0].mxu0
      %v5664 = vadd.f32 0.0, %v5663
      %v5665 = vpop.f32.mrb[0].mxu0
      %5666 = vdwg.mxu0
      %v5667 = vadd.f32 %v5324, %v5517
      %v5668 = vadd.f32 %v5325, %v5520
      %v5669 = vadd.f32 %v5326, %v5525
      %v5670 = vadd.f32 %v5327, %v5528
      %v5671 = vadd.f32 %v5328, %v5533
      %v5672 = vadd.f32 %v5329, %v5536
      %v5673 = vadd.f32 %v5330, %v5541
      %v5674 = vadd.f32 %v5331, %v5544
      %v5675 = vadd.f32 %v5332, %v5549
      %v5676 = vadd.f32 %v5333, %v5552
      %v5677 = vadd.f32 %v5334, %v5557
      %v5678 = vadd.f32 %v5335, %v5560
      %v5679 = vadd.f32 %v5336, %v5565
      %v5680 = vadd.f32 %v5337, %v5568
      %v5681 = vadd.f32 %v5338, %v5573
      %v5682 = vadd.f32 %v5339, %v5576
      %v5683 = vadd.f32 %v5340, %v5581
      %v5684 = vadd.f32 %v5341, %v5584
      %v5685 = vadd.f32 %v5342, %v5589
      %v5686 = vadd.f32 %v5343, %v5592
      %v5687 = vadd.f32 %v5344, %v5597
      %v5688 = vadd.f32 %v5345, %v5600
      %v5689 = vadd.f32 %v5346, %v5605
      %v5690 = vadd.f32 %v5347, %v5608
      %v5691 = vadd.f32 %v5348, %v5613
      %v5692 = vadd.f32 %v5349, %v5616
      %v5693 = vadd.f32 %v5350, %v5621
      %v5694 = vadd.f32 %v5351, %v5624
      %v5695 = vadd.f32 %v5352, %v5629
      %v5696 = vadd.f32 %v5353, %v5632
      %v5697 = vadd.f32 %v5354, %v5637
      %v5698 = vadd.f32 %v5355, %v5640
      %v5699 = vadd.f32 %v5356, %v5645
      %v5700 = vadd.f32 %v5357, %v5648
      %v5701 = vadd.f32 %v5358, %v5653
      %v5702 = vadd.f32 %v5359, %v5656
      %v5703 = vadd.f32 %v5360, %v5661
      %v5704 = vadd.f32 %v5361, %v5664
      %v5705 = vld [vmem:[#allocation2 + $0x41] sm:$0xff]
      %v5706 = vld [vmem:[#allocation2 + $0x49] sm:$0xff]
      %v5707 = vld [vmem:[#allocation2 + $0x51] sm:$0xff]
      %v5708 = vld [vmem:[#allocation2 + $0x59] sm:$0xff]
      %v5709 = vld [vmem:[#allocation2 + $0x61] sm:$0xff]
      %v5710 = vld [vmem:[#allocation2 + $0x69] sm:$0xff]
      %v5711 = vld [vmem:[#allocation2 + $0x71] sm:$0xff]
      %v5712 = vld [vmem:[#allocation2 + $0x79] sm:$0xff]
      %v5713 = vld [vmem:[#allocation2 + $0x81] sm:$0xff]
      %v5714 = vld [vmem:[#allocation2 + $0x89] sm:$0xff]
      %v5715 = vld [vmem:[#allocation2 + $0x91] sm:$0xff]
      %v5716 = vld [vmem:[#allocation2 + $0x99] sm:$0xff]
      %v5717 = vld [vmem:[#allocation2 + $0xa1] sm:$0xff]
      %v5718 = vld [vmem:[#allocation2 + $0xa9] sm:$0xff]
      %v5719 = vld [vmem:[#allocation2 + $0xb1] sm:$0xff]
      %v5720 = vld [vmem:[#allocation2 + $0xb9] sm:$0xff]
      %v5721 = vld [vmem:[#allocation2 + $0xc1] sm:$0xff]
      %v5722 = vld [vmem:[#allocation2 + $0xc9] sm:$0xff]
      %v5723 = vld [vmem:[#allocation2 + $0xd1] sm:$0xff]
      %v5724 = vld [vmem:[#allocation2 + $0xd9] sm:$0xff]
      %v5725 = vld [vmem:[#allocation2 + $0xe1] sm:$0xff]
      %v5726 = vld [vmem:[#allocation2 + $0xe9] sm:$0xff]
      %v5727 = vld [vmem:[#allocation2 + $0xf1] sm:$0xff]
      %v5728 = vld [vmem:[#allocation2 + $0xf9] sm:$0xff]
      %v5729 = vld [vmem:[#allocation2 + $0x101] sm:$0xff]
      %v5730 = vld [vmem:[#allocation2 + $0x109] sm:$0xff]
      %v5731 = vld [vmem:[#allocation2 + $0x111] sm:$0xff]
      %v5732 = vld [vmem:[#allocation2 + $0x119] sm:$0xff]
      %v5733 = vld [vmem:[#allocation2 + $0x121] sm:$0xff]
      %v5734 = vld [vmem:[#allocation2 + $0x129] sm:$0xff]
      %v5735 = vld [vmem:[#allocation2 + $0x131] sm:$0xff]
      %v5736 = vld [vmem:[#allocation2 + $0x139] sm:$0xff]
      %v5737 = vld [vmem:[#allocation2 + $0x141] sm:$0xff]
      %v5738 = vld [vmem:[#allocation2 + $0x149] sm:$0xff]
      %v5739 = vld [vmem:[#allocation2 + $0x151] sm:$0xff]
      %v5740 = vld [vmem:[#allocation2 + $0x159] sm:$0xff]
      %v5741 = vld [vmem:[#allocation2 + $0x161] sm:$0xff]
      %v5742 = vld [vmem:[#allocation2 + $0x169] sm:$0xff]
      %v5743 = vpack.c.bf16 %v5706, %v5705
      %v5744 = vpack.c.bf16 %v5708, %v5707
      %v5745 = vpack.c.bf16 %v5710, %v5709
      %v5746 = vpack.c.bf16 %v5712, %v5711
      %v5747 = vpack.c.bf16 %v5714, %v5713
      %v5748 = vpack.c.bf16 %v5716, %v5715
      %v5749 = vpack.c.bf16 %v5718, %v5717
      %v5750 = vpack.c.bf16 %v5720, %v5719
      %v5751 = vpack.c.bf16 %v5722, %v5721
      %v5752 = vpack.c.bf16 %v5724, %v5723
      %v5753 = vpack.c.bf16 %v5726, %v5725
      %v5754 = vpack.c.bf16 %v5728, %v5727
      %v5755 = vpack.c.bf16 %v5730, %v5729
      %v5756 = vpack.c.bf16 %v5732, %v5731
      %v5757 = vpack.c.bf16 %v5734, %v5733
      %v5758 = vpack.c.bf16 %v5736, %v5735
      %v5759 = vpack.c.bf16 %v5738, %v5737
      %v5760 = vpack.c.bf16 %v5740, %v5739
      %v5761 = vpack.c.bf16 %v5742, %v5741
      %v5764 = vunpack.c.l.b16 %v370
      %v5765 = vunpack.c.l.b16 %v371
      %v5766 = vpack.c.b16 %v5765, %v5764
      %v5769 = vsel %vm376, %v5743, 0
      %v5772 = vsel %vm376, %v5744, 0
      %v5775 = vsel %vm376, %v5745, 0
      %v5778 = vsel %vm376, %v5746, 0
      %v5781 = vsel %vm376, %v5747, 0
      %v5784 = vsel %vm376, %v5748, 0
      %v5787 = vsel %vm376, %v5749, 0
      %v5790 = vsel %vm376, %v5750, 0
      %v5793 = vsel %vm376, %v5751, 0
      %v5796 = vsel %vm376, %v5752, 0
      %v5799 = vsel %vm376, %v5753, 0
      %v5802 = vsel %vm376, %v5754, 0
      %v5805 = vsel %vm376, %v5755, 0
      %v5808 = vsel %vm376, %v5756, 0
      %v5811 = vsel %vm376, %v5757, 0
      %v5814 = vsel %vm376, %v5758, 0
      %v5817 = vsel %vm376, %v5759, 0
      %v5820 = vsel %vm376, %v5760, 0
      %v5823 = vsel %vm376, %v5761, 0
      %5825 = vmatprep.subr.bf16.mxu0 0
      %5826 = vmatpush1.bf16.msra.mxu0 %v5766
      %5827 = vmatprep.subr.bf16.mxu0 0
      %5828 = vmatpush1.bf16.msra.mxu0 0
      %5829 = vmatprep.subr.bf16.mxu0 0
      %5830 = vmatpush1.bf16.msra.mxu0 0
      %5831 = vmatprep.subr.bf16.mxu0 0
      %5832 = vmatpush1.bf16.msra.mxu0 0
      %5833 = vmatprep.subr.bf16.mxu0 0
      %5834 = vmatpush1.bf16.msra.mxu0 0
      %5835 = vmatprep.subr.bf16.mxu0 0
      %5836 = vmatpush1.bf16.msra.mxu0 0
      %5837 = vmatprep.subr.bf16.mxu0 0
      %5838 = vmatpush1.bf16.msra.mxu0 0
      %5839 = vmatprep.subr.bf16.mxu0 0
      %5840 = vmatpush1.bf16.msra.mxu0 0
      %5841 = vmatprep.subr.bf16.mxu0 0
      %5842 = vmatpush1.bf16.msra.mxu0 0
      %5843 = vmatprep.subr.bf16.mxu0 0
      %5844 = vmatpush1.bf16.msra.mxu0 0
      %5845 = vmatprep.subr.bf16.mxu0 0
      %5846 = vmatpush1.bf16.msra.mxu0 0
      %5847 = vmatprep.subr.bf16.mxu0 0
      %5848 = vmatpush1.bf16.msra.mxu0 0
      %5849 = vmatprep.subr.bf16.mxu0 0
      %5850 = vmatpush1.bf16.msra.mxu0 0
      %5851 = vmatprep.subr.bf16.mxu0 0
      %5852 = vmatpush1.bf16.msra.mxu0 0
      %5853 = vmatprep.subr.bf16.mxu0 0
      %5854 = vmatpush1.bf16.msra.mxu0 0
      %5855 = vmatprep.subr.bf16.mxu0 0
      %5856 = vmatpush1.bf16.msra.mxu0 0
      %5857 = vmatprep.mubr.bf16.mxu0 0
      %5858 = vmatmul.mubr.bf16.gmra.mrb[0].mxu0 %v5769
      %v5859 = vpop.f32.mrb[0].mxu0
      %v5860 = vadd.f32 0.0, %v5859
      %v5861 = vpop.f32.mrb[0].mxu0
      %v5862 = vpop.f32.mrb[0].mxu0
      %v5863 = vadd.f32 0.0, %v5862
      %v5864 = vpop.f32.mrb[0].mxu0
      %5865 = vmatprep.mubr.bf16.mxu0 0
      %5866 = vmatmul.mubr.bf16.gmra.mrb[0].mxu0 %v5772
      %v5867 = vpop.f32.mrb[0].mxu0
      %v5868 = vadd.f32 0.0, %v5867
      %v5869 = vpop.f32.mrb[0].mxu0
      %v5870 = vpop.f32.mrb[0].mxu0
      %v5871 = vadd.f32 0.0, %v5870
      %v5872 = vpop.f32.mrb[0].mxu0
      %5873 = vmatprep.mubr.bf16.mxu0 0
      %5874 = vmatmul.mubr.bf16.gmra.mrb[0].mxu0 %v5775
      %v5875 = vpop.f32.mrb[0].mxu0
      %v5876 = vadd.f32 0.0, %v5875
      %v5877 = vpop.f32.mrb[0].mxu0
      %v5878 = vpop.f32.mrb[0].mxu0
      %v5879 = vadd.f32 0.0, %v5878
      %v5880 = vpop.f32.mrb[0].mxu0
      %5881 = vmatprep.mubr.bf16.mxu0 0
      %5882 = vmatmul.mubr.bf16.gmra.mrb[0].mxu0 %v5778
      %v5883 = vpop.f32.mrb[0].mxu0
      %v5884 = vadd.f32 0.0, %v5883
      %v5885 = vpop.f32.mrb[0].mxu0
      %v5886 = vpop.f32.mrb[0].mxu0
      %v5887 = vadd.f32 0.0, %v5886
      %v5888 = vpop.f32.mrb[0].mxu0
      %5889 = vmatprep.mubr.bf16.mxu0 0
      %5890 = vmatmul.mubr.bf16.gmra.mrb[0].mxu0 %v5781
      %v5891 = vpop.f32.mrb[0].mxu0
      %v5892 = vadd.f32 0.0, %v5891
      %v5893 = vpop.f32.mrb[0].mxu0
      %v5894 = vpop.f32.mrb[0].mxu0
      %v5895 = vadd.f32 0.0, %v5894
      %v5896 = vpop.f32.mrb[0].mxu0
      %5897 = vmatprep.mubr.bf16.mxu0 0
      %5898 = vmatmul.mubr.bf16.gmra.mrb[0].mxu0 %v5784
      %v5899 = vpop.f32.mrb[0].mxu0
      %v5900 = vadd.f32 0.0, %v5899
      %v5901 = vpop.f32.mrb[0].mxu0
      %v5902 = vpop.f32.mrb[0].mxu0
      %v5903 = vadd.f32 0.0, %v5902
      %v5904 = vpop.f32.mrb[0].mxu0
      %5905 = vmatprep.mubr.bf16.mxu0 0
      %5906 = vmatmul.mubr.bf16.gmra.mrb[0].mxu0 %v5787
      %v5907 = vpop.f32.mrb[0].mxu0
      %v5908 = vadd.f32 0.0, %v5907
      %v5909 = vpop.f32.mrb[0].mxu0
      %v5910 = vpop.f32.mrb[0].mxu0
      %v5911 = vadd.f32 0.0, %v5910
      %v5912 = vpop.f32.mrb[0].mxu0
      %5913 = vmatprep.mubr.bf16.mxu0 0
      %5914 = vmatmul.mubr.bf16.gmra.mrb[0].mxu0 %v5790
      %v5915 = vpop.f32.mrb[0].mxu0
      %v5916 = vadd.f32 0.0, %v5915
      %v5917 = vpop.f32.mrb[0].mxu0
      %v5918 = vpop.f32.mrb[0].mxu0
      %v5919 = vadd.f32 0.0, %v5918
      %v5920 = vpop.f32.mrb[0].mxu0
      %5921 = vmatprep.mubr.bf16.mxu0 0
      %5922 = vmatmul.mubr.bf16.gmra.mrb[0].mxu0 %v5793
      %v5923 = vpop.f32.mrb[0].mxu0
      %v5924 = vadd.f32 0.0, %v5923
      %v5925 = vpop.f32.mrb[0].mxu0
      %v5926 = vpop.f32.mrb[0].mxu0
      %v5927 = vadd.f32 0.0, %v5926
      %v5928 = vpop.f32.mrb[0].mxu0
      %5929 = vmatprep.mubr.bf16.mxu0 0
      %5930 = vmatmul.mubr.bf16.gmra.mrb[0].mxu0 %v5796
      %v5931 = vpop.f32.mrb[0].mxu0
      %v5932 = vadd.f32 0.0, %v5931
      %v5933 = vpop.f32.mrb[0].mxu0
      %v5934 = vpop.f32.mrb[0].mxu0
      %v5935 = vadd.f32 0.0, %v5934
      %v5936 = vpop.f32.mrb[0].mxu0
      %5937 = vmatprep.mubr.bf16.mxu0 0
      %5938 = vmatmul.mubr.bf16.gmra.mrb[0].mxu0 %v5799
      %v5939 = vpop.f32.mrb[0].mxu0
      %v5940 = vadd.f32 0.0, %v5939
      %v5941 = vpop.f32.mrb[0].mxu0
      %v5942 = vpop.f32.mrb[0].mxu0
      %v5943 = vadd.f32 0.0, %v5942
      %v5944 = vpop.f32.mrb[0].mxu0
      %5945 = vmatprep.mubr.bf16.mxu0 0
      %5946 = vmatmul.mubr.bf16.gmra.mrb[0].mxu0 %v5802
      %v5947 = vpop.f32.mrb[0].mxu0
      %v5948 = vadd.f32 0.0, %v5947
      %v5949 = vpop.f32.mrb[0].mxu0
      %v5950 = vpop.f32.mrb[0].mxu0
      %v5951 = vadd.f32 0.0, %v5950
      %v5952 = vpop.f32.mrb[0].mxu0
      %5953 = vmatprep.mubr.bf16.mxu0 0
      %5954 = vmatmul.mubr.bf16.gmra.mrb[0].mxu0 %v5805
      %v5955 = vpop.f32.mrb[0].mxu0
      %v5956 = vadd.f32 0.0, %v5955
      %v5957 = vpop.f32.mrb[0].mxu0
      %v5958 = vpop.f32.mrb[0].mxu0
      %v5959 = vadd.f32 0.0, %v5958
      %v5960 = vpop.f32.mrb[0].mxu0
      %5961 = vmatprep.mubr.bf16.mxu0 0
      %5962 = vmatmul.mubr.bf16.gmra.mrb[0].mxu0 %v5808
      %v5963 = vpop.f32.mrb[0].mxu0
      %v5964 = vadd.f32 0.0, %v5963
      %v5965 = vpop.f32.mrb[0].mxu0
      %v5966 = vpop.f32.mrb[0].mxu0
      %v5967 = vadd.f32 0.0, %v5966
      %v5968 = vpop.f32.mrb[0].mxu0
      %5969 = vmatprep.mubr.bf16.mxu0 0
      %5970 = vmatmul.mubr.bf16.gmra.mrb[0].mxu0 %v5811
      %v5971 = vpop.f32.mrb[0].mxu0
      %v5972 = vadd.f32 0.0, %v5971
      %v5973 = vpop.f32.mrb[0].mxu0
      %v5974 = vpop.f32.mrb[0].mxu0
      %v5975 = vadd.f32 0.0, %v5974
      %v5976 = vpop.f32.mrb[0].mxu0
      %5977 = vmatprep.mubr.bf16.mxu0 0
      %5978 = vmatmul.mubr.bf16.gmra.mrb[0].mxu0 %v5814
      %v5979 = vpop.f32.mrb[0].mxu0
      %v5980 = vadd.f32 0.0, %v5979
      %v5981 = vpop.f32.mrb[0].mxu0
      %v5982 = vpop.f32.mrb[0].mxu0
      %v5983 = vadd.f32 0.0, %v5982
      %v5984 = vpop.f32.mrb[0].mxu0
      %5985 = vmatprep.mubr.bf16.mxu0 0
      %5986 = vmatmul.mubr.bf16.gmra.mrb[0].mxu0 %v5817
      %v5987 = vpop.f32.mrb[0].mxu0
      %v5988 = vadd.f32 0.0, %v5987
      %v5989 = vpop.f32.mrb[0].mxu0
      %v5990 = vpop.f32.mrb[0].mxu0
      %v5991 = vadd.f32 0.0, %v5990
      %v5992 = vpop.f32.mrb[0].mxu0
      %5993 = vmatprep.mubr.bf16.mxu0 0
      %5994 = vmatmul.mubr.bf16.gmra.mrb[0].mxu0 %v5820
      %v5995 = vpop.f32.mrb[0].mxu0
      %v5996 = vadd.f32 0.0, %v5995
      %v5997 = vpop.f32.mrb[0].mxu0
      %v5998 = vpop.f32.mrb[0].mxu0
      %v5999 = vadd.f32 0.0, %v5998
      %v6000 = vpop.f32.mrb[0].mxu0
      %6001 = vmatprep.mubr.bf16.mxu0 0
      %6002 = vmatmul.mubr.bf16.gmra.mrb[0].mxu0 %v5823
      %v6003 = vpop.f32.mrb[0].mxu0
      %v6004 = vadd.f32 0.0, %v6003
      %v6005 = vpop.f32.mrb[0].mxu0
      %v6006 = vpop.f32.mrb[0].mxu0
      %v6007 = vadd.f32 0.0, %v6006
      %v6008 = vpop.f32.mrb[0].mxu0
      %6009 = vdwg.mxu0
      %v6010 = vadd.f32 %v5667, %v5860
      %v6011 = vadd.f32 %v5668, %v5863
      %v6012 = vadd.f32 %v5669, %v5868
      %v6013 = vadd.f32 %v5670, %v5871
      %v6014 = vadd.f32 %v5671, %v5876
      %v6015 = vadd.f32 %v5672, %v5879
      %v6016 = vadd.f32 %v5673, %v5884
      %v6017 = vadd.f32 %v5674, %v5887
      %v6018 = vadd.f32 %v5675, %v5892
      %v6019 = vadd.f32 %v5676, %v5895
      %v6020 = vadd.f32 %v5677, %v5900
      %v6021 = vadd.f32 %v5678, %v5903
      %v6022 = vadd.f32 %v5679, %v5908
      %v6023 = vadd.f32 %v5680, %v5911
      %v6024 = vadd.f32 %v5681, %v5916
      %v6025 = vadd.f32 %v5682, %v5919
      %v6026 = vadd.f32 %v5683, %v5924
      %v6027 = vadd.f32 %v5684, %v5927
      %v6028 = vadd.f32 %v5685, %v5932
      %v6029 = vadd.f32 %v5686, %v5935
      %v6030 = vadd.f32 %v5687, %v5940
      %v6031 = vadd.f32 %v5688, %v5943
      %v6032 = vadd.f32 %v5689, %v5948
      %v6033 = vadd.f32 %v5690, %v5951
      %v6034 = vadd.f32 %v5691, %v5956
      %v6035 = vadd.f32 %v5692, %v5959
      %v6036 = vadd.f32 %v5693, %v5964
      %v6037 = vadd.f32 %v5694, %v5967
      %v6038 = vadd.f32 %v5695, %v5972
      %v6039 = vadd.f32 %v5696, %v5975
      %v6040 = vadd.f32 %v5697, %v5980
      %v6041 = vadd.f32 %v5698, %v5983
      %v6042 = vadd.f32 %v5699, %v5988
      %v6043 = vadd.f32 %v5700, %v5991
      %v6044 = vadd.f32 %v5701, %v5996
      %v6045 = vadd.f32 %v5702, %v5999
      %v6046 = vadd.f32 %v5703, %v6004
      %v6047 = vadd.f32 %v5704, %v6007
      %v6048 = vld [vmem:[#allocation2 + $0x42] sm:$0xff]
      %v6049 = vld [vmem:[#allocation2 + $0x4a] sm:$0xff]
      %v6050 = vld [vmem:[#allocation2 + $0x52] sm:$0xff]
      %v6051 = vld [vmem:[#allocation2 + $0x5a] sm:$0xff]
      %v6052 = vld [vmem:[#allocation2 + $0x62] sm:$0xff]
      %v6053 = vld [vmem:[#allocation2 + $0x6a] sm:$0xff]
      %v6054 = vld [vmem:[#allocation2 + $0x72] sm:$0xff]
      %v6055 = vld [vmem:[#allocation2 + $0x7a] sm:$0xff]
      %v6056 = vld [vmem:[#allocation2 + $0x82] sm:$0xff]
      %v6057 = vld [vmem:[#allocation2 + $0x8a] sm:$0xff]
      %v6058 = vld [vmem:[#allocation2 + $0x92] sm:$0xff]
      %v6059 = vld [vmem:[#allocation2 + $0x9a] sm:$0xff]
      %v6060 = vld [vmem:[#allocation2 + $0xa2] sm:$0xff]
      %v6061 = vld [vmem:[#allocation2 + $0xaa] sm:$0xff]
      %v6062 = vld [vmem:[#allocation2 + $0xb2] sm:$0xff]
      %v6063 = vld [vmem:[#allocation2 + $0xba] sm:$0xff]
      %v6064 = vld [vmem:[#allocation2 + $0xc2] sm:$0xff]
      %v6065 = vld [vmem:[#allocation2 + $0xca] sm:$0xff]
      %v6066 = vld [vmem:[#allocation2 + $0xd2] sm:$0xff]
      %v6067 = vld [vmem:[#allocation2 + $0xda] sm:$0xff]
      %v6068 = vld [vmem:[#allocation2 + $0xe2] sm:$0xff]
      %v6069 = vld [vmem:[#allocation2 + $0xea] sm:$0xff]
      %v6070 = vld [vmem:[#allocation2 + $0xf2] sm:$0xff]
      %v6071 = vld [vmem:[#allocation2 + $0xfa] sm:$0xff]
      %v6072 = vld [vmem:[#allocation2 + $0x102] sm:$0xff]
      %v6073 = vld [vmem:[#allocation2 + $0x10a] sm:$0xff]
      %v6074 = vld [vmem:[#allocation2 + $0x112] sm:$0xff]
      %v6075 = vld [vmem:[#allocation2 + $0x11a] sm:$0xff]
      %v6076 = vld [vmem:[#allocation2 + $0x122] sm:$0xff]
      %v6077 = vld [vmem:[#allocation2 + $0x12a] sm:$0xff]
      %v6078 = vld [vmem:[#allocation2 + $0x132] sm:$0xff]
      %v6079 = vld [vmem:[#allocation2 + $0x13a] sm:$0xff]
      %v6080 = vld [vmem:[#allocation2 + $0x142] sm:$0xff]
      %v6081 = vld [vmem:[#allocation2 + $0x14a] sm:$0xff]
      %v6082 = vld [vmem:[#allocation2 + $0x152] sm:$0xff]
      %v6083 = vld [vmem:[#allocation2 + $0x15a] sm:$0xff]
      %v6084 = vld [vmem:[#allocation2 + $0x162] sm:$0xff]
      %v6085 = vld [vmem:[#allocation2 + $0x16a] sm:$0xff]
      %v6086 = vpack.c.bf16 %v6049, %v6048
      %v6087 = vpack.c.bf16 %v6051, %v6050
      %v6088 = vpack.c.bf16 %v6053, %v6052
      %v6089 = vpack.c.bf16 %v6055, %v6054
      %v6090 = vpack.c.bf16 %v6057, %v6056
      %v6091 = vpack.c.bf16 %v6059, %v6058
      %v6092 = vpack.c.bf16 %v6061, %v6060
      %v6093 = vpack.c.bf16 %v6063, %v6062
      %v6094 = vpack.c.bf16 %v6065, %v6064
      %v6095 = vpack.c.bf16 %v6067, %v6066
      %v6096 = vpack.c.bf16 %v6069, %v6068
      %v6097 = vpack.c.bf16 %v6071, %v6070
      %v6098 = vpack.c.bf16 %v6073, %v6072
      %v6099 = vpack.c.bf16 %v6075, %v6074
      %v6100 = vpack.c.bf16 %v6077, %v6076
      %v6101 = vpack.c.bf16 %v6079, %v6078
      %v6102 = vpack.c.bf16 %v6081, %v6080
      %v6103 = vpack.c.bf16 %v6083, %v6082
      %v6104 = vpack.c.bf16 %v6085, %v6084
      %v6107 = vunpack.c.l.b16 %v372
      %v6108 = vunpack.c.l.b16 %v373
      %v6109 = vpack.c.b16 %v6108, %v6107
      %v6112 = vsel %vm376, %v6086, 0
      %v6115 = vsel %vm376, %v6087, 0
      %v6118 = vsel %vm376, %v6088, 0
      %v6121 = vsel %vm376, %v6089, 0
      %v6124 = vsel %vm376, %v6090, 0
      %v6127 = vsel %vm376, %v6091, 0
      %v6130 = vsel %vm376, %v6092, 0
      %v6133 = vsel %vm376, %v6093, 0
      %v6136 = vsel %vm376, %v6094, 0
      %v6139 = vsel %vm376, %v6095, 0
      %v6142 = vsel %vm376, %v6096, 0
      %v6145 = vsel %vm376, %v6097, 0
      %v6148 = vsel %vm376, %v6098, 0
      %v6151 = vsel %vm376, %v6099, 0
      %v6154 = vsel %vm376, %v6100, 0
      %v6157 = vsel %vm376, %v6101, 0
      %v6160 = vsel %vm376, %v6102, 0
      %v6163 = vsel %vm376, %v6103, 0
      %v6166 = vsel %vm376, %v6104, 0
      %6168 = vmatprep.subr.bf16.mxu0 0
      %6169 = vmatpush1.bf16.msra.mxu0 %v6109
      %6170 = vmatprep.subr.bf16.mxu0 0
      %6171 = vmatpush1.bf16.msra.mxu0 0
      %6172 = vmatprep.subr.bf16.mxu0 0
      %6173 = vmatpush1.bf16.msra.mxu0 0
      %6174 = vmatprep.subr.bf16.mxu0 0
      %6175 = vmatpush1.bf16.msra.mxu0 0
      %6176 = vmatprep.subr.bf16.mxu0 0
      %6177 = vmatpush1.bf16.msra.mxu0 0
      %6178 = vmatprep.subr.bf16.mxu0 0
      %6179 = vmatpush1.bf16.msra.mxu0 0
      %6180 = vmatprep.subr.bf16.mxu0 0
      %6181 = vmatpush1.bf16.msra.mxu0 0
      %6182 = vmatprep.subr.bf16.mxu0 0
      %6183 = vmatpush1.bf16.msra.mxu0 0
      %6184 = vmatprep.subr.bf16.mxu0 0
      %6185 = vmatpush1.bf16.msra.mxu0 0
      %6186 = vmatprep.subr.bf16.mxu0 0
      %6187 = vmatpush1.bf16.msra.mxu0 0
      %6188 = vmatprep.subr.bf16.mxu0 0
      %6189 = vmatpush1.bf16.msra.mxu0 0
      %6190 = vmatprep.subr.bf16.mxu0 0
      %6191 = vmatpush1.bf16.msra.mxu0 0
      %6192 = vmatprep.subr.bf16.mxu0 0
      %6193 = vmatpush1.bf16.msra.mxu0 0
      %6194 = vmatprep.subr.bf16.mxu0 0
      %6195 = vmatpush1.bf16.msra.mxu0 0
      %6196 = vmatprep.subr.bf16.mxu0 0
      %6197 = vmatpush1.bf16.msra.mxu0 0
      %6198 = vmatprep.subr.bf16.mxu0 0
      %6199 = vmatpush1.bf16.msra.mxu0 0
      %6200 = vmatprep.mubr.bf16.mxu0 0
      %6201 = vmatmul.mubr.bf16.gmra.mrb[0].mxu0 %v6112
      %v6202 = vpop.f32.mrb[0].mxu0
      %v6203 = vadd.f32 0.0, %v6202
      %v6204 = vpop.f32.mrb[0].mxu0
      %v6205 = vpop.f32.mrb[0].mxu0
      %v6206 = vadd.f32 0.0, %v6205
      %v6207 = vpop.f32.mrb[0].mxu0
      %6208 = vmatprep.mubr.bf16.mxu0 0
      %6209 = vmatmul.mubr.bf16.gmra.mrb[0].mxu0 %v6115
      %v6210 = vpop.f32.mrb[0].mxu0
      %v6211 = vadd.f32 0.0, %v6210
      %v6212 = vpop.f32.mrb[0].mxu0
      %v6213 = vpop.f32.mrb[0].mxu0
      %v6214 = vadd.f32 0.0, %v6213
      %v6215 = vpop.f32.mrb[0].mxu0
      %6216 = vmatprep.mubr.bf16.mxu0 0
      %6217 = vmatmul.mubr.bf16.gmra.mrb[0].mxu0 %v6118
      %v6218 = vpop.f32.mrb[0].mxu0
      %v6219 = vadd.f32 0.0, %v6218
      %v6220 = vpop.f32.mrb[0].mxu0
      %v6221 = vpop.f32.mrb[0].mxu0
      %v6222 = vadd.f32 0.0, %v6221
      %v6223 = vpop.f32.mrb[0].mxu0
      %6224 = vmatprep.mubr.bf16.mxu0 0
      %6225 = vmatmul.mubr.bf16.gmra.mrb[0].mxu0 %v6121
      %v6226 = vpop.f32.mrb[0].mxu0
      %v6227 = vadd.f32 0.0, %v6226
      %v6228 = vpop.f32.mrb[0].mxu0
      %v6229 = vpop.f32.mrb[0].mxu0
      %v6230 = vadd.f32 0.0, %v6229
      %v6231 = vpop.f32.mrb[0].mxu0
      %6232 = vmatprep.mubr.bf16.mxu0 0
      %6233 = vmatmul.mubr.bf16.gmra.mrb[0].mxu0 %v6124
      %v6234 = vpop.f32.mrb[0].mxu0
      %v6235 = vadd.f32 0.0, %v6234
      %v6236 = vpop.f32.mrb[0].mxu0
      %v6237 = vpop.f32.mrb[0].mxu0
      %v6238 = vadd.f32 0.0, %v6237
      %v6239 = vpop.f32.mrb[0].mxu0
      %6240 = vmatprep.mubr.bf16.mxu0 0
      %6241 = vmatmul.mubr.bf16.gmra.mrb[0].mxu0 %v6127
      %v6242 = vpop.f32.mrb[0].mxu0
      %v6243 = vadd.f32 0.0, %v6242
      %v6244 = vpop.f32.mrb[0].mxu0
      %v6245 = vpop.f32.mrb[0].mxu0
      %v6246 = vadd.f32 0.0, %v6245
      %v6247 = vpop.f32.mrb[0].mxu0
      %6248 = vmatprep.mubr.bf16.mxu0 0
      %6249 = vmatmul.mubr.bf16.gmra.mrb[0].mxu0 %v6130
      %v6250 = vpop.f32.mrb[0].mxu0
      %v6251 = vadd.f32 0.0, %v6250
      %v6252 = vpop.f32.mrb[0].mxu0
      %v6253 = vpop.f32.mrb[0].mxu0
      %v6254 = vadd.f32 0.0, %v6253
      %v6255 = vpop.f32.mrb[0].mxu0
      %6256 = vmatprep.mubr.bf16.mxu0 0
      %6257 = vmatmul.mubr.bf16.gmra.mrb[0].mxu0 %v6133
      %v6258 = vpop.f32.mrb[0].mxu0
      %v6259 = vadd.f32 0.0, %v6258
      %v6260 = vpop.f32.mrb[0].mxu0
      %v6261 = vpop.f32.mrb[0].mxu0
      %v6262 = vadd.f32 0.0, %v6261
      %v6263 = vpop.f32.mrb[0].mxu0
      %6264 = vmatprep.mubr.bf16.mxu0 0
      %6265 = vmatmul.mubr.bf16.gmra.mrb[0].mxu0 %v6136
      %v6266 = vpop.f32.mrb[0].mxu0
      %v6267 = vadd.f32 0.0, %v6266
      %v6268 = vpop.f32.mrb[0].mxu0
      %v6269 = vpop.f32.mrb[0].mxu0
      %v6270 = vadd.f32 0.0, %v6269
      %v6271 = vpop.f32.mrb[0].mxu0
      %6272 = vmatprep.mubr.bf16.mxu0 0
      %6273 = vmatmul.mubr.bf16.gmra.mrb[0].mxu0 %v6139
      %v6274 = vpop.f32.mrb[0].mxu0
      %v6275 = vadd.f32 0.0, %v6274
      %v6276 = vpop.f32.mrb[0].mxu0
      %v6277 = vpop.f32.mrb[0].mxu0
      %v6278 = vadd.f32 0.0, %v6277
      %v6279 = vpop.f32.mrb[0].mxu0
      %6280 = vmatprep.mubr.bf16.mxu0 0
      %6281 = vmatmul.mubr.bf16.gmra.mrb[0].mxu0 %v6142
      %v6282 = vpop.f32.mrb[0].mxu0
      %v6283 = vadd.f32 0.0, %v6282
      %v6284 = vpop.f32.mrb[0].mxu0
      %v6285 = vpop.f32.mrb[0].mxu0
      %v6286 = vadd.f32 0.0, %v6285
      %v6287 = vpop.f32.mrb[0].mxu0
      %6288 = vmatprep.mubr.bf16.mxu0 0
      %6289 = vmatmul.mubr.bf16.gmra.mrb[0].mxu0 %v6145
      %v6290 = vpop.f32.mrb[0].mxu0
      %v6291 = vadd.f32 0.0, %v6290
      %v6292 = vpop.f32.mrb[0].mxu0
      %v6293 = vpop.f32.mrb[0].mxu0
      %v6294 = vadd.f32 0.0, %v6293
      %v6295 = vpop.f32.mrb[0].mxu0
      %6296 = vmatprep.mubr.bf16.mxu0 0
      %6297 = vmatmul.mubr.bf16.gmra.mrb[0].mxu0 %v6148
      %v6298 = vpop.f32.mrb[0].mxu0
      %v6299 = vadd.f32 0.0, %v6298
      %v6300 = vpop.f32.mrb[0].mxu0
      %v6301 = vpop.f32.mrb[0].mxu0
      %v6302 = vadd.f32 0.0, %v6301
      %v6303 = vpop.f32.mrb[0].mxu0
      %6304 = vmatprep.mubr.bf16.mxu0 0
      %6305 = vmatmul.mubr.bf16.gmra.mrb[0].mxu0 %v6151
      %v6306 = vpop.f32.mrb[0].mxu0
      %v6307 = vadd.f32 0.0, %v6306
      %v6308 = vpop.f32.mrb[0].mxu0
      %v6309 = vpop.f32.mrb[0].mxu0
      %v6310 = vadd.f32 0.0, %v6309
      %v6311 = vpop.f32.mrb[0].mxu0
      %6312 = vmatprep.mubr.bf16.mxu0 0
      %6313 = vmatmul.mubr.bf16.gmra.mrb[0].mxu0 %v6154
      %v6314 = vpop.f32.mrb[0].mxu0
      %v6315 = vadd.f32 0.0, %v6314
      %v6316 = vpop.f32.mrb[0].mxu0
      %v6317 = vpop.f32.mrb[0].mxu0
      %v6318 = vadd.f32 0.0, %v6317
      %v6319 = vpop.f32.mrb[0].mxu0
      %6320 = vmatprep.mubr.bf16.mxu0 0
      %6321 = vmatmul.mubr.bf16.gmra.mrb[0].mxu0 %v6157
      %v6322 = vpop.f32.mrb[0].mxu0
      %v6323 = vadd.f32 0.0, %v6322
      %v6324 = vpop.f32.mrb[0].mxu0
      %v6325 = vpop.f32.mrb[0].mxu0
      %v6326 = vadd.f32 0.0, %v6325
      %v6327 = vpop.f32.mrb[0].mxu0
      %6328 = vmatprep.mubr.bf16.mxu0 0
      %6329 = vmatmul.mubr.bf16.gmra.mrb[0].mxu0 %v6160
      %v6330 = vpop.f32.mrb[0].mxu0
      %v6331 = vadd.f32 0.0, %v6330
      %v6332 = vpop.f32.mrb[0].mxu0
      %v6333 = vpop.f32.mrb[0].mxu0
      %v6334 = vadd.f32 0.0, %v6333
      %v6335 = vpop.f32.mrb[0].mxu0
      %6336 = vmatprep.mubr.bf16.mxu0 0
      %6337 = vmatmul.mubr.bf16.gmra.mrb[0].mxu0 %v6163
      %v6338 = vpop.f32.mrb[0].mxu0
      %v6339 = vadd.f32 0.0, %v6338
      %v6340 = vpop.f32.mrb[0].mxu0
      %v6341 = vpop.f32.mrb[0].mxu0
      %v6342 = vadd.f32 0.0, %v6341
      %v6343 = vpop.f32.mrb[0].mxu0
      %6344 = vmatprep.mubr.bf16.mxu0 0
      %6345 = vmatmul.mubr.bf16.gmra.mrb[0].mxu0 %v6166
      %v6346 = vpop.f32.mrb[0].mxu0
      %v6347 = vadd.f32 0.0, %v6346
      %v6348 = vpop.f32.mrb[0].mxu0
      %v6349 = vpop.f32.mrb[0].mxu0
      %v6350 = vadd.f32 0.0, %v6349
      %v6351 = vpop.f32.mrb[0].mxu0
      %6352 = vdwg.mxu0
      %v6353 = vadd.f32 %v6010, %v6203
      %v6354 = vadd.f32 %v6011, %v6206
      %v6355 = vadd.f32 %v6012, %v6211
      %v6356 = vadd.f32 %v6013, %v6214
      %v6357 = vadd.f32 %v6014, %v6219
      %v6358 = vadd.f32 %v6015, %v6222
      %v6359 = vadd.f32 %v6016, %v6227
      %v6360 = vadd.f32 %v6017, %v6230
      %v6361 = vadd.f32 %v6018, %v6235
      %v6362 = vadd.f32 %v6019, %v6238
      %v6363 = vadd.f32 %v6020, %v6243
      %v6364 = vadd.f32 %v6021, %v6246
      %v6365 = vadd.f32 %v6022, %v6251
      %v6366 = vadd.f32 %v6023, %v6254
      %v6367 = vadd.f32 %v6024, %v6259
      %v6368 = vadd.f32 %v6025, %v6262
      %v6369 = vadd.f32 %v6026, %v6267
      %v6370 = vadd.f32 %v6027, %v6270
      %v6371 = vadd.f32 %v6028, %v6275
      %v6372 = vadd.f32 %v6029, %v6278
      %v6373 = vadd.f32 %v6030, %v6283
      %v6374 = vadd.f32 %v6031, %v6286
      %v6375 = vadd.f32 %v6032, %v6291
      %v6376 = vadd.f32 %v6033, %v6294
      %v6377 = vadd.f32 %v6034, %v6299
      %v6378 = vadd.f32 %v6035, %v6302
      %v6379 = vadd.f32 %v6036, %v6307
      %v6380 = vadd.f32 %v6037, %v6310
      %v6381 = vadd.f32 %v6038, %v6315
      %v6382 = vadd.f32 %v6039, %v6318
      %v6383 = vadd.f32 %v6040, %v6323
      %v6384 = vadd.f32 %v6041, %v6326
      %v6385 = vadd.f32 %v6042, %v6331
      %v6386 = vadd.f32 %v6043, %v6334
      %v6387 = vadd.f32 %v6044, %v6339
      %v6388 = vadd.f32 %v6045, %v6342
      %v6389 = vadd.f32 %v6046, %v6347
      %v6390 = vadd.f32 %v6047, %v6350
      %v6391 = vld [vmem:[#allocation2 + $0x43] sm:$0xff]
      %v6392 = vld [vmem:[#allocation2 + $0x4b] sm:$0xff]
      %v6393 = vld [vmem:[#allocation2 + $0x53] sm:$0xff]
      %v6394 = vld [vmem:[#allocation2 + $0x5b] sm:$0xff]
      %v6395 = vld [vmem:[#allocation2 + $0x63] sm:$0xff]
      %v6396 = vld [vmem:[#allocation2 + $0x6b] sm:$0xff]
      %v6397 = vld [vmem:[#allocation2 + $0x73] sm:$0xff]
      %v6398 = vld [vmem:[#allocation2 + $0x7b] sm:$0xff]
      %v6399 = vld [vmem:[#allocation2 + $0x83] sm:$0xff]
      %v6400 = vld [vmem:[#allocation2 + $0x8b] sm:$0xff]
      %v6401 = vld [vmem:[#allocation2 + $0x93] sm:$0xff]
      %v6402 = vld [vmem:[#allocation2 + $0x9b] sm:$0xff]
      %v6403 = vld [vmem:[#allocation2 + $0xa3] sm:$0xff]
      %v6404 = vld [vmem:[#allocation2 + $0xab] sm:$0xff]
      %v6405 = vld [vmem:[#allocation2 + $0xb3] sm:$0xff]
      %v6406 = vld [vmem:[#allocation2 + $0xbb] sm:$0xff]
      %v6407 = vld [vmem:[#allocation2 + $0xc3] sm:$0xff]
      %v6408 = vld [vmem:[#allocation2 + $0xcb] sm:$0xff]
      %v6409 = vld [vmem:[#allocation2 + $0xd3] sm:$0xff]
      %v6410 = vld [vmem:[#allocation2 + $0xdb] sm:$0xff]
      %v6411 = vld [vmem:[#allocation2 + $0xe3] sm:$0xff]
      %v6412 = vld [vmem:[#allocation2 + $0xeb] sm:$0xff]
      %v6413 = vld [vmem:[#allocation2 + $0xf3] sm:$0xff]
      %v6414 = vld [vmem:[#allocation2 + $0xfb] sm:$0xff]
      %v6415 = vld [vmem:[#allocation2 + $0x103] sm:$0xff]
      %v6416 = vld [vmem:[#allocation2 + $0x10b] sm:$0xff]
      %v6417 = vld [vmem:[#allocation2 + $0x113] sm:$0xff]
      %v6418 = vld [vmem:[#allocation2 + $0x11b] sm:$0xff]
      %v6419 = vld [vmem:[#allocation2 + $0x123] sm:$0xff]
      %v6420 = vld [vmem:[#allocation2 + $0x12b] sm:$0xff]
      %v6421 = vld [vmem:[#allocation2 + $0x133] sm:$0xff]
      %v6422 = vld [vmem:[#allocation2 + $0x13b] sm:$0xff]
      %v6423 = vld [vmem:[#allocation2 + $0x143] sm:$0xff]
      %v6424 = vld [vmem:[#allocation2 + $0x14b] sm:$0xff]
      %v6425 = vld [vmem:[#allocation2 + $0x153] sm:$0xff]
      %v6426 = vld [vmem:[#allocation2 + $0x15b] sm:$0xff]
      %v6427 = vld [vmem:[#allocation2 + $0x163] sm:$0xff]
      %v6428 = vld [vmem:[#allocation2 + $0x16b] sm:$0xff]
      %v6429 = vpack.c.bf16 %v6392, %v6391
      %v6430 = vpack.c.bf16 %v6394, %v6393
      %v6431 = vpack.c.bf16 %v6396, %v6395
      %v6432 = vpack.c.bf16 %v6398, %v6397
      %v6433 = vpack.c.bf16 %v6400, %v6399
      %v6434 = vpack.c.bf16 %v6402, %v6401
      %v6435 = vpack.c.bf16 %v6404, %v6403
      %v6436 = vpack.c.bf16 %v6406, %v6405
      %v6437 = vpack.c.bf16 %v6408, %v6407
      %v6438 = vpack.c.bf16 %v6410, %v6409
      %v6439 = vpack.c.bf16 %v6412, %v6411
      %v6440 = vpack.c.bf16 %v6414, %v6413
      %v6441 = vpack.c.bf16 %v6416, %v6415
      %v6442 = vpack.c.bf16 %v6418, %v6417
      %v6443 = vpack.c.bf16 %v6420, %v6419
      %v6444 = vpack.c.bf16 %v6422, %v6421
      %v6445 = vpack.c.bf16 %v6424, %v6423
      %v6446 = vpack.c.bf16 %v6426, %v6425
      %v6447 = vpack.c.bf16 %v6428, %v6427
      %v6450 = vunpack.c.l.b16 %v374
      %v6451 = vunpack.c.l.b16 %v375
      %v6452 = vpack.c.b16 %v6451, %v6450
      %v6455 = vsel %vm376, %v6429, 0
      %v6458 = vsel %vm376, %v6430, 0
      %v6461 = vsel %vm376, %v6431, 0
      %v6464 = vsel %vm376, %v6432, 0
      %v6467 = vsel %vm376, %v6433, 0
      %v6470 = vsel %vm376, %v6434, 0
      %v6473 = vsel %vm376, %v6435, 0
      %v6476 = vsel %vm376, %v6436, 0
      %v6479 = vsel %vm376, %v6437, 0
      %v6482 = vsel %vm376, %v6438, 0
      %v6485 = vsel %vm376, %v6439, 0
      %v6488 = vsel %vm376, %v6440, 0
      %v6491 = vsel %vm376, %v6441, 0
      %v6494 = vsel %vm376, %v6442, 0
      %v6497 = vsel %vm376, %v6443, 0
      %v6500 = vsel %vm376, %v6444, 0
      %v6503 = vsel %vm376, %v6445, 0
      %v6506 = vsel %vm376, %v6446, 0
      %v6509 = vsel %vm376, %v6447, 0
      %6511 = vmatprep.subr.bf16.mxu0 0
      %6512 = vmatpush1.bf16.msra.mxu0 %v6452
      %6513 = vmatprep.subr.bf16.mxu0 0
      %6514 = vmatpush1.bf16.msra.mxu0 0
      %6515 = vmatprep.subr.bf16.mxu0 0
      %6516 = vmatpush1.bf16.msra.mxu0 0
      %6517 = vmatprep.subr.bf16.mxu0 0
      %6518 = vmatpush1.bf16.msra.mxu0 0
      %6519 = vmatprep.subr.bf16.mxu0 0
      %6520 = vmatpush1.bf16.msra.mxu0 0
      %6521 = vmatprep.subr.bf16.mxu0 0
      %6522 = vmatpush1.bf16.msra.mxu0 0
      %6523 = vmatprep.subr.bf16.mxu0 0
      %6524 = vmatpush1.bf16.msra.mxu0 0
      %6525 = vmatprep.subr.bf16.mxu0 0
      %6526 = vmatpush1.bf16.msra.mxu0 0
      %6527 = vmatprep.subr.bf16.mxu0 0
      %6528 = vmatpush1.bf16.msra.mxu0 0
      %6529 = vmatprep.subr.bf16.mxu0 0
      %6530 = vmatpush1.bf16.msra.mxu0 0
      %6531 = vmatprep.subr.bf16.mxu0 0
      %6532 = vmatpush1.bf16.msra.mxu0 0
      %6533 = vmatprep.subr.bf16.mxu0 0
      %6534 = vmatpush1.bf16.msra.mxu0 0
      %6535 = vmatprep.subr.bf16.mxu0 0
      %6536 = vmatpush1.bf16.msra.mxu0 0
      %6537 = vmatprep.subr.bf16.mxu0 0
      %6538 = vmatpush1.bf16.msra.mxu0 0
      %6539 = vmatprep.subr.bf16.mxu0 0
      %6540 = vmatpush1.bf16.msra.mxu0 0
      %6541 = vmatprep.subr.bf16.mxu0 0
      %6542 = vmatpush1.bf16.msra.mxu0 0
      %6543 = vmatprep.mubr.bf16.mxu0 0
      %6544 = vmatmul.mubr.bf16.gmra.mrb[0].mxu0 %v6455
      %v6545 = vpop.f32.mrb[0].mxu0
      %v6546 = vadd.f32 0.0, %v6545
      %v6547 = vpop.f32.mrb[0].mxu0
      %v6548 = vpop.f32.mrb[0].mxu0
      %v6549 = vadd.f32 0.0, %v6548
      %v6550 = vpop.f32.mrb[0].mxu0
      %6551 = vmatprep.mubr.bf16.mxu0 0
      %6552 = vmatmul.mubr.bf16.gmra.mrb[0].mxu0 %v6458
      %v6553 = vpop.f32.mrb[0].mxu0
      %v6554 = vadd.f32 0.0, %v6553
      %v6555 = vpop.f32.mrb[0].mxu0
      %v6556 = vpop.f32.mrb[0].mxu0
      %v6557 = vadd.f32 0.0, %v6556
      %v6558 = vpop.f32.mrb[0].mxu0
      %6559 = vmatprep.mubr.bf16.mxu0 0
      %6560 = vmatmul.mubr.bf16.gmra.mrb[0].mxu0 %v6461
      %v6561 = vpop.f32.mrb[0].mxu0
      %v6562 = vadd.f32 0.0, %v6561
      %v6563 = vpop.f32.mrb[0].mxu0
      %v6564 = vpop.f32.mrb[0].mxu0
      %v6565 = vadd.f32 0.0, %v6564
      %v6566 = vpop.f32.mrb[0].mxu0
      %6567 = vmatprep.mubr.bf16.mxu0 0
      %6568 = vmatmul.mubr.bf16.gmra.mrb[0].mxu0 %v6464
      %v6569 = vpop.f32.mrb[0].mxu0
      %v6570 = vadd.f32 0.0, %v6569
      %v6571 = vpop.f32.mrb[0].mxu0
      %v6572 = vpop.f32.mrb[0].mxu0
      %v6573 = vadd.f32 0.0, %v6572
      %v6574 = vpop.f32.mrb[0].mxu0
      %6575 = vmatprep.mubr.bf16.mxu0 0
      %6576 = vmatmul.mubr.bf16.gmra.mrb[0].mxu0 %v6467
      %v6577 = vpop.f32.mrb[0].mxu0
      %v6578 = vadd.f32 0.0, %v6577
      %v6579 = vpop.f32.mrb[0].mxu0
      %v6580 = vpop.f32.mrb[0].mxu0
      %v6581 = vadd.f32 0.0, %v6580
      %v6582 = vpop.f32.mrb[0].mxu0
      %6583 = vmatprep.mubr.bf16.mxu0 0
      %6584 = vmatmul.mubr.bf16.gmra.mrb[0].mxu0 %v6470
      %v6585 = vpop.f32.mrb[0].mxu0
      %v6586 = vadd.f32 0.0, %v6585
      %v6587 = vpop.f32.mrb[0].mxu0
      %v6588 = vpop.f32.mrb[0].mxu0
      %v6589 = vadd.f32 0.0, %v6588
      %v6590 = vpop.f32.mrb[0].mxu0
      %6591 = vmatprep.mubr.bf16.mxu0 0
      %6592 = vmatmul.mubr.bf16.gmra.mrb[0].mxu0 %v6473
      %v6593 = vpop.f32.mrb[0].mxu0
      %v6594 = vadd.f32 0.0, %v6593
      %v6595 = vpop.f32.mrb[0].mxu0
      %v6596 = vpop.f32.mrb[0].mxu0
      %v6597 = vadd.f32 0.0, %v6596
      %v6598 = vpop.f32.mrb[0].mxu0
      %6599 = vmatprep.mubr.bf16.mxu0 0
      %6600 = vmatmul.mubr.bf16.gmra.mrb[0].mxu0 %v6476
      %v6601 = vpop.f32.mrb[0].mxu0
      %v6602 = vadd.f32 0.0, %v6601
      %v6603 = vpop.f32.mrb[0].mxu0
      %v6604 = vpop.f32.mrb[0].mxu0
      %v6605 = vadd.f32 0.0, %v6604
      %v6606 = vpop.f32.mrb[0].mxu0
      %6607 = vmatprep.mubr.bf16.mxu0 0
      %6608 = vmatmul.mubr.bf16.gmra.mrb[0].mxu0 %v6479
      %v6609 = vpop.f32.mrb[0].mxu0
      %v6610 = vadd.f32 0.0, %v6609
      %v6611 = vpop.f32.mrb[0].mxu0
      %v6612 = vpop.f32.mrb[0].mxu0
      %v6613 = vadd.f32 0.0, %v6612
      %v6614 = vpop.f32.mrb[0].mxu0
      %6615 = vmatprep.mubr.bf16.mxu0 0
      %6616 = vmatmul.mubr.bf16.gmra.mrb[0].mxu0 %v6482
      %v6617 = vpop.f32.mrb[0].mxu0
      %v6618 = vadd.f32 0.0, %v6617
      %v6619 = vpop.f32.mrb[0].mxu0
      %v6620 = vpop.f32.mrb[0].mxu0
      %v6621 = vadd.f32 0.0, %v6620
      %v6622 = vpop.f32.mrb[0].mxu0
      %6623 = vmatprep.mubr.bf16.mxu0 0
      %6624 = vmatmul.mubr.bf16.gmra.mrb[0].mxu0 %v6485
      %v6625 = vpop.f32.mrb[0].mxu0
      %v6626 = vadd.f32 0.0, %v6625
      %v6627 = vpop.f32.mrb[0].mxu0
      %v6628 = vpop.f32.mrb[0].mxu0
      %v6629 = vadd.f32 0.0, %v6628
      %v6630 = vpop.f32.mrb[0].mxu0
      %6631 = vmatprep.mubr.bf16.mxu0 0
      %6632 = vmatmul.mubr.bf16.gmra.mrb[0].mxu0 %v6488
      %v6633 = vpop.f32.mrb[0].mxu0
      %v6634 = vadd.f32 0.0, %v6633
      %v6635 = vpop.f32.mrb[0].mxu0
      %v6636 = vpop.f32.mrb[0].mxu0
      %v6637 = vadd.f32 0.0, %v6636
      %v6638 = vpop.f32.mrb[0].mxu0
      %6639 = vmatprep.mubr.bf16.mxu0 0
      %6640 = vmatmul.mubr.bf16.gmra.mrb[0].mxu0 %v6491
      %v6641 = vpop.f32.mrb[0].mxu0
      %v6642 = vadd.f32 0.0, %v6641
      %v6643 = vpop.f32.mrb[0].mxu0
      %v6644 = vpop.f32.mrb[0].mxu0
      %v6645 = vadd.f32 0.0, %v6644
      %v6646 = vpop.f32.mrb[0].mxu0
      %6647 = vmatprep.mubr.bf16.mxu0 0
      %6648 = vmatmul.mubr.bf16.gmra.mrb[0].mxu0 %v6494
      %v6649 = vpop.f32.mrb[0].mxu0
      %v6650 = vadd.f32 0.0, %v6649
      %v6651 = vpop.f32.mrb[0].mxu0
      %v6652 = vpop.f32.mrb[0].mxu0
      %v6653 = vadd.f32 0.0, %v6652
      %v6654 = vpop.f32.mrb[0].mxu0
      %6655 = vmatprep.mubr.bf16.mxu0 0
      %6656 = vmatmul.mubr.bf16.gmra.mrb[0].mxu0 %v6497
      %v6657 = vpop.f32.mrb[0].mxu0
      %v6658 = vadd.f32 0.0, %v6657
      %v6659 = vpop.f32.mrb[0].mxu0
      %v6660 = vpop.f32.mrb[0].mxu0
      %v6661 = vadd.f32 0.0, %v6660
      %v6662 = vpop.f32.mrb[0].mxu0
      %6663 = vmatprep.mubr.bf16.mxu0 0
      %6664 = vmatmul.mubr.bf16.gmra.mrb[0].mxu0 %v6500
      %v6665 = vpop.f32.mrb[0].mxu0
      %v6666 = vadd.f32 0.0, %v6665
      %v6667 = vpop.f32.mrb[0].mxu0
      %v6668 = vpop.f32.mrb[0].mxu0
      %v6669 = vadd.f32 0.0, %v6668
      %v6670 = vpop.f32.mrb[0].mxu0
      %6671 = vmatprep.mubr.bf16.mxu0 0
      %6672 = vmatmul.mubr.bf16.gmra.mrb[0].mxu0 %v6503
      %v6673 = vpop.f32.mrb[0].mxu0
      %v6674 = vadd.f32 0.0, %v6673
      %v6675 = vpop.f32.mrb[0].mxu0
      %v6676 = vpop.f32.mrb[0].mxu0
      %v6677 = vadd.f32 0.0, %v6676
      %v6678 = vpop.f32.mrb[0].mxu0
      %6679 = vmatprep.mubr.bf16.mxu0 0
      %6680 = vmatmul.mubr.bf16.gmra.mrb[0].mxu0 %v6506
      %v6681 = vpop.f32.mrb[0].mxu0
      %v6682 = vadd.f32 0.0, %v6681
      %v6683 = vpop.f32.mrb[0].mxu0
      %v6684 = vpop.f32.mrb[0].mxu0
      %v6685 = vadd.f32 0.0, %v6684
      %v6686 = vpop.f32.mrb[0].mxu0
      %6687 = vmatprep.mubr.bf16.mxu0 0
      %6688 = vmatmul.mubr.bf16.gmra.mrb[0].mxu0 %v6509
      %v6689 = vpop.f32.mrb[0].mxu0
      %v6690 = vadd.f32 0.0, %v6689
      %v6691 = vpop.f32.mrb[0].mxu0
      %v6692 = vpop.f32.mrb[0].mxu0
      %v6693 = vadd.f32 0.0, %v6692
      %v6694 = vpop.f32.mrb[0].mxu0
      %6695 = vdwg.mxu0
      %v6696 = vadd.f32 %v6353, %v6546
      %v6697 = vadd.f32 %v6354, %v6549
      %v6698 = vadd.f32 %v6355, %v6554
      %v6699 = vadd.f32 %v6356, %v6557
      %v6700 = vadd.f32 %v6357, %v6562
      %v6701 = vadd.f32 %v6358, %v6565
      %v6702 = vadd.f32 %v6359, %v6570
      %v6703 = vadd.f32 %v6360, %v6573
      %v6704 = vadd.f32 %v6361, %v6578
      %v6705 = vadd.f32 %v6362, %v6581
      %v6706 = vadd.f32 %v6363, %v6586
      %v6707 = vadd.f32 %v6364, %v6589
      %v6708 = vadd.f32 %v6365, %v6594
      %v6709 = vadd.f32 %v6366, %v6597
      %v6710 = vadd.f32 %v6367, %v6602
      %v6711 = vadd.f32 %v6368, %v6605
      %v6712 = vadd.f32 %v6369, %v6610
      %v6713 = vadd.f32 %v6370, %v6613
      %v6714 = vadd.f32 %v6371, %v6618
      %v6715 = vadd.f32 %v6372, %v6621
      %v6716 = vadd.f32 %v6373, %v6626
      %v6717 = vadd.f32 %v6374, %v6629
      %v6718 = vadd.f32 %v6375, %v6634
      %v6719 = vadd.f32 %v6376, %v6637
      %v6720 = vadd.f32 %v6377, %v6642
      %v6721 = vadd.f32 %v6378, %v6645
      %v6722 = vadd.f32 %v6379, %v6650
      %v6723 = vadd.f32 %v6380, %v6653
      %v6724 = vadd.f32 %v6381, %v6658
      %v6725 = vadd.f32 %v6382, %v6661
      %v6726 = vadd.f32 %v6383, %v6666
      %v6727 = vadd.f32 %v6384, %v6669
      %v6728 = vadd.f32 %v6385, %v6674
      %v6729 = vadd.f32 %v6386, %v6677
      %v6730 = vadd.f32 %v6387, %v6682
      %v6731 = vadd.f32 %v6388, %v6685
      %v6732 = vadd.f32 %v6389, %v6690
      %v6733 = vadd.f32 %v6390, %v6693
      %v6735 = vlaneseq
      %v6736 = vshrl.u32 %v6735, 7
      %v6737 = vsub.s32 0, %v6736
      %v6738 = vrot.slane %v346, %v6737
      %v6740 = vadd.f32 %v6696, %v6738
      %v6741 = vadd.f32 %v6697, %v6738
      %v6742 = vadd.f32 %v6698, %v6738
      %v6743 = vadd.f32 %v6699, %v6738
      %v6744 = vadd.f32 %v6700, %v6738
      %v6745 = vadd.f32 %v6701, %v6738
      %v6746 = vadd.f32 %v6702, %v6738
      %v6747 = vadd.f32 %v6703, %v6738
      %v6748 = vadd.f32 %v6704, %v6738
      %v6749 = vadd.f32 %v6705, %v6738
      %v6750 = vadd.f32 %v6706, %v6738
      %v6751 = vadd.f32 %v6707, %v6738
      %v6752 = vadd.f32 %v6708, %v6738
      %v6753 = vadd.f32 %v6709, %v6738
      %v6754 = vadd.f32 %v6710, %v6738
      %v6755 = vadd.f32 %v6711, %v6738
      %v6756 = vadd.f32 %v6712, %v6738
      %v6757 = vadd.f32 %v6713, %v6738
      %v6758 = vadd.f32 %v6714, %v6738
      %v6759 = vadd.f32 %v6715, %v6738
      %v6760 = vadd.f32 %v6716, %v6738
      %v6761 = vadd.f32 %v6717, %v6738
      %v6762 = vadd.f32 %v6718, %v6738
      %v6763 = vadd.f32 %v6719, %v6738
      %v6764 = vadd.f32 %v6720, %v6738
      %v6765 = vadd.f32 %v6721, %v6738
      %v6766 = vadd.f32 %v6722, %v6738
      %v6767 = vadd.f32 %v6723, %v6738
      %v6768 = vadd.f32 %v6724, %v6738
      %v6769 = vadd.f32 %v6725, %v6738
      %v6770 = vadd.f32 %v6726, %v6738
      %v6771 = vadd.f32 %v6727, %v6738
      %v6772 = vadd.f32 %v6728, %v6738
      %v6773 = vadd.f32 %v6729, %v6738
      %v6774 = vadd.f32 %v6730, %v6738
      %v6775 = vadd.f32 %v6731, %v6738
      %v6776 = vadd.f32 %v6732, %v6738
      %v6777 = vadd.f32 %v6733, %v6738
      %v6778 = vld [vmem:[%s300 + $0x30] sm:$0xff]
      %v6779 = vld [vmem:[%s300 + $0x38] sm:$0xff]
      %v6780 = vld [vmem:[%s300 + $0x40] sm:$0xff]
      %v6781 = vld [vmem:[%s300 + $0x48] sm:$0xff]
      %v6782 = vld [vmem:[%s300 + $0x50] sm:$0xff]
      %v6783 = vld [vmem:[%s300 + $0x58] sm:$0xff]
      %v6784 = vld [vmem:[%s300 + $0x60] sm:$0xff]
      %v6785 = vld [vmem:[%s300 + $0x68] sm:$0xff]
      %v6786 = vld [vmem:[%s300 + $0x70] sm:$0xff]
      %v6787 = vld [vmem:[%s300 + $0x78] sm:$0xff]
      %v6788 = vld [vmem:[%s300 + $0x80] sm:$0xff]
      %v6789 = vld [vmem:[%s300 + $0x88] sm:$0xff]
      %v6790 = vld [vmem:[%s300 + $0x90] sm:$0xff]
      %v6791 = vld [vmem:[%s300 + $0x98] sm:$0xff]
      %v6792 = vld [vmem:[%s300 + $0xa0] sm:$0xff]
      %v6793 = vld [vmem:[%s300 + $0xa8] sm:$0xff]
      %v6794 = vld [vmem:[%s300 + $0xb0] sm:$0xff]
      %v6795 = vld [vmem:[%s300 + $0xb8] sm:$0xff]
      %v6796 = vld [vmem:[%s300 + $0xc0] sm:$0xff]
      %v6797 = vld [vmem:[%s300 + $0xc8] sm:$0xff]
      %v6798 = vld [vmem:[%s300 + $0xd0] sm:$0xff]
      %v6799 = vld [vmem:[%s300 + $0xd8] sm:$0xff]
      %v6800 = vld [vmem:[%s300 + $0xe0] sm:$0xff]
      %v6801 = vld [vmem:[%s300 + $0xe8] sm:$0xff]
      %v6802 = vld [vmem:[%s300 + $0xf0] sm:$0xff]
      %v6803 = vld [vmem:[%s300 + $0xf8] sm:$0xff]
      %v6804 = vld [vmem:[%s300 + $0x100] sm:$0xff]
      %v6805 = vld [vmem:[%s300 + $0x108] sm:$0xff]
      %v6806 = vld [vmem:[%s300 + $0x110] sm:$0xff]
      %v6807 = vld [vmem:[%s300 + $0x118] sm:$0xff]
      %v6808 = vld [vmem:[%s300 + $0x120] sm:$0xff]
      %v6809 = vld [vmem:[%s300 + $0x128] sm:$0xff]
      %v6810 = vld [vmem:[%s300 + $0x130] sm:$0xff]
      %v6811 = vld [vmem:[%s300 + $0x138] sm:$0xff]
      %v6812 = vld [vmem:[%s300 + $0x140] sm:$0xff]
      %v6813 = vld [vmem:[%s300 + $0x148] sm:$0xff]
      %v6814 = vld [vmem:[%s300 + $0x150] sm:$0xff]
      %v6815 = vld [vmem:[%s300 + $0x158] sm:$0xff]
      %v6816 = vpack.c.bf16 %v6779, %v6778
      %v6817 = vpack.c.bf16 %v6781, %v6780
      %v6818 = vpack.c.bf16 %v6783, %v6782
      %v6819 = vpack.c.bf16 %v6785, %v6784
      %v6820 = vpack.c.bf16 %v6787, %v6786
      %v6821 = vpack.c.bf16 %v6789, %v6788
      %v6822 = vpack.c.bf16 %v6791, %v6790
      %v6823 = vpack.c.bf16 %v6793, %v6792
      %v6824 = vpack.c.bf16 %v6795, %v6794
      %v6825 = vpack.c.bf16 %v6797, %v6796
      %v6826 = vpack.c.bf16 %v6799, %v6798
      %v6827 = vpack.c.bf16 %v6801, %v6800
      %v6828 = vpack.c.bf16 %v6803, %v6802
      %v6829 = vpack.c.bf16 %v6805, %v6804
      %v6830 = vpack.c.bf16 %v6807, %v6806
      %v6831 = vpack.c.bf16 %v6809, %v6808
      %v6832 = vpack.c.bf16 %v6811, %v6810
      %v6833 = vpack.c.bf16 %v6813, %v6812
      %v6834 = vpack.c.bf16 %v6815, %v6814
      %v6836 = vlaneseq
      %v6837 = vshrl.u32 %v6836, 7
      %v6838 = vsub.s32 0, %v6837
      %v6839 = vrot.slane %v347, %v6838
      %v6842 = vsel %vm503, %v6816, 0
      %v6845 = vsel %vm503, %v6817, 0
      %v6848 = vsel %vm503, %v6818, 0
      %v6851 = vsel %vm503, %v6819, 0
      %v6854 = vsel %vm503, %v6820, 0
      %v6857 = vsel %vm503, %v6821, 0
      %v6860 = vsel %vm503, %v6822, 0
      %v6863 = vsel %vm503, %v6823, 0
      %v6866 = vsel %vm503, %v6824, 0
      %v6869 = vsel %vm503, %v6825, 0
      %v6872 = vsel %vm503, %v6826, 0
      %v6875 = vsel %vm503, %v6827, 0
      %v6878 = vsel %vm503, %v6828, 0
      %v6881 = vsel %vm503, %v6829, 0
      %v6884 = vsel %vm503, %v6830, 0
      %v6887 = vsel %vm503, %v6831, 0
      %v6890 = vsel %vm503, %v6832, 0
      %v6893 = vsel %vm503, %v6833, 0
      %v6896 = vsel %vm503, %v6834, 0
      %v6899 = vsel %vm561, %v348, 0
      %6901 = vmatprep.subr.bf16.mxu0 0
      %6902 = vmatpush1.bf16.msra.mxu0 %v6899
      %6903 = vmatprep.subr.bf16.mxu0 0
      %6904 = vmatpush1.bf16.msra.mxu0 0
      %6905 = vmatprep.subr.bf16.mxu0 0
      %6906 = vmatpush1.bf16.msra.mxu0 0
      %6907 = vmatprep.subr.bf16.mxu0 0
      %6908 = vmatpush1.bf16.msra.mxu0 0
      %6909 = vmatprep.subr.bf16.mxu0 0
      %6910 = vmatpush1.bf16.msra.mxu0 0
      %6911 = vmatprep.subr.bf16.mxu0 0
      %6912 = vmatpush1.bf16.msra.mxu0 0
      %6913 = vmatprep.subr.bf16.mxu0 0
      %6914 = vmatpush1.bf16.msra.mxu0 0
      %6915 = vmatprep.subr.bf16.mxu0 0
      %6916 = vmatpush1.bf16.msra.mxu0 0
      %6917 = vmatprep.subr.bf16.mxu0 0
      %6918 = vmatpush1.bf16.msra.mxu0 0
      %6919 = vmatprep.subr.bf16.mxu0 0
      %6920 = vmatpush1.bf16.msra.mxu0 0
      %6921 = vmatprep.subr.bf16.mxu0 0
      %6922 = vmatpush1.bf16.msra.mxu0 0
      %6923 = vmatprep.subr.bf16.mxu0 0
      %6924 = vmatpush1.bf16.msra.mxu0 0
      %6925 = vmatprep.subr.bf16.mxu0 0
      %6926 = vmatpush1.bf16.msra.mxu0 0
      %6927 = vmatprep.subr.bf16.mxu0 0
      %6928 = vmatpush1.bf16.msra.mxu0 0
      %6929 = vmatprep.subr.bf16.mxu0 0
      %6930 = vmatpush1.bf16.msra.mxu0 0
      %6931 = vmatprep.subr.bf16.mxu0 0
      %6932 = vmatpush1.bf16.msra.mxu0 0
      %6933 = vmatprep.mubr.bf16.mxu0 0
      %6934 = vmatmul.mubr.bf16.gmra.mrb[0].mxu0 %v6842
      %v6935 = vpop.f32.mrb[0].mxu0
      %v6936 = vadd.f32 %v6839, %v6935
      %v6937 = vpop.f32.mrb[0].mxu0
      %v6938 = vpop.f32.mrb[0].mxu0
      %v6939 = vadd.f32 %v6839, %v6938
      %v6940 = vpop.f32.mrb[0].mxu0
      %6941 = vmatprep.mubr.bf16.mxu0 0
      %6942 = vmatmul.mubr.bf16.gmra.mrb[0].mxu0 %v6845
      %v6943 = vpop.f32.mrb[0].mxu0
      %v6944 = vadd.f32 %v6839, %v6943
      %v6945 = vpop.f32.mrb[0].mxu0
      %v6946 = vpop.f32.mrb[0].mxu0
      %v6947 = vadd.f32 %v6839, %v6946
      %v6948 = vpop.f32.mrb[0].mxu0
      %6949 = vmatprep.mubr.bf16.mxu0 0
      %6950 = vmatmul.mubr.bf16.gmra.mrb[0].mxu0 %v6848
      %v6951 = vpop.f32.mrb[0].mxu0
      %v6952 = vadd.f32 %v6839, %v6951
      %v6953 = vpop.f32.mrb[0].mxu0
      %v6954 = vpop.f32.mrb[0].mxu0
      %v6955 = vadd.f32 %v6839, %v6954
      %v6956 = vpop.f32.mrb[0].mxu0
      %6957 = vmatprep.mubr.bf16.mxu0 0
      %6958 = vmatmul.mubr.bf16.gmra.mrb[0].mxu0 %v6851
      %v6959 = vpop.f32.mrb[0].mxu0
      %v6960 = vadd.f32 %v6839, %v6959
      %v6961 = vpop.f32.mrb[0].mxu0
      %v6962 = vpop.f32.mrb[0].mxu0
      %v6963 = vadd.f32 %v6839, %v6962
      %v6964 = vpop.f32.mrb[0].mxu0
      %6965 = vmatprep.mubr.bf16.mxu0 0
      %6966 = vmatmul.mubr.bf16.gmra.mrb[0].mxu0 %v6854
      %v6967 = vpop.f32.mrb[0].mxu0
      %v6968 = vadd.f32 %v6839, %v6967
      %v6969 = vpop.f32.mrb[0].mxu0
      %v6970 = vpop.f32.mrb[0].mxu0
      %v6971 = vadd.f32 %v6839, %v6970
      %v6972 = vpop.f32.mrb[0].mxu0
      %6973 = vmatprep.mubr.bf16.mxu0 0
      %6974 = vmatmul.mubr.bf16.gmra.mrb[0].mxu0 %v6857
      %v6975 = vpop.f32.mrb[0].mxu0
      %v6976 = vadd.f32 %v6839, %v6975
      %v6977 = vpop.f32.mrb[0].mxu0
      %v6978 = vpop.f32.mrb[0].mxu0
      %v6979 = vadd.f32 %v6839, %v6978
      %v6980 = vpop.f32.mrb[0].mxu0
      %6981 = vmatprep.mubr.bf16.mxu0 0
      %6982 = vmatmul.mubr.bf16.gmra.mrb[0].mxu0 %v6860
      %v6983 = vpop.f32.mrb[0].mxu0
      %v6984 = vadd.f32 %v6839, %v6983
      %v6985 = vpop.f32.mrb[0].mxu0
      %v6986 = vpop.f32.mrb[0].mxu0
      %v6987 = vadd.f32 %v6839, %v6986
      %v6988 = vpop.f32.mrb[0].mxu0
      %6989 = vmatprep.mubr.bf16.mxu0 0
      %6990 = vmatmul.mubr.bf16.gmra.mrb[0].mxu0 %v6863
      %v6991 = vpop.f32.mrb[0].mxu0
      %v6992 = vadd.f32 %v6839, %v6991
      %v6993 = vpop.f32.mrb[0].mxu0
      %v6994 = vpop.f32.mrb[0].mxu0
      %v6995 = vadd.f32 %v6839, %v6994
      %v6996 = vpop.f32.mrb[0].mxu0
      %6997 = vmatprep.mubr.bf16.mxu0 0
      %6998 = vmatmul.mubr.bf16.gmra.mrb[0].mxu0 %v6866
      %v6999 = vpop.f32.mrb[0].mxu0
      %v7000 = vadd.f32 %v6839, %v6999
      %v7001 = vpop.f32.mrb[0].mxu0
      %v7002 = vpop.f32.mrb[0].mxu0
      %v7003 = vadd.f32 %v6839, %v7002
      %v7004 = vpop.f32.mrb[0].mxu0
      %7005 = vmatprep.mubr.bf16.mxu0 0
      %7006 = vmatmul.mubr.bf16.gmra.mrb[0].mxu0 %v6869
      %v7007 = vpop.f32.mrb[0].mxu0
      %v7008 = vadd.f32 %v6839, %v7007
      %v7009 = vpop.f32.mrb[0].mxu0
      %v7010 = vpop.f32.mrb[0].mxu0
      %v7011 = vadd.f32 %v6839, %v7010
      %v7012 = vpop.f32.mrb[0].mxu0
      %7013 = vmatprep.mubr.bf16.mxu0 0
      %7014 = vmatmul.mubr.bf16.gmra.mrb[0].mxu0 %v6872
      %v7015 = vpop.f32.mrb[0].mxu0
      %v7016 = vadd.f32 %v6839, %v7015
      %v7017 = vpop.f32.mrb[0].mxu0
      %v7018 = vpop.f32.mrb[0].mxu0
      %v7019 = vadd.f32 %v6839, %v7018
      %v7020 = vpop.f32.mrb[0].mxu0
      %7021 = vmatprep.mubr.bf16.mxu0 0
      %7022 = vmatmul.mubr.bf16.gmra.mrb[0].mxu0 %v6875
      %v7023 = vpop.f32.mrb[0].mxu0
      %v7024 = vadd.f32 %v6839, %v7023
      %v7025 = vpop.f32.mrb[0].mxu0
      %v7026 = vpop.f32.mrb[0].mxu0
      %v7027 = vadd.f32 %v6839, %v7026
      %v7028 = vpop.f32.mrb[0].mxu0
      %7029 = vmatprep.mubr.bf16.mxu0 0
      %7030 = vmatmul.mubr.bf16.gmra.mrb[0].mxu0 %v6878
      %v7031 = vpop.f32.mrb[0].mxu0
      %v7032 = vadd.f32 %v6839, %v7031
      %v7033 = vpop.f32.mrb[0].mxu0
      %v7034 = vpop.f32.mrb[0].mxu0
      %v7035 = vadd.f32 %v6839, %v7034
      %v7036 = vpop.f32.mrb[0].mxu0
      %7037 = vmatprep.mubr.bf16.mxu0 0
      %7038 = vmatmul.mubr.bf16.gmra.mrb[0].mxu0 %v6881
      %v7039 = vpop.f32.mrb[0].mxu0
      %v7040 = vadd.f32 %v6839, %v7039
      %v7041 = vpop.f32.mrb[0].mxu0
      %v7042 = vpop.f32.mrb[0].mxu0
      %v7043 = vadd.f32 %v6839, %v7042
      %v7044 = vpop.f32.mrb[0].mxu0
      %7045 = vmatprep.mubr.bf16.mxu0 0
      %7046 = vmatmul.mubr.bf16.gmra.mrb[0].mxu0 %v6884
      %v7047 = vpop.f32.mrb[0].mxu0
      %v7048 = vadd.f32 %v6839, %v7047
      %v7049 = vpop.f32.mrb[0].mxu0
      %v7050 = vpop.f32.mrb[0].mxu0
      %v7051 = vadd.f32 %v6839, %v7050
      %v7052 = vpop.f32.mrb[0].mxu0
      %7053 = vmatprep.mubr.bf16.mxu0 0
      %7054 = vmatmul.mubr.bf16.gmra.mrb[0].mxu0 %v6887
      %v7055 = vpop.f32.mrb[0].mxu0
      %v7056 = vadd.f32 %v6839, %v7055
      %v7057 = vpop.f32.mrb[0].mxu0
      %v7058 = vpop.f32.mrb[0].mxu0
      %v7059 = vadd.f32 %v6839, %v7058
      %v7060 = vpop.f32.mrb[0].mxu0
      %7061 = vmatprep.mubr.bf16.mxu0 0
      %7062 = vmatmul.mubr.bf16.gmra.mrb[0].mxu0 %v6890
      %v7063 = vpop.f32.mrb[0].mxu0
      %v7064 = vadd.f32 %v6839, %v7063
      %v7065 = vpop.f32.mrb[0].mxu0
      %v7066 = vpop.f32.mrb[0].mxu0
      %v7067 = vadd.f32 %v6839, %v7066
      %v7068 = vpop.f32.mrb[0].mxu0
      %7069 = vmatprep.mubr.bf16.mxu0 0
      %7070 = vmatmul.mubr.bf16.gmra.mrb[0].mxu0 %v6893
      %v7071 = vpop.f32.mrb[0].mxu0
      %v7072 = vadd.f32 %v6839, %v7071
      %v7073 = vpop.f32.mrb[0].mxu0
      %v7074 = vpop.f32.mrb[0].mxu0
      %v7075 = vadd.f32 %v6839, %v7074
      %v7076 = vpop.f32.mrb[0].mxu0
      %7077 = vmatprep.mubr.bf16.mxu0 0
      %7078 = vmatmul.mubr.bf16.gmra.mrb[0].mxu0 %v6896
      %v7079 = vpop.f32.mrb[0].mxu0
      %v7080 = vadd.f32 %v6839, %v7079
      %v7081 = vpop.f32.mrb[0].mxu0
      %v7082 = vpop.f32.mrb[0].mxu0
      %v7083 = vadd.f32 %v6839, %v7082
      %v7084 = vpop.f32.mrb[0].mxu0
      %7085 = vdwg.mxu0
      %v7086 = vadd.f32 %v6740, %v6936
      %v7087 = vadd.f32 %v6741, %v6939
      %v7088 = vadd.f32 %v6742, %v6944
      %v7089 = vadd.f32 %v6743, %v6947
      %v7090 = vadd.f32 %v6744, %v6952
      %v7091 = vadd.f32 %v6745, %v6955
      %v7092 = vadd.f32 %v6746, %v6960
      %v7093 = vadd.f32 %v6747, %v6963
      %v7094 = vadd.f32 %v6748, %v6968
      %v7095 = vadd.f32 %v6749, %v6971
      %v7096 = vadd.f32 %v6750, %v6976
      %v7097 = vadd.f32 %v6751, %v6979
      %v7098 = vadd.f32 %v6752, %v6984
      %v7099 = vadd.f32 %v6753, %v6987
      %v7100 = vadd.f32 %v6754, %v6992
      %v7101 = vadd.f32 %v6755, %v6995
      %v7102 = vadd.f32 %v6756, %v7000
      %v7103 = vadd.f32 %v6757, %v7003
      %v7104 = vadd.f32 %v6758, %v7008
      %v7105 = vadd.f32 %v6759, %v7011
      %v7106 = vadd.f32 %v6760, %v7016
      %v7107 = vadd.f32 %v6761, %v7019
      %v7108 = vadd.f32 %v6762, %v7024
      %v7109 = vadd.f32 %v6763, %v7027
      %v7110 = vadd.f32 %v6764, %v7032
      %v7111 = vadd.f32 %v6765, %v7035
      %v7112 = vadd.f32 %v6766, %v7040
      %v7113 = vadd.f32 %v6767, %v7043
      %v7114 = vadd.f32 %v6768, %v7048
      %v7115 = vadd.f32 %v6769, %v7051
      %v7116 = vadd.f32 %v6770, %v7056
      %v7117 = vadd.f32 %v6771, %v7059
      %v7118 = vadd.f32 %v6772, %v7064
      %v7119 = vadd.f32 %v6773, %v7067
      %v7120 = vadd.f32 %v6774, %v7072
      %v7121 = vadd.f32 %v6775, %v7075
      %v7122 = vadd.f32 %v6776, %v7080
      %v7123 = vadd.f32 %v6777, %v7083
      %v7124 = vmax.f32 %v7086, 0.0
      %v7125 = vmax.f32 %v7087, 0.0
      %v7126 = vmax.f32 %v7088, 0.0
      %v7127 = vmax.f32 %v7089, 0.0
      %v7128 = vmax.f32 %v7090, 0.0
      %v7129 = vmax.f32 %v7091, 0.0
      %v7130 = vmax.f32 %v7092, 0.0
      %v7131 = vmax.f32 %v7093, 0.0
      %v7132 = vmax.f32 %v7094, 0.0
      %v7133 = vmax.f32 %v7095, 0.0
      %v7134 = vmax.f32 %v7096, 0.0
      %v7135 = vmax.f32 %v7097, 0.0
      %v7136 = vmax.f32 %v7098, 0.0
      %v7137 = vmax.f32 %v7099, 0.0
      %v7138 = vmax.f32 %v7100, 0.0
      %v7139 = vmax.f32 %v7101, 0.0
      %v7140 = vmax.f32 %v7102, 0.0
      %v7141 = vmax.f32 %v7103, 0.0
      %v7142 = vmax.f32 %v7104, 0.0
      %v7143 = vmax.f32 %v7105, 0.0
      %v7144 = vmax.f32 %v7106, 0.0
      %v7145 = vmax.f32 %v7107, 0.0
      %v7146 = vmax.f32 %v7108, 0.0
      %v7147 = vmax.f32 %v7109, 0.0
      %v7148 = vmax.f32 %v7110, 0.0
      %v7149 = vmax.f32 %v7111, 0.0
      %v7150 = vmax.f32 %v7112, 0.0
      %v7151 = vmax.f32 %v7113, 0.0
      %v7152 = vmax.f32 %v7114, 0.0
      %v7153 = vmax.f32 %v7115, 0.0
      %v7154 = vmax.f32 %v7116, 0.0
      %v7155 = vmax.f32 %v7117, 0.0
      %v7156 = vmax.f32 %v7118, 0.0
      %v7157 = vmax.f32 %v7119, 0.0
      %v7158 = vmax.f32 %v7120, 0.0
      %v7159 = vmax.f32 %v7121, 0.0
      %v7160 = vmax.f32 %v7122, 0.0
      %v7161 = vmax.f32 %v7123, 0.0
      %7162 = vst.msk [vmem:[%s305 + $0x10] sm:$0xff] %vm376, %v7124
      %7163 = vst.msk [vmem:[%s305 + $0x18] sm:$0xff] %vm376, %v7125
      %7164 = vst.msk [vmem:[%s305 + $0x20] sm:$0xff] %vm376, %v7126
      %7165 = vst.msk [vmem:[%s305 + $0x28] sm:$0xff] %vm376, %v7127
      %7166 = vst.msk [vmem:[%s305 + $0x30] sm:$0xff] %vm376, %v7128
      %7167 = vst.msk [vmem:[%s305 + $0x38] sm:$0xff] %vm376, %v7129
      %7168 = vst.msk [vmem:[%s305 + $0x40] sm:$0xff] %vm376, %v7130
      %7169 = vst.msk [vmem:[%s305 + $0x48] sm:$0xff] %vm376, %v7131
      %7170 = vst.msk [vmem:[%s305 + $0x50] sm:$0xff] %vm376, %v7132
      %7171 = vst.msk [vmem:[%s305 + $0x58] sm:$0xff] %vm376, %v7133
      %7172 = vst.msk [vmem:[%s305 + $0x60] sm:$0xff] %vm376, %v7134
      %7173 = vst.msk [vmem:[%s305 + $0x68] sm:$0xff] %vm376, %v7135
      %7174 = vst.msk [vmem:[%s305 + $0x70] sm:$0xff] %vm376, %v7136
      %7175 = vst.msk [vmem:[%s305 + $0x78] sm:$0xff] %vm376, %v7137
      %7176 = vst.msk [vmem:[%s305 + $0x80] sm:$0xff] %vm376, %v7138
      %7177 = vst.msk [vmem:[%s305 + $0x88] sm:$0xff] %vm376, %v7139
      %7178 = vst.msk [vmem:[%s305 + $0x90] sm:$0xff] %vm376, %v7140
      %7179 = vst.msk [vmem:[%s305 + $0x98] sm:$0xff] %vm376, %v7141
      %7180 = vst.msk [vmem:[%s305 + $0xa0] sm:$0xff] %vm376, %v7142
      %7181 = vst.msk [vmem:[%s305 + $0xa8] sm:$0xff] %vm376, %v7143
      %7182 = vst.msk [vmem:[%s305 + $0xb0] sm:$0xff] %vm376, %v7144
      %7183 = vst.msk [vmem:[%s305 + $0xb8] sm:$0xff] %vm376, %v7145
      %7184 = vst.msk [vmem:[%s305 + $0xc0] sm:$0xff] %vm376, %v7146
      %7185 = vst.msk [vmem:[%s305 + $0xc8] sm:$0xff] %vm376, %v7147
      %7186 = vst.msk [vmem:[%s305 + $0xd0] sm:$0xff] %vm376, %v7148
      %7187 = vst.msk [vmem:[%s305 + $0xd8] sm:$0xff] %vm376, %v7149
      %7188 = vst.msk [vmem:[%s305 + $0xe0] sm:$0xff] %vm376, %v7150
      %7189 = vst.msk [vmem:[%s305 + $0xe8] sm:$0xff] %vm376, %v7151
      %7190 = vst.msk [vmem:[%s305 + $0xf0] sm:$0xff] %vm376, %v7152
      %7191 = vst.msk [vmem:[%s305 + $0xf8] sm:$0xff] %vm376, %v7153
      %7192 = vst.msk [vmem:[%s305 + $0x100] sm:$0xff] %vm376, %v7154
      %7193 = vst.msk [vmem:[%s305 + $0x108] sm:$0xff] %vm376, %v7155
      %7194 = vst.msk [vmem:[%s305 + $0x110] sm:$0xff] %vm376, %v7156
      %7195 = vst.msk [vmem:[%s305 + $0x118] sm:$0xff] %vm376, %v7157
      %7196 = vst.msk [vmem:[%s305 + $0x120] sm:$0xff] %vm376, %v7158
      %7197 = vst.msk [vmem:[%s305 + $0x128] sm:$0xff] %vm376, %v7159
      %7198 = vst.msk [vmem:[%s305 + $0x130] sm:$0xff] %vm376, %v7160
      %7199 = vst.msk [vmem:[%s305 + $0x138] sm:$0xff] %vm376, %v7161
      %p7200 = scmp.lt.s32.totalorder %s19, 1
      %s7201 = scalar_select %p7200, %s19, 1
      %s7202 = smul.addr %s7201, 41
      %s7203 = smul.addr %s7202, 8
      %s7204 = scalar_lea.vmem %s8, %s7203
      // Predicated region
      $region53: #{cnn_block_forward.1} parent=51 // pred_check
        %p7205 = pneg %p210
      $region54: #{cnn_block_forward.1} parent=51 // pred_check_branch
        %7207 = sbr.rel (%p7205) target = $region56
      $region55: #{cnn_block_forward.1} parent=51 // pred_region
        _
      $region56: #{cnn_block_forward.1} parent=51 // pred_fallthru
        _
    $region52: #{cnn_block_forward.1} parent=5 // pred_fallthru
      _
    %p7208 = scmp.le.s32.totalorder 2, %s14
    // Predicated region
    $region57: #{cnn_block_forward.1} parent=5 // pred_check
      %p7209 = pneg %p7208
    $region58: #{cnn_block_forward.1} parent=5 // pred_check_branch
      %7211 = sbr.rel (%p7209) target = $region60
    $region59: #{cnn_block_forward.1} parent=5 // pred_region
      %s7212 = ssub.s32 %s14, 2
      // Predicated region
      $region61: #{cnn_block_forward.1} parent=59 // pred_check
        %p7213 = pneg %p216
      $region62: #{cnn_block_forward.1} parent=59 // pred_check_branch
        %7215 = sbr.rel (%p7213) target = $region64
      $region63: #{cnn_block_forward.1} parent=59 // pred_region
        %p7216 = scmp.lt.s32.totalorder %s20, 1
        %s7217 = scalar_select %p7216, %s20, 1
        %s7218 = smul.addr %s7217, 41
        %s7219 = smul.addr %s7218, 8
        %s7220 = scalar_lea.vmem %s8, %s7219
      $region64: #{cnn_block_forward.1} parent=59 // pred_fallthru
        _
    $region60: #{cnn_block_forward.1} parent=5 // pred_fallthru
      _
  $region6: #{cnn_block_forward.1} parent=0 // loop_footer
    %s18 = sadd.s32 1, %s14
  $region7: #{cnn_block_forward.1} parent=0 // loop_footer_branch
    %13 = sbr.rel target = $region3
  $region8: #{cnn_block_forward.1} parent=0 // loop_exit
    _

</llo_original>
